<compile_context>
chip_gen: v6e
topology: v6e:2x2x1
jax: 0.10.0
libtpu: 0.0.40
codegen_flags: <defaults>
</compile_context>

<pallas_src>
import functools

import jax
import jax.numpy as jnp
import numpy as np
from jax.experimental import pallas as pl
from jax.experimental.pallas import tpu as pltpu


def _round_up(x, m):
    return (x + m - 1) // m * m


_RESIDENT_W_BYTES = 4 * 1024 * 1024   # padded bf16 weights <= this stay VMEM-resident
_VMEM_LIMIT = 56 * 1024 * 1024        # safe on v7x (64 MiB physical per TensorCore)


def _k_tiling(K, cout):
    """Output-channel / reduction tiling (depends only on the layer's weight)."""
    cp = _round_up(cout, 128)             # lane-dense output, full MXU passes
    tk = min(512, _round_up(K, 128))      # reduction tile
    kp = _round_up(K, tk)
    resident = kp * cp * 2 <= _RESIDENT_W_BYTES
    return tk, kp, cp, resident


def _p_tiling(P, cp):
    """Row (sublane) tiling: large tiles for narrow outputs; >=2 tiles for megacore."""
    tp_target = 1024 if cp <= 256 else 512
    p16 = _round_up(P, 16)                # bf16 sublane packing is 16 rows
    if p16 <= tp_target:
        # Whole problem fits one tile: split in two so the "parallel" P axis
        # can still be sharded across v7x's two TensorCores.
        tp = _round_up(-(-P // 2), 16) if P >= 32 else p16
    else:
        tp = tp_target
    pp = _round_up(P, tp)
    return tp, pp


def _bn_row_tile(pp):
    """Largest tile (<=1024 rows) that divides the padded row count."""
    for cand in (1024, 512, 256, 128, 64, 32, 16):
        if pp % cand == 0:
            return cand
    return pp


# ----------------------------------------------------------------------------
# Kernel 1: tiled conv-as-matmul  [P, K] x [K, Cout] -> [P, Cout]
#   grid = (P_tiles, K_tiles); f32 accumulator in VMEM scratch; optional bias,
#   LeakyReLU / Sigmoid epilogue, and per-P-tile BN partial statistics.
# ----------------------------------------------------------------------------
def _conv_matmul_kernel(p_ref, w_ref, b_ref, *out_and_scratch,
                        add_bias, bn_stats, epilogue, tk):
    if bn_stats:
        o_ref, stats_ref, acc_ref = out_and_scratch
    else:
        o_ref, acc_ref = out_and_scratch

    k = pl.program_id(1)

    @pl.when(k == 0)
    def _():
        acc_ref[...] = jnp.zeros_like(acc_ref)

    if w_ref.shape[0] == tk:
        w = w_ref[...]                                   # streamed weight tile
    else:
        start = pl.multiple_of(k * tk, tk)               # resident weight: slice K
        w = w_ref[pl.ds(start, tk), :]
    acc_ref[...] += jnp.dot(p_ref[...], w, preferred_element_type=jnp.float32)

    @pl.when(k == pl.num_programs(1) - 1)
    def _():
        y = acc_ref[...]
        if bn_stats:
            # Exact per-P-tile partial batch statistics from the f32 accumulator.
            # Padded rows are exactly zero (no bias on BN layers) -> contribute 0.
            s = jnp.sum(y, axis=0, keepdims=True)        # [1, Cp]
            sq = jnp.sum(y * y, axis=0, keepdims=True)   # [1, Cp]
            row = jax.lax.broadcasted_iota(jnp.int32, stats_ref.shape, 0)
            stats_ref[...] = (jnp.where(row == 0, s, 0.0)
                              + jnp.where(row == 1, sq, 0.0))
        if add_bias:
            y = y + b_ref[...]
        if epilogue == "lrelu":                          # next layer's pre-activation
            y = jnp.where(y > 0, y, 0.2 * y)
        elif epilogue == "sigmoid":                      # final Sigmoid (EUP recip)
            y = pl.reciprocal(1.0 + jnp.exp(-y), approx=True)
        o_ref[...] = y.astype(o_ref.dtype)


def conv_matmul_pallas(patches, w_pad, b_pad, *, K, cout, add_bias, bn_stats,
                       epilogue, out_dtype):
    # BN statistics rely on padded rows being exactly zero (no bias added).
    assert not (bn_stats and add_bias)
    P, K_in = patches.shape
    assert K_in == K
    kp, cp = w_pad.shape
    tk, kp_chk, cp_chk, resident = _k_tiling(K, cout)
    assert (kp, cp) == (kp_chk, cp_chk)
    tp, pp = _p_tiling(P, cp)
    n_pt, n_kt = pp // tp, kp // tk

    # bf16 MXU inputs (2x MXU rate, half the HBM traffic); f32 accumulation.
    patches_p = jnp.pad(patches.astype(jnp.bfloat16), ((0, pp - P), (0, kp - K)))

    if resident:
        # Whole padded weight DMA'd once per pallas_call, sliced per K step.
        w_spec = pl.BlockSpec((kp, cp), lambda i, k: (0, 0))
    else:
        w_spec = pl.BlockSpec((tk, cp), lambda i, k: (k, 0))

    y_shape = jax.ShapeDtypeStruct((pp, cp), out_dtype)
    y_spec = pl.BlockSpec((tp, cp), lambda i, k: (i, 0))
    if bn_stats:
        out_shape = (y_shape, jax.ShapeDtypeStruct((8 * n_pt, cp), jnp.float32))
        out_specs = (y_spec, pl.BlockSpec((8, cp), lambda i, k: (i, 0)))
    else:
        out_shape = y_shape
        out_specs = y_spec

    kernel = functools.partial(_conv_matmul_kernel, add_bias=add_bias,
                               bn_stats=bn_stats, epilogue=epilogue, tk=tk)
    out_bytes = pp * cp * jnp.dtype(out_dtype).itemsize
    cost = pl.CostEstimate(
        flops=2 * pp * kp * cp,
        transcendentals=pp * cp if epilogue == "sigmoid" else 0,
        bytes_accessed=(patches_p.size * 2
                        + w_pad.size * 2 * (1 if resident else n_pt)
                        + out_bytes),
    )
    return pl.pallas_call(
        kernel,
        out_shape=out_shape,
        grid_spec=pltpu.PrefetchScalarGridSpec(
            num_scalar_prefetch=0,
            grid=(n_pt, n_kt),
            in_specs=[
                pl.BlockSpec((tp, tk), lambda i, k: (i, k)),   # patches tile
                w_spec,                                        # weight (resident or streamed)
                pl.BlockSpec((1, cp), lambda i, k: (0, 0)),    # bias
            ],
            out_specs=out_specs,
            scratch_shapes=[pltpu.VMEM((tp, cp), jnp.float32)],
        ),
        compiler_params=pltpu.CompilerParams(
            dimension_semantics=("parallel", "arbitrary"),
            vmem_limit_bytes=_VMEM_LIMIT,
        ),
        cost_estimate=cost,
    )(patches_p, w_pad, b_pad)


# ----------------------------------------------------------------------------
# Kernel 2: BatchNorm apply (y * scale + shift), fused with the NEXT layer's
# LeakyReLU.  Pure elementwise, tiled over rows, "parallel" axis, bf16 out.
# ----------------------------------------------------------------------------
def _bn_apply_kernel(y_ref, scale_ref, shift_ref, o_ref, *, epilogue):
    y = y_ref[...].astype(jnp.float32) * scale_ref[...] + shift_ref[...]
    if epilogue == "lrelu":
        y = jnp.where(y > 0, y, 0.2 * y)
    o_ref[...] = y.astype(o_ref.dtype)


def bn_apply_pallas(y_pad, scale, shift, *, epilogue, out_dtype):
    pp, cp = y_pad.shape
    tb = _bn_row_tile(pp)
    kernel = functools.partial(_bn_apply_kernel, epilogue=epilogue)
    return pl.pallas_call(
        kernel,
        out_shape=jax.ShapeDtypeStruct((pp, cp), out_dtype),
        grid_spec=pltpu.PrefetchScalarGridSpec(
            num_scalar_prefetch=0,
            grid=(pp // tb,),
            in_specs=[
                pl.BlockSpec((tb, cp), lambda i: (i, 0)),
                pl.BlockSpec((1, cp), lambda i: (0, 0)),
                pl.BlockSpec((1, cp), lambda i: (0, 0)),
            ],
            out_specs=pl.BlockSpec((tb, cp), lambda i: (i, 0)),
        ),
        compiler_params=pltpu.CompilerParams(
            dimension_semantics=("parallel",),
            vmem_limit_bytes=_VMEM_LIMIT,
        ),
    )(y_pad, scale, shift)


# ----------------------------------------------------------------------------
# Glue: im2col on NHWC activations (K ordering = (kh, kw, Cin)).
# ----------------------------------------------------------------------------
def im2col_nhwc(x, k, stride, pad):
    # TODO(synk): build the k*k shifted patches inside the conv kernel (halo-ed
    # VMEM window) to avoid this k^2/stride^2 HBM amplification of activations.
    x = x.astype(jnp.bfloat16)                       # matmul input precision
    N, H, W, C = x.shape
    Ho = (H + 2 * pad - k) // stride + 1
    Wo = (W + 2 * pad - k) // stride + 1
    xp = jnp.pad(x, ((0, 0), (pad, pad), (pad, pad), (0, 0)))
    cols = []
    for i in range(k):
        for j in range(k):
            cols.append(xp[:, i:i + stride * Ho:stride, j:j + stride * Wo:stride, :])
    patches = jnp.concatenate(cols, axis=-1)         # [N, Ho, Wo, k*k*C]
    return patches.reshape(N * Ho * Wo, k * k * C), (N, Ho, Wo)


# ----------------------------------------------------------------------------
# One ConvBlock: im2col -> conv kernel (+ optional BN stats) -> BN apply kernel.
# 'epilogue' is the activation PyTorch applies at the START of the next block
# (LeakyReLU) or the final Sigmoid -- mathematically identical, but applied
# once on the compact activation instead of k*k times on the patches.
# ----------------------------------------------------------------------------
def conv_block(h_nhwc, prep, *, cin, cout, stride, bn, epilogue, out_dtype):
    w_pad, b_pad, g_pad, be_pad = prep
    K = 4 * 4 * cin
    patches, (N, Ho, Wo) = im2col_nhwc(h_nhwc, 4, stride, 1)
    P = patches.shape[0]

    if bn:
        # Bias before BN is redundant (BN removes any per-channel shift).
        y_pad, stats = conv_matmul_pallas(
            patches, w_pad, b_pad, K=K, cout=cout,
            add_bias=False, bn_stats=True, epilogue=None, out_dtype=jnp.bfloat16)
        cp = y_pad.shape[1]
        st = stats.reshape(-1, 8, cp)
        total = jnp.sum(st[:, 0, :], axis=0)            # sum(y) over all P rows
        total_sq = jnp.sum(st[:, 1, :], axis=0)         # sum(y^2)
        mean = total / P                                 # true P; padded rows are 0
        var = total_sq / P - mean * mean                 # biased (training-mode BN)
        scale = g_pad * jax.lax.rsqrt(var + 1e-5)
        shift = be_pad - mean * scale
        y_pad = bn_apply_pallas(y_pad, scale.reshape(1, cp), shift.reshape(1, cp),
                                epilogue=epilogue, out_dtype=out_dtype)
    else:
        y_pad = conv_matmul_pallas(
            patches, w_pad, b_pad, K=K, cout=cout,
            add_bias=True, bn_stats=False, epilogue=epilogue, out_dtype=out_dtype)

    return y_pad[:P, :cout].reshape(N, Ho, Wo, cout)


# ----------------------------------------------------------------------------
# Discriminator512: params + one-time kernel-ready weight prep + forward.
# ----------------------------------------------------------------------------
_STRIDES = (2, 2, 2, 2, 1, 1)
_BNS = (False, True, True, True, True, False)
# epilogue of layer i == pre-activation of layer i+1 (LeakyReLU) / final Sigmoid
_EPILOGUES = ("lrelu", "lrelu", "lrelu", "lrelu", "lrelu", "sigmoid")


def _layer_dims(input_dim, num_filter, output_dim):
    return (
        (input_dim, num_filter),
        (num_filter, num_filter * 2),
        (num_filter * 2, num_filter * 4),
        (num_filter * 4, num_filter * 8),
        (num_filter * 8, num_filter * 16),
        (num_filter * 16, output_dim),
    )


def init_params(key, dims):
    params = []
    for cin, cout in dims:
        key, kw, kb = jax.random.split(key, 3)
        w = 0.02 * jax.random.normal(kw, (cout, cin, 4, 4), jnp.float32)
        b = 0.02 * jax.random.normal(kb, (cout,), jnp.float32)
        gamma = jnp.ones((cout,), jnp.float32)
        beta = jnp.zeros((cout,), jnp.float32)
        params.append((w, b, gamma, beta))
    return params


def prepare_params(params):
    """One-time: transpose/reshape/pad weights to kernel-ready bf16 matrices."""
    prepared = []
    for (w, b, gamma, beta) in params:
        cout, cin, kh, kw_ = w.shape
        K = kh * kw_ * cin
        _, kp, cp, _ = _k_tiling(K, cout)
        w_mat = jnp.transpose(w, (2, 3, 1, 0)).reshape(K, cout)   # (kh,kw,Cin) x Cout
        w_pad = jnp.pad(w_mat.astype(jnp.bfloat16), ((0, kp - K), (0, cp - cout)))
        b_pad = jnp.pad(b.astype(jnp.float32).reshape(1, cout), ((0, 0), (0, cp - cout)))
        g_pad = jnp.pad(gamma.astype(jnp.float32), (0, cp - cout))
        be_pad = jnp.pad(beta.astype(jnp.float32), (0, cp - cout))
        prepared.append((w_pad, b_pad, g_pad, be_pad))
    return prepared


def discriminator512_forward(x, label, prepared, dims):
    h = jnp.concatenate([x, label], axis=1)               # NCHW in
    h = jnp.transpose(h, (0, 2, 3, 1))                    # NHWC internally
    last = len(prepared) - 1
    for idx, ((cin, cout), prep, stride, bn, epi) in enumerate(
            zip(dims, prepared, _STRIDES, _BNS, _EPILOGUES)):
        out_dtype = jnp.float32 if idx == last else jnp.bfloat16
        h = conv_block(h, prep, cin=cin, cout=cout, stride=stride, bn=bn,
                       epilogue=epi, out_dtype=out_dtype)
    return jnp.transpose(h, (0, 3, 1, 2))                 # back to NCHW at the end


# ----------------------------------------------------------------------------
# Pure-JAX f32 reference (PyTorch semantics) for correctness check.
# ----------------------------------------------------------------------------
def reference_forward(x, label, params):
    acts = (False, True, True, True, True, True)
    sigs = (False, False, False, False, False, True)
    h = jnp.concatenate([x, label], axis=1)
    for (w, b, gamma, beta), s, act, bn, sig in zip(params, _STRIDES, acts, _BNS, sigs):
        if act:
            h = jnp.where(h > 0, h, 0.2 * h)
        h = jax.lax.conv_general_dilated(
            h, w, (s, s), [(1, 1), (1, 1)],
            dimension_numbers=("NCHW", "OIHW", "NCHW"),
        ) + b.reshape(1, -1, 1, 1)
        if bn:
            mean = h.mean(axis=(0, 2, 3), keepdims=True)
            var = ((h - mean) ** 2).mean(axis=(0, 2, 3), keepdims=True)
            h = (h - mean) / jnp.sqrt(var + 1e-5) * gamma.reshape(1, -1, 1, 1) \
                + beta.reshape(1, -1, 1, 1)
        if sig:
            h = jax.nn.sigmoid(h)
    return h


if __name__ == "__main__":
    # Small but valid shapes (spatial must survive 4 stride-2 + 2 stride-1 convs).
    N, H, W = 2, 64, 64
    x_ch, label_ch = 3, 1
    input_dim, num_filter, output_dim = x_ch + label_ch, 8, 1

    key = jax.random.PRNGKey(0)
    kx, kl, kparam = jax.random.split(key, 3)
    x = jax.random.normal(kx, (N, x_ch, H, W), jnp.float32)
    label = jax.random.normal(kl, (N, label_ch, H, W), jnp.float32)

    dims = _layer_dims(input_dim, num_filter, output_dim)
    params = init_params(kparam, dims)
    prepared = prepare_params(params)          # one-time weight prep (hoisted)

    fwd = jax.jit(functools.partial(discriminator512_forward, dims=dims))
    out = jax.block_until_ready(fwd(x, label, prepared))

    ref = jax.block_until_ready(reference_forward(x, label, params))
    assert out.shape == ref.shape == (N, output_dim, 2, 2), out.shape
    # Tolerance reflects bf16 MXU inputs + bf16 intermediate activations
    # (f32 accumulation, f32 BN statistics and epilogue math).
    np.testing.assert_allclose(np.asarray(out), np.asarray(ref), atol=2e-2, rtol=2e-2)

    print("KERNEL_OK")
</pallas_src>

<mosaic_0001>
module attributes {stable_mosaic.version = 11 : i64} {
  func.func @_conv_matmul_kernel(%arg0: i32, %arg1: i32, %arg2: memref<1024x128xbf16, #tpu.memory_space<vmem>>, %arg3: memref<128x128xbf16, #tpu.memory_space<vmem>>, %arg4: memref<1x128xf32, #tpu.memory_space<vmem>>, %arg5: memref<1024x128xbf16, #tpu.memory_space<vmem>>, %arg6: memref<1024x128xf32, #tpu.memory_space<vmem>>) attributes {dimension_semantics = [#tpu.dimension_semantics<parallel>, #tpu.dimension_semantics<arbitrary>], iteration_bounds = array<i64: 2, 1>, scalar_prefetch = 0 : i64, scratch_operands = 1 : i64, tpu.core_type = #tpu.core_type<tc>, window_params = [{transform_indices = @transform_0, window_bounds = array<i64: 1024, 128>}, {pipeline_mode = #tpu.pipeline_mode<synchronous>, transform_indices = @transform_1, window_bounds = array<i64: 128, 128>}, {pipeline_mode = #tpu.pipeline_mode<synchronous>, transform_indices = @transform_2, window_bounds = array<i64: 1, 128>}, {transform_indices = @transform_3, window_bounds = array<i64: 1024, 128>}]} {
    %c0_i32 = arith.constant 0 : i32
    %0 = arith.cmpi eq, %arg1, %c0_i32 : i32
    %1 = arith.extui %0 : i1 to i32
    %c0_i32_0 = arith.constant 0 : i32
    %2 = arith.cmpi ne, %1, %c0_i32_0 : i32
    scf.if %2 {
      %cst_10 = arith.constant 0.000000e+00 : f32
      %12 = vector.broadcast %cst_10 : f32 to vector<1024x128xf32>
      %c0_11 = arith.constant 0 : index
      %c0_12 = arith.constant 0 : index
      %13 = vector.load %arg6[%c0_11, %c0_12] : memref<1024x128xf32, #tpu.memory_space<vmem>>, vector<1024x128xf32>
      tpu.vector_store %arg6[%c0_11, %c0_12], %12 {strides = array<i32>} : memref<1024x128xf32, #tpu.memory_space<vmem>>, vector<1024x128xf32>,
    } else {
    }
    %c0 = arith.constant 0 : index
    %c0_1 = arith.constant 0 : index
    %3 = vector.load %arg3[%c0, %c0_1] : memref<128x128xbf16, #tpu.memory_space<vmem>>, vector<128x128xbf16>
    %c0_2 = arith.constant 0 : index
    %c0_3 = arith.constant 0 : index
    %4 = vector.load %arg6[%c0_2, %c0_3] : memref<1024x128xf32, #tpu.memory_space<vmem>>, vector<1024x128xf32>
    %c0_4 = arith.constant 0 : index
    %c0_5 = arith.constant 0 : index
    %5 = vector.load %arg2[%c0_4, %c0_5] : memref<1024x128xbf16, #tpu.memory_space<vmem>>, vector<1024x128xbf16>
    %cst = arith.constant dense<0.000000e+00> : vector<1024x128xf32>
    %6 = tpu.matmul %5, %3, %cst {dimension_numbers = #tpu.dot_dimension_numbers<[1], [0], [0], [1], [0, 0, 1, 1], [], []>} : vector<1024x128xbf16>, vector<128x128xbf16>, vector<1024x128xf32> -> vector<1024x128xf32>
    %7 = arith.addf %4, %6 : vector<1024x128xf32>
    %c0_6 = arith.constant 0 : index
    %c0_7 = arith.constant 0 : index
    %8 = vector.load %arg6[%c0_6, %c0_7] : memref<1024x128xf32, #tpu.memory_space<vmem>>, vector<1024x128xf32>
    tpu.vector_store %arg6[%c0_6, %c0_7], %7 {strides = array<i32>} : memref<1024x128xf32, #tpu.memory_space<vmem>>, vector<1024x128xf32>,
    %c0_i32_8 = arith.constant 0 : i32
    %9 = arith.cmpi eq, %arg1, %c0_i32_8 : i32
    %10 = arith.extui %9 : i1 to i32
    %c0_i32_9 = arith.constant 0 : i32
    %11 = arith.cmpi ne, %10, %c0_i32_9 : i32
    scf.if %11 {
      %c0_10 = arith.constant 0 : index
      %c0_11 = arith.constant 0 : index
      %12 = vector.load %arg6[%c0_10, %c0_11] : memref<1024x128xf32, #tpu.memory_space<vmem>>, vector<1024x128xf32>
      %c0_12 = arith.constant 0 : index
      %c0_13 = arith.constant 0 : index
      %13 = vector.load %arg4[%c0_12, %c0_13] : memref<1x128xf32, #tpu.memory_space<vmem>>, vector<1x128xf32>
      %14 = vector.broadcast %13 : vector<1x128xf32> to vector<1024x128xf32>
      %15 = arith.addf %12, %14 : vector<1024x128xf32>
      %cst_14 = arith.constant 0.000000e+00 : f32
      %16 = vector.broadcast %cst_14 : f32 to vector<1024x128xf32>
      %17 = arith.cmpf ogt, %15, %16 : vector<1024x128xf32>
      %cst_15 = arith.constant 2.000000e-01 : f32
      %18 = vector.broadcast %cst_15 : f32 to vector<1024x128xf32>
      %19 = arith.mulf %18, %15 : vector<1024x128xf32>
      %20 = arith.select %17, %15, %19 : vector<1024x128xi1>, vector<1024x128xf32>
      %21 = arith.truncf %20 : vector<1024x128xf32> to vector<1024x128xbf16>
      %c0_16 = arith.constant 0 : index
      %c0_17 = arith.constant 0 : index
      %22 = vector.load %arg5[%c0_16, %c0_17] : memref<1024x128xbf16, #tpu.memory_space<vmem>>, vector<1024x128xbf16>
      tpu.vector_store %arg5[%c0_16, %c0_17], %21 {strides = array<i32>} : memref<1024x128xbf16, #tpu.memory_space<vmem>>, vector<1024x128xbf16>,
    } else {
    }
    return
  }
  func.func @transform_0(%arg0: i32, %arg1: i32) -> (i32, i32) {
    %c0_i32 = arith.constant 0 : i32
    return %arg0, %arg1 : i32, i32
  }
  func.func @transform_1(%arg0: i32, %arg1: i32) -> (i32, i32) {
    %c0_i32 = arith.constant 0 : i32
    %c0_i32_0 = arith.constant 0 : i32
    %c0_i32_1 = arith.constant 0 : i32
    return %c0_i32, %c0_i32_0 : i32, i32
  }
  func.func @transform_2(%arg0: i32, %arg1: i32) -> (i32, i32) {
    %c0_i32 = arith.constant 0 : i32
    %c0_i32_0 = arith.constant 0 : i32
    %c0_i32_1 = arith.constant 0 : i32
    return %c0_i32, %c0_i32_0 : i32, i32
  }
  func.func @transform_3(%arg0: i32, %arg1: i32) -> (i32, i32) {
    %c0_i32 = arith.constant 0 : i32
    %c0_i32_0 = arith.constant 0 : i32
    return %arg0, %c0_i32 : i32, i32
  }
}

module attributes {stable_mosaic.version = 11 : i64} {
  func.func @_bn_apply_kernel(%arg0: i32, %arg1: memref<512x128xbf16, #tpu.memory_space<vmem>>, %arg2: memref<1x128xf32, #tpu.memory_space<vmem>>, %arg3: memref<1x128xf32, #tpu.memory_space<vmem>>, %arg4: memref<512x128xbf16, #tpu.memory_space<vmem>>) attributes {dimension_semantics = [#tpu.dimension_semantics<parallel>], iteration_bounds = array<i64: 1>, scalar_prefetch = 0 : i64, scratch_operands = 0 : i64, tpu.core_type = #tpu.core_type<tc>, window_params = [{transform_indices = @transform_0, window_bounds = array<i64: 512, 128>}, {pipeline_mode = #tpu.pipeline_mode<synchronous>, transform_indices = @transform_1, window_bounds = array<i64: 1, 128>}, {pipeline_mode = #tpu.pipeline_mode<synchronous>, transform_indices = @transform_2, window_bounds = array<i64: 1, 128>}, {transform_indices = @transform_3, window_bounds = array<i64: 512, 128>}]} {
    %c0 = arith.constant 0 : index
    %c0_0 = arith.constant 0 : index
    %0 = vector.load %arg1[%c0, %c0_0] : memref<512x128xbf16, #tpu.memory_space<vmem>>, vector<512x128xbf16>
    %1 = arith.extf %0 : vector<512x128xbf16> to vector<512x128xf32>
    %c0_1 = arith.constant 0 : index
    %c0_2 = arith.constant 0 : index
    %2 = vector.load %arg2[%c0_1, %c0_2] : memref<1x128xf32, #tpu.memory_space<vmem>>, vector<1x128xf32>
    %3 = vector.broadcast %2 : vector<1x128xf32> to vector<512x128xf32>
    %4 = arith.mulf %1, %3 : vector<512x128xf32>
    %c0_3 = arith.constant 0 : index
    %c0_4 = arith.constant 0 : index
    %5 = vector.load %arg3[%c0_3, %c0_4] : memref<1x128xf32, #tpu.memory_space<vmem>>, vector<1x128xf32>
    %6 = vector.broadcast %5 : vector<1x128xf32> to vector<512x128xf32>
    %7 = arith.addf %4, %6 : vector<512x128xf32>
    %cst = arith.constant 0.000000e+00 : f32
    %8 = vector.broadcast %cst : f32 to vector<512x128xf32>
    %9 = arith.cmpf ogt, %7, %8 : vector<512x128xf32>
    %cst_5 = arith.constant 2.000000e-01 : f32
    %10 = vector.broadcast %cst_5 : f32 to vector<512x128xf32>
    %11 = arith.mulf %10, %7 : vector<512x128xf32>
    %12 = arith.select %9, %7, %11 : vector<512x128xi1>, vector<512x128xf32>
    %13 = arith.truncf %12 : vector<512x128xf32> to vector<512x128xbf16>
    %c0_6 = arith.constant 0 : index
    %c0_7 = arith.constant 0 : index
    %14 = vector.load %arg4[%c0_6, %c0_7] : memref<512x128xbf16, #tpu.memory_space<vmem>>, vector<512x128xbf16>
    tpu.vector_store %arg4[%c0_6, %c0_7], %13 {strides = array<i32>} : memref<512x128xbf16, #tpu.memory_space<vmem>>, vector<512x128xbf16>,
    return
  }
  func.func @transform_0(%arg0: i32) -> (i32, i32) {
    %c0_i32 = arith.constant 0 : i32
    %c0_i32_0 = arith.constant 0 : i32
    return %arg0, %c0_i32 : i32, i32
  }
  func.func @transform_1(%arg0: i32) -> (i32, i32) {
    %c0_i32 = arith.constant 0 : i32
    %c0_i32_0 = arith.constant 0 : i32
    %c0_i32_1 = arith.constant 0 : i32
    return %c0_i32, %c0_i32_0 : i32, i32
  }
  func.func @transform_2(%arg0: i32) -> (i32, i32) {
    %c0_i32 = arith.constant 0 : i32
    %c0_i32_0 = arith.constant 0 : i32
    %c0_i32_1 = arith.constant 0 : i32
    return %c0_i32, %c0_i32_0 : i32, i32
  }
  func.func @transform_3(%arg0: i32) -> (i32, i32) {
    %c0_i32 = arith.constant 0 : i32
    %c0_i32_0 = arith.constant 0 : i32
    return %arg0, %c0_i32 : i32, i32
  }
}

module attributes {stable_mosaic.version = 11 : i64} {
  func.func @_conv_matmul_kernel(%arg0: i32, %arg1: i32, %arg2: memref<256x128xbf16, #tpu.memory_space<vmem>>, %arg3: memref<128x128xbf16, #tpu.memory_space<vmem>>, %arg4: memref<1x128xf32, #tpu.memory_space<vmem>>, %arg5: memref<256x128xbf16, #tpu.memory_space<vmem>>, %arg6: memref<8x128xf32, #tpu.memory_space<vmem>>, %arg7: memref<256x128xf32, #tpu.memory_space<vmem>>) attributes {dimension_semantics = [#tpu.dimension_semantics<parallel>, #tpu.dimension_semantics<arbitrary>], iteration_bounds = array<i64: 2, 1>, scalar_prefetch = 0 : i64, scratch_operands = 1 : i64, tpu.core_type = #tpu.core_type<tc>, window_params = [{transform_indices = @transform_0, window_bounds = array<i64: 256, 128>}, {pipeline_mode = #tpu.pipeline_mode<synchronous>, transform_indices = @transform_1, window_bounds = array<i64: 128, 128>}, {pipeline_mode = #tpu.pipeline_mode<synchronous>, transform_indices = @transform_2, window_bounds = array<i64: 1, 128>}, {transform_indices = @transform_3, window_bounds = array<i64: 256, 128>}, {transform_indices = @transform_4, window_bounds = array<i64: 8, 128>}]} {
    %c0_i32 = arith.constant 0 : i32
    %0 = arith.cmpi eq, %arg1, %c0_i32 : i32
    %1 = arith.extui %0 : i1 to i32
    %c0_i32_0 = arith.constant 0 : i32
    %2 = arith.cmpi ne, %1, %c0_i32_0 : i32
    scf.if %2 {
      %cst_10 = arith.constant 0.000000e+00 : f32
      %12 = vector.broadcast %cst_10 : f32 to vector<256x128xf32>
      %c0_11 = arith.constant 0 : index
      %c0_12 = arith.constant 0 : index
      %13 = vector.load %arg7[%c0_11, %c0_12] : memref<256x128xf32, #tpu.memory_space<vmem>>, vector<256x128xf32>
      tpu.vector_store %arg7[%c0_11, %c0_12], %12 {strides = array<i32>} : memref<256x128xf32, #tpu.memory_space<vmem>>, vector<256x128xf32>,
    } else {
    }
    %c0 = arith.constant 0 : index
    %c0_1 = arith.constant 0 : index
    %3 = vector.load %arg3[%c0, %c0_1] : memref<128x128xbf16, #tpu.memory_space<vmem>>, vector<128x128xbf16>
    %c0_2 = arith.constant 0 : index
    %c0_3 = arith.constant 0 : index
    %4 = vector.load %arg7[%c0_2, %c0_3] : memref<256x128xf32, #tpu.memory_space<vmem>>, vector<256x128xf32>
    %c0_4 = arith.constant 0 : index
    %c0_5 = arith.constant 0 : index
    %5 = vector.load %arg2[%c0_4, %c0_5] : memref<256x128xbf16, #tpu.memory_space<vmem>>, vector<256x128xbf16>
    %cst = arith.constant dense<0.000000e+00> : vector<256x128xf32>
    %6 = tpu.matmul %5, %3, %cst {dimension_numbers = #tpu.dot_dimension_numbers<[1], [0], [0], [1], [0, 0, 1, 1], [], []>} : vector<256x128xbf16>, vector<128x128xbf16>, vector<256x128xf32> -> vector<256x128xf32>
    %7 = arith.addf %4, %6 : vector<256x128xf32>
    %c0_6 = arith.constant 0 : index
    %c0_7 = arith.constant 0 : index
    %8 = vector.load %arg7[%c0_6, %c0_7] : memref<256x128xf32, #tpu.memory_space<vmem>>, vector<256x128xf32>
    tpu.vector_store %arg7[%c0_6, %c0_7], %7 {strides = array<i32>} : memref<256x128xf32, #tpu.memory_space<vmem>>, vector<256x128xf32>,
    %c0_i32_8 = arith.constant 0 : i32
    %9 = arith.cmpi eq, %arg1, %c0_i32_8 : i32
    %10 = arith.extui %9 : i1 to i32
    %c0_i32_9 = arith.constant 0 : i32
    %11 = arith.cmpi ne, %10, %c0_i32_9 : i32
    scf.if %11 {
      %c0_10 = arith.constant 0 : index
      %c0_11 = arith.constant 0 : index
      %12 = vector.load %arg7[%c0_10, %c0_11] : memref<256x128xf32, #tpu.memory_space<vmem>>, vector<256x128xf32>
      %cst_12 = arith.constant dense<0.000000e+00> : vector<128xf32>
      %13 = vector.multi_reduction <add>, %12, %cst_12 [0] : vector<256x128xf32> to vector<128xf32>
      %14 = vector.shape_cast %13 : vector<128xf32> to vector<1x128xf32>
      %15 = arith.mulf %12, %12 : vector<256x128xf32>
      %cst_13 = arith.constant dense<0.000000e+00> : vector<128xf32>
      %16 = vector.multi_reduction <add>, %15, %cst_13 [0] : vector<256x128xf32> to vector<128xf32>
      %17 = vector.shape_cast %16 : vector<128xf32> to vector<1x128xf32>
      %18 = tpu.iota {dimensions = array<i32: 0>} : vector<8x128xi32>
      %c0_i32_14 = arith.constant 0 : i32
      %19 = vector.broadcast %c0_i32_14 : i32 to vector<8x128xi32>
      %20 = arith.cmpi eq, %18, %19 : vector<8x128xi32>
      %cst_15 = arith.constant 0.000000e+00 : f32
      %21 = vector.shape_cast %14 : vector<1x128xf32> to vector<1x128xf32>
      %22 = vector.broadcast %21 : vector<1x128xf32> to vector<8x128xf32>
      %23 = vector.broadcast %cst_15 : f32 to vector<8x128xf32>
      %24 = arith.select %20, %22, %23 : vector<8x128xi1>, vector<8x128xf32>
      %c1_i32 = arith.constant 1 : i32
      %25 = vector.broadcast %c1_i32 : i32 to vector<8x128xi32>
      %26 = arith.cmpi eq, %18, %25 : vector<8x128xi32>
      %cst_16 = arith.constant 0.000000e+00 : f32
      %27 = vector.shape_cast %17 : vector<1x128xf32> to vector<1x128xf32>
      %28 = vector.broadcast %27 : vector<1x128xf32> to vector<8x128xf32>
      %29 = vector.broadcast %cst_16 : f32 to vector<8x128xf32>
      %30 = arith.select %26, %28, %29 : vector<8x128xi1>, vector<8x128xf32>
      %31 = arith.addf %24, %30 : vector<8x128xf32>
      %c0_17 = arith.constant 0 : index
      %c0_18 = arith.constant 0 : index
      %32 = vector.load %arg6[%c0_17, %c0_18] : memref<8x128xf32, #tpu.memory_space<vmem>>, vector<8x128xf32>
      tpu.vector_store %arg6[%c0_17, %c0_18], %31 {strides = array<i32>} : memref<8x128xf32, #tpu.memory_space<vmem>>, vector<8x128xf32>,
      %33 = arith.truncf %12 : vector<256x128xf32> to vector<256x128xbf16>
      %c0_19 = arith.constant 0 : index
      %c0_20 = arith.constant 0 : index
      %34 = vector.load %arg5[%c0_19, %c0_20] : memref<256x128xbf16, #tpu.memory_space<vmem>>, vector<256x128xbf16>
      tpu.vector_store %arg5[%c0_19, %c0_20], %33 {strides = array<i32>} : memref<256x128xbf16, #tpu.memory_space<vmem>>, vector<256x128xbf16>,
    } else {
    }
    return
  }
  func.func @transform_0(%arg0: i32, %arg1: i32) -> (i32, i32) {
    %c0_i32 = arith.constant 0 : i32
    return %arg0, %arg1 : i32, i32
  }
  func.func @transform_1(%arg0: i32, %arg1: i32) -> (i32, i32) {
    %c0_i32 = arith.constant 0 : i32
    %c0_i32_0 = arith.constant 0 : i32
    %c0_i32_1 = arith.constant 0 : i32
    return %c0_i32, %c0_i32_0 : i32, i32
  }
  func.func @transform_2(%arg0: i32, %arg1: i32) -> (i32, i32) {
    %c0_i32 = arith.constant 0 : i32
    %c0_i32_0 = arith.constant 0 : i32
    %c0_i32_1 = arith.constant 0 : i32
    return %c0_i32, %c0_i32_0 : i32, i32
  }
  func.func @transform_3(%arg0: i32, %arg1: i32) -> (i32, i32) {
    %c0_i32 = arith.constant 0 : i32
    %c0_i32_0 = arith.constant 0 : i32
    return %arg0, %c0_i32 : i32, i32
  }
  func.func @transform_4(%arg0: i32, %arg1: i32) -> (i32, i32) {
    %c0_i32 = arith.constant 0 : i32
    %c0_i32_0 = arith.constant 0 : i32
    return %arg0, %c0_i32 : i32, i32
  }
}

module attributes {stable_mosaic.version = 11 : i64} {
  func.func @_bn_apply_kernel(%arg0: i32, %arg1: memref<128x128xbf16, #tpu.memory_space<vmem>>, %arg2: memref<1x128xf32, #tpu.memory_space<vmem>>, %arg3: memref<1x128xf32, #tpu.memory_space<vmem>>, %arg4: memref<128x128xbf16, #tpu.memory_space<vmem>>) attributes {dimension_semantics = [#tpu.dimension_semantics<parallel>], iteration_bounds = array<i64: 1>, scalar_prefetch = 0 : i64, scratch_operands = 0 : i64, tpu.core_type = #tpu.core_type<tc>, window_params = [{transform_indices = @transform_0, window_bounds = array<i64: 128, 128>}, {pipeline_mode = #tpu.pipeline_mode<synchronous>, transform_indices = @transform_1, window_bounds = array<i64: 1, 128>}, {pipeline_mode = #tpu.pipeline_mode<synchronous>, transform_indices = @transform_2, window_bounds = array<i64: 1, 128>}, {transform_indices = @transform_3, window_bounds = array<i64: 128, 128>}]} {
    %c0 = arith.constant 0 : index
    %c0_0 = arith.constant 0 : index
    %0 = vector.load %arg1[%c0, %c0_0] : memref<128x128xbf16, #tpu.memory_space<vmem>>, vector<128x128xbf16>
    %1 = arith.extf %0 : vector<128x128xbf16> to vector<128x128xf32>
    %c0_1 = arith.constant 0 : index
    %c0_2 = arith.constant 0 : index
    %2 = vector.load %arg2[%c0_1, %c0_2] : memref<1x128xf32, #tpu.memory_space<vmem>>, vector<1x128xf32>
    %3 = vector.broadcast %2 : vector<1x128xf32> to vector<128x128xf32>
    %4 = arith.mulf %1, %3 : vector<128x128xf32>
    %c0_3 = arith.constant 0 : index
    %c0_4 = arith.constant 0 : index
    %5 = vector.load %arg3[%c0_3, %c0_4] : memref<1x128xf32, #tpu.memory_space<vmem>>, vector<1x128xf32>
    %6 = vector.broadcast %5 : vector<1x128xf32> to vector<128x128xf32>
    %7 = arith.addf %4, %6 : vector<128x128xf32>
    %cst = arith.constant 0.000000e+00 : f32
    %8 = vector.broadcast %cst : f32 to vector<128x128xf32>
    %9 = arith.cmpf ogt, %7, %8 : vector<128x128xf32>
    %cst_5 = arith.constant 2.000000e-01 : f32
    %10 = vector.broadcast %cst_5 : f32 to vector<128x128xf32>
    %11 = arith.mulf %10, %7 : vector<128x128xf32>
    %12 = arith.select %9, %7, %11 : vector<128x128xi1>, vector<128x128xf32>
    %13 = arith.truncf %12 : vector<128x128xf32> to vector<128x128xbf16>
    %c0_6 = arith.constant 0 : index
    %c0_7 = arith.constant 0 : index
    %14 = vector.load %arg4[%c0_6, %c0_7] : memref<128x128xbf16, #tpu.memory_space<vmem>>, vector<128x128xbf16>
    tpu.vector_store %arg4[%c0_6, %c0_7], %13 {strides = array<i32>} : memref<128x128xbf16, #tpu.memory_space<vmem>>, vector<128x128xbf16>,
    return
  }
  func.func @transform_0(%arg0: i32) -> (i32, i32) {
    %c0_i32 = arith.constant 0 : i32
    %c0_i32_0 = arith.constant 0 : i32
    return %arg0, %c0_i32 : i32, i32
  }
  func.func @transform_1(%arg0: i32) -> (i32, i32) {
    %c0_i32 = arith.constant 0 : i32
    %c0_i32_0 = arith.constant 0 : i32
    %c0_i32_1 = arith.constant 0 : i32
    return %c0_i32, %c0_i32_0 : i32, i32
  }
  func.func @transform_2(%arg0: i32) -> (i32, i32) {
    %c0_i32 = arith.constant 0 : i32
    %c0_i32_0 = arith.constant 0 : i32
    %c0_i32_1 = arith.constant 0 : i32
    return %c0_i32, %c0_i32_0 : i32, i32
  }
  func.func @transform_3(%arg0: i32) -> (i32, i32) {
    %c0_i32 = arith.constant 0 : i32
    %c0_i32_0 = arith.constant 0 : i32
    return %arg0, %c0_i32 : i32, i32
  }
}

module attributes {stable_mosaic.version = 11 : i64} {
  func.func @_conv_matmul_kernel(%arg0: i32, %arg1: i32, %arg2: memref<64x256xbf16, #tpu.memory_space<vmem>>, %arg3: memref<256x128xbf16, #tpu.memory_space<vmem>>, %arg4: memref<1x128xf32, #tpu.memory_space<vmem>>, %arg5: memref<64x128xbf16, #tpu.memory_space<vmem>>, %arg6: memref<8x128xf32, #tpu.memory_space<vmem>>, %arg7: memref<64x128xf32, #tpu.memory_space<vmem>>) attributes {dimension_semantics = [#tpu.dimension_semantics<parallel>, #tpu.dimension_semantics<arbitrary>], iteration_bounds = array<i64: 2, 1>, scalar_prefetch = 0 : i64, scratch_operands = 1 : i64, tpu.core_type = #tpu.core_type<tc>, window_params = [{transform_indices = @transform_0, window_bounds = array<i64: 64, 256>}, {pipeline_mode = #tpu.pipeline_mode<synchronous>, transform_indices = @transform_1, window_bounds = array<i64: 256, 128>}, {pipeline_mode = #tpu.pipeline_mode<synchronous>, transform_indices = @transform_2, window_bounds = array<i64: 1, 128>}, {transform_indices = @transform_3, window_bounds = array<i64: 64, 128>}, {transform_indices = @transform_4, window_bounds = array<i64: 8, 128>}]} {
    %c0_i32 = arith.constant 0 : i32
    %0 = arith.cmpi eq, %arg1, %c0_i32 : i32
    %1 = arith.extui %0 : i1 to i32
    %c0_i32_0 = arith.constant 0 : i32
    %2 = arith.cmpi ne, %1, %c0_i32_0 : i32
    scf.if %2 {
      %cst_10 = arith.constant 0.000000e+00 : f32
      %12 = vector.broadcast %cst_10 : f32 to vector<64x128xf32>
      %c0_11 = arith.constant 0 : index
      %c0_12 = arith.constant 0 : index
      %13 = vector.load %arg7[%c0_11, %c0_12] : memref<64x128xf32, #tpu.memory_space<vmem>>, vector<64x128xf32>
      tpu.vector_store %arg7[%c0_11, %c0_12], %12 {strides = array<i32>} : memref<64x128xf32, #tpu.memory_space<vmem>>, vector<64x128xf32>,
    } else {
    }
    %c0 = arith.constant 0 : index
    %c0_1 = arith.constant 0 : index
    %3 = vector.load %arg3[%c0, %c0_1] : memref<256x128xbf16, #tpu.memory_space<vmem>>, vector<256x128xbf16>
    %c0_2 = arith.constant 0 : index
    %c0_3 = arith.constant 0 : index
    %4 = vector.load %arg7[%c0_2, %c0_3] : memref<64x128xf32, #tpu.memory_space<vmem>>, vector<64x128xf32>
    %c0_4 = arith.constant 0 : index
    %c0_5 = arith.constant 0 : index
    %5 = vector.load %arg2[%c0_4, %c0_5] : memref<64x256xbf16, #tpu.memory_space<vmem>>, vector<64x256xbf16>
    %cst = arith.constant dense<0.000000e+00> : vector<64x128xf32>
    %6 = tpu.matmul %5, %3, %cst {dimension_numbers = #tpu.dot_dimension_numbers<[1], [0], [0], [1], [0, 0, 1, 1], [], []>} : vector<64x256xbf16>, vector<256x128xbf16>, vector<64x128xf32> -> vector<64x128xf32>
    %7 = arith.addf %4, %6 : vector<64x128xf32>
    %c0_6 = arith.constant 0 : index
    %c0_7 = arith.constant 0 : index
    %8 = vector.load %arg7[%c0_6, %c0_7] : memref<64x128xf32, #tpu.memory_space<vmem>>, vector<64x128xf32>
    tpu.vector_store %arg7[%c0_6, %c0_7], %7 {strides = array<i32>} : memref<64x128xf32, #tpu.memory_space<vmem>>, vector<64x128xf32>,
    %c0_i32_8 = arith.constant 0 : i32
    %9 = arith.cmpi eq, %arg1, %c0_i32_8 : i32
    %10 = arith.extui %9 : i1 to i32
    %c0_i32_9 = arith.constant 0 : i32
    %11 = arith.cmpi ne, %10, %c0_i32_9 : i32
    scf.if %11 {
      %c0_10 = arith.constant 0 : index
      %c0_11 = arith.constant 0 : index
      %12 = vector.load %arg7[%c0_10, %c0_11] : memref<64x128xf32, #tpu.memory_space<vmem>>, vector<64x128xf32>
      %cst_12 = arith.constant dense<0.000000e+00> : vector<128xf32>
      %13 = vector.multi_reduction <add>, %12, %cst_12 [0] : vector<64x128xf32> to vector<128xf32>
      %14 = vector.shape_cast %13 : vector<128xf32> to vector<1x128xf32>
      %15 = arith.mulf %12, %12 : vector<64x128xf32>
      %cst_13 = arith.constant dense<0.000000e+00> : vector<128xf32>
      %16 = vector.multi_reduction <add>, %15, %cst_13 [0] : vector<64x128xf32> to vector<128xf32>
      %17 = vector.shape_cast %16 : vector<128xf32> to vector<1x128xf32>
      %18 = tpu.iota {dimensions = array<i32: 0>} : vector<8x128xi32>
      %c0_i32_14 = arith.constant 0 : i32
      %19 = vector.broadcast %c0_i32_14 : i32 to vector<8x128xi32>
      %20 = arith.cmpi eq, %18, %19 : vector<8x128xi32>
      %cst_15 = arith.constant 0.000000e+00 : f32
      %21 = vector.shape_cast %14 : vector<1x128xf32> to vector<1x128xf32>
      %22 = vector.broadcast %21 : vector<1x128xf32> to vector<8x128xf32>
      %23 = vector.broadcast %cst_15 : f32 to vector<8x128xf32>
      %24 = arith.select %20, %22, %23 : vector<8x128xi1>, vector<8x128xf32>
      %c1_i32 = arith.constant 1 : i32
      %25 = vector.broadcast %c1_i32 : i32 to vector<8x128xi32>
      %26 = arith.cmpi eq, %18, %25 : vector<8x128xi32>
      %cst_16 = arith.constant 0.000000e+00 : f32
      %27 = vector.shape_cast %17 : vector<1x128xf32> to vector<1x128xf32>
      %28 = vector.broadcast %27 : vector<1x128xf32> to vector<8x128xf32>
      %29 = vector.broadcast %cst_16 : f32 to vector<8x128xf32>
      %30 = arith.select %26, %28, %29 : vector<8x128xi1>, vector<8x128xf32>
      %31 = arith.addf %24, %30 : vector<8x128xf32>
      %c0_17 = arith.constant 0 : index
      %c0_18 = arith.constant 0 : index
      %32 = vector.load %arg6[%c0_17, %c0_18] : memref<8x128xf32, #tpu.memory_space<vmem>>, vector<8x128xf32>
      tpu.vector_store %arg6[%c0_17, %c0_18], %31 {strides = array<i32>} : memref<8x128xf32, #tpu.memory_space<vmem>>, vector<8x128xf32>,
      %33 = arith.truncf %12 : vector<64x128xf32> to vector<64x128xbf16>
      %c0_19 = arith.constant 0 : index
      %c0_20 = arith.constant 0 : index
      %34 = vector.load %arg5[%c0_19, %c0_20] : memref<64x128xbf16, #tpu.memory_space<vmem>>, vector<64x128xbf16>
      tpu.vector_store %arg5[%c0_19, %c0_20], %33 {strides = array<i32>} : memref<64x128xbf16, #tpu.memory_space<vmem>>, vector<64x128xbf16>,
    } else {
    }
    return
  }
  func.func @transform_0(%arg0: i32, %arg1: i32) -> (i32, i32) {
    %c0_i32 = arith.constant 0 : i32
    return %arg0, %arg1 : i32, i32
  }
  func.func @transform_1(%arg0: i32, %arg1: i32) -> (i32, i32) {
    %c0_i32 = arith.constant 0 : i32
    %c0_i32_0 = arith.constant 0 : i32
    %c0_i32_1 = arith.constant 0 : i32
    return %c0_i32, %c0_i32_0 : i32, i32
  }
  func.func @transform_2(%arg0: i32, %arg1: i32) -> (i32, i32) {
    %c0_i32 = arith.constant 0 : i32
    %c0_i32_0 = arith.constant 0 : i32
    %c0_i32_1 = arith.constant 0 : i32
    return %c0_i32, %c0_i32_0 : i32, i32
  }
  func.func @transform_3(%arg0: i32, %arg1: i32) -> (i32, i32) {
    %c0_i32 = arith.constant 0 : i32
    %c0_i32_0 = arith.constant 0 : i32
    return %arg0, %c0_i32 : i32, i32
  }
  func.func @transform_4(%arg0: i32, %arg1: i32) -> (i32, i32) {
    %c0_i32 = arith.constant 0 : i32
    %c0_i32_0 = arith.constant 0 : i32
    return %arg0, %c0_i32 : i32, i32
  }
}

module attributes {stable_mosaic.version = 11 : i64} {
  func.func @_bn_apply_kernel(%arg0: i32, %arg1: memref<32x128xbf16, #tpu.memory_space<vmem>>, %arg2: memref<1x128xf32, #tpu.memory_space<vmem>>, %arg3: memref<1x128xf32, #tpu.memory_space<vmem>>, %arg4: memref<32x128xbf16, #tpu.memory_space<vmem>>) attributes {dimension_semantics = [#tpu.dimension_semantics<parallel>], iteration_bounds = array<i64: 1>, scalar_prefetch = 0 : i64, scratch_operands = 0 : i64, tpu.core_type = #tpu.core_type<tc>, window_params = [{transform_indices = @transform_0, window_bounds = array<i64: 32, 128>}, {pipeline_mode = #tpu.pipeline_mode<synchronous>, transform_indices = @transform_1, window_bounds = array<i64: 1, 128>}, {pipeline_mode = #tpu.pipeline_mode<synchronous>, transform_indices = @transform_2, window_bounds = array<i64: 1, 128>}, {transform_indices = @transform_3, window_bounds = array<i64: 32, 128>}]} {
    %c0 = arith.constant 0 : index
    %c0_0 = arith.constant 0 : index
    %0 = vector.load %arg1[%c0, %c0_0] : memref<32x128xbf16, #tpu.memory_space<vmem>>, vector<32x128xbf16>
    %1 = arith.extf %0 : vector<32x128xbf16> to vector<32x128xf32>
    %c0_1 = arith.constant 0 : index
    %c0_2 = arith.constant 0 : index
    %2 = vector.load %arg2[%c0_1, %c0_2] : memref<1x128xf32, #tpu.memory_space<vmem>>, vector<1x128xf32>
    %3 = vector.broadcast %2 : vector<1x128xf32> to vector<32x128xf32>
    %4 = arith.mulf %1, %3 : vector<32x128xf32>
    %c0_3 = arith.constant 0 : index
    %c0_4 = arith.constant 0 : index
    %5 = vector.load %arg3[%c0_3, %c0_4] : memref<1x128xf32, #tpu.memory_space<vmem>>, vector<1x128xf32>
    %6 = vector.broadcast %5 : vector<1x128xf32> to vector<32x128xf32>
    %7 = arith.addf %4, %6 : vector<32x128xf32>
    %cst = arith.constant 0.000000e+00 : f32
    %8 = vector.broadcast %cst : f32 to vector<32x128xf32>
    %9 = arith.cmpf ogt, %7, %8 : vector<32x128xf32>
    %cst_5 = arith.constant 2.000000e-01 : f32
    %10 = vector.broadcast %cst_5 : f32 to vector<32x128xf32>
    %11 = arith.mulf %10, %7 : vector<32x128xf32>
    %12 = arith.select %9, %7, %11 : vector<32x128xi1>, vector<32x128xf32>
    %13 = arith.truncf %12 : vector<32x128xf32> to vector<32x128xbf16>
    %c0_6 = arith.constant 0 : index
    %c0_7 = arith.constant 0 : index
    %14 = vector.load %arg4[%c0_6, %c0_7] : memref<32x128xbf16, #tpu.memory_space<vmem>>, vector<32x128xbf16>
    tpu.vector_store %arg4[%c0_6, %c0_7], %13 {strides = array<i32>} : memref<32x128xbf16, #tpu.memory_space<vmem>>, vector<32x128xbf16>,
    return
  }
  func.func @transform_0(%arg0: i32) -> (i32, i32) {
    %c0_i32 = arith.constant 0 : i32
    %c0_i32_0 = arith.constant 0 : i32
    return %arg0, %c0_i32 : i32, i32
  }
  func.func @transform_1(%arg0: i32) -> (i32, i32) {
    %c0_i32 = arith.constant 0 : i32
    %c0_i32_0 = arith.constant 0 : i32
    %c0_i32_1 = arith.constant 0 : i32
    return %c0_i32, %c0_i32_0 : i32, i32
  }
  func.func @transform_2(%arg0: i32) -> (i32, i32) {
    %c0_i32 = arith.constant 0 : i32
    %c0_i32_0 = arith.constant 0 : i32
    %c0_i32_1 = arith.constant 0 : i32
    return %c0_i32, %c0_i32_0 : i32, i32
  }
  func.func @transform_3(%arg0: i32) -> (i32, i32) {
    %c0_i32 = arith.constant 0 : i32
    %c0_i32_0 = arith.constant 0 : i32
    return %arg0, %c0_i32 : i32, i32
  }
}

module attributes {stable_mosaic.version = 11 : i64} {
  func.func @_conv_matmul_kernel(%arg0: i32, %arg1: i32, %arg2: memref<16x512xbf16, #tpu.memory_space<vmem>>, %arg3: memref<512x128xbf16, #tpu.memory_space<vmem>>, %arg4: memref<1x128xf32, #tpu.memory_space<vmem>>, %arg5: memref<16x128xbf16, #tpu.memory_space<vmem>>, %arg6: memref<8x128xf32, #tpu.memory_space<vmem>>, %arg7: memref<16x128xf32, #tpu.memory_space<vmem>>) attributes {dimension_semantics = [#tpu.dimension_semantics<parallel>, #tpu.dimension_semantics<arbitrary>], iteration_bounds = array<i64: 2, 1>, scalar_prefetch = 0 : i64, scratch_operands = 1 : i64, tpu.core_type = #tpu.core_type<tc>, window_params = [{transform_indices = @transform_0, window_bounds = array<i64: 16, 512>}, {pipeline_mode = #tpu.pipeline_mode<synchronous>, transform_indices = @transform_1, window_bounds = array<i64: 512, 128>}, {pipeline_mode = #tpu.pipeline_mode<synchronous>, transform_indices = @transform_2, window_bounds = array<i64: 1, 128>}, {transform_indices = @transform_3, window_bounds = array<i64: 16, 128>}, {transform_indices = @transform_4, window_bounds = array<i64: 8, 128>}]} {
    %c0_i32 = arith.constant 0 : i32
    %0 = arith.cmpi eq, %arg1, %c0_i32 : i32
    %1 = arith.extui %0 : i1 to i32
    %c0_i32_0 = arith.constant 0 : i32
    %2 = arith.cmpi ne, %1, %c0_i32_0 : i32
    scf.if %2 {
      %cst_10 = arith.constant 0.000000e+00 : f32
      %12 = vector.broadcast %cst_10 : f32 to vector<16x128xf32>
      %c0_11 = arith.constant 0 : index
      %c0_12 = arith.constant 0 : index
      %13 = vector.load %arg7[%c0_11, %c0_12] : memref<16x128xf32, #tpu.memory_space<vmem>>, vector<16x128xf32>
      tpu.vector_store %arg7[%c0_11, %c0_12], %12 {strides = array<i32>} : memref<16x128xf32, #tpu.memory_space<vmem>>, vector<16x128xf32>,
    } else {
    }
    %c0 = arith.constant 0 : index
    %c0_1 = arith.constant 0 : index
    %3 = vector.load %arg3[%c0, %c0_1] : memref<512x128xbf16, #tpu.memory_space<vmem>>, vector<512x128xbf16>
    %c0_2 = arith.constant 0 : index
    %c0_3 = arith.constant 0 : index
    %4 = vector.load %arg7[%c0_2, %c0_3] : memref<16x128xf32, #tpu.memory_space<vmem>>, vector<16x128xf32>
    %c0_4 = arith.constant 0 : index
    %c0_5 = arith.constant 0 : index
    %5 = vector.load %arg2[%c0_4, %c0_5] : memref<16x512xbf16, #tpu.memory_space<vmem>>, vector<16x512xbf16>
    %cst = arith.constant dense<0.000000e+00> : vector<16x128xf32>
    %6 = tpu.matmul %5, %3, %cst {dimension_numbers = #tpu.dot_dimension_numbers<[1], [0], [0], [1], [0, 0, 1, 1], [], []>} : vector<16x512xbf16>, vector<512x128xbf16>, vector<16x128xf32> -> vector<16x128xf32>
    %7 = arith.addf %4, %6 : vector<16x128xf32>
    %c0_6 = arith.constant 0 : index
    %c0_7 = arith.constant 0 : index
    %8 = vector.load %arg7[%c0_6, %c0_7] : memref<16x128xf32, #tpu.memory_space<vmem>>, vector<16x128xf32>
    tpu.vector_store %arg7[%c0_6, %c0_7], %7 {strides = array<i32>} : memref<16x128xf32, #tpu.memory_space<vmem>>, vector<16x128xf32>,
    %c0_i32_8 = arith.constant 0 : i32
    %9 = arith.cmpi eq, %arg1, %c0_i32_8 : i32
    %10 = arith.extui %9 : i1 to i32
    %c0_i32_9 = arith.constant 0 : i32
    %11 = arith.cmpi ne, %10, %c0_i32_9 : i32
    scf.if %11 {
      %c0_10 = arith.constant 0 : index
      %c0_11 = arith.constant 0 : index
      %12 = vector.load %arg7[%c0_10, %c0_11] : memref<16x128xf32, #tpu.memory_space<vmem>>, vector<16x128xf32>
      %cst_12 = arith.constant dense<0.000000e+00> : vector<128xf32>
      %13 = vector.multi_reduction <add>, %12, %cst_12 [0] : vector<16x128xf32> to vector<128xf32>
      %14 = vector.shape_cast %13 : vector<128xf32> to vector<1x128xf32>
      %15 = arith.mulf %12, %12 : vector<16x128xf32>
      %cst_13 = arith.constant dense<0.000000e+00> : vector<128xf32>
      %16 = vector.multi_reduction <add>, %15, %cst_13 [0] : vector<16x128xf32> to vector<128xf32>
      %17 = vector.shape_cast %16 : vector<128xf32> to vector<1x128xf32>
      %18 = tpu.iota {dimensions = array<i32: 0>} : vector<8x128xi32>
      %c0_i32_14 = arith.constant 0 : i32
      %19 = vector.broadcast %c0_i32_14 : i32 to vector<8x128xi32>
      %20 = arith.cmpi eq, %18, %19 : vector<8x128xi32>
      %cst_15 = arith.constant 0.000000e+00 : f32
      %21 = vector.shape_cast %14 : vector<1x128xf32> to vector<1x128xf32>
      %22 = vector.broadcast %21 : vector<1x128xf32> to vector<8x128xf32>
      %23 = vector.broadcast %cst_15 : f32 to vector<8x128xf32>
      %24 = arith.select %20, %22, %23 : vector<8x128xi1>, vector<8x128xf32>
      %c1_i32 = arith.constant 1 : i32
      %25 = vector.broadcast %c1_i32 : i32 to vector<8x128xi32>
      %26 = arith.cmpi eq, %18, %25 : vector<8x128xi32>
      %cst_16 = arith.constant 0.000000e+00 : f32
      %27 = vector.shape_cast %17 : vector<1x128xf32> to vector<1x128xf32>
      %28 = vector.broadcast %27 : vector<1x128xf32> to vector<8x128xf32>
      %29 = vector.broadcast %cst_16 : f32 to vector<8x128xf32>
      %30 = arith.select %26, %28, %29 : vector<8x128xi1>, vector<8x128xf32>
      %31 = arith.addf %24, %30 : vector<8x128xf32>
      %c0_17 = arith.constant 0 : index
      %c0_18 = arith.constant 0 : index
      %32 = vector.load %arg6[%c0_17, %c0_18] : memref<8x128xf32, #tpu.memory_space<vmem>>, vector<8x128xf32>
      tpu.vector_store %arg6[%c0_17, %c0_18], %31 {strides = array<i32>} : memref<8x128xf32, #tpu.memory_space<vmem>>, vector<8x128xf32>,
      %33 = arith.truncf %12 : vector<16x128xf32> to vector<16x128xbf16>
      %c0_19 = arith.constant 0 : index
      %c0_20 = arith.constant 0 : index
      %34 = vector.load %arg5[%c0_19, %c0_20] : memref<16x128xbf16, #tpu.memory_space<vmem>>, vector<16x128xbf16>
      tpu.vector_store %arg5[%c0_19, %c0_20], %33 {strides = array<i32>} : memref<16x128xbf16, #tpu.memory_space<vmem>>, vector<16x128xbf16>,
    } else {
    }
    return
  }
  func.func @transform_0(%arg0: i32, %arg1: i32) -> (i32, i32) {
    %c0_i32 = arith.constant 0 : i32
    return %arg0, %arg1 : i32, i32
  }
  func.func @transform_1(%arg0: i32, %arg1: i32) -> (i32, i32) {
    %c0_i32 = arith.constant 0 : i32
    %c0_i32_0 = arith.constant 0 : i32
    %c0_i32_1 = arith.constant 0 : i32
    return %c0_i32, %c0_i32_0 : i32, i32
  }
  func.func @transform_2(%arg0: i32, %arg1: i32) -> (i32, i32) {
    %c0_i32 = arith.constant 0 : i32
    %c0_i32_0 = arith.constant 0 : i32
    %c0_i32_1 = arith.constant 0 : i32
    return %c0_i32, %c0_i32_0 : i32, i32
  }
  func.func @transform_3(%arg0: i32, %arg1: i32) -> (i32, i32) {
    %c0_i32 = arith.constant 0 : i32
    %c0_i32_0 = arith.constant 0 : i32
    return %arg0, %c0_i32 : i32, i32
  }
  func.func @transform_4(%arg0: i32, %arg1: i32) -> (i32, i32) {
    %c0_i32 = arith.constant 0 : i32
    %c0_i32_0 = arith.constant 0 : i32
    return %arg0, %c0_i32 : i32, i32
  }
}

module attributes {stable_mosaic.version = 11 : i64} {
  func.func @_conv_matmul_kernel(%arg0: i32, %arg1: i32, %arg2: memref<32x512xbf16, #tpu.memory_space<vmem>>, %arg3: memref<1024x128xbf16, #tpu.memory_space<vmem>>, %arg4: memref<1x128xf32, #tpu.memory_space<vmem>>, %arg5: memref<32x128xbf16, #tpu.memory_space<vmem>>, %arg6: memref<8x128xf32, #tpu.memory_space<vmem>>, %arg7: memref<32x128xf32, #tpu.memory_space<vmem>>) attributes {dimension_semantics = [#tpu.dimension_semantics<parallel>, #tpu.dimension_semantics<arbitrary>], iteration_bounds = array<i64: 1, 2>, scalar_prefetch = 0 : i64, scratch_operands = 1 : i64, tpu.core_type = #tpu.core_type<tc>, window_params = [{transform_indices = @transform_0, window_bounds = array<i64: 32, 512>}, {pipeline_mode = #tpu.pipeline_mode<synchronous>, transform_indices = @transform_1, window_bounds = array<i64: 1024, 128>}, {pipeline_mode = #tpu.pipeline_mode<synchronous>, transform_indices = @transform_2, window_bounds = array<i64: 1, 128>}, {transform_indices = @transform_3, window_bounds = array<i64: 32, 128>}, {transform_indices = @transform_4, window_bounds = array<i64: 8, 128>}]} {
    %c0_i32 = arith.constant 0 : i32
    %0 = arith.cmpi eq, %arg1, %c0_i32 : i32
    %1 = arith.extui %0 : i1 to i32
    %c0_i32_0 = arith.constant 0 : i32
    %2 = arith.cmpi ne, %1, %c0_i32_0 : i32
    scf.if %2 {
      %cst_8 = arith.constant 0.000000e+00 : f32
      %15 = vector.broadcast %cst_8 : f32 to vector<32x128xf32>
      %c0_9 = arith.constant 0 : index
      %c0_10 = arith.constant 0 : index
      %16 = vector.load %arg7[%c0_9, %c0_10] : memref<32x128xf32, #tpu.memory_space<vmem>>, vector<32x128xf32>
      tpu.vector_store %arg7[%c0_9, %c0_10], %15 {strides = array<i32>} : memref<32x128xf32, #tpu.memory_space<vmem>>, vector<32x128xf32>,
    } else {
    }
    %c512_i32 = arith.constant 512 : i32
    %3 = arith.muli %arg1, %c512_i32 : i32
    %4 = tpu.assume_multiple %3, 512 : i32
    %5 = arith.index_cast %4 : i32 to index
    %c0 = arith.constant 0 : index
    %6 = vector.load %arg3[%5, %c0] : memref<1024x128xbf16, #tpu.memory_space<vmem>>, vector<512x128xbf16>
    %c0_1 = arith.constant 0 : index
    %c0_2 = arith.constant 0 : index
    %7 = vector.load %arg7[%c0_1, %c0_2] : memref<32x128xf32, #tpu.memory_space<vmem>>, vector<32x128xf32>
    %c0_3 = arith.constant 0 : index
    %c0_4 = arith.constant 0 : index
    %8 = vector.load %arg2[%c0_3, %c0_4] : memref<32x512xbf16, #tpu.memory_space<vmem>>, vector<32x512xbf16>
    %cst = arith.constant dense<0.000000e+00> : vector<32x128xf32>
    %9 = tpu.matmul %8, %6, %cst {dimension_numbers = #tpu.dot_dimension_numbers<[1], [0], [0], [1], [0, 0, 1, 1], [], []>} : vector<32x512xbf16>, vector<512x128xbf16>, vector<32x128xf32> -> vector<32x128xf32>
    %10 = arith.addf %7, %9 : vector<32x128xf32>
    %c0_5 = arith.constant 0 : index
    %c0_6 = arith.constant 0 : index
    %11 = vector.load %arg7[%c0_5, %c0_6] : memref<32x128xf32, #tpu.memory_space<vmem>>, vector<32x128xf32>
    tpu.vector_store %arg7[%c0_5, %c0_6], %10 {strides = array<i32>} : memref<32x128xf32, #tpu.memory_space<vmem>>, vector<32x128xf32>,
    %c1_i32 = arith.constant 1 : i32
    %12 = arith.cmpi eq, %arg1, %c1_i32 : i32
    %13 = arith.extui %12 : i1 to i32
    %c0_i32_7 = arith.constant 0 : i32
    %14 = arith.cmpi ne, %13, %c0_i32_7 : i32
    scf.if %14 {
      %c0_8 = arith.constant 0 : index
      %c0_9 = arith.constant 0 : index
      %15 = vector.load %arg7[%c0_8, %c0_9] : memref<32x128xf32, #tpu.memory_space<vmem>>, vector<32x128xf32>
      %cst_10 = arith.constant dense<0.000000e+00> : vector<128xf32>
      %16 = vector.multi_reduction <add>, %15, %cst_10 [0] : vector<32x128xf32> to vector<128xf32>
      %17 = vector.shape_cast %16 : vector<128xf32> to vector<1x128xf32>
      %18 = arith.mulf %15, %15 : vector<32x128xf32>
      %cst_11 = arith.constant dense<0.000000e+00> : vector<128xf32>
      %19 = vector.multi_reduction <add>, %18, %cst_11 [0] : vector<32x128xf32> to vector<128xf32>
      %20 = vector.shape_cast %19 : vector<128xf32> to vector<1x128xf32>
      %21 = tpu.iota {dimensions = array<i32: 0>} : vector<8x128xi32>
      %c0_i32_12 = arith.constant 0 : i32
      %22 = vector.broadcast %c0_i32_12 : i32 to vector<8x128xi32>
      %23 = arith.cmpi eq, %21, %22 : vector<8x128xi32>
      %cst_13 = arith.constant 0.000000e+00 : f32
      %24 = vector.shape_cast %17 : vector<1x128xf32> to vector<1x128xf32>
      %25 = vector.broadcast %24 : vector<1x128xf32> to vector<8x128xf32>
      %26 = vector.broadcast %cst_13 : f32 to vector<8x128xf32>
      %27 = arith.select %23, %25, %26 : vector<8x128xi1>, vector<8x128xf32>
      %c1_i32_14 = arith.constant 1 : i32
      %28 = vector.broadcast %c1_i32_14 : i32 to vector<8x128xi32>
      %29 = arith.cmpi eq, %21, %28 : vector<8x128xi32>
      %cst_15 = arith.constant 0.000000e+00 : f32
      %30 = vector.shape_cast %20 : vector<1x128xf32> to vector<1x128xf32>
      %31 = vector.broadcast %30 : vector<1x128xf32> to vector<8x128xf32>
      %32 = vector.broadcast %cst_15 : f32 to vector<8x128xf32>
      %33 = arith.select %29, %31, %32 : vector<8x128xi1>, vector<8x128xf32>
      %34 = arith.addf %27, %33 : vector<8x128xf32>
      %c0_16 = arith.constant 0 : index
      %c0_17 = arith.constant 0 : index
      %35 = vector.load %arg6[%c0_16, %c0_17] : memref<8x128xf32, #tpu.memory_space<vmem>>, vector<8x128xf32>
      tpu.vector_store %arg6[%c0_16, %c0_17], %34 {strides = array<i32>} : memref<8x128xf32, #tpu.memory_space<vmem>>, vector<8x128xf32>,
      %36 = arith.truncf %15 : vector<32x128xf32> to vector<32x128xbf16>
      %c0_18 = arith.constant 0 : index
      %c0_19 = arith.constant 0 : index
      %37 = vector.load %arg5[%c0_18, %c0_19] : memref<32x128xbf16, #tpu.memory_space<vmem>>, vector<32x128xbf16>
      tpu.vector_store %arg5[%c0_18, %c0_19], %36 {strides = array<i32>} : memref<32x128xbf16, #tpu.memory_space<vmem>>, vector<32x128xbf16>,
    } else {
    }
    return
  }
  func.func @transform_0(%arg0: i32, %arg1: i32) -> (i32, i32) {
    %c0_i32 = arith.constant 0 : i32
    return %arg0, %arg1 : i32, i32
  }
  func.func @transform_1(%arg0: i32, %arg1: i32) -> (i32, i32) {
    %c0_i32 = arith.constant 0 : i32
    %c0_i32_0 = arith.constant 0 : i32
    %c0_i32_1 = arith.constant 0 : i32
    return %c0_i32, %c0_i32_0 : i32, i32
  }
  func.func @transform_2(%arg0: i32, %arg1: i32) -> (i32, i32) {
    %c0_i32 = arith.constant 0 : i32
    %c0_i32_0 = arith.constant 0 : i32
    %c0_i32_1 = arith.constant 0 : i32
    return %c0_i32, %c0_i32_0 : i32, i32
  }
  func.func @transform_3(%arg0: i32, %arg1: i32) -> (i32, i32) {
    %c0_i32 = arith.constant 0 : i32
    %c0_i32_0 = arith.constant 0 : i32
    return %arg0, %c0_i32 : i32, i32
  }
  func.func @transform_4(%arg0: i32, %arg1: i32) -> (i32, i32) {
    %c0_i32 = arith.constant 0 : i32
    %c0_i32_0 = arith.constant 0 : i32
    return %arg0, %c0_i32 : i32, i32
  }
}

module attributes {stable_mosaic.version = 11 : i64} {
  func.func @_conv_matmul_kernel(%arg0: i32, %arg1: i32, %arg2: memref<16x512xbf16, #tpu.memory_space<vmem>>, %arg3: memref<2048x128xbf16, #tpu.memory_space<vmem>>, %arg4: memref<1x128xf32, #tpu.memory_space<vmem>>, %arg5: memref<16x128xf32, #tpu.memory_space<vmem>>, %arg6: memref<16x128xf32, #tpu.memory_space<vmem>>) attributes {dimension_semantics = [#tpu.dimension_semantics<parallel>, #tpu.dimension_semantics<arbitrary>], iteration_bounds = array<i64: 1, 4>, scalar_prefetch = 0 : i64, scratch_operands = 1 : i64, tpu.core_type = #tpu.core_type<tc>, window_params = [{transform_indices = @transform_0, window_bounds = array<i64: 16, 512>}, {pipeline_mode = #tpu.pipeline_mode<synchronous>, transform_indices = @transform_1, window_bounds = array<i64: 2048, 128>}, {pipeline_mode = #tpu.pipeline_mode<synchronous>, transform_indices = @transform_2, window_bounds = array<i64: 1, 128>}, {transform_indices = @transform_3, window_bounds = array<i64: 16, 128>}]} {
    %c0_i32 = arith.constant 0 : i32
    %0 = arith.cmpi eq, %arg1, %c0_i32 : i32
    %1 = arith.extui %0 : i1 to i32
    %c0_i32_0 = arith.constant 0 : i32
    %2 = arith.cmpi ne, %1, %c0_i32_0 : i32
    scf.if %2 {
      %cst_8 = arith.constant 0.000000e+00 : f32
      %15 = vector.broadcast %cst_8 : f32 to vector<16x128xf32>
      %c0_9 = arith.constant 0 : index
      %c0_10 = arith.constant 0 : index
      %16 = vector.load %arg6[%c0_9, %c0_10] : memref<16x128xf32, #tpu.memory_space<vmem>>, vector<16x128xf32>
      tpu.vector_store %arg6[%c0_9, %c0_10], %15 {strides = array<i32>} : memref<16x128xf32, #tpu.memory_space<vmem>>, vector<16x128xf32>,
    } else {
    }
    %c512_i32 = arith.constant 512 : i32
    %3 = arith.muli %arg1, %c512_i32 : i32
    %4 = tpu.assume_multiple %3, 512 : i32
    %5 = arith.index_cast %4 : i32 to index
    %c0 = arith.constant 0 : index
    %6 = vector.load %arg3[%5, %c0] : memref<2048x128xbf16, #tpu.memory_space<vmem>>, vector<512x128xbf16>
    %c0_1 = arith.constant 0 : index
    %c0_2 = arith.constant 0 : index
    %7 = vector.load %arg6[%c0_1, %c0_2] : memref<16x128xf32, #tpu.memory_space<vmem>>, vector<16x128xf32>
    %c0_3 = arith.constant 0 : index
    %c0_4 = arith.constant 0 : index
    %8 = vector.load %arg2[%c0_3, %c0_4] : memref<16x512xbf16, #tpu.memory_space<vmem>>, vector<16x512xbf16>
    %cst = arith.constant dense<0.000000e+00> : vector<16x128xf32>
    %9 = tpu.matmul %8, %6, %cst {dimension_numbers = #tpu.dot_dimension_numbers<[1], [0], [0], [1], [0, 0, 1, 1], [], []>} : vector<16x512xbf16>, vector<512x128xbf16>, vector<16x128xf32> -> vector<16x128xf32>
    %10 = arith.addf %7, %9 : vector<16x128xf32>
    %c0_5 = arith.constant 0 : index
    %c0_6 = arith.constant 0 : index
    %11 = vector.load %arg6[%c0_5, %c0_6] : memref<16x128xf32, #tpu.memory_space<vmem>>, vector<16x128xf32>
    tpu.vector_store %arg6[%c0_5, %c0_6], %10 {strides = array<i32>} : memref<16x128xf32, #tpu.memory_space<vmem>>, vector<16x128xf32>,
    %c3_i32 = arith.constant 3 : i32
    %12 = arith.cmpi eq, %arg1, %c3_i32 : i32
    %13 = arith.extui %12 : i1 to i32
    %c0_i32_7 = arith.constant 0 : i32
    %14 = arith.cmpi ne, %13, %c0_i32_7 : i32
    scf.if %14 {
      %c0_8 = arith.constant 0 : index
      %c0_9 = arith.constant 0 : index
      %15 = vector.load %arg6[%c0_8, %c0_9] : memref<16x128xf32, #tpu.memory_space<vmem>>, vector<16x128xf32>
      %c0_10 = arith.constant 0 : index
      %c0_11 = arith.constant 0 : index
      %16 = vector.load %arg4[%c0_10, %c0_11] : memref<1x128xf32, #tpu.memory_space<vmem>>, vector<1x128xf32>
      %17 = vector.broadcast %16 : vector<1x128xf32> to vector<16x128xf32>
      %18 = arith.addf %15, %17 : vector<16x128xf32>
      %cst_12 = arith.constant 0.000000e+00 : f32
      %19 = vector.broadcast %cst_12 : f32 to vector<16x128xf32>
      %20 = arith.subf %19, %18 : vector<16x128xf32>
      %21 = math.exp %20 : vector<16x128xf32>
      %cst_13 = arith.constant 1.000000e+00 : f32
      %22 = vector.broadcast %cst_13 : f32 to vector<16x128xf32>
      %23 = arith.addf %22, %21 : vector<16x128xf32>
      %24 = tpu.reciprocal %23 {approx = true} : vector<16x128xf32> -> vector<16x128xf32>
      %c0_14 = arith.constant 0 : index
      %c0_15 = arith.constant 0 : index
      %25 = vector.load %arg5[%c0_14, %c0_15] : memref<16x128xf32, #tpu.memory_space<vmem>>, vector<16x128xf32>
      tpu.vector_store %arg5[%c0_14, %c0_15], %24 {strides = array<i32>} : memref<16x128xf32, #tpu.memory_space<vmem>>, vector<16x128xf32>,
    } else {
    }
    return
  }
  func.func @transform_0(%arg0: i32, %arg1: i32) -> (i32, i32) {
    %c0_i32 = arith.constant 0 : i32
    return %arg0, %arg1 : i32, i32
  }
  func.func @transform_1(%arg0: i32, %arg1: i32) -> (i32, i32) {
    %c0_i32 = arith.constant 0 : i32
    %c0_i32_0 = arith.constant 0 : i32
    %c0_i32_1 = arith.constant 0 : i32
    return %c0_i32, %c0_i32_0 : i32, i32
  }
  func.func @transform_2(%arg0: i32, %arg1: i32) -> (i32, i32) {
    %c0_i32 = arith.constant 0 : i32
    %c0_i32_0 = arith.constant 0 : i32
    %c0_i32_1 = arith.constant 0 : i32
    return %c0_i32, %c0_i32_0 : i32, i32
  }
  func.func @transform_3(%arg0: i32, %arg1: i32) -> (i32, i32) {
    %c0_i32 = arith.constant 0 : i32
    %c0_i32_0 = arith.constant 0 : i32
    return %arg0, %c0_i32 : i32, i32
  }
}

</mosaic_0001>

<llo_original>
// kernel: discriminator512_forward.10
$region0: #{discriminator512_forward.10}
  #allocation0 [shape = 'u32[]', space=smem, size = 0x4, offset = 0x4, fixed_abs, tag = 'smem constant byte address 0x4 - core index']
  #allocation1 [shape = 'u32[144,128]{1,0:T(1,128)}', space=vmem, size = 0x12000, scoped, tag = 'internal scratch']
  #allocation2 [shape = 'f32[1024,128]{1,0:T(8,128)}', space=vmem, size = 0x80000, scoped, tag = 'scratch operand']
  %s0 = inlined_call_operand.vmem [shape: bf16[2048,128], index: 0, kind: input, shape index: {}]
  %s1 = inlined_call_operand.vmem [shape: bf16[128,128], index: 1, kind: input, shape index: {}]
  %s2 = inlined_call_operand.vmem [shape: f32[1,128], index: 2, kind: input, shape index: {}]
  %s3 = inlined_call_operand.vmem [shape: bf16[2048,128], index: 3, kind: output, shape index: {}]
  %s4 = sld [smem:[#allocation0]]
  $region53: #{discriminator512_forward.10} parent=0
    _
  %s6 = ssub.s32 1, %s4
  %s7 = scalar_select 0, %s6, %s4
  loop: start=0, step=1, limit=4
  $region2: #{discriminator512_forward.10} parent=0 // loop_pre_header
    _
  $region3: #{discriminator512_forward.10} parent=0 // loop_header
    %s9 = sphi 0, %s13
    %p10 = scmp.ge.s32.totalorder %s9, 4
    %s16 = sphi 0, %s28
    %s17 = sphi 0, %s24
    %s18 = sphi 0, %s16
    %s19 = sphi 0, %s17
    %s20 = sphi 0, %s18
    %s21 = sphi 0, %s19
    %s33 = sphi 0, %s35
    %s36 = sphi 0, %s33
    %s37 = sphi 0, %s36
    %s53 = sphi 0, %s37
    %s57 = sphi 0, %s57
    %s59 = sphi 0, %s57
    %s60 = sphi 0, %s59
    %s74 = sphi 0, %s60
    %s78 = sphi 0, %s78
    %s80 = sphi 0, %s78
    %s81 = sphi 0, %s80
    %s95 = sphi 0, %s81
    %s101 = sphi 0, %s103
    %s104 = sphi 0, %s101
    %s105 = sphi 0, %s104
    %s121 = sphi 0, %s105
  $region4: #{discriminator512_forward.10} parent=0 // loop_header_branch
    %12 = sbr.rel (%p10) target = $region8
  $region5: #{discriminator512_forward.10} parent=0 // loop_body
    %s14 = ssub.s32 %s9, 1
    %s15 = ssub.s32 %s9, 2
    %s22 = sadd.s32 1, %s17
    %p23 = scmp.ge.s32.totalorder %s22, 1
    %s24 = scalar_select %p23, 0, %s22
    %s25 = sadd.s32 1, %s16
    %s26 = scalar_select %p23, %s25, %s16
    %p27 = scmp.ge.s32.totalorder %s26, 2
    %s28 = scalar_select %p27, 0, %s26
    %s29 = ssub.s32 %s16, %s28
    %s30 = ssub.s32 %s17, %s24
    %s31 = sor.u32 %s29, %s30
    %p32 = scmp.eq.s32.totalorder %s31, 0
    %s34 = sadd.s32 %s33, 1
    %s35 = scalar_select %p32, %s33, %s34
    %p38 = pneg %p32
    %p39 = scmp.eq.s32.totalorder %s9, 1
    %p40 = por %p38, %p39
    %p41 = scmp.ne.s32.totalorder %s33, %s36
    %p42 = scmp.eq.s32.totalorder %s9, 0
    %p43 = por %p41, %p42
    %p44 = scmp.ne.s32.totalorder %s33, %s36
    %p45 = scmp.eq.s32.totalorder %s14, 1
    %p46 = por %p44, %p45
    %p47 = scmp.ne.s32.totalorder %s36, %s37
    %p48 = scmp.eq.s32.totalorder %s14, 0
    %p49 = por %p47, %p48
    %p50 = scmp.ne.s32.totalorder %s36, %s37
    %p51 = scmp.eq.s32.totalorder %s15, 1
    %p52 = por %p50, %p51
    %p54 = scmp.ne.s32.totalorder %s37, %s53
    %p55 = scmp.eq.s32.totalorder %s15, 0
    %p56 = por %p54, %p55
    %s58 = sadd.s32 %s57, 1
    %p61 = scmp.eq.s32.totalorder %s9, 1
    %p62 = scmp.ne.s32.totalorder %s57, %s59
    %p63 = scmp.eq.s32.totalorder %s9, 0
    %p64 = por %p62, %p63
    %p65 = scmp.ne.s32.totalorder %s57, %s59
    %p66 = scmp.eq.s32.totalorder %s14, 1
    %p67 = por %p65, %p66
    %p68 = scmp.ne.s32.totalorder %s59, %s60
    %p69 = scmp.eq.s32.totalorder %s14, 0
    %p70 = por %p68, %p69
    %p71 = scmp.ne.s32.totalorder %s59, %s60
    %p72 = scmp.eq.s32.totalorder %s15, 1
    %p73 = por %p71, %p72
    %p75 = scmp.ne.s32.totalorder %s60, %s74
    %p76 = scmp.eq.s32.totalorder %s15, 0
    %p77 = por %p75, %p76
    %s79 = sadd.s32 %s78, 1
    %p82 = scmp.eq.s32.totalorder %s9, 1
    %p83 = scmp.ne.s32.totalorder %s78, %s80
    %p84 = scmp.eq.s32.totalorder %s9, 0
    %p85 = por %p83, %p84
    %p86 = scmp.ne.s32.totalorder %s78, %s80
    %p87 = scmp.eq.s32.totalorder %s14, 1
    %p88 = por %p86, %p87
    %p89 = scmp.ne.s32.totalorder %s80, %s81
    %p90 = scmp.eq.s32.totalorder %s14, 0
    %p91 = por %p89, %p90
    %p92 = scmp.ne.s32.totalorder %s80, %s81
    %p93 = scmp.eq.s32.totalorder %s15, 1
    %p94 = por %p92, %p93
    %p96 = scmp.ne.s32.totalorder %s81, %s95
    %p97 = scmp.eq.s32.totalorder %s15, 0
    %p98 = por %p96, %p97
    %s99 = ssub.s32 %s16, %s28
    %p100 = scmp.eq.s32.totalorder %s99, 0
    %s102 = sadd.s32 %s101, 1
    %s103 = scalar_select %p100, %s101, %s102
    %p106 = pneg %p100
    %p107 = scmp.eq.s32.totalorder %s9, 1
    %p108 = por %p106, %p107
    %p109 = scmp.ne.s32.totalorder %s101, %s104
    %p110 = scmp.eq.s32.totalorder %s9, 0
    %p111 = por %p109, %p110
    %p112 = scmp.ne.s32.totalorder %s101, %s104
    %p113 = scmp.eq.s32.totalorder %s14, 1
    %p114 = por %p112, %p113
    %p115 = scmp.ne.s32.totalorder %s104, %s105
    %p116 = scmp.eq.s32.totalorder %s14, 0
    %p117 = por %p115, %p116
    %p118 = scmp.ne.s32.totalorder %s104, %s105
    %p119 = scmp.eq.s32.totalorder %s15, 1
    %p120 = por %p118, %p119
    %p122 = scmp.ne.s32.totalorder %s105, %s121
    %p123 = scmp.eq.s32.totalorder %s15, 0
    %p124 = por %p122, %p123
    %p125 = scmp.le.s32.totalorder 1, %s9
    %p126 = scmp.lt.s32.totalorder %s9, 3
    %p127 = pnand %p125, %p126
    %p128 = pneg %p127
    // Predicated region
    $region9: #{discriminator512_forward.10} parent=5 // pred_check
      _
    $region10: #{discriminator512_forward.10} parent=5 // pred_check_branch
      %130 = sbr.rel (%p127) target = $region12
    $region11: #{discriminator512_forward.10} parent=5 // pred_region
      %s131 = ssub.s32 %s9, 1
      // Predicated region
      $region13: #{discriminator512_forward.10} parent=11 // pred_check
        %p132 = pneg %p70
      $region14: #{discriminator512_forward.10} parent=11 // pred_check_branch
        %134 = sbr.rel (%p132) target = $region16
      $region15: #{discriminator512_forward.10} parent=11 // pred_region
        _
      $region16: #{discriminator512_forward.10} parent=11 // pred_fallthru
        _
      // Predicated region
      $region17: #{discriminator512_forward.10} parent=11 // pred_check
        %p135 = pneg %p91
      $region18: #{discriminator512_forward.10} parent=11 // pred_check_branch
        %137 = sbr.rel (%p135) target = $region20
      $region19: #{discriminator512_forward.10} parent=11 // pred_region
        _
      $region20: #{discriminator512_forward.10} parent=11 // pred_fallthru
        _
    $region12: #{discriminator512_forward.10} parent=5 // pred_fallthru
      _
    %p138 = scmp.lt.s32.totalorder %s9, 2
    // Predicated region
    $region21: #{discriminator512_forward.10} parent=5 // pred_check
      %p139 = pneg %p138
    $region22: #{discriminator512_forward.10} parent=5 // pred_check_branch
      %141 = sbr.rel (%p139) target = $region24
    $region23: #{discriminator512_forward.10} parent=5 // pred_region
      // Predicated region
      $region25: #{discriminator512_forward.10} parent=23 // pred_check
        %p142 = pneg %p43
      $region26: #{discriminator512_forward.10} parent=23 // pred_check_branch
        %144 = sbr.rel (%p142) target = $region28
      $region27: #{discriminator512_forward.10} parent=23 // pred_region
        %s145 = smul.u32 128, %s16
        %p146 = scmp.lt.s32.totalorder %s145, 255
        %s147 = scalar_select %p146, %s145, 255
        %p148 = scmp.lt.s32.totalorder %s17, 0
        %s149 = scalar_select %p148, %s17, 0
        %s150 = sadd.s32 %s149, %s147
        %s151 = smul.addr %s150, 4
        %s152 = scalar_lea.vmem %s0, %s151
        %s153 = smul.u32 128, %s16
      $region28: #{discriminator512_forward.10} parent=23 // pred_fallthru
        _
    $region24: #{discriminator512_forward.10} parent=5 // pred_fallthru
      _
    %p154 = scmp.le.s32.totalorder 1, %s9
    %p155 = scmp.lt.s32.totalorder %s9, 3
    %p156 = pnand %p154, %p155
    %p157 = pneg %p156
    // Predicated region
    $region29: #{discriminator512_forward.10} parent=5 // pred_check
      _
    $region30: #{discriminator512_forward.10} parent=5 // pred_check_branch
      %159 = sbr.rel (%p156) target = $region32
    $region31: #{discriminator512_forward.10} parent=5 // pred_region
      %s160 = ssub.s32 %s9, 1
      %s161 = smul.u32 128, %s18
      %p162 = scmp.lt.s32.totalorder %s161, 255
      %s163 = scalar_select %p162, %s161, 255
      %p164 = scmp.lt.s32.totalorder %s19, 0
      %s165 = scalar_select %p164, %s19, 0
      %s166 = sadd.s32 %s165, %s163
      %s167 = smul.addr %s166, 4
      %s168 = scalar_lea.vmem %s0, %s167
      %p169 = pneg %p49
      %p170 = pneg %p46
      %p171 = pneg %p70
      %p172 = pneg %p67
      %p173 = pneg %p91
      %p174 = pneg %p88
      %p175 = pneg %p117
      %p176 = pneg %p114
      %s177 = smul.u32 128, %s18
      %p178 = scmp.lt.s32.totalorder %s177, 255
      %s179 = scalar_select %p178, %s177, 255
      %s180 = smul.addr %s179, 4
      %s181 = scalar_lea.vmem %s3, %s180
      %s182 = smul.u32 128, %s18
      %p183 = scmp.lt.s32.totalorder %s182, 255
      %s184 = scalar_select %p183, %s182, 255
      %p185 = scmp.lt.s32.totalorder %s19, 0
      %s186 = scalar_select %p185, %s19, 0
      %s187 = sadd.s32 %s186, %s184
      %s188 = smul.addr %s187, 4
      %s189 = scalar_lea.vmem %s0, %s188
      %s190 = smul.u32 128, %s18
      %s191 = smul.u32 128, %s18
      %p192 = scmp.lt.s32.totalorder %s191, 255
      %s193 = scalar_select %p192, %s191, 255
      %s194 = smul.addr %s193, 4
      %s195 = scalar_lea.vmem %s3, %s194
      %s196 = smul.u32 128, %s18
      %p198 = scmp.eq.s32.totalorder %s19, 0
      // Predicated region
      $region33: #{discriminator512_forward.10} parent=31 // pred_check
        %p199 = pneg %p198
      $region34: #{discriminator512_forward.10} parent=31 // pred_check_branch
        %201 = sbr.rel (%p199) target = $region36
      $region35: #{discriminator512_forward.10} parent=31 // pred_region
        %202 = vst [vmem:[#allocation2] sm:$0xff] 0.0
        %203 = vst [vmem:[#allocation2 + $0x8] sm:$0xff] 0.0
        %204 = vst [vmem:[#allocation2 + $0x10] sm:$0xff] 0.0
        %205 = vst [vmem:[#allocation2 + $0x18] sm:$0xff] 0.0
        %206 = vst [vmem:[#allocation2 + $0x20] sm:$0xff] 0.0
        %207 = vst [vmem:[#allocation2 + $0x28] sm:$0xff] 0.0
        %208 = vst [vmem:[#allocation2 + $0x30] sm:$0xff] 0.0
        %209 = vst [vmem:[#allocation2 + $0x38] sm:$0xff] 0.0
        %210 = vst [vmem:[#allocation2 + $0x40] sm:$0xff] 0.0
        %211 = vst [vmem:[#allocation2 + $0x48] sm:$0xff] 0.0
        %212 = vst [vmem:[#allocation2 + $0x50] sm:$0xff] 0.0
        %213 = vst [vmem:[#allocation2 + $0x58] sm:$0xff] 0.0
        %214 = vst [vmem:[#allocation2 + $0x60] sm:$0xff] 0.0
        %215 = vst [vmem:[#allocation2 + $0x68] sm:$0xff] 0.0
        %216 = vst [vmem:[#allocation2 + $0x70] sm:$0xff] 0.0
        %217 = vst [vmem:[#allocation2 + $0x78] sm:$0xff] 0.0
        %218 = vst [vmem:[#allocation2 + $0x80] sm:$0xff] 0.0
        %219 = vst [vmem:[#allocation2 + $0x88] sm:$0xff] 0.0
        %220 = vst [vmem:[#allocation2 + $0x90] sm:$0xff] 0.0
        %221 = vst [vmem:[#allocation2 + $0x98] sm:$0xff] 0.0
        %222 = vst [vmem:[#allocation2 + $0xa0] sm:$0xff] 0.0
        %223 = vst [vmem:[#allocation2 + $0xa8] sm:$0xff] 0.0
        %224 = vst [vmem:[#allocation2 + $0xb0] sm:$0xff] 0.0
        %225 = vst [vmem:[#allocation2 + $0xb8] sm:$0xff] 0.0
        %226 = vst [vmem:[#allocation2 + $0xc0] sm:$0xff] 0.0
        %227 = vst [vmem:[#allocation2 + $0xc8] sm:$0xff] 0.0
        %228 = vst [vmem:[#allocation2 + $0xd0] sm:$0xff] 0.0
        %229 = vst [vmem:[#allocation2 + $0xd8] sm:$0xff] 0.0
        %230 = vst [vmem:[#allocation2 + $0xe0] sm:$0xff] 0.0
        %231 = vst [vmem:[#allocation2 + $0xe8] sm:$0xff] 0.0
        %232 = vst [vmem:[#allocation2 + $0xf0] sm:$0xff] 0.0
        %233 = vst [vmem:[#allocation2 + $0xf8] sm:$0xff] 0.0
        %234 = vst [vmem:[#allocation2 + $0x100] sm:$0xff] 0.0
        %235 = vst [vmem:[#allocation2 + $0x108] sm:$0xff] 0.0
        %236 = vst [vmem:[#allocation2 + $0x110] sm:$0xff] 0.0
        %237 = vst [vmem:[#allocation2 + $0x118] sm:$0xff] 0.0
        %238 = vst [vmem:[#allocation2 + $0x120] sm:$0xff] 0.0
        %239 = vst [vmem:[#allocation2 + $0x128] sm:$0xff] 0.0
        %240 = vst [vmem:[#allocation2 + $0x130] sm:$0xff] 0.0
        %241 = vst [vmem:[#allocation2 + $0x138] sm:$0xff] 0.0
        %242 = vst [vmem:[#allocation2 + $0x140] sm:$0xff] 0.0
        %243 = vst [vmem:[#allocation2 + $0x148] sm:$0xff] 0.0
        %244 = vst [vmem:[#allocation2 + $0x150] sm:$0xff] 0.0
        %245 = vst [vmem:[#allocation2 + $0x158] sm:$0xff] 0.0
        %246 = vst [vmem:[#allocation2 + $0x160] sm:$0xff] 0.0
        %247 = vst [vmem:[#allocation2 + $0x168] sm:$0xff] 0.0
        %248 = vst [vmem:[#allocation2 + $0x170] sm:$0xff] 0.0
        %249 = vst [vmem:[#allocation2 + $0x178] sm:$0xff] 0.0
        %250 = vst [vmem:[#allocation2 + $0x180] sm:$0xff] 0.0
        %251 = vst [vmem:[#allocation2 + $0x188] sm:$0xff] 0.0
        %252 = vst [vmem:[#allocation2 + $0x190] sm:$0xff] 0.0
        %253 = vst [vmem:[#allocation2 + $0x198] sm:$0xff] 0.0
        %254 = vst [vmem:[#allocation2 + $0x1a0] sm:$0xff] 0.0
        %255 = vst [vmem:[#allocation2 + $0x1a8] sm:$0xff] 0.0
        %256 = vst [vmem:[#allocation2 + $0x1b0] sm:$0xff] 0.0
        %257 = vst [vmem:[#allocation2 + $0x1b8] sm:$0xff] 0.0
        %258 = vst [vmem:[#allocation2 + $0x1c0] sm:$0xff] 0.0
        %259 = vst [vmem:[#allocation2 + $0x1c8] sm:$0xff] 0.0
        %260 = vst [vmem:[#allocation2 + $0x1d0] sm:$0xff] 0.0
        %261 = vst [vmem:[#allocation2 + $0x1d8] sm:$0xff] 0.0
        %262 = vst [vmem:[#allocation2 + $0x1e0] sm:$0xff] 0.0
        %263 = vst [vmem:[#allocation2 + $0x1e8] sm:$0xff] 0.0
        %264 = vst [vmem:[#allocation2 + $0x1f0] sm:$0xff] 0.0
        %265 = vst [vmem:[#allocation2 + $0x1f8] sm:$0xff] 0.0
        %266 = vst [vmem:[#allocation2 + $0x200] sm:$0xff] 0.0
        %267 = vst [vmem:[#allocation2 + $0x208] sm:$0xff] 0.0
        %268 = vst [vmem:[#allocation2 + $0x210] sm:$0xff] 0.0
        %269 = vst [vmem:[#allocation2 + $0x218] sm:$0xff] 0.0
        %270 = vst [vmem:[#allocation2 + $0x220] sm:$0xff] 0.0
        %271 = vst [vmem:[#allocation2 + $0x228] sm:$0xff] 0.0
        %272 = vst [vmem:[#allocation2 + $0x230] sm:$0xff] 0.0
        %273 = vst [vmem:[#allocation2 + $0x238] sm:$0xff] 0.0
        %274 = vst [vmem:[#allocation2 + $0x240] sm:$0xff] 0.0
        %275 = vst [vmem:[#allocation2 + $0x248] sm:$0xff] 0.0
        %276 = vst [vmem:[#allocation2 + $0x250] sm:$0xff] 0.0
        %277 = vst [vmem:[#allocation2 + $0x258] sm:$0xff] 0.0
        %278 = vst [vmem:[#allocation2 + $0x260] sm:$0xff] 0.0
        %279 = vst [vmem:[#allocation2 + $0x268] sm:$0xff] 0.0
        %280 = vst [vmem:[#allocation2 + $0x270] sm:$0xff] 0.0
        %281 = vst [vmem:[#allocation2 + $0x278] sm:$0xff] 0.0
        %282 = vst [vmem:[#allocation2 + $0x280] sm:$0xff] 0.0
        %283 = vst [vmem:[#allocation2 + $0x288] sm:$0xff] 0.0
        %284 = vst [vmem:[#allocation2 + $0x290] sm:$0xff] 0.0
        %285 = vst [vmem:[#allocation2 + $0x298] sm:$0xff] 0.0
        %286 = vst [vmem:[#allocation2 + $0x2a0] sm:$0xff] 0.0
        %287 = vst [vmem:[#allocation2 + $0x2a8] sm:$0xff] 0.0
        %288 = vst [vmem:[#allocation2 + $0x2b0] sm:$0xff] 0.0
        %289 = vst [vmem:[#allocation2 + $0x2b8] sm:$0xff] 0.0
        %290 = vst [vmem:[#allocation2 + $0x2c0] sm:$0xff] 0.0
        %291 = vst [vmem:[#allocation2 + $0x2c8] sm:$0xff] 0.0
        %292 = vst [vmem:[#allocation2 + $0x2d0] sm:$0xff] 0.0
        %293 = vst [vmem:[#allocation2 + $0x2d8] sm:$0xff] 0.0
        %294 = vst [vmem:[#allocation2 + $0x2e0] sm:$0xff] 0.0
        %295 = vst [vmem:[#allocation2 + $0x2e8] sm:$0xff] 0.0
        %296 = vst [vmem:[#allocation2 + $0x2f0] sm:$0xff] 0.0
        %297 = vst [vmem:[#allocation2 + $0x2f8] sm:$0xff] 0.0
        %298 = vst [vmem:[#allocation2 + $0x300] sm:$0xff] 0.0
        %299 = vst [vmem:[#allocation2 + $0x308] sm:$0xff] 0.0
        %300 = vst [vmem:[#allocation2 + $0x310] sm:$0xff] 0.0
        %301 = vst [vmem:[#allocation2 + $0x318] sm:$0xff] 0.0
        %302 = vst [vmem:[#allocation2 + $0x320] sm:$0xff] 0.0
        %303 = vst [vmem:[#allocation2 + $0x328] sm:$0xff] 0.0
        %304 = vst [vmem:[#allocation2 + $0x330] sm:$0xff] 0.0
        %305 = vst [vmem:[#allocation2 + $0x338] sm:$0xff] 0.0
        %306 = vst [vmem:[#allocation2 + $0x340] sm:$0xff] 0.0
        %307 = vst [vmem:[#allocation2 + $0x348] sm:$0xff] 0.0
        %308 = vst [vmem:[#allocation2 + $0x350] sm:$0xff] 0.0
        %309 = vst [vmem:[#allocation2 + $0x358] sm:$0xff] 0.0
        %310 = vst [vmem:[#allocation2 + $0x360] sm:$0xff] 0.0
        %311 = vst [vmem:[#allocation2 + $0x368] sm:$0xff] 0.0
        %312 = vst [vmem:[#allocation2 + $0x370] sm:$0xff] 0.0
        %313 = vst [vmem:[#allocation2 + $0x378] sm:$0xff] 0.0
        %314 = vst [vmem:[#allocation2 + $0x380] sm:$0xff] 0.0
        %315 = vst [vmem:[#allocation2 + $0x388] sm:$0xff] 0.0
        %316 = vst [vmem:[#allocation2 + $0x390] sm:$0xff] 0.0
        %317 = vst [vmem:[#allocation2 + $0x398] sm:$0xff] 0.0
        %318 = vst [vmem:[#allocation2 + $0x3a0] sm:$0xff] 0.0
        %319 = vst [vmem:[#allocation2 + $0x3a8] sm:$0xff] 0.0
        %320 = vst [vmem:[#allocation2 + $0x3b0] sm:$0xff] 0.0
        %321 = vst [vmem:[#allocation2 + $0x3b8] sm:$0xff] 0.0
        %322 = vst [vmem:[#allocation2 + $0x3c0] sm:$0xff] 0.0
        %323 = vst [vmem:[#allocation2 + $0x3c8] sm:$0xff] 0.0
        %324 = vst [vmem:[#allocation2 + $0x3d0] sm:$0xff] 0.0
        %325 = vst [vmem:[#allocation2 + $0x3d8] sm:$0xff] 0.0
        %326 = vst [vmem:[#allocation2 + $0x3e0] sm:$0xff] 0.0
        %327 = vst [vmem:[#allocation2 + $0x3e8] sm:$0xff] 0.0
        %328 = vst [vmem:[#allocation2 + $0x3f0] sm:$0xff] 0.0
        %329 = vst [vmem:[#allocation2 + $0x3f8] sm:$0xff] 0.0
      $region36: #{discriminator512_forward.10} parent=31 // pred_fallthru
        _
      %v330 = vld [vmem:[%s1] sm:$0xf]
      %v331 = vld [vmem:[%s1 + $0x4] sm:$0xf]
      %v332 = vld [vmem:[%s1 + $0x8] sm:$0xf]
      %v333 = vld [vmem:[%s1 + $0xc] sm:$0xf]
      %v334 = vld [vmem:[%s1 + $0x10] sm:$0xf]
      %v335 = vld [vmem:[%s1 + $0x14] sm:$0xf]
      %v336 = vld [vmem:[%s1 + $0x18] sm:$0xf]
      %v337 = vld [vmem:[%s1 + $0x1c] sm:$0xf]
      %v338 = vld [vmem:[%s1 + $0x20] sm:$0xf]
      %v339 = vld [vmem:[%s1 + $0x24] sm:$0xf]
      %v340 = vld [vmem:[%s1 + $0x28] sm:$0xf]
      %v341 = vld [vmem:[%s1 + $0x2c] sm:$0xf]
      %v342 = vld [vmem:[%s1 + $0x30] sm:$0xf]
      %v343 = vld [vmem:[%s1 + $0x34] sm:$0xf]
      %v344 = vld [vmem:[%s1 + $0x38] sm:$0xf]
      %v345 = vld [vmem:[%s1 + $0x3c] sm:$0xf]
      %v346 = vld [vmem:[#allocation2] sm:$0xff]
      %v347 = vld [vmem:[#allocation2 + $0x8] sm:$0xff]
      %v348 = vld [vmem:[#allocation2 + $0x10] sm:$0xff]
      %v349 = vld [vmem:[#allocation2 + $0x18] sm:$0xff]
      %v350 = vld [vmem:[#allocation2 + $0x20] sm:$0xff]
      %v351 = vld [vmem:[#allocation2 + $0x28] sm:$0xff]
      %v352 = vld [vmem:[#allocation2 + $0x30] sm:$0xff]
      %v353 = vld [vmem:[#allocation2 + $0x38] sm:$0xff]
      %v354 = vld [vmem:[#allocation2 + $0x40] sm:$0xff]
      %v355 = vld [vmem:[#allocation2 + $0x48] sm:$0xff]
      %v356 = vld [vmem:[#allocation2 + $0x50] sm:$0xff]
      %v357 = vld [vmem:[#allocation2 + $0x58] sm:$0xff]
      %v358 = vld [vmem:[#allocation2 + $0x60] sm:$0xff]
      %v359 = vld [vmem:[#allocation2 + $0x68] sm:$0xff]
      %v360 = vld [vmem:[#allocation2 + $0x70] sm:$0xff]
      %v361 = vld [vmem:[#allocation2 + $0x78] sm:$0xff]
      %v362 = vld [vmem:[#allocation2 + $0x80] sm:$0xff]
      %v363 = vld [vmem:[#allocation2 + $0x88] sm:$0xff]
      %v364 = vld [vmem:[#allocation2 + $0x90] sm:$0xff]
      %v365 = vld [vmem:[#allocation2 + $0x98] sm:$0xff]
      %v366 = vld [vmem:[#allocation2 + $0xa0] sm:$0xff]
      %v367 = vld [vmem:[#allocation2 + $0xa8] sm:$0xff]
      %v368 = vld [vmem:[#allocation2 + $0xb0] sm:$0xff]
      %v369 = vld [vmem:[#allocation2 + $0xb8] sm:$0xff]
      %v370 = vld [vmem:[#allocation2 + $0xc0] sm:$0xff]
      %v371 = vld [vmem:[#allocation2 + $0xc8] sm:$0xff]
      %v372 = vld [vmem:[#allocation2 + $0xd0] sm:$0xff]
      %v373 = vld [vmem:[#allocation2 + $0xd8] sm:$0xff]
      %v374 = vld [vmem:[#allocation2 + $0xe0] sm:$0xff]
      %v375 = vld [vmem:[#allocation2 + $0xe8] sm:$0xff]
      %v376 = vld [vmem:[#allocation2 + $0xf0] sm:$0xff]
      %v377 = vld [vmem:[#allocation2 + $0xf8] sm:$0xff]
      %v378 = vld [vmem:[#allocation2 + $0x100] sm:$0xff]
      %v379 = vld [vmem:[#allocation2 + $0x108] sm:$0xff]
      %v380 = vld [vmem:[#allocation2 + $0x110] sm:$0xff]
      %v381 = vld [vmem:[#allocation2 + $0x118] sm:$0xff]
      %v382 = vld [vmem:[#allocation2 + $0x120] sm:$0xff]
      %v383 = vld [vmem:[#allocation2 + $0x128] sm:$0xff]
      %v384 = vld [vmem:[#allocation2 + $0x130] sm:$0xff]
      %v385 = vld [vmem:[#allocation2 + $0x138] sm:$0xff]
      %v386 = vld [vmem:[#allocation2 + $0x140] sm:$0xff]
      %v387 = vld [vmem:[#allocation2 + $0x148] sm:$0xff]
      %v388 = vld [vmem:[#allocation2 + $0x150] sm:$0xff]
      %v389 = vld [vmem:[#allocation2 + $0x158] sm:$0xff]
      %v390 = vld [vmem:[#allocation2 + $0x160] sm:$0xff]
      %v391 = vld [vmem:[#allocation2 + $0x168] sm:$0xff]
      %v392 = vld [vmem:[#allocation2 + $0x170] sm:$0xff]
      %v393 = vld [vmem:[#allocation2 + $0x178] sm:$0xff]
      %v394 = vld [vmem:[#allocation2 + $0x180] sm:$0xff]
      %v395 = vld [vmem:[#allocation2 + $0x188] sm:$0xff]
      %v396 = vld [vmem:[#allocation2 + $0x190] sm:$0xff]
      %v397 = vld [vmem:[#allocation2 + $0x198] sm:$0xff]
      %v398 = vld [vmem:[#allocation2 + $0x1a0] sm:$0xff]
      %v399 = vld [vmem:[#allocation2 + $0x1a8] sm:$0xff]
      %v400 = vld [vmem:[#allocation2 + $0x1b0] sm:$0xff]
      %v401 = vld [vmem:[#allocation2 + $0x1b8] sm:$0xff]
      %v402 = vld [vmem:[#allocation2 + $0x1c0] sm:$0xff]
      %v403 = vld [vmem:[#allocation2 + $0x1c8] sm:$0xff]
      %v404 = vld [vmem:[#allocation2 + $0x1d0] sm:$0xff]
      %v405 = vld [vmem:[#allocation2 + $0x1d8] sm:$0xff]
      %v406 = vld [vmem:[#allocation2 + $0x1e0] sm:$0xff]
      %v407 = vld [vmem:[#allocation2 + $0x1e8] sm:$0xff]
      %v408 = vld [vmem:[#allocation2 + $0x1f0] sm:$0xff]
      %v409 = vld [vmem:[#allocation2 + $0x1f8] sm:$0xff]
      %v410 = vld [vmem:[#allocation2 + $0x200] sm:$0xff]
      %v411 = vld [vmem:[#allocation2 + $0x208] sm:$0xff]
      %v412 = vld [vmem:[#allocation2 + $0x210] sm:$0xff]
      %v413 = vld [vmem:[#allocation2 + $0x218] sm:$0xff]
      %v414 = vld [vmem:[#allocation2 + $0x220] sm:$0xff]
      %v415 = vld [vmem:[#allocation2 + $0x228] sm:$0xff]
      %v416 = vld [vmem:[#allocation2 + $0x230] sm:$0xff]
      %v417 = vld [vmem:[#allocation2 + $0x238] sm:$0xff]
      %v418 = vld [vmem:[#allocation2 + $0x240] sm:$0xff]
      %v419 = vld [vmem:[#allocation2 + $0x248] sm:$0xff]
      %v420 = vld [vmem:[#allocation2 + $0x250] sm:$0xff]
      %v421 = vld [vmem:[#allocation2 + $0x258] sm:$0xff]
      %v422 = vld [vmem:[#allocation2 + $0x260] sm:$0xff]
      %v423 = vld [vmem:[#allocation2 + $0x268] sm:$0xff]
      %v424 = vld [vmem:[#allocation2 + $0x270] sm:$0xff]
      %v425 = vld [vmem:[#allocation2 + $0x278] sm:$0xff]
      %v426 = vld [vmem:[#allocation2 + $0x280] sm:$0xff]
      %v427 = vld [vmem:[#allocation2 + $0x288] sm:$0xff]
      %v428 = vld [vmem:[#allocation2 + $0x290] sm:$0xff]
      %v429 = vld [vmem:[#allocation2 + $0x298] sm:$0xff]
      %v430 = vld [vmem:[#allocation2 + $0x2a0] sm:$0xff]
      %v431 = vld [vmem:[#allocation2 + $0x2a8] sm:$0xff]
      %v432 = vld [vmem:[#allocation2 + $0x2b0] sm:$0xff]
      %v433 = vld [vmem:[#allocation2 + $0x2b8] sm:$0xff]
      %v434 = vld [vmem:[#allocation2 + $0x2c0] sm:$0xff]
      %v435 = vld [vmem:[#allocation2 + $0x2c8] sm:$0xff]
      %v436 = vld [vmem:[#allocation2 + $0x2d0] sm:$0xff]
      %v437 = vld [vmem:[#allocation2 + $0x2d8] sm:$0xff]
      %v438 = vld [vmem:[#allocation2 + $0x2e0] sm:$0xff]
      %v439 = vld [vmem:[#allocation2 + $0x2e8] sm:$0xff]
      %v440 = vld [vmem:[#allocation2 + $0x2f0] sm:$0xff]
      %v441 = vld [vmem:[#allocation2 + $0x2f8] sm:$0xff]
      %v442 = vld [vmem:[#allocation2 + $0x300] sm:$0xff]
      %v443 = vld [vmem:[#allocation2 + $0x308] sm:$0xff]
      %v444 = vld [vmem:[#allocation2 + $0x310] sm:$0xff]
      %v445 = vld [vmem:[#allocation2 + $0x318] sm:$0xff]
      %v446 = vld [vmem:[#allocation2 + $0x320] sm:$0xff]
      %v447 = vld [vmem:[#allocation2 + $0x328] sm:$0xff]
      %v448 = vld [vmem:[#allocation2 + $0x330] sm:$0xff]
      %v449 = vld [vmem:[#allocation2 + $0x338] sm:$0xff]
      %v450 = vld [vmem:[#allocation2 + $0x340] sm:$0xff]
      %v451 = vld [vmem:[#allocation2 + $0x348] sm:$0xff]
      %v452 = vld [vmem:[#allocation2 + $0x350] sm:$0xff]
      %v453 = vld [vmem:[#allocation2 + $0x358] sm:$0xff]
      %v454 = vld [vmem:[#allocation2 + $0x360] sm:$0xff]
      %v455 = vld [vmem:[#allocation2 + $0x368] sm:$0xff]
      %v456 = vld [vmem:[#allocation2 + $0x370] sm:$0xff]
      %v457 = vld [vmem:[#allocation2 + $0x378] sm:$0xff]
      %v458 = vld [vmem:[#allocation2 + $0x380] sm:$0xff]
      %v459 = vld [vmem:[#allocation2 + $0x388] sm:$0xff]
      %v460 = vld [vmem:[#allocation2 + $0x390] sm:$0xff]
      %v461 = vld [vmem:[#allocation2 + $0x398] sm:$0xff]
      %v462 = vld [vmem:[#allocation2 + $0x3a0] sm:$0xff]
      %v463 = vld [vmem:[#allocation2 + $0x3a8] sm:$0xff]
      %v464 = vld [vmem:[#allocation2 + $0x3b0] sm:$0xff]
      %v465 = vld [vmem:[#allocation2 + $0x3b8] sm:$0xff]
      %v466 = vld [vmem:[#allocation2 + $0x3c0] sm:$0xff]
      %v467 = vld [vmem:[#allocation2 + $0x3c8] sm:$0xff]
      %v468 = vld [vmem:[#allocation2 + $0x3d0] sm:$0xff]
      %v469 = vld [vmem:[#allocation2 + $0x3d8] sm:$0xff]
      %v470 = vld [vmem:[#allocation2 + $0x3e0] sm:$0xff]
      %v471 = vld [vmem:[#allocation2 + $0x3e8] sm:$0xff]
      %v472 = vld [vmem:[#allocation2 + $0x3f0] sm:$0xff]
      %v473 = vld [vmem:[#allocation2 + $0x3f8] sm:$0xff]
      %v474 = vld [vmem:[%s189] sm:$0xf]
      %v475 = vld [vmem:[%s189 + $0x4] sm:$0xf]
      %v476 = vld [vmem:[%s189 + $0x8] sm:$0xf]
      %v477 = vld [vmem:[%s189 + $0xc] sm:$0xf]
      %v478 = vld [vmem:[%s189 + $0x10] sm:$0xf]
      %v479 = vld [vmem:[%s189 + $0x14] sm:$0xf]
      %v480 = vld [vmem:[%s189 + $0x18] sm:$0xf]
      %v481 = vld [vmem:[%s189 + $0x1c] sm:$0xf]
      %v482 = vld [vmem:[%s189 + $0x20] sm:$0xf]
      %v483 = vld [vmem:[%s189 + $0x24] sm:$0xf]
      %v484 = vld [vmem:[%s189 + $0x28] sm:$0xf]
      %v485 = vld [vmem:[%s189 + $0x2c] sm:$0xf]
      %v486 = vld [vmem:[%s189 + $0x30] sm:$0xf]
      %v487 = vld [vmem:[%s189 + $0x34] sm:$0xf]
      %v488 = vld [vmem:[%s189 + $0x38] sm:$0xf]
      %v489 = vld [vmem:[%s189 + $0x3c] sm:$0xf]
      %v490 = vld [vmem:[%s189 + $0x40] sm:$0xf]
      %v491 = vld [vmem:[%s189 + $0x44] sm:$0xf]
      %v492 = vld [vmem:[%s189 + $0x48] sm:$0xf]
      %v493 = vld [vmem:[%s189 + $0x4c] sm:$0xf]
      %v494 = vld [vmem:[%s189 + $0x50] sm:$0xf]
      %v495 = vld [vmem:[%s189 + $0x54] sm:$0xf]
      %v496 = vld [vmem:[%s189 + $0x58] sm:$0xf]
      %v497 = vld [vmem:[%s189 + $0x5c] sm:$0xf]
      %v498 = vld [vmem:[%s189 + $0x60] sm:$0xf]
      %v499 = vld [vmem:[%s189 + $0x64] sm:$0xf]
      %v500 = vld [vmem:[%s189 + $0x68] sm:$0xf]
      %v501 = vld [vmem:[%s189 + $0x6c] sm:$0xf]
      %v502 = vld [vmem:[%s189 + $0x70] sm:$0xf]
      %v503 = vld [vmem:[%s189 + $0x74] sm:$0xf]
      %v504 = vld [vmem:[%s189 + $0x78] sm:$0xf]
      %v505 = vld [vmem:[%s189 + $0x7c] sm:$0xf]
      %v506 = vld [vmem:[%s189 + $0x80] sm:$0xf]
      %v507 = vld [vmem:[%s189 + $0x84] sm:$0xf]
      %v508 = vld [vmem:[%s189 + $0x88] sm:$0xf]
      %v509 = vld [vmem:[%s189 + $0x8c] sm:$0xf]
      %v510 = vld [vmem:[%s189 + $0x90] sm:$0xf]
      %v511 = vld [vmem:[%s189 + $0x94] sm:$0xf]
      %v512 = vld [vmem:[%s189 + $0x98] sm:$0xf]
      %v513 = vld [vmem:[%s189 + $0x9c] sm:$0xf]
      %v514 = vld [vmem:[%s189 + $0xa0] sm:$0xf]
      %v515 = vld [vmem:[%s189 + $0xa4] sm:$0xf]
      %v516 = vld [vmem:[%s189 + $0xa8] sm:$0xf]
      %v517 = vld [vmem:[%s189 + $0xac] sm:$0xf]
      %v518 = vld [vmem:[%s189 + $0xb0] sm:$0xf]
      %v519 = vld [vmem:[%s189 + $0xb4] sm:$0xf]
      %v520 = vld [vmem:[%s189 + $0xb8] sm:$0xf]
      %v521 = vld [vmem:[%s189 + $0xbc] sm:$0xf]
      %v522 = vld [vmem:[%s189 + $0xc0] sm:$0xf]
      %v523 = vld [vmem:[%s189 + $0xc4] sm:$0xf]
      %v524 = vld [vmem:[%s189 + $0xc8] sm:$0xf]
      %v525 = vld [vmem:[%s189 + $0xcc] sm:$0xf]
      %v526 = vld [vmem:[%s189 + $0xd0] sm:$0xf]
      %v527 = vld [vmem:[%s189 + $0xd4] sm:$0xf]
      %v528 = vld [vmem:[%s189 + $0xd8] sm:$0xf]
      %v529 = vld [vmem:[%s189 + $0xdc] sm:$0xf]
      %v530 = vld [vmem:[%s189 + $0xe0] sm:$0xf]
      %v531 = vld [vmem:[%s189 + $0xe4] sm:$0xf]
      %v532 = vld [vmem:[%s189 + $0xe8] sm:$0xf]
      %v533 = vld [vmem:[%s189 + $0xec] sm:$0xf]
      %v534 = vld [vmem:[%s189 + $0xf0] sm:$0xf]
      %v535 = vld [vmem:[%s189 + $0xf4] sm:$0xf]
      %v536 = vld [vmem:[%s189 + $0xf8] sm:$0xf]
      %v537 = vld [vmem:[%s189 + $0xfc] sm:$0xf]
      %v538 = vld [vmem:[%s189 + $0x100] sm:$0xf]
      %v539 = vld [vmem:[%s189 + $0x104] sm:$0xf]
      %v540 = vld [vmem:[%s189 + $0x108] sm:$0xf]
      %v541 = vld [vmem:[%s189 + $0x10c] sm:$0xf]
      %v542 = vld [vmem:[%s189 + $0x110] sm:$0xf]
      %v543 = vld [vmem:[%s189 + $0x114] sm:$0xf]
      %v544 = vld [vmem:[%s189 + $0x118] sm:$0xf]
      %v545 = vld [vmem:[%s189 + $0x11c] sm:$0xf]
      %v546 = vld [vmem:[%s189 + $0x120] sm:$0xf]
      %v547 = vld [vmem:[%s189 + $0x124] sm:$0xf]
      %v548 = vld [vmem:[%s189 + $0x128] sm:$0xf]
      %v549 = vld [vmem:[%s189 + $0x12c] sm:$0xf]
      %v550 = vld [vmem:[%s189 + $0x130] sm:$0xf]
      %v551 = vld [vmem:[%s189 + $0x134] sm:$0xf]
      %v552 = vld [vmem:[%s189 + $0x138] sm:$0xf]
      %v553 = vld [vmem:[%s189 + $0x13c] sm:$0xf]
      %v554 = vld [vmem:[%s189 + $0x140] sm:$0xf]
      %v555 = vld [vmem:[%s189 + $0x144] sm:$0xf]
      %v556 = vld [vmem:[%s189 + $0x148] sm:$0xf]
      %v557 = vld [vmem:[%s189 + $0x14c] sm:$0xf]
      %v558 = vld [vmem:[%s189 + $0x150] sm:$0xf]
      %v559 = vld [vmem:[%s189 + $0x154] sm:$0xf]
      %v560 = vld [vmem:[%s189 + $0x158] sm:$0xf]
      %v561 = vld [vmem:[%s189 + $0x15c] sm:$0xf]
      %v562 = vld [vmem:[%s189 + $0x160] sm:$0xf]
      %v563 = vld [vmem:[%s189 + $0x164] sm:$0xf]
      %v564 = vld [vmem:[%s189 + $0x168] sm:$0xf]
      %v565 = vld [vmem:[%s189 + $0x16c] sm:$0xf]
      %v566 = vld [vmem:[%s189 + $0x170] sm:$0xf]
      %v567 = vld [vmem:[%s189 + $0x174] sm:$0xf]
      %v568 = vld [vmem:[%s189 + $0x178] sm:$0xf]
      %v569 = vld [vmem:[%s189 + $0x17c] sm:$0xf]
      %v570 = vld [vmem:[%s189 + $0x180] sm:$0xf]
      %v571 = vld [vmem:[%s189 + $0x184] sm:$0xf]
      %v572 = vld [vmem:[%s189 + $0x188] sm:$0xf]
      %v573 = vld [vmem:[%s189 + $0x18c] sm:$0xf]
      %v574 = vld [vmem:[%s189 + $0x190] sm:$0xf]
      %v575 = vld [vmem:[%s189 + $0x194] sm:$0xf]
      %v576 = vld [vmem:[%s189 + $0x198] sm:$0xf]
      %v577 = vld [vmem:[%s189 + $0x19c] sm:$0xf]
      %v578 = vld [vmem:[%s189 + $0x1a0] sm:$0xf]
      %v579 = vld [vmem:[%s189 + $0x1a4] sm:$0xf]
      %v580 = vld [vmem:[%s189 + $0x1a8] sm:$0xf]
      %v581 = vld [vmem:[%s189 + $0x1ac] sm:$0xf]
      %v582 = vld [vmem:[%s189 + $0x1b0] sm:$0xf]
      %v583 = vld [vmem:[%s189 + $0x1b4] sm:$0xf]
      %v584 = vld [vmem:[%s189 + $0x1b8] sm:$0xf]
      %v585 = vld [vmem:[%s189 + $0x1bc] sm:$0xf]
      %v586 = vld [vmem:[%s189 + $0x1c0] sm:$0xf]
      %v587 = vld [vmem:[%s189 + $0x1c4] sm:$0xf]
      %v588 = vld [vmem:[%s189 + $0x1c8] sm:$0xf]
      %v589 = vld [vmem:[%s189 + $0x1cc] sm:$0xf]
      %v590 = vld [vmem:[%s189 + $0x1d0] sm:$0xf]
      %v591 = vld [vmem:[%s189 + $0x1d4] sm:$0xf]
      %v592 = vld [vmem:[%s189 + $0x1d8] sm:$0xf]
      %v593 = vld [vmem:[%s189 + $0x1dc] sm:$0xf]
      %v594 = vld [vmem:[%s189 + $0x1e0] sm:$0xf]
      %v595 = vld [vmem:[%s189 + $0x1e4] sm:$0xf]
      %v596 = vld [vmem:[%s189 + $0x1e8] sm:$0xf]
      %v597 = vld [vmem:[%s189 + $0x1ec] sm:$0xf]
      %v598 = vld [vmem:[%s189 + $0x1f0] sm:$0xf]
      %v599 = vld [vmem:[%s189 + $0x1f4] sm:$0xf]
      %v600 = vld [vmem:[%s189 + $0x1f8] sm:$0xf]
      %v601 = vld [vmem:[%s189 + $0x1fc] sm:$0xf]
      %v730 = vunpack.c.l.b16 %v474
      %v731 = vunpack.c.l.b16 %v475
      %v732 = vunpack.c.l.b16 %v476
      %v733 = vunpack.c.l.b16 %v477
      %v734 = vunpack.c.l.b16 %v478
      %v735 = vunpack.c.l.b16 %v479
      %v736 = vunpack.c.l.b16 %v480
      %v737 = vunpack.c.l.b16 %v481
      %v738 = vunpack.c.l.b16 %v482
      %v739 = vunpack.c.l.b16 %v483
      %v740 = vunpack.c.l.b16 %v484
      %v741 = vunpack.c.l.b16 %v485
      %v742 = vunpack.c.l.b16 %v486
      %v743 = vunpack.c.l.b16 %v487
      %v744 = vunpack.c.l.b16 %v488
      %v745 = vunpack.c.l.b16 %v489
      %v746 = vunpack.c.l.b16 %v490
      %v747 = vunpack.c.l.b16 %v491
      %v748 = vunpack.c.l.b16 %v492
      %v749 = vunpack.c.l.b16 %v493
      %v750 = vunpack.c.l.b16 %v494
      %v751 = vunpack.c.l.b16 %v495
      %v752 = vunpack.c.l.b16 %v496
      %v753 = vunpack.c.l.b16 %v497
      %v754 = vunpack.c.l.b16 %v498
      %v755 = vunpack.c.l.b16 %v499
      %v756 = vunpack.c.l.b16 %v500
      %v757 = vunpack.c.l.b16 %v501
      %v758 = vunpack.c.l.b16 %v502
      %v759 = vunpack.c.l.b16 %v503
      %v760 = vunpack.c.l.b16 %v504
      %v761 = vunpack.c.l.b16 %v505
      %v762 = vunpack.c.l.b16 %v506
      %v763 = vunpack.c.l.b16 %v507
      %v764 = vunpack.c.l.b16 %v508
      %v765 = vunpack.c.l.b16 %v509
      %v766 = vunpack.c.l.b16 %v510
      %v767 = vunpack.c.l.b16 %v511
      %v768 = vunpack.c.l.b16 %v512
      %v769 = vunpack.c.l.b16 %v513
      %v770 = vunpack.c.l.b16 %v514
      %v771 = vunpack.c.l.b16 %v515
      %v772 = vunpack.c.l.b16 %v516
      %v773 = vunpack.c.l.b16 %v517
      %v774 = vunpack.c.l.b16 %v518
      %v775 = vunpack.c.l.b16 %v519
      %v776 = vunpack.c.l.b16 %v520
      %v777 = vunpack.c.l.b16 %v521
      %v778 = vunpack.c.l.b16 %v522
      %v779 = vunpack.c.l.b16 %v523
      %v780 = vunpack.c.l.b16 %v524
      %v781 = vunpack.c.l.b16 %v525
      %v782 = vunpack.c.l.b16 %v526
      %v783 = vunpack.c.l.b16 %v527
      %v784 = vunpack.c.l.b16 %v528
      %v785 = vunpack.c.l.b16 %v529
      %v786 = vunpack.c.l.b16 %v530
      %v787 = vunpack.c.l.b16 %v531
      %v788 = vunpack.c.l.b16 %v532
      %v789 = vunpack.c.l.b16 %v533
      %v790 = vunpack.c.l.b16 %v534
      %v791 = vunpack.c.l.b16 %v535
      %v792 = vunpack.c.l.b16 %v536
      %v793 = vunpack.c.l.b16 %v537
      %v794 = vunpack.c.l.b16 %v538
      %v795 = vunpack.c.l.b16 %v539
      %v796 = vunpack.c.l.b16 %v540
      %v797 = vunpack.c.l.b16 %v541
      %v798 = vunpack.c.l.b16 %v542
      %v799 = vunpack.c.l.b16 %v543
      %v800 = vunpack.c.l.b16 %v544
      %v801 = vunpack.c.l.b16 %v545
      %v802 = vunpack.c.l.b16 %v546
      %v803 = vunpack.c.l.b16 %v547
      %v804 = vunpack.c.l.b16 %v548
      %v805 = vunpack.c.l.b16 %v549
      %v806 = vunpack.c.l.b16 %v550
      %v807 = vunpack.c.l.b16 %v551
      %v808 = vunpack.c.l.b16 %v552
      %v809 = vunpack.c.l.b16 %v553
      %v810 = vunpack.c.l.b16 %v554
      %v811 = vunpack.c.l.b16 %v555
      %v812 = vunpack.c.l.b16 %v556
      %v813 = vunpack.c.l.b16 %v557
      %v814 = vunpack.c.l.b16 %v558
      %v815 = vunpack.c.l.b16 %v559
      %v816 = vunpack.c.l.b16 %v560
      %v817 = vunpack.c.l.b16 %v561
      %v818 = vunpack.c.l.b16 %v562
      %v819 = vunpack.c.l.b16 %v563
      %v820 = vunpack.c.l.b16 %v564
      %v821 = vunpack.c.l.b16 %v565
      %v822 = vunpack.c.l.b16 %v566
      %v823 = vunpack.c.l.b16 %v567
      %v824 = vunpack.c.l.b16 %v568
      %v825 = vunpack.c.l.b16 %v569
      %v826 = vunpack.c.l.b16 %v570
      %v827 = vunpack.c.l.b16 %v571
      %v828 = vunpack.c.l.b16 %v572
      %v829 = vunpack.c.l.b16 %v573
      %v830 = vunpack.c.l.b16 %v574
      %v831 = vunpack.c.l.b16 %v575
      %v832 = vunpack.c.l.b16 %v576
      %v833 = vunpack.c.l.b16 %v577
      %v834 = vunpack.c.l.b16 %v578
      %v835 = vunpack.c.l.b16 %v579
      %v836 = vunpack.c.l.b16 %v580
      %v837 = vunpack.c.l.b16 %v581
      %v838 = vunpack.c.l.b16 %v582
      %v839 = vunpack.c.l.b16 %v583
      %v840 = vunpack.c.l.b16 %v584
      %v841 = vunpack.c.l.b16 %v585
      %v842 = vunpack.c.l.b16 %v586
      %v843 = vunpack.c.l.b16 %v587
      %v844 = vunpack.c.l.b16 %v588
      %v845 = vunpack.c.l.b16 %v589
      %v846 = vunpack.c.l.b16 %v590
      %v847 = vunpack.c.l.b16 %v591
      %v848 = vunpack.c.l.b16 %v592
      %v849 = vunpack.c.l.b16 %v593
      %v850 = vunpack.c.l.b16 %v594
      %v851 = vunpack.c.l.b16 %v595
      %v852 = vunpack.c.l.b16 %v596
      %v853 = vunpack.c.l.b16 %v597
      %v854 = vunpack.c.l.b16 %v598
      %v855 = vunpack.c.l.b16 %v599
      %v856 = vunpack.c.l.b16 %v600
      %v857 = vunpack.c.l.b16 %v601
      %v858 = vpack.c.b16 %v731, %v730
      %v859 = vpack.c.b16 %v733, %v732
      %v860 = vpack.c.b16 %v735, %v734
      %v861 = vpack.c.b16 %v737, %v736
      %v862 = vpack.c.b16 %v739, %v738
      %v863 = vpack.c.b16 %v741, %v740
      %v864 = vpack.c.b16 %v743, %v742
      %v865 = vpack.c.b16 %v745, %v744
      %v866 = vpack.c.b16 %v747, %v746
      %v867 = vpack.c.b16 %v749, %v748
      %v868 = vpack.c.b16 %v751, %v750
      %v869 = vpack.c.b16 %v753, %v752
      %v870 = vpack.c.b16 %v755, %v754
      %v871 = vpack.c.b16 %v757, %v756
      %v872 = vpack.c.b16 %v759, %v758
      %v873 = vpack.c.b16 %v761, %v760
      %v874 = vpack.c.b16 %v763, %v762
      %v875 = vpack.c.b16 %v765, %v764
      %v876 = vpack.c.b16 %v767, %v766
      %v877 = vpack.c.b16 %v769, %v768
      %v878 = vpack.c.b16 %v771, %v770
      %v879 = vpack.c.b16 %v773, %v772
      %v880 = vpack.c.b16 %v775, %v774
      %v881 = vpack.c.b16 %v777, %v776
      %v882 = vpack.c.b16 %v779, %v778
      %v883 = vpack.c.b16 %v781, %v780
      %v884 = vpack.c.b16 %v783, %v782
      %v885 = vpack.c.b16 %v785, %v784
      %v886 = vpack.c.b16 %v787, %v786
      %v887 = vpack.c.b16 %v789, %v788
      %v888 = vpack.c.b16 %v791, %v790
      %v889 = vpack.c.b16 %v793, %v792
      %v890 = vpack.c.b16 %v795, %v794
      %v891 = vpack.c.b16 %v797, %v796
      %v892 = vpack.c.b16 %v799, %v798
      %v893 = vpack.c.b16 %v801, %v800
      %v894 = vpack.c.b16 %v803, %v802
      %v895 = vpack.c.b16 %v805, %v804
      %v896 = vpack.c.b16 %v807, %v806
      %v897 = vpack.c.b16 %v809, %v808
      %v898 = vpack.c.b16 %v811, %v810
      %v899 = vpack.c.b16 %v813, %v812
      %v900 = vpack.c.b16 %v815, %v814
      %v901 = vpack.c.b16 %v817, %v816
      %v902 = vpack.c.b16 %v819, %v818
      %v903 = vpack.c.b16 %v821, %v820
      %v904 = vpack.c.b16 %v823, %v822
      %v905 = vpack.c.b16 %v825, %v824
      %v906 = vpack.c.b16 %v827, %v826
      %v907 = vpack.c.b16 %v829, %v828
      %v908 = vpack.c.b16 %v831, %v830
      %v909 = vpack.c.b16 %v833, %v832
      %v910 = vpack.c.b16 %v835, %v834
      %v911 = vpack.c.b16 %v837, %v836
      %v912 = vpack.c.b16 %v839, %v838
      %v913 = vpack.c.b16 %v841, %v840
      %v914 = vpack.c.b16 %v843, %v842
      %v915 = vpack.c.b16 %v845, %v844
      %v916 = vpack.c.b16 %v847, %v846
      %v917 = vpack.c.b16 %v849, %v848
      %v918 = vpack.c.b16 %v851, %v850
      %v919 = vpack.c.b16 %v853, %v852
      %v920 = vpack.c.b16 %v855, %v854
      %v921 = vpack.c.b16 %v857, %v856
      %v1002 = vunpack.c.l.b16 %v330
      %v1003 = vunpack.c.l.b16 %v331
      %v1004 = vunpack.c.l.b16 %v332
      %v1005 = vunpack.c.l.b16 %v333
      %v1006 = vunpack.c.l.b16 %v334
      %v1007 = vunpack.c.l.b16 %v335
      %v1008 = vunpack.c.l.b16 %v336
      %v1009 = vunpack.c.l.b16 %v337
      %v1010 = vunpack.c.l.b16 %v338
      %v1011 = vunpack.c.l.b16 %v339
      %v1012 = vunpack.c.l.b16 %v340
      %v1013 = vunpack.c.l.b16 %v341
      %v1014 = vunpack.c.l.b16 %v342
      %v1015 = vunpack.c.l.b16 %v343
      %v1016 = vunpack.c.l.b16 %v344
      %v1017 = vunpack.c.l.b16 %v345
      %v1018 = vpack.c.b16 %v1003, %v1002
      %v1019 = vpack.c.b16 %v1005, %v1004
      %v1020 = vpack.c.b16 %v1007, %v1006
      %v1021 = vpack.c.b16 %v1009, %v1008
      %v1022 = vpack.c.b16 %v1011, %v1010
      %v1023 = vpack.c.b16 %v1013, %v1012
      %v1024 = vpack.c.b16 %v1015, %v1014
      %v1025 = vpack.c.b16 %v1017, %v1016
      %1034 = vmatprep.subr.bf16.mxu0 0
      %1035 = vmatpush1.bf16.msra.mxu0 %v1025
      %1036 = vmatprep.subr.bf16.mxu0 0
      %1037 = vmatpush1.bf16.msra.mxu0 %v1024
      %1038 = vmatprep.subr.bf16.mxu0 0
      %1039 = vmatpush1.bf16.msra.mxu0 %v1023
      %1040 = vmatprep.subr.bf16.mxu0 0
      %1041 = vmatpush1.bf16.msra.mxu0 %v1022
      %1042 = vmatprep.subr.bf16.mxu0 0
      %1043 = vmatpush1.bf16.msra.mxu0 %v1021
      %1044 = vmatprep.subr.bf16.mxu0 0
      %1045 = vmatpush1.bf16.msra.mxu0 %v1020
      %1046 = vmatprep.subr.bf16.mxu0 0
      %1047 = vmatpush1.bf16.msra.mxu0 %v1019
      %1048 = vmatprep.subr.bf16.mxu0 0
      %1049 = vmatpush1.bf16.msra.mxu0 %v1018
      %1050 = vmatprep.subr.bf16.mxu0 0
      %1051 = vmatpush2.bf16.msra.mxu0 0
      %1052 = vmatprep.subr.bf16.mxu0 0
      %1053 = vmatpush2.bf16.msra.mxu0 0
      %1054 = vmatprep.subr.bf16.mxu0 0
      %1055 = vmatpush2.bf16.msra.mxu0 0
      %1056 = vmatprep.subr.bf16.mxu0 0
      %1057 = vmatpush2.bf16.msra.mxu0 0
      %1058 = vmatprep.subr.bf16.mxu0 0
      %1059 = vmatpush2.bf16.msra.mxu0 0
      %1060 = vmatprep.subr.bf16.mxu0 0
      %1061 = vmatpush2.bf16.msra.mxu0 0
      %1062 = vmatprep.subr.bf16.mxu0 0
      %1063 = vmatpush2.bf16.msra.mxu0 0
      %1064 = vmatprep.subr.bf16.mxu0 0
      %1065 = vmatpush2.bf16.msra.mxu0 0
      %1066 = vmatprep.mubr.bf16.mxu0 0
      %1067 = vmatmul.mubr.bf16.gmra.mxu0 %v858
      %v1068 = vpop.f32.mrf.mxu0
      %v1069 = vadd.f32 0.0, %v1068
      %v1070 = vpop.f32.mrf.mxu0
      %v1071 = vpop.f32.mrf.mxu0
      %v1072 = vadd.f32 0.0, %v1071
      %v1073 = vpop.f32.mrf.mxu0
      %1074 = vmatprep.mubr.bf16.mxu0 0
      %1075 = vmatmul.mubr.bf16.gmra.mxu0 %v859
      %v1076 = vpop.f32.mrf.mxu0
      %v1077 = vadd.f32 0.0, %v1076
      %v1078 = vpop.f32.mrf.mxu0
      %v1079 = vpop.f32.mrf.mxu0
      %v1080 = vadd.f32 0.0, %v1079
      %v1081 = vpop.f32.mrf.mxu0
      %1082 = vmatprep.mubr.bf16.mxu0 0
      %1083 = vmatmul.mubr.bf16.gmra.mxu0 %v860
      %v1084 = vpop.f32.mrf.mxu0
      %v1085 = vadd.f32 0.0, %v1084
      %v1086 = vpop.f32.mrf.mxu0
      %v1087 = vpop.f32.mrf.mxu0
      %v1088 = vadd.f32 0.0, %v1087
      %v1089 = vpop.f32.mrf.mxu0
      %1090 = vmatprep.mubr.bf16.mxu0 0
      %1091 = vmatmul.mubr.bf16.gmra.mxu0 %v861
      %v1092 = vpop.f32.mrf.mxu0
      %v1093 = vadd.f32 0.0, %v1092
      %v1094 = vpop.f32.mrf.mxu0
      %v1095 = vpop.f32.mrf.mxu0
      %v1096 = vadd.f32 0.0, %v1095
      %v1097 = vpop.f32.mrf.mxu0
      %1098 = vmatprep.mubr.bf16.mxu0 0
      %1099 = vmatmul.mubr.bf16.gmra.mxu0 %v862
      %v1100 = vpop.f32.mrf.mxu0
      %v1101 = vadd.f32 0.0, %v1100
      %v1102 = vpop.f32.mrf.mxu0
      %v1103 = vpop.f32.mrf.mxu0
      %v1104 = vadd.f32 0.0, %v1103
      %v1105 = vpop.f32.mrf.mxu0
      %1106 = vmatprep.mubr.bf16.mxu0 0
      %1107 = vmatmul.mubr.bf16.gmra.mxu0 %v863
      %v1108 = vpop.f32.mrf.mxu0
      %v1109 = vadd.f32 0.0, %v1108
      %v1110 = vpop.f32.mrf.mxu0
      %v1111 = vpop.f32.mrf.mxu0
      %v1112 = vadd.f32 0.0, %v1111
      %v1113 = vpop.f32.mrf.mxu0
      %1114 = vmatprep.mubr.bf16.mxu0 0
      %1115 = vmatmul.mubr.bf16.gmra.mxu0 %v864
      %v1116 = vpop.f32.mrf.mxu0
      %v1117 = vadd.f32 0.0, %v1116
      %v1118 = vpop.f32.mrf.mxu0
      %v1119 = vpop.f32.mrf.mxu0
      %v1120 = vadd.f32 0.0, %v1119
      %v1121 = vpop.f32.mrf.mxu0
      %1122 = vmatprep.mubr.bf16.mxu0 0
      %1123 = vmatmul.mubr.bf16.gmra.mxu0 %v865
      %v1124 = vpop.f32.mrf.mxu0
      %v1125 = vadd.f32 0.0, %v1124
      %v1126 = vpop.f32.mrf.mxu0
      %v1127 = vpop.f32.mrf.mxu0
      %v1128 = vadd.f32 0.0, %v1127
      %v1129 = vpop.f32.mrf.mxu0
      %1130 = vmatprep.mubr.bf16.mxu0 0
      %1131 = vmatmul.mubr.bf16.gmra.mxu0 %v866
      %v1132 = vpop.f32.mrf.mxu0
      %v1133 = vadd.f32 0.0, %v1132
      %v1134 = vpop.f32.mrf.mxu0
      %v1135 = vpop.f32.mrf.mxu0
      %v1136 = vadd.f32 0.0, %v1135
      %v1137 = vpop.f32.mrf.mxu0
      %1138 = vmatprep.mubr.bf16.mxu0 0
      %1139 = vmatmul.mubr.bf16.gmra.mxu0 %v867
      %v1140 = vpop.f32.mrf.mxu0
      %v1141 = vadd.f32 0.0, %v1140
      %v1142 = vpop.f32.mrf.mxu0
      %v1143 = vpop.f32.mrf.mxu0
      %v1144 = vadd.f32 0.0, %v1143
      %v1145 = vpop.f32.mrf.mxu0
      %1146 = vmatprep.mubr.bf16.mxu0 0
      %1147 = vmatmul.mubr.bf16.gmra.mxu0 %v868
      %v1148 = vpop.f32.mrf.mxu0
      %v1149 = vadd.f32 0.0, %v1148
      %v1150 = vpop.f32.mrf.mxu0
      %v1151 = vpop.f32.mrf.mxu0
      %v1152 = vadd.f32 0.0, %v1151
      %v1153 = vpop.f32.mrf.mxu0
      %1154 = vmatprep.mubr.bf16.mxu0 0
      %1155 = vmatmul.mubr.bf16.gmra.mxu0 %v869
      %v1156 = vpop.f32.mrf.mxu0
      %v1157 = vadd.f32 0.0, %v1156
      %v1158 = vpop.f32.mrf.mxu0
      %v1159 = vpop.f32.mrf.mxu0
      %v1160 = vadd.f32 0.0, %v1159
      %v1161 = vpop.f32.mrf.mxu0
      %1162 = vmatprep.mubr.bf16.mxu0 0
      %1163 = vmatmul.mubr.bf16.gmra.mxu0 %v870
      %v1164 = vpop.f32.mrf.mxu0
      %v1165 = vadd.f32 0.0, %v1164
      %v1166 = vpop.f32.mrf.mxu0
      %v1167 = vpop.f32.mrf.mxu0
      %v1168 = vadd.f32 0.0, %v1167
      %v1169 = vpop.f32.mrf.mxu0
      %1170 = vmatprep.mubr.bf16.mxu0 0
      %1171 = vmatmul.mubr.bf16.gmra.mxu0 %v871
      %v1172 = vpop.f32.mrf.mxu0
      %v1173 = vadd.f32 0.0, %v1172
      %v1174 = vpop.f32.mrf.mxu0
      %v1175 = vpop.f32.mrf.mxu0
      %v1176 = vadd.f32 0.0, %v1175
      %v1177 = vpop.f32.mrf.mxu0
      %1178 = vmatprep.mubr.bf16.mxu0 0
      %1179 = vmatmul.mubr.bf16.gmra.mxu0 %v872
      %v1180 = vpop.f32.mrf.mxu0
      %v1181 = vadd.f32 0.0, %v1180
      %v1182 = vpop.f32.mrf.mxu0
      %v1183 = vpop.f32.mrf.mxu0
      %v1184 = vadd.f32 0.0, %v1183
      %v1185 = vpop.f32.mrf.mxu0
      %1186 = vmatprep.mubr.bf16.mxu0 0
      %1187 = vmatmul.mubr.bf16.gmra.mxu0 %v873
      %v1188 = vpop.f32.mrf.mxu0
      %v1189 = vadd.f32 0.0, %v1188
      %v1190 = vpop.f32.mrf.mxu0
      %v1191 = vpop.f32.mrf.mxu0
      %v1192 = vadd.f32 0.0, %v1191
      %v1193 = vpop.f32.mrf.mxu0
      %1194 = vmatprep.mubr.bf16.mxu0 0
      %1195 = vmatmul.mubr.bf16.gmra.mxu0 %v874
      %v1196 = vpop.f32.mrf.mxu0
      %v1197 = vadd.f32 0.0, %v1196
      %v1198 = vpop.f32.mrf.mxu0
      %v1199 = vpop.f32.mrf.mxu0
      %v1200 = vadd.f32 0.0, %v1199
      %v1201 = vpop.f32.mrf.mxu0
      %1202 = vmatprep.mubr.bf16.mxu0 0
      %1203 = vmatmul.mubr.bf16.gmra.mxu0 %v875
      %v1204 = vpop.f32.mrf.mxu0
      %v1205 = vadd.f32 0.0, %v1204
      %v1206 = vpop.f32.mrf.mxu0
      %v1207 = vpop.f32.mrf.mxu0
      %v1208 = vadd.f32 0.0, %v1207
      %v1209 = vpop.f32.mrf.mxu0
      %1210 = vmatprep.mubr.bf16.mxu0 0
      %1211 = vmatmul.mubr.bf16.gmra.mxu0 %v876
      %v1212 = vpop.f32.mrf.mxu0
      %v1213 = vadd.f32 0.0, %v1212
      %v1214 = vpop.f32.mrf.mxu0
      %v1215 = vpop.f32.mrf.mxu0
      %v1216 = vadd.f32 0.0, %v1215
      %v1217 = vpop.f32.mrf.mxu0
      %1218 = vmatprep.mubr.bf16.mxu0 0
      %1219 = vmatmul.mubr.bf16.gmra.mxu0 %v877
      %v1220 = vpop.f32.mrf.mxu0
      %v1221 = vadd.f32 0.0, %v1220
      %v1222 = vpop.f32.mrf.mxu0
      %v1223 = vpop.f32.mrf.mxu0
      %v1224 = vadd.f32 0.0, %v1223
      %v1225 = vpop.f32.mrf.mxu0
      %1226 = vmatprep.mubr.bf16.mxu0 0
      %1227 = vmatmul.mubr.bf16.gmra.mxu0 %v878
      %v1228 = vpop.f32.mrf.mxu0
      %v1229 = vadd.f32 0.0, %v1228
      %v1230 = vpop.f32.mrf.mxu0
      %v1231 = vpop.f32.mrf.mxu0
      %v1232 = vadd.f32 0.0, %v1231
      %v1233 = vpop.f32.mrf.mxu0
      %1234 = vmatprep.mubr.bf16.mxu0 0
      %1235 = vmatmul.mubr.bf16.gmra.mxu0 %v879
      %v1236 = vpop.f32.mrf.mxu0
      %v1237 = vadd.f32 0.0, %v1236
      %v1238 = vpop.f32.mrf.mxu0
      %v1239 = vpop.f32.mrf.mxu0
      %v1240 = vadd.f32 0.0, %v1239
      %v1241 = vpop.f32.mrf.mxu0
      %1242 = vmatprep.mubr.bf16.mxu0 0
      %1243 = vmatmul.mubr.bf16.gmra.mxu0 %v880
      %v1244 = vpop.f32.mrf.mxu0
      %v1245 = vadd.f32 0.0, %v1244
      %v1246 = vpop.f32.mrf.mxu0
      %v1247 = vpop.f32.mrf.mxu0
      %v1248 = vadd.f32 0.0, %v1247
      %v1249 = vpop.f32.mrf.mxu0
      %1250 = vmatprep.mubr.bf16.mxu0 0
      %1251 = vmatmul.mubr.bf16.gmra.mxu0 %v881
      %v1252 = vpop.f32.mrf.mxu0
      %v1253 = vadd.f32 0.0, %v1252
      %v1254 = vpop.f32.mrf.mxu0
      %v1255 = vpop.f32.mrf.mxu0
      %v1256 = vadd.f32 0.0, %v1255
      %v1257 = vpop.f32.mrf.mxu0
      %1258 = vmatprep.mubr.bf16.mxu0 0
      %1259 = vmatmul.mubr.bf16.gmra.mxu0 %v882
      %v1260 = vpop.f32.mrf.mxu0
      %v1261 = vadd.f32 0.0, %v1260
      %v1262 = vpop.f32.mrf.mxu0
      %v1263 = vpop.f32.mrf.mxu0
      %v1264 = vadd.f32 0.0, %v1263
      %v1265 = vpop.f32.mrf.mxu0
      %1266 = vmatprep.mubr.bf16.mxu0 0
      %1267 = vmatmul.mubr.bf16.gmra.mxu0 %v883
      %v1268 = vpop.f32.mrf.mxu0
      %v1269 = vadd.f32 0.0, %v1268
      %v1270 = vpop.f32.mrf.mxu0
      %v1271 = vpop.f32.mrf.mxu0
      %v1272 = vadd.f32 0.0, %v1271
      %v1273 = vpop.f32.mrf.mxu0
      %1274 = vmatprep.mubr.bf16.mxu0 0
      %1275 = vmatmul.mubr.bf16.gmra.mxu0 %v884
      %v1276 = vpop.f32.mrf.mxu0
      %v1277 = vadd.f32 0.0, %v1276
      %v1278 = vpop.f32.mrf.mxu0
      %v1279 = vpop.f32.mrf.mxu0
      %v1280 = vadd.f32 0.0, %v1279
      %v1281 = vpop.f32.mrf.mxu0
      %1282 = vmatprep.mubr.bf16.mxu0 0
      %1283 = vmatmul.mubr.bf16.gmra.mxu0 %v885
      %v1284 = vpop.f32.mrf.mxu0
      %v1285 = vadd.f32 0.0, %v1284
      %v1286 = vpop.f32.mrf.mxu0
      %v1287 = vpop.f32.mrf.mxu0
      %v1288 = vadd.f32 0.0, %v1287
      %v1289 = vpop.f32.mrf.mxu0
      %1290 = vmatprep.mubr.bf16.mxu0 0
      %1291 = vmatmul.mubr.bf16.gmra.mxu0 %v886
      %v1292 = vpop.f32.mrf.mxu0
      %v1293 = vadd.f32 0.0, %v1292
      %v1294 = vpop.f32.mrf.mxu0
      %v1295 = vpop.f32.mrf.mxu0
      %v1296 = vadd.f32 0.0, %v1295
      %v1297 = vpop.f32.mrf.mxu0
      %1298 = vmatprep.mubr.bf16.mxu0 0
      %1299 = vmatmul.mubr.bf16.gmra.mxu0 %v887
      %v1300 = vpop.f32.mrf.mxu0
      %v1301 = vadd.f32 0.0, %v1300
      %v1302 = vpop.f32.mrf.mxu0
      %v1303 = vpop.f32.mrf.mxu0
      %v1304 = vadd.f32 0.0, %v1303
      %v1305 = vpop.f32.mrf.mxu0
      %1306 = vmatprep.mubr.bf16.mxu0 0
      %1307 = vmatmul.mubr.bf16.gmra.mxu0 %v888
      %v1308 = vpop.f32.mrf.mxu0
      %v1309 = vadd.f32 0.0, %v1308
      %v1310 = vpop.f32.mrf.mxu0
      %v1311 = vpop.f32.mrf.mxu0
      %v1312 = vadd.f32 0.0, %v1311
      %v1313 = vpop.f32.mrf.mxu0
      %1314 = vmatprep.mubr.bf16.mxu0 0
      %1315 = vmatmul.mubr.bf16.gmra.mxu0 %v889
      %v1316 = vpop.f32.mrf.mxu0
      %v1317 = vadd.f32 0.0, %v1316
      %v1318 = vpop.f32.mrf.mxu0
      %v1319 = vpop.f32.mrf.mxu0
      %v1320 = vadd.f32 0.0, %v1319
      %v1321 = vpop.f32.mrf.mxu0
      %1322 = vmatprep.mubr.bf16.mxu0 0
      %1323 = vmatmul.mubr.bf16.gmra.mxu0 %v890
      %v1324 = vpop.f32.mrf.mxu0
      %v1325 = vadd.f32 0.0, %v1324
      %v1326 = vpop.f32.mrf.mxu0
      %v1327 = vpop.f32.mrf.mxu0
      %v1328 = vadd.f32 0.0, %v1327
      %v1329 = vpop.f32.mrf.mxu0
      %1330 = vmatprep.mubr.bf16.mxu0 0
      %1331 = vmatmul.mubr.bf16.gmra.mxu0 %v891
      %v1332 = vpop.f32.mrf.mxu0
      %v1333 = vadd.f32 0.0, %v1332
      %v1334 = vpop.f32.mrf.mxu0
      %v1335 = vpop.f32.mrf.mxu0
      %v1336 = vadd.f32 0.0, %v1335
      %v1337 = vpop.f32.mrf.mxu0
      %1338 = vmatprep.mubr.bf16.mxu0 0
      %1339 = vmatmul.mubr.bf16.gmra.mxu0 %v892
      %v1340 = vpop.f32.mrf.mxu0
      %v1341 = vadd.f32 0.0, %v1340
      %v1342 = vpop.f32.mrf.mxu0
      %v1343 = vpop.f32.mrf.mxu0
      %v1344 = vadd.f32 0.0, %v1343
      %v1345 = vpop.f32.mrf.mxu0
      %1346 = vmatprep.mubr.bf16.mxu0 0
      %1347 = vmatmul.mubr.bf16.gmra.mxu0 %v893
      %v1348 = vpop.f32.mrf.mxu0
      %v1349 = vadd.f32 0.0, %v1348
      %v1350 = vpop.f32.mrf.mxu0
      %v1351 = vpop.f32.mrf.mxu0
      %v1352 = vadd.f32 0.0, %v1351
      %v1353 = vpop.f32.mrf.mxu0
      %1354 = vmatprep.mubr.bf16.mxu0 0
      %1355 = vmatmul.mubr.bf16.gmra.mxu0 %v894
      %v1356 = vpop.f32.mrf.mxu0
      %v1357 = vadd.f32 0.0, %v1356
      %v1358 = vpop.f32.mrf.mxu0
      %v1359 = vpop.f32.mrf.mxu0
      %v1360 = vadd.f32 0.0, %v1359
      %v1361 = vpop.f32.mrf.mxu0
      %1362 = vmatprep.mubr.bf16.mxu0 0
      %1363 = vmatmul.mubr.bf16.gmra.mxu0 %v895
      %v1364 = vpop.f32.mrf.mxu0
      %v1365 = vadd.f32 0.0, %v1364
      %v1366 = vpop.f32.mrf.mxu0
      %v1367 = vpop.f32.mrf.mxu0
      %v1368 = vadd.f32 0.0, %v1367
      %v1369 = vpop.f32.mrf.mxu0
      %1370 = vmatprep.mubr.bf16.mxu0 0
      %1371 = vmatmul.mubr.bf16.gmra.mxu0 %v896
      %v1372 = vpop.f32.mrf.mxu0
      %v1373 = vadd.f32 0.0, %v1372
      %v1374 = vpop.f32.mrf.mxu0
      %v1375 = vpop.f32.mrf.mxu0
      %v1376 = vadd.f32 0.0, %v1375
      %v1377 = vpop.f32.mrf.mxu0
      %1378 = vmatprep.mubr.bf16.mxu0 0
      %1379 = vmatmul.mubr.bf16.gmra.mxu0 %v897
      %v1380 = vpop.f32.mrf.mxu0
      %v1381 = vadd.f32 0.0, %v1380
      %v1382 = vpop.f32.mrf.mxu0
      %v1383 = vpop.f32.mrf.mxu0
      %v1384 = vadd.f32 0.0, %v1383
      %v1385 = vpop.f32.mrf.mxu0
      %1386 = vmatprep.mubr.bf16.mxu0 0
      %1387 = vmatmul.mubr.bf16.gmra.mxu0 %v898
      %v1388 = vpop.f32.mrf.mxu0
      %v1389 = vadd.f32 0.0, %v1388
      %v1390 = vpop.f32.mrf.mxu0
      %v1391 = vpop.f32.mrf.mxu0
      %v1392 = vadd.f32 0.0, %v1391
      %v1393 = vpop.f32.mrf.mxu0
      %1394 = vmatprep.mubr.bf16.mxu0 0
      %1395 = vmatmul.mubr.bf16.gmra.mxu0 %v899
      %v1396 = vpop.f32.mrf.mxu0
      %v1397 = vadd.f32 0.0, %v1396
      %v1398 = vpop.f32.mrf.mxu0
      %v1399 = vpop.f32.mrf.mxu0
      %v1400 = vadd.f32 0.0, %v1399
      %v1401 = vpop.f32.mrf.mxu0
      %1402 = vmatprep.mubr.bf16.mxu0 0
      %1403 = vmatmul.mubr.bf16.gmra.mxu0 %v900
      %v1404 = vpop.f32.mrf.mxu0
      %v1405 = vadd.f32 0.0, %v1404
      %v1406 = vpop.f32.mrf.mxu0
      %v1407 = vpop.f32.mrf.mxu0
      %v1408 = vadd.f32 0.0, %v1407
      %v1409 = vpop.f32.mrf.mxu0
      %1410 = vmatprep.mubr.bf16.mxu0 0
      %1411 = vmatmul.mubr.bf16.gmra.mxu0 %v901
      %v1412 = vpop.f32.mrf.mxu0
      %v1413 = vadd.f32 0.0, %v1412
      %v1414 = vpop.f32.mrf.mxu0
      %v1415 = vpop.f32.mrf.mxu0
      %v1416 = vadd.f32 0.0, %v1415
      %v1417 = vpop.f32.mrf.mxu0
      %1418 = vmatprep.mubr.bf16.mxu0 0
      %1419 = vmatmul.mubr.bf16.gmra.mxu0 %v902
      %v1420 = vpop.f32.mrf.mxu0
      %v1421 = vadd.f32 0.0, %v1420
      %v1422 = vpop.f32.mrf.mxu0
      %v1423 = vpop.f32.mrf.mxu0
      %v1424 = vadd.f32 0.0, %v1423
      %v1425 = vpop.f32.mrf.mxu0
      %1426 = vmatprep.mubr.bf16.mxu0 0
      %1427 = vmatmul.mubr.bf16.gmra.mxu0 %v903
      %v1428 = vpop.f32.mrf.mxu0
      %v1429 = vadd.f32 0.0, %v1428
      %v1430 = vpop.f32.mrf.mxu0
      %v1431 = vpop.f32.mrf.mxu0
      %v1432 = vadd.f32 0.0, %v1431
      %v1433 = vpop.f32.mrf.mxu0
      %1434 = vmatprep.mubr.bf16.mxu0 0
      %1435 = vmatmul.mubr.bf16.gmra.mxu0 %v904
      %v1436 = vpop.f32.mrf.mxu0
      %v1437 = vadd.f32 0.0, %v1436
      %v1438 = vpop.f32.mrf.mxu0
      %v1439 = vpop.f32.mrf.mxu0
      %v1440 = vadd.f32 0.0, %v1439
      %v1441 = vpop.f32.mrf.mxu0
      %1442 = vmatprep.mubr.bf16.mxu0 0
      %1443 = vmatmul.mubr.bf16.gmra.mxu0 %v905
      %v1444 = vpop.f32.mrf.mxu0
      %v1445 = vadd.f32 0.0, %v1444
      %v1446 = vpop.f32.mrf.mxu0
      %v1447 = vpop.f32.mrf.mxu0
      %v1448 = vadd.f32 0.0, %v1447
      %v1449 = vpop.f32.mrf.mxu0
      %1450 = vmatprep.mubr.bf16.mxu0 0
      %1451 = vmatmul.mubr.bf16.gmra.mxu0 %v906
      %v1452 = vpop.f32.mrf.mxu0
      %v1453 = vadd.f32 0.0, %v1452
      %v1454 = vpop.f32.mrf.mxu0
      %v1455 = vpop.f32.mrf.mxu0
      %v1456 = vadd.f32 0.0, %v1455
      %v1457 = vpop.f32.mrf.mxu0
      %1458 = vmatprep.mubr.bf16.mxu0 0
      %1459 = vmatmul.mubr.bf16.gmra.mxu0 %v907
      %v1460 = vpop.f32.mrf.mxu0
      %v1461 = vadd.f32 0.0, %v1460
      %v1462 = vpop.f32.mrf.mxu0
      %v1463 = vpop.f32.mrf.mxu0
      %v1464 = vadd.f32 0.0, %v1463
      %v1465 = vpop.f32.mrf.mxu0
      %1466 = vmatprep.mubr.bf16.mxu0 0
      %1467 = vmatmul.mubr.bf16.gmra.mxu0 %v908
      %v1468 = vpop.f32.mrf.mxu0
      %v1469 = vadd.f32 0.0, %v1468
      %v1470 = vpop.f32.mrf.mxu0
      %v1471 = vpop.f32.mrf.mxu0
      %v1472 = vadd.f32 0.0, %v1471
      %v1473 = vpop.f32.mrf.mxu0
      %1474 = vmatprep.mubr.bf16.mxu0 0
      %1475 = vmatmul.mubr.bf16.gmra.mxu0 %v909
      %v1476 = vpop.f32.mrf.mxu0
      %v1477 = vadd.f32 0.0, %v1476
      %v1478 = vpop.f32.mrf.mxu0
      %v1479 = vpop.f32.mrf.mxu0
      %v1480 = vadd.f32 0.0, %v1479
      %v1481 = vpop.f32.mrf.mxu0
      %1482 = vmatprep.mubr.bf16.mxu0 0
      %1483 = vmatmul.mubr.bf16.gmra.mxu0 %v910
      %v1484 = vpop.f32.mrf.mxu0
      %v1485 = vadd.f32 0.0, %v1484
      %v1486 = vpop.f32.mrf.mxu0
      %v1487 = vpop.f32.mrf.mxu0
      %v1488 = vadd.f32 0.0, %v1487
      %v1489 = vpop.f32.mrf.mxu0
      %1490 = vmatprep.mubr.bf16.mxu0 0
      %1491 = vmatmul.mubr.bf16.gmra.mxu0 %v911
      %v1492 = vpop.f32.mrf.mxu0
      %v1493 = vadd.f32 0.0, %v1492
      %v1494 = vpop.f32.mrf.mxu0
      %v1495 = vpop.f32.mrf.mxu0
      %v1496 = vadd.f32 0.0, %v1495
      %v1497 = vpop.f32.mrf.mxu0
      %1498 = vmatprep.mubr.bf16.mxu0 0
      %1499 = vmatmul.mubr.bf16.gmra.mxu0 %v912
      %v1500 = vpop.f32.mrf.mxu0
      %v1501 = vadd.f32 0.0, %v1500
      %v1502 = vpop.f32.mrf.mxu0
      %v1503 = vpop.f32.mrf.mxu0
      %v1504 = vadd.f32 0.0, %v1503
      %v1505 = vpop.f32.mrf.mxu0
      %1506 = vmatprep.mubr.bf16.mxu0 0
      %1507 = vmatmul.mubr.bf16.gmra.mxu0 %v913
      %v1508 = vpop.f32.mrf.mxu0
      %v1509 = vadd.f32 0.0, %v1508
      %v1510 = vpop.f32.mrf.mxu0
      %v1511 = vpop.f32.mrf.mxu0
      %v1512 = vadd.f32 0.0, %v1511
      %v1513 = vpop.f32.mrf.mxu0
      %1514 = vmatprep.mubr.bf16.mxu0 0
      %1515 = vmatmul.mubr.bf16.gmra.mxu0 %v914
      %v1516 = vpop.f32.mrf.mxu0
      %v1517 = vadd.f32 0.0, %v1516
      %v1518 = vpop.f32.mrf.mxu0
      %v1519 = vpop.f32.mrf.mxu0
      %v1520 = vadd.f32 0.0, %v1519
      %v1521 = vpop.f32.mrf.mxu0
      %1522 = vmatprep.mubr.bf16.mxu0 0
      %1523 = vmatmul.mubr.bf16.gmra.mxu0 %v915
      %v1524 = vpop.f32.mrf.mxu0
      %v1525 = vadd.f32 0.0, %v1524
      %v1526 = vpop.f32.mrf.mxu0
      %v1527 = vpop.f32.mrf.mxu0
      %v1528 = vadd.f32 0.0, %v1527
      %v1529 = vpop.f32.mrf.mxu0
      %1530 = vmatprep.mubr.bf16.mxu0 0
      %1531 = vmatmul.mubr.bf16.gmra.mxu0 %v916
      %v1532 = vpop.f32.mrf.mxu0
      %v1533 = vadd.f32 0.0, %v1532
      %v1534 = vpop.f32.mrf.mxu0
      %v1535 = vpop.f32.mrf.mxu0
      %v1536 = vadd.f32 0.0, %v1535
      %v1537 = vpop.f32.mrf.mxu0
      %1538 = vmatprep.mubr.bf16.mxu0 0
      %1539 = vmatmul.mubr.bf16.gmra.mxu0 %v917
      %v1540 = vpop.f32.mrf.mxu0
      %v1541 = vadd.f32 0.0, %v1540
      %v1542 = vpop.f32.mrf.mxu0
      %v1543 = vpop.f32.mrf.mxu0
      %v1544 = vadd.f32 0.0, %v1543
      %v1545 = vpop.f32.mrf.mxu0
      %1546 = vmatprep.mubr.bf16.mxu0 0
      %1547 = vmatmul.mubr.bf16.gmra.mxu0 %v918
      %v1548 = vpop.f32.mrf.mxu0
      %v1549 = vadd.f32 0.0, %v1548
      %v1550 = vpop.f32.mrf.mxu0
      %v1551 = vpop.f32.mrf.mxu0
      %v1552 = vadd.f32 0.0, %v1551
      %v1553 = vpop.f32.mrf.mxu0
      %1554 = vmatprep.mubr.bf16.mxu0 0
      %1555 = vmatmul.mubr.bf16.gmra.mxu0 %v919
      %v1556 = vpop.f32.mrf.mxu0
      %v1557 = vadd.f32 0.0, %v1556
      %v1558 = vpop.f32.mrf.mxu0
      %v1559 = vpop.f32.mrf.mxu0
      %v1560 = vadd.f32 0.0, %v1559
      %v1561 = vpop.f32.mrf.mxu0
      %1562 = vmatprep.mubr.bf16.mxu0 0
      %1563 = vmatmul.mubr.bf16.gmra.mxu0 %v920
      %v1564 = vpop.f32.mrf.mxu0
      %v1565 = vadd.f32 0.0, %v1564
      %v1566 = vpop.f32.mrf.mxu0
      %v1567 = vpop.f32.mrf.mxu0
      %v1568 = vadd.f32 0.0, %v1567
      %v1569 = vpop.f32.mrf.mxu0
      %1570 = vmatprep.mubr.bf16.mxu0 0
      %1571 = vmatmul.mubr.bf16.gmra.mxu0 %v921
      %v1572 = vpop.f32.mrf.mxu0
      %v1573 = vadd.f32 0.0, %v1572
      %v1574 = vpop.f32.mrf.mxu0
      %v1575 = vpop.f32.mrf.mxu0
      %v1576 = vadd.f32 0.0, %v1575
      %v1577 = vpop.f32.mrf.mxu0
      %1578 = vdwg.mxu0
      %v1579 = vadd.f32 %v346, %v1069
      %v1580 = vadd.f32 %v347, %v1072
      %v1581 = vadd.f32 %v348, %v1077
      %v1582 = vadd.f32 %v349, %v1080
      %v1583 = vadd.f32 %v350, %v1085
      %v1584 = vadd.f32 %v351, %v1088
      %v1585 = vadd.f32 %v352, %v1093
      %v1586 = vadd.f32 %v353, %v1096
      %v1587 = vadd.f32 %v354, %v1101
      %v1588 = vadd.f32 %v355, %v1104
      %v1589 = vadd.f32 %v356, %v1109
      %v1590 = vadd.f32 %v357, %v1112
      %v1591 = vadd.f32 %v358, %v1117
      %v1592 = vadd.f32 %v359, %v1120
      %v1593 = vadd.f32 %v360, %v1125
      %v1594 = vadd.f32 %v361, %v1128
      %v1595 = vadd.f32 %v362, %v1133
      %v1596 = vadd.f32 %v363, %v1136
      %v1597 = vadd.f32 %v364, %v1141
      %v1598 = vadd.f32 %v365, %v1144
      %v1599 = vadd.f32 %v366, %v1149
      %v1600 = vadd.f32 %v367, %v1152
      %v1601 = vadd.f32 %v368, %v1157
      %v1602 = vadd.f32 %v369, %v1160
      %v1603 = vadd.f32 %v370, %v1165
      %v1604 = vadd.f32 %v371, %v1168
      %v1605 = vadd.f32 %v372, %v1173
      %v1606 = vadd.f32 %v373, %v1176
      %v1607 = vadd.f32 %v374, %v1181
      %v1608 = vadd.f32 %v375, %v1184
      %v1609 = vadd.f32 %v376, %v1189
      %v1610 = vadd.f32 %v377, %v1192
      %v1611 = vadd.f32 %v378, %v1197
      %v1612 = vadd.f32 %v379, %v1200
      %v1613 = vadd.f32 %v380, %v1205
      %v1614 = vadd.f32 %v381, %v1208
      %v1615 = vadd.f32 %v382, %v1213
      %v1616 = vadd.f32 %v383, %v1216
      %v1617 = vadd.f32 %v384, %v1221
      %v1618 = vadd.f32 %v385, %v1224
      %v1619 = vadd.f32 %v386, %v1229
      %v1620 = vadd.f32 %v387, %v1232
      %v1621 = vadd.f32 %v388, %v1237
      %v1622 = vadd.f32 %v389, %v1240
      %v1623 = vadd.f32 %v390, %v1245
      %v1624 = vadd.f32 %v391, %v1248
      %v1625 = vadd.f32 %v392, %v1253
      %v1626 = vadd.f32 %v393, %v1256
      %v1627 = vadd.f32 %v394, %v1261
      %v1628 = vadd.f32 %v395, %v1264
      %v1629 = vadd.f32 %v396, %v1269
      %v1630 = vadd.f32 %v397, %v1272
      %v1631 = vadd.f32 %v398, %v1277
      %v1632 = vadd.f32 %v399, %v1280
      %v1633 = vadd.f32 %v400, %v1285
      %v1634 = vadd.f32 %v401, %v1288
      %v1635 = vadd.f32 %v402, %v1293
      %v1636 = vadd.f32 %v403, %v1296
      %v1637 = vadd.f32 %v404, %v1301
      %v1638 = vadd.f32 %v405, %v1304
      %v1639 = vadd.f32 %v406, %v1309
      %v1640 = vadd.f32 %v407, %v1312
      %v1641 = vadd.f32 %v408, %v1317
      %v1642 = vadd.f32 %v409, %v1320
      %v1643 = vadd.f32 %v410, %v1325
      %v1644 = vadd.f32 %v411, %v1328
      %v1645 = vadd.f32 %v412, %v1333
      %v1646 = vadd.f32 %v413, %v1336
      %v1647 = vadd.f32 %v414, %v1341
      %v1648 = vadd.f32 %v415, %v1344
      %v1649 = vadd.f32 %v416, %v1349
      %v1650 = vadd.f32 %v417, %v1352
      %v1651 = vadd.f32 %v418, %v1357
      %v1652 = vadd.f32 %v419, %v1360
      %v1653 = vadd.f32 %v420, %v1365
      %v1654 = vadd.f32 %v421, %v1368
      %v1655 = vadd.f32 %v422, %v1373
      %v1656 = vadd.f32 %v423, %v1376
      %v1657 = vadd.f32 %v424, %v1381
      %v1658 = vadd.f32 %v425, %v1384
      %v1659 = vadd.f32 %v426, %v1389
      %v1660 = vadd.f32 %v427, %v1392
      %v1661 = vadd.f32 %v428, %v1397
      %v1662 = vadd.f32 %v429, %v1400
      %v1663 = vadd.f32 %v430, %v1405
      %v1664 = vadd.f32 %v431, %v1408
      %v1665 = vadd.f32 %v432, %v1413
      %v1666 = vadd.f32 %v433, %v1416
      %v1667 = vadd.f32 %v434, %v1421
      %v1668 = vadd.f32 %v435, %v1424
      %v1669 = vadd.f32 %v436, %v1429
      %v1670 = vadd.f32 %v437, %v1432
      %v1671 = vadd.f32 %v438, %v1437
      %v1672 = vadd.f32 %v439, %v1440
      %v1673 = vadd.f32 %v440, %v1445
      %v1674 = vadd.f32 %v441, %v1448
      %v1675 = vadd.f32 %v442, %v1453
      %v1676 = vadd.f32 %v443, %v1456
      %v1677 = vadd.f32 %v444, %v1461
      %v1678 = vadd.f32 %v445, %v1464
      %v1679 = vadd.f32 %v446, %v1469
      %v1680 = vadd.f32 %v447, %v1472
      %v1681 = vadd.f32 %v448, %v1477
      %v1682 = vadd.f32 %v449, %v1480
      %v1683 = vadd.f32 %v450, %v1485
      %v1684 = vadd.f32 %v451, %v1488
      %v1685 = vadd.f32 %v452, %v1493
      %v1686 = vadd.f32 %v453, %v1496
      %v1687 = vadd.f32 %v454, %v1501
      %v1688 = vadd.f32 %v455, %v1504
      %v1689 = vadd.f32 %v456, %v1509
      %v1690 = vadd.f32 %v457, %v1512
      %v1691 = vadd.f32 %v458, %v1517
      %v1692 = vadd.f32 %v459, %v1520
      %v1693 = vadd.f32 %v460, %v1525
      %v1694 = vadd.f32 %v461, %v1528
      %v1695 = vadd.f32 %v462, %v1533
      %v1696 = vadd.f32 %v463, %v1536
      %v1697 = vadd.f32 %v464, %v1541
      %v1698 = vadd.f32 %v465, %v1544
      %v1699 = vadd.f32 %v466, %v1549
      %v1700 = vadd.f32 %v467, %v1552
      %v1701 = vadd.f32 %v468, %v1557
      %v1702 = vadd.f32 %v469, %v1560
      %v1703 = vadd.f32 %v470, %v1565
      %v1704 = vadd.f32 %v471, %v1568
      %v1705 = vadd.f32 %v472, %v1573
      %v1706 = vadd.f32 %v473, %v1576
      %1707 = vst [vmem:[#allocation2] sm:$0xff] %v1579
      %1708 = vst [vmem:[#allocation2 + $0x8] sm:$0xff] %v1580
      %1709 = vst [vmem:[#allocation2 + $0x10] sm:$0xff] %v1581
      %1710 = vst [vmem:[#allocation2 + $0x18] sm:$0xff] %v1582
      %1711 = vst [vmem:[#allocation2 + $0x20] sm:$0xff] %v1583
      %1712 = vst [vmem:[#allocation2 + $0x28] sm:$0xff] %v1584
      %1713 = vst [vmem:[#allocation2 + $0x30] sm:$0xff] %v1585
      %1714 = vst [vmem:[#allocation2 + $0x38] sm:$0xff] %v1586
      %1715 = vst [vmem:[#allocation2 + $0x40] sm:$0xff] %v1587
      %1716 = vst [vmem:[#allocation2 + $0x48] sm:$0xff] %v1588
      %1717 = vst [vmem:[#allocation2 + $0x50] sm:$0xff] %v1589
      %1718 = vst [vmem:[#allocation2 + $0x58] sm:$0xff] %v1590
      %1719 = vst [vmem:[#allocation2 + $0x60] sm:$0xff] %v1591
      %1720 = vst [vmem:[#allocation2 + $0x68] sm:$0xff] %v1592
      %1721 = vst [vmem:[#allocation2 + $0x70] sm:$0xff] %v1593
      %1722 = vst [vmem:[#allocation2 + $0x78] sm:$0xff] %v1594
      %1723 = vst [vmem:[#allocation2 + $0x80] sm:$0xff] %v1595
      %1724 = vst [vmem:[#allocation2 + $0x88] sm:$0xff] %v1596
      %1725 = vst [vmem:[#allocation2 + $0x90] sm:$0xff] %v1597
      %1726 = vst [vmem:[#allocation2 + $0x98] sm:$0xff] %v1598
      %1727 = vst [vmem:[#allocation2 + $0xa0] sm:$0xff] %v1599
      %1728 = vst [vmem:[#allocation2 + $0xa8] sm:$0xff] %v1600
      %1729 = vst [vmem:[#allocation2 + $0xb0] sm:$0xff] %v1601
      %1730 = vst [vmem:[#allocation2 + $0xb8] sm:$0xff] %v1602
      %1731 = vst [vmem:[#allocation2 + $0xc0] sm:$0xff] %v1603
      %1732 = vst [vmem:[#allocation2 + $0xc8] sm:$0xff] %v1604
      %1733 = vst [vmem:[#allocation2 + $0xd0] sm:$0xff] %v1605
      %1734 = vst [vmem:[#allocation2 + $0xd8] sm:$0xff] %v1606
      %1735 = vst [vmem:[#allocation2 + $0xe0] sm:$0xff] %v1607
      %1736 = vst [vmem:[#allocation2 + $0xe8] sm:$0xff] %v1608
      %1737 = vst [vmem:[#allocation2 + $0xf0] sm:$0xff] %v1609
      %1738 = vst [vmem:[#allocation2 + $0xf8] sm:$0xff] %v1610
      %1739 = vst [vmem:[#allocation2 + $0x100] sm:$0xff] %v1611
      %1740 = vst [vmem:[#allocation2 + $0x108] sm:$0xff] %v1612
      %1741 = vst [vmem:[#allocation2 + $0x110] sm:$0xff] %v1613
      %1742 = vst [vmem:[#allocation2 + $0x118] sm:$0xff] %v1614
      %1743 = vst [vmem:[#allocation2 + $0x120] sm:$0xff] %v1615
      %1744 = vst [vmem:[#allocation2 + $0x128] sm:$0xff] %v1616
      %1745 = vst [vmem:[#allocation2 + $0x130] sm:$0xff] %v1617
      %1746 = vst [vmem:[#allocation2 + $0x138] sm:$0xff] %v1618
      %1747 = vst [vmem:[#allocation2 + $0x140] sm:$0xff] %v1619
      %1748 = vst [vmem:[#allocation2 + $0x148] sm:$0xff] %v1620
      %1749 = vst [vmem:[#allocation2 + $0x150] sm:$0xff] %v1621
      %1750 = vst [vmem:[#allocation2 + $0x158] sm:$0xff] %v1622
      %1751 = vst [vmem:[#allocation2 + $0x160] sm:$0xff] %v1623
      %1752 = vst [vmem:[#allocation2 + $0x168] sm:$0xff] %v1624
      %1753 = vst [vmem:[#allocation2 + $0x170] sm:$0xff] %v1625
      %1754 = vst [vmem:[#allocation2 + $0x178] sm:$0xff] %v1626
      %1755 = vst [vmem:[#allocation2 + $0x180] sm:$0xff] %v1627
      %1756 = vst [vmem:[#allocation2 + $0x188] sm:$0xff] %v1628
      %1757 = vst [vmem:[#allocation2 + $0x190] sm:$0xff] %v1629
      %1758 = vst [vmem:[#allocation2 + $0x198] sm:$0xff] %v1630
      %1759 = vst [vmem:[#allocation2 + $0x1a0] sm:$0xff] %v1631
      %1760 = vst [vmem:[#allocation2 + $0x1a8] sm:$0xff] %v1632
      %1761 = vst [vmem:[#allocation2 + $0x1b0] sm:$0xff] %v1633
      %1762 = vst [vmem:[#allocation2 + $0x1b8] sm:$0xff] %v1634
      %1763 = vst [vmem:[#allocation2 + $0x1c0] sm:$0xff] %v1635
      %1764 = vst [vmem:[#allocation2 + $0x1c8] sm:$0xff] %v1636
      %1765 = vst [vmem:[#allocation2 + $0x1d0] sm:$0xff] %v1637
      %1766 = vst [vmem:[#allocation2 + $0x1d8] sm:$0xff] %v1638
      %1767 = vst [vmem:[#allocation2 + $0x1e0] sm:$0xff] %v1639
      %1768 = vst [vmem:[#allocation2 + $0x1e8] sm:$0xff] %v1640
      %1769 = vst [vmem:[#allocation2 + $0x1f0] sm:$0xff] %v1641
      %1770 = vst [vmem:[#allocation2 + $0x1f8] sm:$0xff] %v1642
      %1771 = vst [vmem:[#allocation2 + $0x200] sm:$0xff] %v1643
      %1772 = vst [vmem:[#allocation2 + $0x208] sm:$0xff] %v1644
      %1773 = vst [vmem:[#allocation2 + $0x210] sm:$0xff] %v1645
      %1774 = vst [vmem:[#allocation2 + $0x218] sm:$0xff] %v1646
      %1775 = vst [vmem:[#allocation2 + $0x220] sm:$0xff] %v1647
      %1776 = vst [vmem:[#allocation2 + $0x228] sm:$0xff] %v1648
      %1777 = vst [vmem:[#allocation2 + $0x230] sm:$0xff] %v1649
      %1778 = vst [vmem:[#allocation2 + $0x238] sm:$0xff] %v1650
      %1779 = vst [vmem:[#allocation2 + $0x240] sm:$0xff] %v1651
      %1780 = vst [vmem:[#allocation2 + $0x248] sm:$0xff] %v1652
      %1781 = vst [vmem:[#allocation2 + $0x250] sm:$0xff] %v1653
      %1782 = vst [vmem:[#allocation2 + $0x258] sm:$0xff] %v1654
      %1783 = vst [vmem:[#allocation2 + $0x260] sm:$0xff] %v1655
      %1784 = vst [vmem:[#allocation2 + $0x268] sm:$0xff] %v1656
      %1785 = vst [vmem:[#allocation2 + $0x270] sm:$0xff] %v1657
      %1786 = vst [vmem:[#allocation2 + $0x278] sm:$0xff] %v1658
      %1787 = vst [vmem:[#allocation2 + $0x280] sm:$0xff] %v1659
      %1788 = vst [vmem:[#allocation2 + $0x288] sm:$0xff] %v1660
      %1789 = vst [vmem:[#allocation2 + $0x290] sm:$0xff] %v1661
      %1790 = vst [vmem:[#allocation2 + $0x298] sm:$0xff] %v1662
      %1791 = vst [vmem:[#allocation2 + $0x2a0] sm:$0xff] %v1663
      %1792 = vst [vmem:[#allocation2 + $0x2a8] sm:$0xff] %v1664
      %1793 = vst [vmem:[#allocation2 + $0x2b0] sm:$0xff] %v1665
      %1794 = vst [vmem:[#allocation2 + $0x2b8] sm:$0xff] %v1666
      %1795 = vst [vmem:[#allocation2 + $0x2c0] sm:$0xff] %v1667
      %1796 = vst [vmem:[#allocation2 + $0x2c8] sm:$0xff] %v1668
      %1797 = vst [vmem:[#allocation2 + $0x2d0] sm:$0xff] %v1669
      %1798 = vst [vmem:[#allocation2 + $0x2d8] sm:$0xff] %v1670
      %1799 = vst [vmem:[#allocation2 + $0x2e0] sm:$0xff] %v1671
      %1800 = vst [vmem:[#allocation2 + $0x2e8] sm:$0xff] %v1672
      %1801 = vst [vmem:[#allocation2 + $0x2f0] sm:$0xff] %v1673
      %1802 = vst [vmem:[#allocation2 + $0x2f8] sm:$0xff] %v1674
      %1803 = vst [vmem:[#allocation2 + $0x300] sm:$0xff] %v1675
      %1804 = vst [vmem:[#allocation2 + $0x308] sm:$0xff] %v1676
      %1805 = vst [vmem:[#allocation2 + $0x310] sm:$0xff] %v1677
      %1806 = vst [vmem:[#allocation2 + $0x318] sm:$0xff] %v1678
      %1807 = vst [vmem:[#allocation2 + $0x320] sm:$0xff] %v1679
      %1808 = vst [vmem:[#allocation2 + $0x328] sm:$0xff] %v1680
      %1809 = vst [vmem:[#allocation2 + $0x330] sm:$0xff] %v1681
      %1810 = vst [vmem:[#allocation2 + $0x338] sm:$0xff] %v1682
      %1811 = vst [vmem:[#allocation2 + $0x340] sm:$0xff] %v1683
      %1812 = vst [vmem:[#allocation2 + $0x348] sm:$0xff] %v1684
      %1813 = vst [vmem:[#allocation2 + $0x350] sm:$0xff] %v1685
      %1814 = vst [vmem:[#allocation2 + $0x358] sm:$0xff] %v1686
      %1815 = vst [vmem:[#allocation2 + $0x360] sm:$0xff] %v1687
      %1816 = vst [vmem:[#allocation2 + $0x368] sm:$0xff] %v1688
      %1817 = vst [vmem:[#allocation2 + $0x370] sm:$0xff] %v1689
      %1818 = vst [vmem:[#allocation2 + $0x378] sm:$0xff] %v1690
      %1819 = vst [vmem:[#allocation2 + $0x380] sm:$0xff] %v1691
      %1820 = vst [vmem:[#allocation2 + $0x388] sm:$0xff] %v1692
      %1821 = vst [vmem:[#allocation2 + $0x390] sm:$0xff] %v1693
      %1822 = vst [vmem:[#allocation2 + $0x398] sm:$0xff] %v1694
      %1823 = vst [vmem:[#allocation2 + $0x3a0] sm:$0xff] %v1695
      %1824 = vst [vmem:[#allocation2 + $0x3a8] sm:$0xff] %v1696
      %1825 = vst [vmem:[#allocation2 + $0x3b0] sm:$0xff] %v1697
      %1826 = vst [vmem:[#allocation2 + $0x3b8] sm:$0xff] %v1698
      %1827 = vst [vmem:[#allocation2 + $0x3c0] sm:$0xff] %v1699
      %1828 = vst [vmem:[#allocation2 + $0x3c8] sm:$0xff] %v1700
      %1829 = vst [vmem:[#allocation2 + $0x3d0] sm:$0xff] %v1701
      %1830 = vst [vmem:[#allocation2 + $0x3d8] sm:$0xff] %v1702
      %1831 = vst [vmem:[#allocation2 + $0x3e0] sm:$0xff] %v1703
      %1832 = vst [vmem:[#allocation2 + $0x3e8] sm:$0xff] %v1704
      %1833 = vst [vmem:[#allocation2 + $0x3f0] sm:$0xff] %v1705
      %1834 = vst [vmem:[#allocation2 + $0x3f8] sm:$0xff] %v1706
      // Predicated region
      $region37: #{discriminator512_forward.10} parent=31 // pred_check
        %p1835 = pneg %p198
      $region38: #{discriminator512_forward.10} parent=31 // pred_check_branch
        %1837 = sbr.rel (%p1835) target = $region40
      $region39: #{discriminator512_forward.10} parent=31 // pred_region
        %v1838 = vld [vmem:[#allocation2] sm:$0xff]
        %v1839 = vld [vmem:[#allocation2 + $0x8] sm:$0xff]
        %v1840 = vld [vmem:[#allocation2 + $0x10] sm:$0xff]
        %v1841 = vld [vmem:[#allocation2 + $0x18] sm:$0xff]
        %v1842 = vld [vmem:[#allocation2 + $0x20] sm:$0xff]
        %v1843 = vld [vmem:[#allocation2 + $0x28] sm:$0xff]
        %v1844 = vld [vmem:[#allocation2 + $0x30] sm:$0xff]
        %v1845 = vld [vmem:[#allocation2 + $0x38] sm:$0xff]
        %v1846 = vld [vmem:[#allocation2 + $0x40] sm:$0xff]
        %v1847 = vld [vmem:[#allocation2 + $0x48] sm:$0xff]
        %v1848 = vld [vmem:[#allocation2 + $0x50] sm:$0xff]
        %v1849 = vld [vmem:[#allocation2 + $0x58] sm:$0xff]
        %v1850 = vld [vmem:[#allocation2 + $0x60] sm:$0xff]
        %v1851 = vld [vmem:[#allocation2 + $0x68] sm:$0xff]
        %v1852 = vld [vmem:[#allocation2 + $0x70] sm:$0xff]
        %v1853 = vld [vmem:[#allocation2 + $0x78] sm:$0xff]
        %v1854 = vld [vmem:[#allocation2 + $0x80] sm:$0xff]
        %v1855 = vld [vmem:[#allocation2 + $0x88] sm:$0xff]
        %v1856 = vld [vmem:[#allocation2 + $0x90] sm:$0xff]
        %v1857 = vld [vmem:[#allocation2 + $0x98] sm:$0xff]
        %v1858 = vld [vmem:[#allocation2 + $0xa0] sm:$0xff]
        %v1859 = vld [vmem:[#allocation2 + $0xa8] sm:$0xff]
        %v1860 = vld [vmem:[#allocation2 + $0xb0] sm:$0xff]
        %v1861 = vld [vmem:[#allocation2 + $0xb8] sm:$0xff]
        %v1862 = vld [vmem:[#allocation2 + $0xc0] sm:$0xff]
        %v1863 = vld [vmem:[#allocation2 + $0xc8] sm:$0xff]
        %v1864 = vld [vmem:[#allocation2 + $0xd0] sm:$0xff]
        %v1865 = vld [vmem:[#allocation2 + $0xd8] sm:$0xff]
        %v1866 = vld [vmem:[#allocation2 + $0xe0] sm:$0xff]
        %v1867 = vld [vmem:[#allocation2 + $0xe8] sm:$0xff]
        %v1868 = vld [vmem:[#allocation2 + $0xf0] sm:$0xff]
        %v1869 = vld [vmem:[#allocation2 + $0xf8] sm:$0xff]
        %v1870 = vld [vmem:[#allocation2 + $0x100] sm:$0xff]
        %v1871 = vld [vmem:[#allocation2 + $0x108] sm:$0xff]
        %v1872 = vld [vmem:[#allocation2 + $0x110] sm:$0xff]
        %v1873 = vld [vmem:[#allocation2 + $0x118] sm:$0xff]
        %v1874 = vld [vmem:[#allocation2 + $0x120] sm:$0xff]
        %v1875 = vld [vmem:[#allocation2 + $0x128] sm:$0xff]
        %v1876 = vld [vmem:[#allocation2 + $0x130] sm:$0xff]
        %v1877 = vld [vmem:[#allocation2 + $0x138] sm:$0xff]
        %v1878 = vld [vmem:[#allocation2 + $0x140] sm:$0xff]
        %v1879 = vld [vmem:[#allocation2 + $0x148] sm:$0xff]
        %v1880 = vld [vmem:[#allocation2 + $0x150] sm:$0xff]
        %v1881 = vld [vmem:[#allocation2 + $0x158] sm:$0xff]
        %v1882 = vld [vmem:[#allocation2 + $0x160] sm:$0xff]
        %v1883 = vld [vmem:[#allocation2 + $0x168] sm:$0xff]
        %v1884 = vld [vmem:[#allocation2 + $0x170] sm:$0xff]
        %v1885 = vld [vmem:[#allocation2 + $0x178] sm:$0xff]
        %v1886 = vld [vmem:[#allocation2 + $0x180] sm:$0xff]
        %v1887 = vld [vmem:[#allocation2 + $0x188] sm:$0xff]
        %v1888 = vld [vmem:[#allocation2 + $0x190] sm:$0xff]
        %v1889 = vld [vmem:[#allocation2 + $0x198] sm:$0xff]
        %v1890 = vld [vmem:[#allocation2 + $0x1a0] sm:$0xff]
        %v1891 = vld [vmem:[#allocation2 + $0x1a8] sm:$0xff]
        %v1892 = vld [vmem:[#allocation2 + $0x1b0] sm:$0xff]
        %v1893 = vld [vmem:[#allocation2 + $0x1b8] sm:$0xff]
        %v1894 = vld [vmem:[#allocation2 + $0x1c0] sm:$0xff]
        %v1895 = vld [vmem:[#allocation2 + $0x1c8] sm:$0xff]
        %v1896 = vld [vmem:[#allocation2 + $0x1d0] sm:$0xff]
        %v1897 = vld [vmem:[#allocation2 + $0x1d8] sm:$0xff]
        %v1898 = vld [vmem:[#allocation2 + $0x1e0] sm:$0xff]
        %v1899 = vld [vmem:[#allocation2 + $0x1e8] sm:$0xff]
        %v1900 = vld [vmem:[#allocation2 + $0x1f0] sm:$0xff]
        %v1901 = vld [vmem:[#allocation2 + $0x1f8] sm:$0xff]
        %v1902 = vld [vmem:[#allocation2 + $0x200] sm:$0xff]
        %v1903 = vld [vmem:[#allocation2 + $0x208] sm:$0xff]
        %v1904 = vld [vmem:[#allocation2 + $0x210] sm:$0xff]
        %v1905 = vld [vmem:[#allocation2 + $0x218] sm:$0xff]
        %v1906 = vld [vmem:[#allocation2 + $0x220] sm:$0xff]
        %v1907 = vld [vmem:[#allocation2 + $0x228] sm:$0xff]
        %v1908 = vld [vmem:[#allocation2 + $0x230] sm:$0xff]
        %v1909 = vld [vmem:[#allocation2 + $0x238] sm:$0xff]
        %v1910 = vld [vmem:[#allocation2 + $0x240] sm:$0xff]
        %v1911 = vld [vmem:[#allocation2 + $0x248] sm:$0xff]
        %v1912 = vld [vmem:[#allocation2 + $0x250] sm:$0xff]
        %v1913 = vld [vmem:[#allocation2 + $0x258] sm:$0xff]
        %v1914 = vld [vmem:[#allocation2 + $0x260] sm:$0xff]
        %v1915 = vld [vmem:[#allocation2 + $0x268] sm:$0xff]
        %v1916 = vld [vmem:[#allocation2 + $0x270] sm:$0xff]
        %v1917 = vld [vmem:[#allocation2 + $0x278] sm:$0xff]
        %v1918 = vld [vmem:[#allocation2 + $0x280] sm:$0xff]
        %v1919 = vld [vmem:[#allocation2 + $0x288] sm:$0xff]
        %v1920 = vld [vmem:[#allocation2 + $0x290] sm:$0xff]
        %v1921 = vld [vmem:[#allocation2 + $0x298] sm:$0xff]
        %v1922 = vld [vmem:[#allocation2 + $0x2a0] sm:$0xff]
        %v1923 = vld [vmem:[#allocation2 + $0x2a8] sm:$0xff]
        %v1924 = vld [vmem:[#allocation2 + $0x2b0] sm:$0xff]
        %v1925 = vld [vmem:[#allocation2 + $0x2b8] sm:$0xff]
        %v1926 = vld [vmem:[#allocation2 + $0x2c0] sm:$0xff]
        %v1927 = vld [vmem:[#allocation2 + $0x2c8] sm:$0xff]
        %v1928 = vld [vmem:[#allocation2 + $0x2d0] sm:$0xff]
        %v1929 = vld [vmem:[#allocation2 + $0x2d8] sm:$0xff]
        %v1930 = vld [vmem:[#allocation2 + $0x2e0] sm:$0xff]
        %v1931 = vld [vmem:[#allocation2 + $0x2e8] sm:$0xff]
        %v1932 = vld [vmem:[#allocation2 + $0x2f0] sm:$0xff]
        %v1933 = vld [vmem:[#allocation2 + $0x2f8] sm:$0xff]
        %v1934 = vld [vmem:[#allocation2 + $0x300] sm:$0xff]
        %v1935 = vld [vmem:[#allocation2 + $0x308] sm:$0xff]
        %v1936 = vld [vmem:[#allocation2 + $0x310] sm:$0xff]
        %v1937 = vld [vmem:[#allocation2 + $0x318] sm:$0xff]
        %v1938 = vld [vmem:[#allocation2 + $0x320] sm:$0xff]
        %v1939 = vld [vmem:[#allocation2 + $0x328] sm:$0xff]
        %v1940 = vld [vmem:[#allocation2 + $0x330] sm:$0xff]
        %v1941 = vld [vmem:[#allocation2 + $0x338] sm:$0xff]
        %v1942 = vld [vmem:[#allocation2 + $0x340] sm:$0xff]
        %v1943 = vld [vmem:[#allocation2 + $0x348] sm:$0xff]
        %v1944 = vld [vmem:[#allocation2 + $0x350] sm:$0xff]
        %v1945 = vld [vmem:[#allocation2 + $0x358] sm:$0xff]
        %v1946 = vld [vmem:[#allocation2 + $0x360] sm:$0xff]
        %v1947 = vld [vmem:[#allocation2 + $0x368] sm:$0xff]
        %v1948 = vld [vmem:[#allocation2 + $0x370] sm:$0xff]
        %v1949 = vld [vmem:[#allocation2 + $0x378] sm:$0xff]
        %v1950 = vld [vmem:[#allocation2 + $0x380] sm:$0xff]
        %v1951 = vld [vmem:[#allocation2 + $0x388] sm:$0xff]
        %v1952 = vld [vmem:[#allocation2 + $0x390] sm:$0xff]
        %v1953 = vld [vmem:[#allocation2 + $0x398] sm:$0xff]
        %v1954 = vld [vmem:[#allocation2 + $0x3a0] sm:$0xff]
        %v1955 = vld [vmem:[#allocation2 + $0x3a8] sm:$0xff]
        %v1956 = vld [vmem:[#allocation2 + $0x3b0] sm:$0xff]
        %v1957 = vld [vmem:[#allocation2 + $0x3b8] sm:$0xff]
        %v1958 = vld [vmem:[#allocation2 + $0x3c0] sm:$0xff]
        %v1959 = vld [vmem:[#allocation2 + $0x3c8] sm:$0xff]
        %v1960 = vld [vmem:[#allocation2 + $0x3d0] sm:$0xff]
        %v1961 = vld [vmem:[#allocation2 + $0x3d8] sm:$0xff]
        %v1962 = vld [vmem:[#allocation2 + $0x3e0] sm:$0xff]
        %v1963 = vld [vmem:[#allocation2 + $0x3e8] sm:$0xff]
        %v1964 = vld [vmem:[#allocation2 + $0x3f0] sm:$0xff]
        %v1965 = vld [vmem:[#allocation2 + $0x3f8] sm:$0xff]
        %v1966 = vld [vmem:[%s2] sm:$0x1]
        %v1968 = vlaneseq
        %v1969 = vshrl.u32 %v1968, 7
        %v1970 = vsub.s32 0, %v1969
        %v1971 = vrot.slane %v1966, %v1970
        %v1973 = vadd.f32 %v1838, %v1971
        %v1974 = vadd.f32 %v1839, %v1971
        %v1975 = vadd.f32 %v1840, %v1971
        %v1976 = vadd.f32 %v1841, %v1971
        %v1977 = vadd.f32 %v1842, %v1971
        %v1978 = vadd.f32 %v1843, %v1971
        %v1979 = vadd.f32 %v1844, %v1971
        %v1980 = vadd.f32 %v1845, %v1971
        %v1981 = vadd.f32 %v1846, %v1971
        %v1982 = vadd.f32 %v1847, %v1971
        %v1983 = vadd.f32 %v1848, %v1971
        %v1984 = vadd.f32 %v1849, %v1971
        %v1985 = vadd.f32 %v1850, %v1971
        %v1986 = vadd.f32 %v1851, %v1971
        %v1987 = vadd.f32 %v1852, %v1971
        %v1988 = vadd.f32 %v1853, %v1971
        %v1989 = vadd.f32 %v1854, %v1971
        %v1990 = vadd.f32 %v1855, %v1971
        %v1991 = vadd.f32 %v1856, %v1971
        %v1992 = vadd.f32 %v1857, %v1971
        %v1993 = vadd.f32 %v1858, %v1971
        %v1994 = vadd.f32 %v1859, %v1971
        %v1995 = vadd.f32 %v1860, %v1971
        %v1996 = vadd.f32 %v1861, %v1971
        %v1997 = vadd.f32 %v1862, %v1971
        %v1998 = vadd.f32 %v1863, %v1971
        %v1999 = vadd.f32 %v1864, %v1971
        %v2000 = vadd.f32 %v1865, %v1971
        %v2001 = vadd.f32 %v1866, %v1971
        %v2002 = vadd.f32 %v1867, %v1971
        %v2003 = vadd.f32 %v1868, %v1971
        %v2004 = vadd.f32 %v1869, %v1971
        %v2005 = vadd.f32 %v1870, %v1971
        %v2006 = vadd.f32 %v1871, %v1971
        %v2007 = vadd.f32 %v1872, %v1971
        %v2008 = vadd.f32 %v1873, %v1971
        %v2009 = vadd.f32 %v1874, %v1971
        %v2010 = vadd.f32 %v1875, %v1971
        %v2011 = vadd.f32 %v1876, %v1971
        %v2012 = vadd.f32 %v1877, %v1971
        %v2013 = vadd.f32 %v1878, %v1971
        %v2014 = vadd.f32 %v1879, %v1971
        %v2015 = vadd.f32 %v1880, %v1971
        %v2016 = vadd.f32 %v1881, %v1971
        %v2017 = vadd.f32 %v1882, %v1971
        %v2018 = vadd.f32 %v1883, %v1971
        %v2019 = vadd.f32 %v1884, %v1971
        %v2020 = vadd.f32 %v1885, %v1971
        %v2021 = vadd.f32 %v1886, %v1971
        %v2022 = vadd.f32 %v1887, %v1971
        %v2023 = vadd.f32 %v1888, %v1971
        %v2024 = vadd.f32 %v1889, %v1971
        %v2025 = vadd.f32 %v1890, %v1971
        %v2026 = vadd.f32 %v1891, %v1971
        %v2027 = vadd.f32 %v1892, %v1971
        %v2028 = vadd.f32 %v1893, %v1971
        %v2029 = vadd.f32 %v1894, %v1971
        %v2030 = vadd.f32 %v1895, %v1971
        %v2031 = vadd.f32 %v1896, %v1971
        %v2032 = vadd.f32 %v1897, %v1971
        %v2033 = vadd.f32 %v1898, %v1971
        %v2034 = vadd.f32 %v1899, %v1971
        %v2035 = vadd.f32 %v1900, %v1971
        %v2036 = vadd.f32 %v1901, %v1971
        %v2037 = vadd.f32 %v1902, %v1971
        %v2038 = vadd.f32 %v1903, %v1971
        %v2039 = vadd.f32 %v1904, %v1971
        %v2040 = vadd.f32 %v1905, %v1971
        %v2041 = vadd.f32 %v1906, %v1971
        %v2042 = vadd.f32 %v1907, %v1971
        %v2043 = vadd.f32 %v1908, %v1971
        %v2044 = vadd.f32 %v1909, %v1971
        %v2045 = vadd.f32 %v1910, %v1971
        %v2046 = vadd.f32 %v1911, %v1971
        %v2047 = vadd.f32 %v1912, %v1971
        %v2048 = vadd.f32 %v1913, %v1971
        %v2049 = vadd.f32 %v1914, %v1971
        %v2050 = vadd.f32 %v1915, %v1971
        %v2051 = vadd.f32 %v1916, %v1971
        %v2052 = vadd.f32 %v1917, %v1971
        %v2053 = vadd.f32 %v1918, %v1971
        %v2054 = vadd.f32 %v1919, %v1971
        %v2055 = vadd.f32 %v1920, %v1971
        %v2056 = vadd.f32 %v1921, %v1971
        %v2057 = vadd.f32 %v1922, %v1971
        %v2058 = vadd.f32 %v1923, %v1971
        %v2059 = vadd.f32 %v1924, %v1971
        %v2060 = vadd.f32 %v1925, %v1971
        %v2061 = vadd.f32 %v1926, %v1971
        %v2062 = vadd.f32 %v1927, %v1971
        %v2063 = vadd.f32 %v1928, %v1971
        %v2064 = vadd.f32 %v1929, %v1971
        %v2065 = vadd.f32 %v1930, %v1971
        %v2066 = vadd.f32 %v1931, %v1971
        %v2067 = vadd.f32 %v1932, %v1971
        %v2068 = vadd.f32 %v1933, %v1971
        %v2069 = vadd.f32 %v1934, %v1971
        %v2070 = vadd.f32 %v1935, %v1971
        %v2071 = vadd.f32 %v1936, %v1971
        %v2072 = vadd.f32 %v1937, %v1971
        %v2073 = vadd.f32 %v1938, %v1971
        %v2074 = vadd.f32 %v1939, %v1971
        %v2075 = vadd.f32 %v1940, %v1971
        %v2076 = vadd.f32 %v1941, %v1971
        %v2077 = vadd.f32 %v1942, %v1971
        %v2078 = vadd.f32 %v1943, %v1971
        %v2079 = vadd.f32 %v1944, %v1971
        %v2080 = vadd.f32 %v1945, %v1971
        %v2081 = vadd.f32 %v1946, %v1971
        %v2082 = vadd.f32 %v1947, %v1971
        %v2083 = vadd.f32 %v1948, %v1971
        %v2084 = vadd.f32 %v1949, %v1971
        %v2085 = vadd.f32 %v1950, %v1971
        %v2086 = vadd.f32 %v1951, %v1971
        %v2087 = vadd.f32 %v1952, %v1971
        %v2088 = vadd.f32 %v1953, %v1971
        %v2089 = vadd.f32 %v1954, %v1971
        %v2090 = vadd.f32 %v1955, %v1971
        %v2091 = vadd.f32 %v1956, %v1971
        %v2092 = vadd.f32 %v1957, %v1971
        %v2093 = vadd.f32 %v1958, %v1971
        %v2094 = vadd.f32 %v1959, %v1971
        %v2095 = vadd.f32 %v1960, %v1971
        %v2096 = vadd.f32 %v1961, %v1971
        %v2097 = vadd.f32 %v1962, %v1971
        %v2098 = vadd.f32 %v1963, %v1971
        %v2099 = vadd.f32 %v1964, %v1971
        %v2100 = vadd.f32 %v1965, %v1971
        %vm2101 = vcmp.gt.f32.partialorder %v1973, 0.0
        %vm2102 = vcmp.gt.f32.partialorder %v1974, 0.0
        %vm2103 = vcmp.gt.f32.partialorder %v1975, 0.0
        %vm2104 = vcmp.gt.f32.partialorder %v1976, 0.0
        %vm2105 = vcmp.gt.f32.partialorder %v1977, 0.0
        %vm2106 = vcmp.gt.f32.partialorder %v1978, 0.0
        %vm2107 = vcmp.gt.f32.partialorder %v1979, 0.0
        %vm2108 = vcmp.gt.f32.partialorder %v1980, 0.0
        %vm2109 = vcmp.gt.f32.partialorder %v1981, 0.0
        %vm2110 = vcmp.gt.f32.partialorder %v1982, 0.0
        %vm2111 = vcmp.gt.f32.partialorder %v1983, 0.0
        %vm2112 = vcmp.gt.f32.partialorder %v1984, 0.0
        %vm2113 = vcmp.gt.f32.partialorder %v1985, 0.0
        %vm2114 = vcmp.gt.f32.partialorder %v1986, 0.0
        %vm2115 = vcmp.gt.f32.partialorder %v1987, 0.0
        %vm2116 = vcmp.gt.f32.partialorder %v1988, 0.0
        %vm2117 = vcmp.gt.f32.partialorder %v1989, 0.0
        %vm2118 = vcmp.gt.f32.partialorder %v1990, 0.0
        %vm2119 = vcmp.gt.f32.partialorder %v1991, 0.0
        %vm2120 = vcmp.gt.f32.partialorder %v1992, 0.0
        %vm2121 = vcmp.gt.f32.partialorder %v1993, 0.0
        %vm2122 = vcmp.gt.f32.partialorder %v1994, 0.0
        %vm2123 = vcmp.gt.f32.partialorder %v1995, 0.0
        %vm2124 = vcmp.gt.f32.partialorder %v1996, 0.0
        %vm2125 = vcmp.gt.f32.partialorder %v1997, 0.0
        %vm2126 = vcmp.gt.f32.partialorder %v1998, 0.0
        %vm2127 = vcmp.gt.f32.partialorder %v1999, 0.0
        %vm2128 = vcmp.gt.f32.partialorder %v2000, 0.0
        %vm2129 = vcmp.gt.f32.partialorder %v2001, 0.0
        %vm2130 = vcmp.gt.f32.partialorder %v2002, 0.0
        %vm2131 = vcmp.gt.f32.partialorder %v2003, 0.0
        %vm2132 = vcmp.gt.f32.partialorder %v2004, 0.0
        %vm2133 = vcmp.gt.f32.partialorder %v2005, 0.0
        %vm2134 = vcmp.gt.f32.partialorder %v2006, 0.0
        %vm2135 = vcmp.gt.f32.partialorder %v2007, 0.0
        %vm2136 = vcmp.gt.f32.partialorder %v2008, 0.0
        %vm2137 = vcmp.gt.f32.partialorder %v2009, 0.0
        %vm2138 = vcmp.gt.f32.partialorder %v2010, 0.0
        %vm2139 = vcmp.gt.f32.partialorder %v2011, 0.0
        %vm2140 = vcmp.gt.f32.partialorder %v2012, 0.0
        %vm2141 = vcmp.gt.f32.partialorder %v2013, 0.0
        %vm2142 = vcmp.gt.f32.partialorder %v2014, 0.0
        %vm2143 = vcmp.gt.f32.partialorder %v2015, 0.0
        %vm2144 = vcmp.gt.f32.partialorder %v2016, 0.0
        %vm2145 = vcmp.gt.f32.partialorder %v2017, 0.0
        %vm2146 = vcmp.gt.f32.partialorder %v2018, 0.0
        %vm2147 = vcmp.gt.f32.partialorder %v2019, 0.0
        %vm2148 = vcmp.gt.f32.partialorder %v2020, 0.0
        %vm2149 = vcmp.gt.f32.partialorder %v2021, 0.0
        %vm2150 = vcmp.gt.f32.partialorder %v2022, 0.0
        %vm2151 = vcmp.gt.f32.partialorder %v2023, 0.0
        %vm2152 = vcmp.gt.f32.partialorder %v2024, 0.0
        %vm2153 = vcmp.gt.f32.partialorder %v2025, 0.0
        %vm2154 = vcmp.gt.f32.partialorder %v2026, 0.0
        %vm2155 = vcmp.gt.f32.partialorder %v2027, 0.0
        %vm2156 = vcmp.gt.f32.partialorder %v2028, 0.0
        %vm2157 = vcmp.gt.f32.partialorder %v2029, 0.0
        %vm2158 = vcmp.gt.f32.partialorder %v2030, 0.0
        %vm2159 = vcmp.gt.f32.partialorder %v2031, 0.0
        %vm2160 = vcmp.gt.f32.partialorder %v2032, 0.0
        %vm2161 = vcmp.gt.f32.partialorder %v2033, 0.0
        %vm2162 = vcmp.gt.f32.partialorder %v2034, 0.0
        %vm2163 = vcmp.gt.f32.partialorder %v2035, 0.0
        %vm2164 = vcmp.gt.f32.partialorder %v2036, 0.0
        %vm2165 = vcmp.gt.f32.partialorder %v2037, 0.0
        %vm2166 = vcmp.gt.f32.partialorder %v2038, 0.0
        %vm2167 = vcmp.gt.f32.partialorder %v2039, 0.0
        %vm2168 = vcmp.gt.f32.partialorder %v2040, 0.0
        %vm2169 = vcmp.gt.f32.partialorder %v2041, 0.0
        %vm2170 = vcmp.gt.f32.partialorder %v2042, 0.0
        %vm2171 = vcmp.gt.f32.partialorder %v2043, 0.0
        %vm2172 = vcmp.gt.f32.partialorder %v2044, 0.0
        %vm2173 = vcmp.gt.f32.partialorder %v2045, 0.0
        %vm2174 = vcmp.gt.f32.partialorder %v2046, 0.0
        %vm2175 = vcmp.gt.f32.partialorder %v2047, 0.0
        %vm2176 = vcmp.gt.f32.partialorder %v2048, 0.0
        %vm2177 = vcmp.gt.f32.partialorder %v2049, 0.0
        %vm2178 = vcmp.gt.f32.partialorder %v2050, 0.0
        %vm2179 = vcmp.gt.f32.partialorder %v2051, 0.0
        %vm2180 = vcmp.gt.f32.partialorder %v2052, 0.0
        %vm2181 = vcmp.gt.f32.partialorder %v2053, 0.0
        %vm2182 = vcmp.gt.f32.partialorder %v2054, 0.0
        %vm2183 = vcmp.gt.f32.partialorder %v2055, 0.0
        %vm2184 = vcmp.gt.f32.partialorder %v2056, 0.0
        %vm2185 = vcmp.gt.f32.partialorder %v2057, 0.0
        %vm2186 = vcmp.gt.f32.partialorder %v2058, 0.0
        %vm2187 = vcmp.gt.f32.partialorder %v2059, 0.0
        %vm2188 = vcmp.gt.f32.partialorder %v2060, 0.0
        %vm2189 = vcmp.gt.f32.partialorder %v2061, 0.0
        %vm2190 = vcmp.gt.f32.partialorder %v2062, 0.0
        %vm2191 = vcmp.gt.f32.partialorder %v2063, 0.0
        %vm2192 = vcmp.gt.f32.partialorder %v2064, 0.0
        %vm2193 = vcmp.gt.f32.partialorder %v2065, 0.0
        %vm2194 = vcmp.gt.f32.partialorder %v2066, 0.0
        %vm2195 = vcmp.gt.f32.partialorder %v2067, 0.0
        %vm2196 = vcmp.gt.f32.partialorder %v2068, 0.0
        %vm2197 = vcmp.gt.f32.partialorder %v2069, 0.0
        %vm2198 = vcmp.gt.f32.partialorder %v2070, 0.0
        %vm2199 = vcmp.gt.f32.partialorder %v2071, 0.0
        %vm2200 = vcmp.gt.f32.partialorder %v2072, 0.0
        %vm2201 = vcmp.gt.f32.partialorder %v2073, 0.0
        %vm2202 = vcmp.gt.f32.partialorder %v2074, 0.0
        %vm2203 = vcmp.gt.f32.partialorder %v2075, 0.0
        %vm2204 = vcmp.gt.f32.partialorder %v2076, 0.0
        %vm2205 = vcmp.gt.f32.partialorder %v2077, 0.0
        %vm2206 = vcmp.gt.f32.partialorder %v2078, 0.0
        %vm2207 = vcmp.gt.f32.partialorder %v2079, 0.0
        %vm2208 = vcmp.gt.f32.partialorder %v2080, 0.0
        %vm2209 = vcmp.gt.f32.partialorder %v2081, 0.0
        %vm2210 = vcmp.gt.f32.partialorder %v2082, 0.0
        %vm2211 = vcmp.gt.f32.partialorder %v2083, 0.0
        %vm2212 = vcmp.gt.f32.partialorder %v2084, 0.0
        %vm2213 = vcmp.gt.f32.partialorder %v2085, 0.0
        %vm2214 = vcmp.gt.f32.partialorder %v2086, 0.0
        %vm2215 = vcmp.gt.f32.partialorder %v2087, 0.0
        %vm2216 = vcmp.gt.f32.partialorder %v2088, 0.0
        %vm2217 = vcmp.gt.f32.partialorder %v2089, 0.0
        %vm2218 = vcmp.gt.f32.partialorder %v2090, 0.0
        %vm2219 = vcmp.gt.f32.partialorder %v2091, 0.0
        %vm2220 = vcmp.gt.f32.partialorder %v2092, 0.0
        %vm2221 = vcmp.gt.f32.partialorder %v2093, 0.0
        %vm2222 = vcmp.gt.f32.partialorder %v2094, 0.0
        %vm2223 = vcmp.gt.f32.partialorder %v2095, 0.0
        %vm2224 = vcmp.gt.f32.partialorder %v2096, 0.0
        %vm2225 = vcmp.gt.f32.partialorder %v2097, 0.0
        %vm2226 = vcmp.gt.f32.partialorder %v2098, 0.0
        %vm2227 = vcmp.gt.f32.partialorder %v2099, 0.0
        %vm2228 = vcmp.gt.f32.partialorder %v2100, 0.0
        %v2229 = vmul.f32 %v1973, 0.2
        %v2230 = vmul.f32 %v1974, 0.2
        %v2231 = vmul.f32 %v1975, 0.2
        %v2232 = vmul.f32 %v1976, 0.2
        %v2233 = vmul.f32 %v1977, 0.2
        %v2234 = vmul.f32 %v1978, 0.2
        %v2235 = vmul.f32 %v1979, 0.2
        %v2236 = vmul.f32 %v1980, 0.2
        %v2237 = vmul.f32 %v1981, 0.2
        %v2238 = vmul.f32 %v1982, 0.2
        %v2239 = vmul.f32 %v1983, 0.2
        %v2240 = vmul.f32 %v1984, 0.2
        %v2241 = vmul.f32 %v1985, 0.2
        %v2242 = vmul.f32 %v1986, 0.2
        %v2243 = vmul.f32 %v1987, 0.2
        %v2244 = vmul.f32 %v1988, 0.2
        %v2245 = vmul.f32 %v1989, 0.2
        %v2246 = vmul.f32 %v1990, 0.2
        %v2247 = vmul.f32 %v1991, 0.2
        %v2248 = vmul.f32 %v1992, 0.2
        %v2249 = vmul.f32 %v1993, 0.2
        %v2250 = vmul.f32 %v1994, 0.2
        %v2251 = vmul.f32 %v1995, 0.2
        %v2252 = vmul.f32 %v1996, 0.2
        %v2253 = vmul.f32 %v1997, 0.2
        %v2254 = vmul.f32 %v1998, 0.2
        %v2255 = vmul.f32 %v1999, 0.2
        %v2256 = vmul.f32 %v2000, 0.2
        %v2257 = vmul.f32 %v2001, 0.2
        %v2258 = vmul.f32 %v2002, 0.2
        %v2259 = vmul.f32 %v2003, 0.2
        %v2260 = vmul.f32 %v2004, 0.2
        %v2261 = vmul.f32 %v2005, 0.2
        %v2262 = vmul.f32 %v2006, 0.2
        %v2263 = vmul.f32 %v2007, 0.2
        %v2264 = vmul.f32 %v2008, 0.2
        %v2265 = vmul.f32 %v2009, 0.2
        %v2266 = vmul.f32 %v2010, 0.2
        %v2267 = vmul.f32 %v2011, 0.2
        %v2268 = vmul.f32 %v2012, 0.2
        %v2269 = vmul.f32 %v2013, 0.2
        %v2270 = vmul.f32 %v2014, 0.2
        %v2271 = vmul.f32 %v2015, 0.2
        %v2272 = vmul.f32 %v2016, 0.2
        %v2273 = vmul.f32 %v2017, 0.2
        %v2274 = vmul.f32 %v2018, 0.2
        %v2275 = vmul.f32 %v2019, 0.2
        %v2276 = vmul.f32 %v2020, 0.2
        %v2277 = vmul.f32 %v2021, 0.2
        %v2278 = vmul.f32 %v2022, 0.2
        %v2279 = vmul.f32 %v2023, 0.2
        %v2280 = vmul.f32 %v2024, 0.2
        %v2281 = vmul.f32 %v2025, 0.2
        %v2282 = vmul.f32 %v2026, 0.2
        %v2283 = vmul.f32 %v2027, 0.2
        %v2284 = vmul.f32 %v2028, 0.2
        %v2285 = vmul.f32 %v2029, 0.2
        %v2286 = vmul.f32 %v2030, 0.2
        %v2287 = vmul.f32 %v2031, 0.2
        %v2288 = vmul.f32 %v2032, 0.2
        %v2289 = vmul.f32 %v2033, 0.2
        %v2290 = vmul.f32 %v2034, 0.2
        %v2291 = vmul.f32 %v2035, 0.2
        %v2292 = vmul.f32 %v2036, 0.2
        %v2293 = vmul.f32 %v2037, 0.2
        %v2294 = vmul.f32 %v2038, 0.2
        %v2295 = vmul.f32 %v2039, 0.2
        %v2296 = vmul.f32 %v2040, 0.2
        %v2297 = vmul.f32 %v2041, 0.2
        %v2298 = vmul.f32 %v2042, 0.2
        %v2299 = vmul.f32 %v2043, 0.2
        %v2300 = vmul.f32 %v2044, 0.2
        %v2301 = vmul.f32 %v2045, 0.2
        %v2302 = vmul.f32 %v2046, 0.2
        %v2303 = vmul.f32 %v2047, 0.2
        %v2304 = vmul.f32 %v2048, 0.2
        %v2305 = vmul.f32 %v2049, 0.2
        %v2306 = vmul.f32 %v2050, 0.2
        %v2307 = vmul.f32 %v2051, 0.2
        %v2308 = vmul.f32 %v2052, 0.2
        %v2309 = vmul.f32 %v2053, 0.2
        %v2310 = vmul.f32 %v2054, 0.2
        %v2311 = vmul.f32 %v2055, 0.2
        %v2312 = vmul.f32 %v2056, 0.2
        %v2313 = vmul.f32 %v2057, 0.2
        %v2314 = vmul.f32 %v2058, 0.2
        %v2315 = vmul.f32 %v2059, 0.2
        %v2316 = vmul.f32 %v2060, 0.2
        %v2317 = vmul.f32 %v2061, 0.2
        %v2318 = vmul.f32 %v2062, 0.2
        %v2319 = vmul.f32 %v2063, 0.2
        %v2320 = vmul.f32 %v2064, 0.2
        %v2321 = vmul.f32 %v2065, 0.2
        %v2322 = vmul.f32 %v2066, 0.2
        %v2323 = vmul.f32 %v2067, 0.2
        %v2324 = vmul.f32 %v2068, 0.2
        %v2325 = vmul.f32 %v2069, 0.2
        %v2326 = vmul.f32 %v2070, 0.2
        %v2327 = vmul.f32 %v2071, 0.2
        %v2328 = vmul.f32 %v2072, 0.2
        %v2329 = vmul.f32 %v2073, 0.2
        %v2330 = vmul.f32 %v2074, 0.2
        %v2331 = vmul.f32 %v2075, 0.2
        %v2332 = vmul.f32 %v2076, 0.2
        %v2333 = vmul.f32 %v2077, 0.2
        %v2334 = vmul.f32 %v2078, 0.2
        %v2335 = vmul.f32 %v2079, 0.2
        %v2336 = vmul.f32 %v2080, 0.2
        %v2337 = vmul.f32 %v2081, 0.2
        %v2338 = vmul.f32 %v2082, 0.2
        %v2339 = vmul.f32 %v2083, 0.2
        %v2340 = vmul.f32 %v2084, 0.2
        %v2341 = vmul.f32 %v2085, 0.2
        %v2342 = vmul.f32 %v2086, 0.2
        %v2343 = vmul.f32 %v2087, 0.2
        %v2344 = vmul.f32 %v2088, 0.2
        %v2345 = vmul.f32 %v2089, 0.2
        %v2346 = vmul.f32 %v2090, 0.2
        %v2347 = vmul.f32 %v2091, 0.2
        %v2348 = vmul.f32 %v2092, 0.2
        %v2349 = vmul.f32 %v2093, 0.2
        %v2350 = vmul.f32 %v2094, 0.2
        %v2351 = vmul.f32 %v2095, 0.2
        %v2352 = vmul.f32 %v2096, 0.2
        %v2353 = vmul.f32 %v2097, 0.2
        %v2354 = vmul.f32 %v2098, 0.2
        %v2355 = vmul.f32 %v2099, 0.2
        %v2356 = vmul.f32 %v2100, 0.2
        %v2357 = vsel %vm2101, %v1973, %v2229
        %v2358 = vsel %vm2102, %v1974, %v2230
        %v2359 = vsel %vm2103, %v1975, %v2231
        %v2360 = vsel %vm2104, %v1976, %v2232
        %v2361 = vsel %vm2105, %v1977, %v2233
        %v2362 = vsel %vm2106, %v1978, %v2234
        %v2363 = vsel %vm2107, %v1979, %v2235
        %v2364 = vsel %vm2108, %v1980, %v2236
        %v2365 = vsel %vm2109, %v1981, %v2237
        %v2366 = vsel %vm2110, %v1982, %v2238
        %v2367 = vsel %vm2111, %v1983, %v2239
        %v2368 = vsel %vm2112, %v1984, %v2240
        %v2369 = vsel %vm2113, %v1985, %v2241
        %v2370 = vsel %vm2114, %v1986, %v2242
        %v2371 = vsel %vm2115, %v1987, %v2243
        %v2372 = vsel %vm2116, %v1988, %v2244
        %v2373 = vsel %vm2117, %v1989, %v2245
        %v2374 = vsel %vm2118, %v1990, %v2246
        %v2375 = vsel %vm2119, %v1991, %v2247
        %v2376 = vsel %vm2120, %v1992, %v2248
        %v2377 = vsel %vm2121, %v1993, %v2249
        %v2378 = vsel %vm2122, %v1994, %v2250
        %v2379 = vsel %vm2123, %v1995, %v2251
        %v2380 = vsel %vm2124, %v1996, %v2252
        %v2381 = vsel %vm2125, %v1997, %v2253
        %v2382 = vsel %vm2126, %v1998, %v2254
        %v2383 = vsel %vm2127, %v1999, %v2255
        %v2384 = vsel %vm2128, %v2000, %v2256
        %v2385 = vsel %vm2129, %v2001, %v2257
        %v2386 = vsel %vm2130, %v2002, %v2258
        %v2387 = vsel %vm2131, %v2003, %v2259
        %v2388 = vsel %vm2132, %v2004, %v2260
        %v2389 = vsel %vm2133, %v2005, %v2261
        %v2390 = vsel %vm2134, %v2006, %v2262
        %v2391 = vsel %vm2135, %v2007, %v2263
        %v2392 = vsel %vm2136, %v2008, %v2264
        %v2393 = vsel %vm2137, %v2009, %v2265
        %v2394 = vsel %vm2138, %v2010, %v2266
        %v2395 = vsel %vm2139, %v2011, %v2267
        %v2396 = vsel %vm2140, %v2012, %v2268
        %v2397 = vsel %vm2141, %v2013, %v2269
        %v2398 = vsel %vm2142, %v2014, %v2270
        %v2399 = vsel %vm2143, %v2015, %v2271
        %v2400 = vsel %vm2144, %v2016, %v2272
        %v2401 = vsel %vm2145, %v2017, %v2273
        %v2402 = vsel %vm2146, %v2018, %v2274
        %v2403 = vsel %vm2147, %v2019, %v2275
        %v2404 = vsel %vm2148, %v2020, %v2276
        %v2405 = vsel %vm2149, %v2021, %v2277
        %v2406 = vsel %vm2150, %v2022, %v2278
        %v2407 = vsel %vm2151, %v2023, %v2279
        %v2408 = vsel %vm2152, %v2024, %v2280
        %v2409 = vsel %vm2153, %v2025, %v2281
        %v2410 = vsel %vm2154, %v2026, %v2282
        %v2411 = vsel %vm2155, %v2027, %v2283
        %v2412 = vsel %vm2156, %v2028, %v2284
        %v2413 = vsel %vm2157, %v2029, %v2285
        %v2414 = vsel %vm2158, %v2030, %v2286
        %v2415 = vsel %vm2159, %v2031, %v2287
        %v2416 = vsel %vm2160, %v2032, %v2288
        %v2417 = vsel %vm2161, %v2033, %v2289
        %v2418 = vsel %vm2162, %v2034, %v2290
        %v2419 = vsel %vm2163, %v2035, %v2291
        %v2420 = vsel %vm2164, %v2036, %v2292
        %v2421 = vsel %vm2165, %v2037, %v2293
        %v2422 = vsel %vm2166, %v2038, %v2294
        %v2423 = vsel %vm2167, %v2039, %v2295
        %v2424 = vsel %vm2168, %v2040, %v2296
        %v2425 = vsel %vm2169, %v2041, %v2297
        %v2426 = vsel %vm2170, %v2042, %v2298
        %v2427 = vsel %vm2171, %v2043, %v2299
        %v2428 = vsel %vm2172, %v2044, %v2300
        %v2429 = vsel %vm2173, %v2045, %v2301
        %v2430 = vsel %vm2174, %v2046, %v2302
        %v2431 = vsel %vm2175, %v2047, %v2303
        %v2432 = vsel %vm2176, %v2048, %v2304
        %v2433 = vsel %vm2177, %v2049, %v2305
        %v2434 = vsel %vm2178, %v2050, %v2306
        %v2435 = vsel %vm2179, %v2051, %v2307
        %v2436 = vsel %vm2180, %v2052, %v2308
        %v2437 = vsel %vm2181, %v2053, %v2309
        %v2438 = vsel %vm2182, %v2054, %v2310
        %v2439 = vsel %vm2183, %v2055, %v2311
        %v2440 = vsel %vm2184, %v2056, %v2312
        %v2441 = vsel %vm2185, %v2057, %v2313
        %v2442 = vsel %vm2186, %v2058, %v2314
        %v2443 = vsel %vm2187, %v2059, %v2315
        %v2444 = vsel %vm2188, %v2060, %v2316
        %v2445 = vsel %vm2189, %v2061, %v2317
        %v2446 = vsel %vm2190, %v2062, %v2318
        %v2447 = vsel %vm2191, %v2063, %v2319
        %v2448 = vsel %vm2192, %v2064, %v2320
        %v2449 = vsel %vm2193, %v2065, %v2321
        %v2450 = vsel %vm2194, %v2066, %v2322
        %v2451 = vsel %vm2195, %v2067, %v2323
        %v2452 = vsel %vm2196, %v2068, %v2324
        %v2453 = vsel %vm2197, %v2069, %v2325
        %v2454 = vsel %vm2198, %v2070, %v2326
        %v2455 = vsel %vm2199, %v2071, %v2327
        %v2456 = vsel %vm2200, %v2072, %v2328
        %v2457 = vsel %vm2201, %v2073, %v2329
        %v2458 = vsel %vm2202, %v2074, %v2330
        %v2459 = vsel %vm2203, %v2075, %v2331
        %v2460 = vsel %vm2204, %v2076, %v2332
        %v2461 = vsel %vm2205, %v2077, %v2333
        %v2462 = vsel %vm2206, %v2078, %v2334
        %v2463 = vsel %vm2207, %v2079, %v2335
        %v2464 = vsel %vm2208, %v2080, %v2336
        %v2465 = vsel %vm2209, %v2081, %v2337
        %v2466 = vsel %vm2210, %v2082, %v2338
        %v2467 = vsel %vm2211, %v2083, %v2339
        %v2468 = vsel %vm2212, %v2084, %v2340
        %v2469 = vsel %vm2213, %v2085, %v2341
        %v2470 = vsel %vm2214, %v2086, %v2342
        %v2471 = vsel %vm2215, %v2087, %v2343
        %v2472 = vsel %vm2216, %v2088, %v2344
        %v2473 = vsel %vm2217, %v2089, %v2345
        %v2474 = vsel %vm2218, %v2090, %v2346
        %v2475 = vsel %vm2219, %v2091, %v2347
        %v2476 = vsel %vm2220, %v2092, %v2348
        %v2477 = vsel %vm2221, %v2093, %v2349
        %v2478 = vsel %vm2222, %v2094, %v2350
        %v2479 = vsel %vm2223, %v2095, %v2351
        %v2480 = vsel %vm2224, %v2096, %v2352
        %v2481 = vsel %vm2225, %v2097, %v2353
        %v2482 = vsel %vm2226, %v2098, %v2354
        %v2483 = vsel %vm2227, %v2099, %v2355
        %v2484 = vsel %vm2228, %v2100, %v2356
        %v2485 = vpack.c.bf16 %v2358, %v2357
        %v2486 = vpack.c.bf16 %v2360, %v2359
        %v2487 = vpack.c.bf16 %v2362, %v2361
        %v2488 = vpack.c.bf16 %v2364, %v2363
        %v2489 = vpack.c.bf16 %v2366, %v2365
        %v2490 = vpack.c.bf16 %v2368, %v2367
        %v2491 = vpack.c.bf16 %v2370, %v2369
        %v2492 = vpack.c.bf16 %v2372, %v2371
        %v2493 = vpack.c.bf16 %v2374, %v2373
        %v2494 = vpack.c.bf16 %v2376, %v2375
        %v2495 = vpack.c.bf16 %v2378, %v2377
        %v2496 = vpack.c.bf16 %v2380, %v2379
        %v2497 = vpack.c.bf16 %v2382, %v2381
        %v2498 = vpack.c.bf16 %v2384, %v2383
        %v2499 = vpack.c.bf16 %v2386, %v2385
        %v2500 = vpack.c.bf16 %v2388, %v2387
        %v2501 = vpack.c.bf16 %v2390, %v2389
        %v2502 = vpack.c.bf16 %v2392, %v2391
        %v2503 = vpack.c.bf16 %v2394, %v2393
        %v2504 = vpack.c.bf16 %v2396, %v2395
        %v2505 = vpack.c.bf16 %v2398, %v2397
        %v2506 = vpack.c.bf16 %v2400, %v2399
        %v2507 = vpack.c.bf16 %v2402, %v2401
        %v2508 = vpack.c.bf16 %v2404, %v2403
        %v2509 = vpack.c.bf16 %v2406, %v2405
        %v2510 = vpack.c.bf16 %v2408, %v2407
        %v2511 = vpack.c.bf16 %v2410, %v2409
        %v2512 = vpack.c.bf16 %v2412, %v2411
        %v2513 = vpack.c.bf16 %v2414, %v2413
        %v2514 = vpack.c.bf16 %v2416, %v2415
        %v2515 = vpack.c.bf16 %v2418, %v2417
        %v2516 = vpack.c.bf16 %v2420, %v2419
        %v2517 = vpack.c.bf16 %v2422, %v2421
        %v2518 = vpack.c.bf16 %v2424, %v2423
        %v2519 = vpack.c.bf16 %v2426, %v2425
        %v2520 = vpack.c.bf16 %v2428, %v2427
        %v2521 = vpack.c.bf16 %v2430, %v2429
        %v2522 = vpack.c.bf16 %v2432, %v2431
        %v2523 = vpack.c.bf16 %v2434, %v2433
        %v2524 = vpack.c.bf16 %v2436, %v2435
        %v2525 = vpack.c.bf16 %v2438, %v2437
        %v2526 = vpack.c.bf16 %v2440, %v2439
        %v2527 = vpack.c.bf16 %v2442, %v2441
        %v2528 = vpack.c.bf16 %v2444, %v2443
        %v2529 = vpack.c.bf16 %v2446, %v2445
        %v2530 = vpack.c.bf16 %v2448, %v2447
        %v2531 = vpack.c.bf16 %v2450, %v2449
        %v2532 = vpack.c.bf16 %v2452, %v2451
        %v2533 = vpack.c.bf16 %v2454, %v2453
        %v2534 = vpack.c.bf16 %v2456, %v2455
        %v2535 = vpack.c.bf16 %v2458, %v2457
        %v2536 = vpack.c.bf16 %v2460, %v2459
        %v2537 = vpack.c.bf16 %v2462, %v2461
        %v2538 = vpack.c.bf16 %v2464, %v2463
        %v2539 = vpack.c.bf16 %v2466, %v2465
        %v2540 = vpack.c.bf16 %v2468, %v2467
        %v2541 = vpack.c.bf16 %v2470, %v2469
        %v2542 = vpack.c.bf16 %v2472, %v2471
        %v2543 = vpack.c.bf16 %v2474, %v2473
        %v2544 = vpack.c.bf16 %v2476, %v2475
        %v2545 = vpack.c.bf16 %v2478, %v2477
        %v2546 = vpack.c.bf16 %v2480, %v2479
        %v2547 = vpack.c.bf16 %v2482, %v2481
        %v2548 = vpack.c.bf16 %v2484, %v2483
        %v2613 = vunpack.c.l.b16 %v2485
        %v2614 = vunpack.c.h.b16 %v2485
        %v2615 = vunpack.c.l.b16 %v2486
        %v2616 = vunpack.c.h.b16 %v2486
        %v2617 = vunpack.c.l.b16 %v2487
        %v2618 = vunpack.c.h.b16 %v2487
        %v2619 = vunpack.c.l.b16 %v2488
        %v2620 = vunpack.c.h.b16 %v2488
        %v2621 = vunpack.c.l.b16 %v2489
        %v2622 = vunpack.c.h.b16 %v2489
        %v2623 = vunpack.c.l.b16 %v2490
        %v2624 = vunpack.c.h.b16 %v2490
        %v2625 = vunpack.c.l.b16 %v2491
        %v2626 = vunpack.c.h.b16 %v2491
        %v2627 = vunpack.c.l.b16 %v2492
        %v2628 = vunpack.c.h.b16 %v2492
        %v2629 = vunpack.c.l.b16 %v2493
        %v2630 = vunpack.c.h.b16 %v2493
        %v2631 = vunpack.c.l.b16 %v2494
        %v2632 = vunpack.c.h.b16 %v2494
        %v2633 = vunpack.c.l.b16 %v2495
        %v2634 = vunpack.c.h.b16 %v2495
        %v2635 = vunpack.c.l.b16 %v2496
        %v2636 = vunpack.c.h.b16 %v2496
        %v2637 = vunpack.c.l.b16 %v2497
        %v2638 = vunpack.c.h.b16 %v2497
        %v2639 = vunpack.c.l.b16 %v2498
        %v2640 = vunpack.c.h.b16 %v2498
        %v2641 = vunpack.c.l.b16 %v2499
        %v2642 = vunpack.c.h.b16 %v2499
        %v2643 = vunpack.c.l.b16 %v2500
        %v2644 = vunpack.c.h.b16 %v2500
        %v2645 = vunpack.c.l.b16 %v2501
        %v2646 = vunpack.c.h.b16 %v2501
        %v2647 = vunpack.c.l.b16 %v2502
        %v2648 = vunpack.c.h.b16 %v2502
        %v2649 = vunpack.c.l.b16 %v2503
        %v2650 = vunpack.c.h.b16 %v2503
        %v2651 = vunpack.c.l.b16 %v2504
        %v2652 = vunpack.c.h.b16 %v2504
        %v2653 = vunpack.c.l.b16 %v2505
        %v2654 = vunpack.c.h.b16 %v2505
        %v2655 = vunpack.c.l.b16 %v2506
        %v2656 = vunpack.c.h.b16 %v2506
        %v2657 = vunpack.c.l.b16 %v2507
        %v2658 = vunpack.c.h.b16 %v2507
        %v2659 = vunpack.c.l.b16 %v2508
        %v2660 = vunpack.c.h.b16 %v2508
        %v2661 = vunpack.c.l.b16 %v2509
        %v2662 = vunpack.c.h.b16 %v2509
        %v2663 = vunpack.c.l.b16 %v2510
        %v2664 = vunpack.c.h.b16 %v2510
        %v2665 = vunpack.c.l.b16 %v2511
        %v2666 = vunpack.c.h.b16 %v2511
        %v2667 = vunpack.c.l.b16 %v2512
        %v2668 = vunpack.c.h.b16 %v2512
        %v2669 = vunpack.c.l.b16 %v2513
        %v2670 = vunpack.c.h.b16 %v2513
        %v2671 = vunpack.c.l.b16 %v2514
        %v2672 = vunpack.c.h.b16 %v2514
        %v2673 = vunpack.c.l.b16 %v2515
        %v2674 = vunpack.c.h.b16 %v2515
        %v2675 = vunpack.c.l.b16 %v2516
        %v2676 = vunpack.c.h.b16 %v2516
        %v2677 = vunpack.c.l.b16 %v2517
        %v2678 = vunpack.c.h.b16 %v2517
        %v2679 = vunpack.c.l.b16 %v2518
        %v2680 = vunpack.c.h.b16 %v2518
        %v2681 = vunpack.c.l.b16 %v2519
        %v2682 = vunpack.c.h.b16 %v2519
        %v2683 = vunpack.c.l.b16 %v2520
        %v2684 = vunpack.c.h.b16 %v2520
        %v2685 = vunpack.c.l.b16 %v2521
        %v2686 = vunpack.c.h.b16 %v2521
        %v2687 = vunpack.c.l.b16 %v2522
        %v2688 = vunpack.c.h.b16 %v2522
        %v2689 = vunpack.c.l.b16 %v2523
        %v2690 = vunpack.c.h.b16 %v2523
        %v2691 = vunpack.c.l.b16 %v2524
        %v2692 = vunpack.c.h.b16 %v2524
        %v2693 = vunpack.c.l.b16 %v2525
        %v2694 = vunpack.c.h.b16 %v2525
        %v2695 = vunpack.c.l.b16 %v2526
        %v2696 = vunpack.c.h.b16 %v2526
        %v2697 = vunpack.c.l.b16 %v2527
        %v2698 = vunpack.c.h.b16 %v2527
        %v2699 = vunpack.c.l.b16 %v2528
        %v2700 = vunpack.c.h.b16 %v2528
        %v2701 = vunpack.c.l.b16 %v2529
        %v2702 = vunpack.c.h.b16 %v2529
        %v2703 = vunpack.c.l.b16 %v2530
        %v2704 = vunpack.c.h.b16 %v2530
        %v2705 = vunpack.c.l.b16 %v2531
        %v2706 = vunpack.c.h.b16 %v2531
        %v2707 = vunpack.c.l.b16 %v2532
        %v2708 = vunpack.c.h.b16 %v2532
        %v2709 = vunpack.c.l.b16 %v2533
        %v2710 = vunpack.c.h.b16 %v2533
        %v2711 = vunpack.c.l.b16 %v2534
        %v2712 = vunpack.c.h.b16 %v2534
        %v2713 = vunpack.c.l.b16 %v2535
        %v2714 = vunpack.c.h.b16 %v2535
        %v2715 = vunpack.c.l.b16 %v2536
        %v2716 = vunpack.c.h.b16 %v2536
        %v2717 = vunpack.c.l.b16 %v2537
        %v2718 = vunpack.c.h.b16 %v2537
        %v2719 = vunpack.c.l.b16 %v2538
        %v2720 = vunpack.c.h.b16 %v2538
        %v2721 = vunpack.c.l.b16 %v2539
        %v2722 = vunpack.c.h.b16 %v2539
        %v2723 = vunpack.c.l.b16 %v2540
        %v2724 = vunpack.c.h.b16 %v2540
        %v2725 = vunpack.c.l.b16 %v2541
        %v2726 = vunpack.c.h.b16 %v2541
        %v2727 = vunpack.c.l.b16 %v2542
        %v2728 = vunpack.c.h.b16 %v2542
        %v2729 = vunpack.c.l.b16 %v2543
        %v2730 = vunpack.c.h.b16 %v2543
        %v2731 = vunpack.c.l.b16 %v2544
        %v2732 = vunpack.c.h.b16 %v2544
        %v2733 = vunpack.c.l.b16 %v2545
        %v2734 = vunpack.c.h.b16 %v2545
        %v2735 = vunpack.c.l.b16 %v2546
        %v2736 = vunpack.c.h.b16 %v2546
        %v2737 = vunpack.c.l.b16 %v2547
        %v2738 = vunpack.c.h.b16 %v2547
        %v2739 = vunpack.c.l.b16 %v2548
        %v2740 = vunpack.c.h.b16 %v2548
        %v2741 = vpack.c.b16 %v2613, %v2613
        %v2742 = vpack.c.b16 %v2614, %v2614
        %v2743 = vpack.c.b16 %v2615, %v2615
        %v2744 = vpack.c.b16 %v2616, %v2616
        %v2745 = vpack.c.b16 %v2617, %v2617
        %v2746 = vpack.c.b16 %v2618, %v2618
        %v2747 = vpack.c.b16 %v2619, %v2619
        %v2748 = vpack.c.b16 %v2620, %v2620
        %v2749 = vpack.c.b16 %v2621, %v2621
        %v2750 = vpack.c.b16 %v2622, %v2622
        %v2751 = vpack.c.b16 %v2623, %v2623
        %v2752 = vpack.c.b16 %v2624, %v2624
        %v2753 = vpack.c.b16 %v2625, %v2625
        %v2754 = vpack.c.b16 %v2626, %v2626
        %v2755 = vpack.c.b16 %v2627, %v2627
        %v2756 = vpack.c.b16 %v2628, %v2628
        %v2757 = vpack.c.b16 %v2629, %v2629
        %v2758 = vpack.c.b16 %v2630, %v2630
        %v2759 = vpack.c.b16 %v2631, %v2631
        %v2760 = vpack.c.b16 %v2632, %v2632
        %v2761 = vpack.c.b16 %v2633, %v2633
        %v2762 = vpack.c.b16 %v2634, %v2634
        %v2763 = vpack.c.b16 %v2635, %v2635
        %v2764 = vpack.c.b16 %v2636, %v2636
        %v2765 = vpack.c.b16 %v2637, %v2637
        %v2766 = vpack.c.b16 %v2638, %v2638
        %v2767 = vpack.c.b16 %v2639, %v2639
        %v2768 = vpack.c.b16 %v2640, %v2640
        %v2769 = vpack.c.b16 %v2641, %v2641
        %v2770 = vpack.c.b16 %v2642, %v2642
        %v2771 = vpack.c.b16 %v2643, %v2643
        %v2772 = vpack.c.b16 %v2644, %v2644
        %v2773 = vpack.c.b16 %v2645, %v2645
        %v2774 = vpack.c.b16 %v2646, %v2646
        %v2775 = vpack.c.b16 %v2647, %v2647
        %v2776 = vpack.c.b16 %v2648, %v2648
        %v2777 = vpack.c.b16 %v2649, %v2649
        %v2778 = vpack.c.b16 %v2650, %v2650
        %v2779 = vpack.c.b16 %v2651, %v2651
        %v2780 = vpack.c.b16 %v2652, %v2652
        %v2781 = vpack.c.b16 %v2653, %v2653
        %v2782 = vpack.c.b16 %v2654, %v2654
        %v2783 = vpack.c.b16 %v2655, %v2655
        %v2784 = vpack.c.b16 %v2656, %v2656
        %v2785 = vpack.c.b16 %v2657, %v2657
        %v2786 = vpack.c.b16 %v2658, %v2658
        %v2787 = vpack.c.b16 %v2659, %v2659
        %v2788 = vpack.c.b16 %v2660, %v2660
        %v2789 = vpack.c.b16 %v2661, %v2661
        %v2790 = vpack.c.b16 %v2662, %v2662
        %v2791 = vpack.c.b16 %v2663, %v2663
        %v2792 = vpack.c.b16 %v2664, %v2664
        %v2793 = vpack.c.b16 %v2665, %v2665
        %v2794 = vpack.c.b16 %v2666, %v2666
        %v2795 = vpack.c.b16 %v2667, %v2667
        %v2796 = vpack.c.b16 %v2668, %v2668
        %v2797 = vpack.c.b16 %v2669, %v2669
        %v2798 = vpack.c.b16 %v2670, %v2670
        %v2799 = vpack.c.b16 %v2671, %v2671
        %v2800 = vpack.c.b16 %v2672, %v2672
        %v2801 = vpack.c.b16 %v2673, %v2673
        %v2802 = vpack.c.b16 %v2674, %v2674
        %v2803 = vpack.c.b16 %v2675, %v2675
        %v2804 = vpack.c.b16 %v2676, %v2676
        %v2805 = vpack.c.b16 %v2677, %v2677
        %v2806 = vpack.c.b16 %v2678, %v2678
        %v2807 = vpack.c.b16 %v2679, %v2679
        %v2808 = vpack.c.b16 %v2680, %v2680
        %v2809 = vpack.c.b16 %v2681, %v2681
        %v2810 = vpack.c.b16 %v2682, %v2682
        %v2811 = vpack.c.b16 %v2683, %v2683
        %v2812 = vpack.c.b16 %v2684, %v2684
        %v2813 = vpack.c.b16 %v2685, %v2685
        %v2814 = vpack.c.b16 %v2686, %v2686
        %v2815 = vpack.c.b16 %v2687, %v2687
        %v2816 = vpack.c.b16 %v2688, %v2688
        %v2817 = vpack.c.b16 %v2689, %v2689
        %v2818 = vpack.c.b16 %v2690, %v2690
        %v2819 = vpack.c.b16 %v2691, %v2691
        %v2820 = vpack.c.b16 %v2692, %v2692
        %v2821 = vpack.c.b16 %v2693, %v2693
        %v2822 = vpack.c.b16 %v2694, %v2694
        %v2823 = vpack.c.b16 %v2695, %v2695
        %v2824 = vpack.c.b16 %v2696, %v2696
        %v2825 = vpack.c.b16 %v2697, %v2697
        %v2826 = vpack.c.b16 %v2698, %v2698
        %v2827 = vpack.c.b16 %v2699, %v2699
        %v2828 = vpack.c.b16 %v2700, %v2700
        %v2829 = vpack.c.b16 %v2701, %v2701
        %v2830 = vpack.c.b16 %v2702, %v2702
        %v2831 = vpack.c.b16 %v2703, %v2703
        %v2832 = vpack.c.b16 %v2704, %v2704
        %v2833 = vpack.c.b16 %v2705, %v2705
        %v2834 = vpack.c.b16 %v2706, %v2706
        %v2835 = vpack.c.b16 %v2707, %v2707
        %v2836 = vpack.c.b16 %v2708, %v2708
        %v2837 = vpack.c.b16 %v2709, %v2709
        %v2838 = vpack.c.b16 %v2710, %v2710
        %v2839 = vpack.c.b16 %v2711, %v2711
        %v2840 = vpack.c.b16 %v2712, %v2712
        %v2841 = vpack.c.b16 %v2713, %v2713
        %v2842 = vpack.c.b16 %v2714, %v2714
        %v2843 = vpack.c.b16 %v2715, %v2715
        %v2844 = vpack.c.b16 %v2716, %v2716
        %v2845 = vpack.c.b16 %v2717, %v2717
        %v2846 = vpack.c.b16 %v2718, %v2718
        %v2847 = vpack.c.b16 %v2719, %v2719
        %v2848 = vpack.c.b16 %v2720, %v2720
        %v2849 = vpack.c.b16 %v2721, %v2721
        %v2850 = vpack.c.b16 %v2722, %v2722
        %v2851 = vpack.c.b16 %v2723, %v2723
        %v2852 = vpack.c.b16 %v2724, %v2724
        %v2853 = vpack.c.b16 %v2725, %v2725
        %v2854 = vpack.c.b16 %v2726, %v2726
        %v2855 = vpack.c.b16 %v2727, %v2727
        %v2856 = vpack.c.b16 %v2728, %v2728
        %v2857 = vpack.c.b16 %v2729, %v2729
        %v2858 = vpack.c.b16 %v2730, %v2730
        %v2859 = vpack.c.b16 %v2731, %v2731
        %v2860 = vpack.c.b16 %v2732, %v2732
        %v2861 = vpack.c.b16 %v2733, %v2733
        %v2862 = vpack.c.b16 %v2734, %v2734
        %v2863 = vpack.c.b16 %v2735, %v2735
        %v2864 = vpack.c.b16 %v2736, %v2736
        %v2865 = vpack.c.b16 %v2737, %v2737
        %v2866 = vpack.c.b16 %v2738, %v2738
        %v2867 = vpack.c.b16 %v2739, %v2739
        %v2868 = vpack.c.b16 %v2740, %v2740
        %2997 = vst [vmem:[%s195] sm:$0xf] %v2741
        %2998 = vst [vmem:[%s195 + $0x4] sm:$0xf] %v2742
        %2999 = vst [vmem:[%s195 + $0x8] sm:$0xf] %v2743
        %3000 = vst [vmem:[%s195 + $0xc] sm:$0xf] %v2744
        %3001 = vst [vmem:[%s195 + $0x10] sm:$0xf] %v2745
        %3002 = vst [vmem:[%s195 + $0x14] sm:$0xf] %v2746
        %3003 = vst [vmem:[%s195 + $0x18] sm:$0xf] %v2747
        %3004 = vst [vmem:[%s195 + $0x1c] sm:$0xf] %v2748
        %3005 = vst [vmem:[%s195 + $0x20] sm:$0xf] %v2749
        %3006 = vst [vmem:[%s195 + $0x24] sm:$0xf] %v2750
        %3007 = vst [vmem:[%s195 + $0x28] sm:$0xf] %v2751
        %3008 = vst [vmem:[%s195 + $0x2c] sm:$0xf] %v2752
        %3009 = vst [vmem:[%s195 + $0x30] sm:$0xf] %v2753
        %3010 = vst [vmem:[%s195 + $0x34] sm:$0xf] %v2754
        %3011 = vst [vmem:[%s195 + $0x38] sm:$0xf] %v2755
        %3012 = vst [vmem:[%s195 + $0x3c] sm:$0xf] %v2756
        %3013 = vst [vmem:[%s195 + $0x40] sm:$0xf] %v2757
        %3014 = vst [vmem:[%s195 + $0x44] sm:$0xf] %v2758
        %3015 = vst [vmem:[%s195 + $0x48] sm:$0xf] %v2759
        %3016 = vst [vmem:[%s195 + $0x4c] sm:$0xf] %v2760
        %3017 = vst [vmem:[%s195 + $0x50] sm:$0xf] %v2761
        %3018 = vst [vmem:[%s195 + $0x54] sm:$0xf] %v2762
        %3019 = vst [vmem:[%s195 + $0x58] sm:$0xf] %v2763
        %3020 = vst [vmem:[%s195 + $0x5c] sm:$0xf] %v2764
        %3021 = vst [vmem:[%s195 + $0x60] sm:$0xf] %v2765
        %3022 = vst [vmem:[%s195 + $0x64] sm:$0xf] %v2766
        %3023 = vst [vmem:[%s195 + $0x68] sm:$0xf] %v2767
        %3024 = vst [vmem:[%s195 + $0x6c] sm:$0xf] %v2768
        %3025 = vst [vmem:[%s195 + $0x70] sm:$0xf] %v2769
        %3026 = vst [vmem:[%s195 + $0x74] sm:$0xf] %v2770
        %3027 = vst [vmem:[%s195 + $0x78] sm:$0xf] %v2771
        %3028 = vst [vmem:[%s195 + $0x7c] sm:$0xf] %v2772
        %3029 = vst [vmem:[%s195 + $0x80] sm:$0xf] %v2773
        %3030 = vst [vmem:[%s195 + $0x84] sm:$0xf] %v2774
        %3031 = vst [vmem:[%s195 + $0x88] sm:$0xf] %v2775
        %3032 = vst [vmem:[%s195 + $0x8c] sm:$0xf] %v2776
        %3033 = vst [vmem:[%s195 + $0x90] sm:$0xf] %v2777
        %3034 = vst [vmem:[%s195 + $0x94] sm:$0xf] %v2778
        %3035 = vst [vmem:[%s195 + $0x98] sm:$0xf] %v2779
        %3036 = vst [vmem:[%s195 + $0x9c] sm:$0xf] %v2780
        %3037 = vst [vmem:[%s195 + $0xa0] sm:$0xf] %v2781
        %3038 = vst [vmem:[%s195 + $0xa4] sm:$0xf] %v2782
        %3039 = vst [vmem:[%s195 + $0xa8] sm:$0xf] %v2783
        %3040 = vst [vmem:[%s195 + $0xac] sm:$0xf] %v2784
        %3041 = vst [vmem:[%s195 + $0xb0] sm:$0xf] %v2785
        %3042 = vst [vmem:[%s195 + $0xb4] sm:$0xf] %v2786
        %3043 = vst [vmem:[%s195 + $0xb8] sm:$0xf] %v2787
        %3044 = vst [vmem:[%s195 + $0xbc] sm:$0xf] %v2788
        %3045 = vst [vmem:[%s195 + $0xc0] sm:$0xf] %v2789
        %3046 = vst [vmem:[%s195 + $0xc4] sm:$0xf] %v2790
        %3047 = vst [vmem:[%s195 + $0xc8] sm:$0xf] %v2791
        %3048 = vst [vmem:[%s195 + $0xcc] sm:$0xf] %v2792
        %3049 = vst [vmem:[%s195 + $0xd0] sm:$0xf] %v2793
        %3050 = vst [vmem:[%s195 + $0xd4] sm:$0xf] %v2794
        %3051 = vst [vmem:[%s195 + $0xd8] sm:$0xf] %v2795
        %3052 = vst [vmem:[%s195 + $0xdc] sm:$0xf] %v2796
        %3053 = vst [vmem:[%s195 + $0xe0] sm:$0xf] %v2797
        %3054 = vst [vmem:[%s195 + $0xe4] sm:$0xf] %v2798
        %3055 = vst [vmem:[%s195 + $0xe8] sm:$0xf] %v2799
        %3056 = vst [vmem:[%s195 + $0xec] sm:$0xf] %v2800
        %3057 = vst [vmem:[%s195 + $0xf0] sm:$0xf] %v2801
        %3058 = vst [vmem:[%s195 + $0xf4] sm:$0xf] %v2802
        %3059 = vst [vmem:[%s195 + $0xf8] sm:$0xf] %v2803
        %3060 = vst [vmem:[%s195 + $0xfc] sm:$0xf] %v2804
        %3061 = vst [vmem:[%s195 + $0x100] sm:$0xf] %v2805
        %3062 = vst [vmem:[%s195 + $0x104] sm:$0xf] %v2806
        %3063 = vst [vmem:[%s195 + $0x108] sm:$0xf] %v2807
        %3064 = vst [vmem:[%s195 + $0x10c] sm:$0xf] %v2808
        %3065 = vst [vmem:[%s195 + $0x110] sm:$0xf] %v2809
        %3066 = vst [vmem:[%s195 + $0x114] sm:$0xf] %v2810
        %3067 = vst [vmem:[%s195 + $0x118] sm:$0xf] %v2811
        %3068 = vst [vmem:[%s195 + $0x11c] sm:$0xf] %v2812
        %3069 = vst [vmem:[%s195 + $0x120] sm:$0xf] %v2813
        %3070 = vst [vmem:[%s195 + $0x124] sm:$0xf] %v2814
        %3071 = vst [vmem:[%s195 + $0x128] sm:$0xf] %v2815
        %3072 = vst [vmem:[%s195 + $0x12c] sm:$0xf] %v2816
        %3073 = vst [vmem:[%s195 + $0x130] sm:$0xf] %v2817
        %3074 = vst [vmem:[%s195 + $0x134] sm:$0xf] %v2818
        %3075 = vst [vmem:[%s195 + $0x138] sm:$0xf] %v2819
        %3076 = vst [vmem:[%s195 + $0x13c] sm:$0xf] %v2820
        %3077 = vst [vmem:[%s195 + $0x140] sm:$0xf] %v2821
        %3078 = vst [vmem:[%s195 + $0x144] sm:$0xf] %v2822
        %3079 = vst [vmem:[%s195 + $0x148] sm:$0xf] %v2823
        %3080 = vst [vmem:[%s195 + $0x14c] sm:$0xf] %v2824
        %3081 = vst [vmem:[%s195 + $0x150] sm:$0xf] %v2825
        %3082 = vst [vmem:[%s195 + $0x154] sm:$0xf] %v2826
        %3083 = vst [vmem:[%s195 + $0x158] sm:$0xf] %v2827
        %3084 = vst [vmem:[%s195 + $0x15c] sm:$0xf] %v2828
        %3085 = vst [vmem:[%s195 + $0x160] sm:$0xf] %v2829
        %3086 = vst [vmem:[%s195 + $0x164] sm:$0xf] %v2830
        %3087 = vst [vmem:[%s195 + $0x168] sm:$0xf] %v2831
        %3088 = vst [vmem:[%s195 + $0x16c] sm:$0xf] %v2832
        %3089 = vst [vmem:[%s195 + $0x170] sm:$0xf] %v2833
        %3090 = vst [vmem:[%s195 + $0x174] sm:$0xf] %v2834
        %3091 = vst [vmem:[%s195 + $0x178] sm:$0xf] %v2835
        %3092 = vst [vmem:[%s195 + $0x17c] sm:$0xf] %v2836
        %3093 = vst [vmem:[%s195 + $0x180] sm:$0xf] %v2837
        %3094 = vst [vmem:[%s195 + $0x184] sm:$0xf] %v2838
        %3095 = vst [vmem:[%s195 + $0x188] sm:$0xf] %v2839
        %3096 = vst [vmem:[%s195 + $0x18c] sm:$0xf] %v2840
        %3097 = vst [vmem:[%s195 + $0x190] sm:$0xf] %v2841
        %3098 = vst [vmem:[%s195 + $0x194] sm:$0xf] %v2842
        %3099 = vst [vmem:[%s195 + $0x198] sm:$0xf] %v2843
        %3100 = vst [vmem:[%s195 + $0x19c] sm:$0xf] %v2844
        %3101 = vst [vmem:[%s195 + $0x1a0] sm:$0xf] %v2845
        %3102 = vst [vmem:[%s195 + $0x1a4] sm:$0xf] %v2846
        %3103 = vst [vmem:[%s195 + $0x1a8] sm:$0xf] %v2847
        %3104 = vst [vmem:[%s195 + $0x1ac] sm:$0xf] %v2848
        %3105 = vst [vmem:[%s195 + $0x1b0] sm:$0xf] %v2849
        %3106 = vst [vmem:[%s195 + $0x1b4] sm:$0xf] %v2850
        %3107 = vst [vmem:[%s195 + $0x1b8] sm:$0xf] %v2851
        %3108 = vst [vmem:[%s195 + $0x1bc] sm:$0xf] %v2852
        %3109 = vst [vmem:[%s195 + $0x1c0] sm:$0xf] %v2853
        %3110 = vst [vmem:[%s195 + $0x1c4] sm:$0xf] %v2854
        %3111 = vst [vmem:[%s195 + $0x1c8] sm:$0xf] %v2855
        %3112 = vst [vmem:[%s195 + $0x1cc] sm:$0xf] %v2856
        %3113 = vst [vmem:[%s195 + $0x1d0] sm:$0xf] %v2857
        %3114 = vst [vmem:[%s195 + $0x1d4] sm:$0xf] %v2858
        %3115 = vst [vmem:[%s195 + $0x1d8] sm:$0xf] %v2859
        %3116 = vst [vmem:[%s195 + $0x1dc] sm:$0xf] %v2860
        %3117 = vst [vmem:[%s195 + $0x1e0] sm:$0xf] %v2861
        %3118 = vst [vmem:[%s195 + $0x1e4] sm:$0xf] %v2862
        %3119 = vst [vmem:[%s195 + $0x1e8] sm:$0xf] %v2863
        %3120 = vst [vmem:[%s195 + $0x1ec] sm:$0xf] %v2864
        %3121 = vst [vmem:[%s195 + $0x1f0] sm:$0xf] %v2865
        %3122 = vst [vmem:[%s195 + $0x1f4] sm:$0xf] %v2866
        %3123 = vst [vmem:[%s195 + $0x1f8] sm:$0xf] %v2867
        %3124 = vst [vmem:[%s195 + $0x1fc] sm:$0xf] %v2868
      $region40: #{discriminator512_forward.10} parent=31 // pred_fallthru
        _
      %s3125 = smul.u32 128, %s18
      %p3126 = scmp.lt.s32.totalorder %s3125, 255
      %s3127 = scalar_select %p3126, %s3125, 255
      %s3128 = smul.addr %s3127, 4
      %s3129 = scalar_lea.vmem %s3, %s3128
      // Predicated region
      $region41: #{discriminator512_forward.10} parent=31 // pred_check
        %p3130 = pneg %p114
      $region42: #{discriminator512_forward.10} parent=31 // pred_check_branch
        %3132 = sbr.rel (%p3130) target = $region44
      $region43: #{discriminator512_forward.10} parent=31 // pred_region
        %s3133 = smul.u32 128, %s18
      $region44: #{discriminator512_forward.10} parent=31 // pred_fallthru
        _
    $region32: #{discriminator512_forward.10} parent=5 // pred_fallthru
      _
    %p3134 = scmp.le.s32.totalorder 2, %s9
    // Predicated region
    $region45: #{discriminator512_forward.10} parent=5 // pred_check
      %p3135 = pneg %p3134
    $region46: #{discriminator512_forward.10} parent=5 // pred_check_branch
      %3137 = sbr.rel (%p3135) target = $region48
    $region47: #{discriminator512_forward.10} parent=5 // pred_region
      %s3138 = ssub.s32 %s9, 2
      // Predicated region
      $region49: #{discriminator512_forward.10} parent=47 // pred_check
        %p3139 = pneg %p120
      $region50: #{discriminator512_forward.10} parent=47 // pred_check_branch
        %3141 = sbr.rel (%p3139) target = $region52
      $region51: #{discriminator512_forward.10} parent=47 // pred_region
        %s3142 = smul.u32 128, %s20
        %p3143 = scmp.lt.s32.totalorder %s3142, 255
        %s3144 = scalar_select %p3143, %s3142, 255
        %s3145 = smul.addr %s3144, 4
        %s3146 = scalar_lea.vmem %s3, %s3145
      $region52: #{discriminator512_forward.10} parent=47 // pred_fallthru
        _
    $region48: #{discriminator512_forward.10} parent=5 // pred_fallthru
      _
  $region6: #{discriminator512_forward.10} parent=0 // loop_footer
    %s13 = sadd.s32 1, %s9
  $region7: #{discriminator512_forward.10} parent=0 // loop_footer_branch
    %8 = sbr.rel target = $region3
  $region8: #{discriminator512_forward.10} parent=0 // loop_exit
    _

// kernel: discriminator512_forward.12
$region0: #{discriminator512_forward.12}
  #allocation0 [shape = 'u32[]', space=smem, size = 0x4, offset = 0x4, fixed_abs, tag = 'smem constant byte address 0x4 - core index']
  #allocation1 [shape = 'u32[144,128]{1,0:T(1,128)}', space=vmem, size = 0x12000, scoped, tag = 'internal scratch']
  %s0 = inlined_call_operand.vmem [shape: bf16[512,128], index: 0, kind: input, shape index: {}]
  %s1 = inlined_call_operand.vmem [shape: f32[1,128], index: 1, kind: input, shape index: {}]
  %s2 = inlined_call_operand.vmem [shape: f32[1,128], index: 2, kind: input, shape index: {}]
  %s3 = inlined_call_operand.vmem [shape: bf16[512,128], index: 3, kind: output, shape index: {}]
  %s4 = sld [smem:[#allocation0]]
  $region22: #{discriminator512_forward.12} parent=0
    _
  %s6 = ssub.s32 1, %s4
  %s7 = scalar_select 0, %s6, %s4
  // Predicated region
  $region2: #{discriminator512_forward.12} parent=0 // pred_check
    _
  $region3: #{discriminator512_forward.12} parent=0 // pred_check_branch
    %9 = sbr.rel (0) target = $region5
  $region4: #{discriminator512_forward.12} parent=0 // pred_region
    _
  $region5: #{discriminator512_forward.12} parent=0 // pred_fallthru
    _
  // Predicated region
  $region6: #{discriminator512_forward.12} parent=0 // pred_check
    _
  $region7: #{discriminator512_forward.12} parent=0 // pred_check_branch
    %11 = sbr.rel (0) target = $region9
  $region8: #{discriminator512_forward.12} parent=0 // pred_region
    _
  $region9: #{discriminator512_forward.12} parent=0 // pred_fallthru
    _
  // Predicated region
  $region10: #{discriminator512_forward.12} parent=0 // pred_check
    _
  $region11: #{discriminator512_forward.12} parent=0 // pred_check_branch
    %13 = sbr.rel (0) target = $region13
  $region12: #{discriminator512_forward.12} parent=0 // pred_region
    _
  $region13: #{discriminator512_forward.12} parent=0 // pred_fallthru
    _
  %v14 = vld [vmem:[%s0] sm:$0xf]
  %v15 = vld [vmem:[%s0 + $0x4] sm:$0xf]
  %v16 = vld [vmem:[%s0 + $0x8] sm:$0xf]
  %v17 = vld [vmem:[%s0 + $0xc] sm:$0xf]
  %v18 = vld [vmem:[%s0 + $0x10] sm:$0xf]
  %v19 = vld [vmem:[%s0 + $0x14] sm:$0xf]
  %v20 = vld [vmem:[%s0 + $0x18] sm:$0xf]
  %v21 = vld [vmem:[%s0 + $0x1c] sm:$0xf]
  %v22 = vld [vmem:[%s0 + $0x20] sm:$0xf]
  %v23 = vld [vmem:[%s0 + $0x24] sm:$0xf]
  %v24 = vld [vmem:[%s0 + $0x28] sm:$0xf]
  %v25 = vld [vmem:[%s0 + $0x2c] sm:$0xf]
  %v26 = vld [vmem:[%s0 + $0x30] sm:$0xf]
  %v27 = vld [vmem:[%s0 + $0x34] sm:$0xf]
  %v28 = vld [vmem:[%s0 + $0x38] sm:$0xf]
  %v29 = vld [vmem:[%s0 + $0x3c] sm:$0xf]
  %v30 = vld [vmem:[%s0 + $0x40] sm:$0xf]
  %v31 = vld [vmem:[%s0 + $0x44] sm:$0xf]
  %v32 = vld [vmem:[%s0 + $0x48] sm:$0xf]
  %v33 = vld [vmem:[%s0 + $0x4c] sm:$0xf]
  %v34 = vld [vmem:[%s0 + $0x50] sm:$0xf]
  %v35 = vld [vmem:[%s0 + $0x54] sm:$0xf]
  %v36 = vld [vmem:[%s0 + $0x58] sm:$0xf]
  %v37 = vld [vmem:[%s0 + $0x5c] sm:$0xf]
  %v38 = vld [vmem:[%s0 + $0x60] sm:$0xf]
  %v39 = vld [vmem:[%s0 + $0x64] sm:$0xf]
  %v40 = vld [vmem:[%s0 + $0x68] sm:$0xf]
  %v41 = vld [vmem:[%s0 + $0x6c] sm:$0xf]
  %v42 = vld [vmem:[%s0 + $0x70] sm:$0xf]
  %v43 = vld [vmem:[%s0 + $0x74] sm:$0xf]
  %v44 = vld [vmem:[%s0 + $0x78] sm:$0xf]
  %v45 = vld [vmem:[%s0 + $0x7c] sm:$0xf]
  %v46 = vld [vmem:[%s0 + $0x80] sm:$0xf]
  %v47 = vld [vmem:[%s0 + $0x84] sm:$0xf]
  %v48 = vld [vmem:[%s0 + $0x88] sm:$0xf]
  %v49 = vld [vmem:[%s0 + $0x8c] sm:$0xf]
  %v50 = vld [vmem:[%s0 + $0x90] sm:$0xf]
  %v51 = vld [vmem:[%s0 + $0x94] sm:$0xf]
  %v52 = vld [vmem:[%s0 + $0x98] sm:$0xf]
  %v53 = vld [vmem:[%s0 + $0x9c] sm:$0xf]
  %v54 = vld [vmem:[%s0 + $0xa0] sm:$0xf]
  %v55 = vld [vmem:[%s0 + $0xa4] sm:$0xf]
  %v56 = vld [vmem:[%s0 + $0xa8] sm:$0xf]
  %v57 = vld [vmem:[%s0 + $0xac] sm:$0xf]
  %v58 = vld [vmem:[%s0 + $0xb0] sm:$0xf]
  %v59 = vld [vmem:[%s0 + $0xb4] sm:$0xf]
  %v60 = vld [vmem:[%s0 + $0xb8] sm:$0xf]
  %v61 = vld [vmem:[%s0 + $0xbc] sm:$0xf]
  %v62 = vld [vmem:[%s0 + $0xc0] sm:$0xf]
  %v63 = vld [vmem:[%s0 + $0xc4] sm:$0xf]
  %v64 = vld [vmem:[%s0 + $0xc8] sm:$0xf]
  %v65 = vld [vmem:[%s0 + $0xcc] sm:$0xf]
  %v66 = vld [vmem:[%s0 + $0xd0] sm:$0xf]
  %v67 = vld [vmem:[%s0 + $0xd4] sm:$0xf]
  %v68 = vld [vmem:[%s0 + $0xd8] sm:$0xf]
  %v69 = vld [vmem:[%s0 + $0xdc] sm:$0xf]
  %v70 = vld [vmem:[%s0 + $0xe0] sm:$0xf]
  %v71 = vld [vmem:[%s0 + $0xe4] sm:$0xf]
  %v72 = vld [vmem:[%s0 + $0xe8] sm:$0xf]
  %v73 = vld [vmem:[%s0 + $0xec] sm:$0xf]
  %v74 = vld [vmem:[%s0 + $0xf0] sm:$0xf]
  %v75 = vld [vmem:[%s0 + $0xf4] sm:$0xf]
  %v76 = vld [vmem:[%s0 + $0xf8] sm:$0xf]
  %v77 = vld [vmem:[%s0 + $0xfc] sm:$0xf]
  %v78 = vunpack.c.l.bf16 %v14
  %v79 = vunpack.c.l.bf16 %v15
  %v80 = vunpack.c.l.bf16 %v16
  %v81 = vunpack.c.l.bf16 %v17
  %v82 = vunpack.c.l.bf16 %v18
  %v83 = vunpack.c.l.bf16 %v19
  %v84 = vunpack.c.l.bf16 %v20
  %v85 = vunpack.c.l.bf16 %v21
  %v86 = vunpack.c.l.bf16 %v22
  %v87 = vunpack.c.l.bf16 %v23
  %v88 = vunpack.c.l.bf16 %v24
  %v89 = vunpack.c.l.bf16 %v25
  %v90 = vunpack.c.l.bf16 %v26
  %v91 = vunpack.c.l.bf16 %v27
  %v92 = vunpack.c.l.bf16 %v28
  %v93 = vunpack.c.l.bf16 %v29
  %v94 = vunpack.c.l.bf16 %v30
  %v95 = vunpack.c.l.bf16 %v31
  %v96 = vunpack.c.l.bf16 %v32
  %v97 = vunpack.c.l.bf16 %v33
  %v98 = vunpack.c.l.bf16 %v34
  %v99 = vunpack.c.l.bf16 %v35
  %v100 = vunpack.c.l.bf16 %v36
  %v101 = vunpack.c.l.bf16 %v37
  %v102 = vunpack.c.l.bf16 %v38
  %v103 = vunpack.c.l.bf16 %v39
  %v104 = vunpack.c.l.bf16 %v40
  %v105 = vunpack.c.l.bf16 %v41
  %v106 = vunpack.c.l.bf16 %v42
  %v107 = vunpack.c.l.bf16 %v43
  %v108 = vunpack.c.l.bf16 %v44
  %v109 = vunpack.c.l.bf16 %v45
  %v110 = vunpack.c.l.bf16 %v46
  %v111 = vunpack.c.l.bf16 %v47
  %v112 = vunpack.c.l.bf16 %v48
  %v113 = vunpack.c.l.bf16 %v49
  %v114 = vunpack.c.l.bf16 %v50
  %v115 = vunpack.c.l.bf16 %v51
  %v116 = vunpack.c.l.bf16 %v52
  %v117 = vunpack.c.l.bf16 %v53
  %v118 = vunpack.c.l.bf16 %v54
  %v119 = vunpack.c.l.bf16 %v55
  %v120 = vunpack.c.l.bf16 %v56
  %v121 = vunpack.c.l.bf16 %v57
  %v122 = vunpack.c.l.bf16 %v58
  %v123 = vunpack.c.l.bf16 %v59
  %v124 = vunpack.c.l.bf16 %v60
  %v125 = vunpack.c.l.bf16 %v61
  %v126 = vunpack.c.l.bf16 %v62
  %v127 = vunpack.c.l.bf16 %v63
  %v128 = vunpack.c.l.bf16 %v64
  %v129 = vunpack.c.l.bf16 %v65
  %v130 = vunpack.c.l.bf16 %v66
  %v131 = vunpack.c.l.bf16 %v67
  %v132 = vunpack.c.l.bf16 %v68
  %v133 = vunpack.c.l.bf16 %v69
  %v134 = vunpack.c.l.bf16 %v70
  %v135 = vunpack.c.l.bf16 %v71
  %v136 = vunpack.c.l.bf16 %v72
  %v137 = vunpack.c.l.bf16 %v73
  %v138 = vunpack.c.l.bf16 %v74
  %v139 = vunpack.c.l.bf16 %v75
  %v140 = vunpack.c.l.bf16 %v76
  %v141 = vunpack.c.l.bf16 %v77
  %v142 = vld [vmem:[%s1] sm:$0x1]
  %v144 = vlaneseq
  %v145 = vshrl.u32 %v144, 7
  %v146 = vsub.s32 0, %v145
  %v147 = vrot.slane %v142, %v146
  %v149 = vmul.f32 %v78, %v147
  %v150 = vmul.f32 %v79, %v147
  %v151 = vmul.f32 %v80, %v147
  %v152 = vmul.f32 %v81, %v147
  %v153 = vmul.f32 %v82, %v147
  %v154 = vmul.f32 %v83, %v147
  %v155 = vmul.f32 %v84, %v147
  %v156 = vmul.f32 %v85, %v147
  %v157 = vmul.f32 %v86, %v147
  %v158 = vmul.f32 %v87, %v147
  %v159 = vmul.f32 %v88, %v147
  %v160 = vmul.f32 %v89, %v147
  %v161 = vmul.f32 %v90, %v147
  %v162 = vmul.f32 %v91, %v147
  %v163 = vmul.f32 %v92, %v147
  %v164 = vmul.f32 %v93, %v147
  %v165 = vmul.f32 %v94, %v147
  %v166 = vmul.f32 %v95, %v147
  %v167 = vmul.f32 %v96, %v147
  %v168 = vmul.f32 %v97, %v147
  %v169 = vmul.f32 %v98, %v147
  %v170 = vmul.f32 %v99, %v147
  %v171 = vmul.f32 %v100, %v147
  %v172 = vmul.f32 %v101, %v147
  %v173 = vmul.f32 %v102, %v147
  %v174 = vmul.f32 %v103, %v147
  %v175 = vmul.f32 %v104, %v147
  %v176 = vmul.f32 %v105, %v147
  %v177 = vmul.f32 %v106, %v147
  %v178 = vmul.f32 %v107, %v147
  %v179 = vmul.f32 %v108, %v147
  %v180 = vmul.f32 %v109, %v147
  %v181 = vmul.f32 %v110, %v147
  %v182 = vmul.f32 %v111, %v147
  %v183 = vmul.f32 %v112, %v147
  %v184 = vmul.f32 %v113, %v147
  %v185 = vmul.f32 %v114, %v147
  %v186 = vmul.f32 %v115, %v147
  %v187 = vmul.f32 %v116, %v147
  %v188 = vmul.f32 %v117, %v147
  %v189 = vmul.f32 %v118, %v147
  %v190 = vmul.f32 %v119, %v147
  %v191 = vmul.f32 %v120, %v147
  %v192 = vmul.f32 %v121, %v147
  %v193 = vmul.f32 %v122, %v147
  %v194 = vmul.f32 %v123, %v147
  %v195 = vmul.f32 %v124, %v147
  %v196 = vmul.f32 %v125, %v147
  %v197 = vmul.f32 %v126, %v147
  %v198 = vmul.f32 %v127, %v147
  %v199 = vmul.f32 %v128, %v147
  %v200 = vmul.f32 %v129, %v147
  %v201 = vmul.f32 %v130, %v147
  %v202 = vmul.f32 %v131, %v147
  %v203 = vmul.f32 %v132, %v147
  %v204 = vmul.f32 %v133, %v147
  %v205 = vmul.f32 %v134, %v147
  %v206 = vmul.f32 %v135, %v147
  %v207 = vmul.f32 %v136, %v147
  %v208 = vmul.f32 %v137, %v147
  %v209 = vmul.f32 %v138, %v147
  %v210 = vmul.f32 %v139, %v147
  %v211 = vmul.f32 %v140, %v147
  %v212 = vmul.f32 %v141, %v147
  %v213 = vld [vmem:[%s2] sm:$0x1]
  %v215 = vlaneseq
  %v216 = vshrl.u32 %v215, 7
  %v217 = vsub.s32 0, %v216
  %v218 = vrot.slane %v213, %v217
  %v220 = vadd.f32 %v149, %v218
  %v221 = vadd.f32 %v150, %v218
  %v222 = vadd.f32 %v151, %v218
  %v223 = vadd.f32 %v152, %v218
  %v224 = vadd.f32 %v153, %v218
  %v225 = vadd.f32 %v154, %v218
  %v226 = vadd.f32 %v155, %v218
  %v227 = vadd.f32 %v156, %v218
  %v228 = vadd.f32 %v157, %v218
  %v229 = vadd.f32 %v158, %v218
  %v230 = vadd.f32 %v159, %v218
  %v231 = vadd.f32 %v160, %v218
  %v232 = vadd.f32 %v161, %v218
  %v233 = vadd.f32 %v162, %v218
  %v234 = vadd.f32 %v163, %v218
  %v235 = vadd.f32 %v164, %v218
  %v236 = vadd.f32 %v165, %v218
  %v237 = vadd.f32 %v166, %v218
  %v238 = vadd.f32 %v167, %v218
  %v239 = vadd.f32 %v168, %v218
  %v240 = vadd.f32 %v169, %v218
  %v241 = vadd.f32 %v170, %v218
  %v242 = vadd.f32 %v171, %v218
  %v243 = vadd.f32 %v172, %v218
  %v244 = vadd.f32 %v173, %v218
  %v245 = vadd.f32 %v174, %v218
  %v246 = vadd.f32 %v175, %v218
  %v247 = vadd.f32 %v176, %v218
  %v248 = vadd.f32 %v177, %v218
  %v249 = vadd.f32 %v178, %v218
  %v250 = vadd.f32 %v179, %v218
  %v251 = vadd.f32 %v180, %v218
  %v252 = vadd.f32 %v181, %v218
  %v253 = vadd.f32 %v182, %v218
  %v254 = vadd.f32 %v183, %v218
  %v255 = vadd.f32 %v184, %v218
  %v256 = vadd.f32 %v185, %v218
  %v257 = vadd.f32 %v186, %v218
  %v258 = vadd.f32 %v187, %v218
  %v259 = vadd.f32 %v188, %v218
  %v260 = vadd.f32 %v189, %v218
  %v261 = vadd.f32 %v190, %v218
  %v262 = vadd.f32 %v191, %v218
  %v263 = vadd.f32 %v192, %v218
  %v264 = vadd.f32 %v193, %v218
  %v265 = vadd.f32 %v194, %v218
  %v266 = vadd.f32 %v195, %v218
  %v267 = vadd.f32 %v196, %v218
  %v268 = vadd.f32 %v197, %v218
  %v269 = vadd.f32 %v198, %v218
  %v270 = vadd.f32 %v199, %v218
  %v271 = vadd.f32 %v200, %v218
  %v272 = vadd.f32 %v201, %v218
  %v273 = vadd.f32 %v202, %v218
  %v274 = vadd.f32 %v203, %v218
  %v275 = vadd.f32 %v204, %v218
  %v276 = vadd.f32 %v205, %v218
  %v277 = vadd.f32 %v206, %v218
  %v278 = vadd.f32 %v207, %v218
  %v279 = vadd.f32 %v208, %v218
  %v280 = vadd.f32 %v209, %v218
  %v281 = vadd.f32 %v210, %v218
  %v282 = vadd.f32 %v211, %v218
  %v283 = vadd.f32 %v212, %v218
  %vm284 = vcmp.gt.f32.partialorder %v220, 0.0
  %vm285 = vcmp.gt.f32.partialorder %v221, 0.0
  %vm286 = vcmp.gt.f32.partialorder %v222, 0.0
  %vm287 = vcmp.gt.f32.partialorder %v223, 0.0
  %vm288 = vcmp.gt.f32.partialorder %v224, 0.0
  %vm289 = vcmp.gt.f32.partialorder %v225, 0.0
  %vm290 = vcmp.gt.f32.partialorder %v226, 0.0
  %vm291 = vcmp.gt.f32.partialorder %v227, 0.0
  %vm292 = vcmp.gt.f32.partialorder %v228, 0.0
  %vm293 = vcmp.gt.f32.partialorder %v229, 0.0
  %vm294 = vcmp.gt.f32.partialorder %v230, 0.0
  %vm295 = vcmp.gt.f32.partialorder %v231, 0.0
  %vm296 = vcmp.gt.f32.partialorder %v232, 0.0
  %vm297 = vcmp.gt.f32.partialorder %v233, 0.0
  %vm298 = vcmp.gt.f32.partialorder %v234, 0.0
  %vm299 = vcmp.gt.f32.partialorder %v235, 0.0
  %vm300 = vcmp.gt.f32.partialorder %v236, 0.0
  %vm301 = vcmp.gt.f32.partialorder %v237, 0.0
  %vm302 = vcmp.gt.f32.partialorder %v238, 0.0
  %vm303 = vcmp.gt.f32.partialorder %v239, 0.0
  %vm304 = vcmp.gt.f32.partialorder %v240, 0.0
  %vm305 = vcmp.gt.f32.partialorder %v241, 0.0
  %vm306 = vcmp.gt.f32.partialorder %v242, 0.0
  %vm307 = vcmp.gt.f32.partialorder %v243, 0.0
  %vm308 = vcmp.gt.f32.partialorder %v244, 0.0
  %vm309 = vcmp.gt.f32.partialorder %v245, 0.0
  %vm310 = vcmp.gt.f32.partialorder %v246, 0.0
  %vm311 = vcmp.gt.f32.partialorder %v247, 0.0
  %vm312 = vcmp.gt.f32.partialorder %v248, 0.0
  %vm313 = vcmp.gt.f32.partialorder %v249, 0.0
  %vm314 = vcmp.gt.f32.partialorder %v250, 0.0
  %vm315 = vcmp.gt.f32.partialorder %v251, 0.0
  %vm316 = vcmp.gt.f32.partialorder %v252, 0.0
  %vm317 = vcmp.gt.f32.partialorder %v253, 0.0
  %vm318 = vcmp.gt.f32.partialorder %v254, 0.0
  %vm319 = vcmp.gt.f32.partialorder %v255, 0.0
  %vm320 = vcmp.gt.f32.partialorder %v256, 0.0
  %vm321 = vcmp.gt.f32.partialorder %v257, 0.0
  %vm322 = vcmp.gt.f32.partialorder %v258, 0.0
  %vm323 = vcmp.gt.f32.partialorder %v259, 0.0
  %vm324 = vcmp.gt.f32.partialorder %v260, 0.0
  %vm325 = vcmp.gt.f32.partialorder %v261, 0.0
  %vm326 = vcmp.gt.f32.partialorder %v262, 0.0
  %vm327 = vcmp.gt.f32.partialorder %v263, 0.0
  %vm328 = vcmp.gt.f32.partialorder %v264, 0.0
  %vm329 = vcmp.gt.f32.partialorder %v265, 0.0
  %vm330 = vcmp.gt.f32.partialorder %v266, 0.0
  %vm331 = vcmp.gt.f32.partialorder %v267, 0.0
  %vm332 = vcmp.gt.f32.partialorder %v268, 0.0
  %vm333 = vcmp.gt.f32.partialorder %v269, 0.0
  %vm334 = vcmp.gt.f32.partialorder %v270, 0.0
  %vm335 = vcmp.gt.f32.partialorder %v271, 0.0
  %vm336 = vcmp.gt.f32.partialorder %v272, 0.0
  %vm337 = vcmp.gt.f32.partialorder %v273, 0.0
  %vm338 = vcmp.gt.f32.partialorder %v274, 0.0
  %vm339 = vcmp.gt.f32.partialorder %v275, 0.0
  %vm340 = vcmp.gt.f32.partialorder %v276, 0.0
  %vm341 = vcmp.gt.f32.partialorder %v277, 0.0
  %vm342 = vcmp.gt.f32.partialorder %v278, 0.0
  %vm343 = vcmp.gt.f32.partialorder %v279, 0.0
  %vm344 = vcmp.gt.f32.partialorder %v280, 0.0
  %vm345 = vcmp.gt.f32.partialorder %v281, 0.0
  %vm346 = vcmp.gt.f32.partialorder %v282, 0.0
  %vm347 = vcmp.gt.f32.partialorder %v283, 0.0
  %v348 = vmul.f32 %v220, 0.2
  %v349 = vmul.f32 %v221, 0.2
  %v350 = vmul.f32 %v222, 0.2
  %v351 = vmul.f32 %v223, 0.2
  %v352 = vmul.f32 %v224, 0.2
  %v353 = vmul.f32 %v225, 0.2
  %v354 = vmul.f32 %v226, 0.2
  %v355 = vmul.f32 %v227, 0.2
  %v356 = vmul.f32 %v228, 0.2
  %v357 = vmul.f32 %v229, 0.2
  %v358 = vmul.f32 %v230, 0.2
  %v359 = vmul.f32 %v231, 0.2
  %v360 = vmul.f32 %v232, 0.2
  %v361 = vmul.f32 %v233, 0.2
  %v362 = vmul.f32 %v234, 0.2
  %v363 = vmul.f32 %v235, 0.2
  %v364 = vmul.f32 %v236, 0.2
  %v365 = vmul.f32 %v237, 0.2
  %v366 = vmul.f32 %v238, 0.2
  %v367 = vmul.f32 %v239, 0.2
  %v368 = vmul.f32 %v240, 0.2
  %v369 = vmul.f32 %v241, 0.2
  %v370 = vmul.f32 %v242, 0.2
  %v371 = vmul.f32 %v243, 0.2
  %v372 = vmul.f32 %v244, 0.2
  %v373 = vmul.f32 %v245, 0.2
  %v374 = vmul.f32 %v246, 0.2
  %v375 = vmul.f32 %v247, 0.2
  %v376 = vmul.f32 %v248, 0.2
  %v377 = vmul.f32 %v249, 0.2
  %v378 = vmul.f32 %v250, 0.2
  %v379 = vmul.f32 %v251, 0.2
  %v380 = vmul.f32 %v252, 0.2
  %v381 = vmul.f32 %v253, 0.2
  %v382 = vmul.f32 %v254, 0.2
  %v383 = vmul.f32 %v255, 0.2
  %v384 = vmul.f32 %v256, 0.2
  %v385 = vmul.f32 %v257, 0.2
  %v386 = vmul.f32 %v258, 0.2
  %v387 = vmul.f32 %v259, 0.2
  %v388 = vmul.f32 %v260, 0.2
  %v389 = vmul.f32 %v261, 0.2
  %v390 = vmul.f32 %v262, 0.2
  %v391 = vmul.f32 %v263, 0.2
  %v392 = vmul.f32 %v264, 0.2
  %v393 = vmul.f32 %v265, 0.2
  %v394 = vmul.f32 %v266, 0.2
  %v395 = vmul.f32 %v267, 0.2
  %v396 = vmul.f32 %v268, 0.2
  %v397 = vmul.f32 %v269, 0.2
  %v398 = vmul.f32 %v270, 0.2
  %v399 = vmul.f32 %v271, 0.2
  %v400 = vmul.f32 %v272, 0.2
  %v401 = vmul.f32 %v273, 0.2
  %v402 = vmul.f32 %v274, 0.2
  %v403 = vmul.f32 %v275, 0.2
  %v404 = vmul.f32 %v276, 0.2
  %v405 = vmul.f32 %v277, 0.2
  %v406 = vmul.f32 %v278, 0.2
  %v407 = vmul.f32 %v279, 0.2
  %v408 = vmul.f32 %v280, 0.2
  %v409 = vmul.f32 %v281, 0.2
  %v410 = vmul.f32 %v282, 0.2
  %v411 = vmul.f32 %v283, 0.2
  %v412 = vsel %vm284, %v220, %v348
  %v413 = vsel %vm285, %v221, %v349
  %v414 = vsel %vm286, %v222, %v350
  %v415 = vsel %vm287, %v223, %v351
  %v416 = vsel %vm288, %v224, %v352
  %v417 = vsel %vm289, %v225, %v353
  %v418 = vsel %vm290, %v226, %v354
  %v419 = vsel %vm291, %v227, %v355
  %v420 = vsel %vm292, %v228, %v356
  %v421 = vsel %vm293, %v229, %v357
  %v422 = vsel %vm294, %v230, %v358
  %v423 = vsel %vm295, %v231, %v359
  %v424 = vsel %vm296, %v232, %v360
  %v425 = vsel %vm297, %v233, %v361
  %v426 = vsel %vm298, %v234, %v362
  %v427 = vsel %vm299, %v235, %v363
  %v428 = vsel %vm300, %v236, %v364
  %v429 = vsel %vm301, %v237, %v365
  %v430 = vsel %vm302, %v238, %v366
  %v431 = vsel %vm303, %v239, %v367
  %v432 = vsel %vm304, %v240, %v368
  %v433 = vsel %vm305, %v241, %v369
  %v434 = vsel %vm306, %v242, %v370
  %v435 = vsel %vm307, %v243, %v371
  %v436 = vsel %vm308, %v244, %v372
  %v437 = vsel %vm309, %v245, %v373
  %v438 = vsel %vm310, %v246, %v374
  %v439 = vsel %vm311, %v247, %v375
  %v440 = vsel %vm312, %v248, %v376
  %v441 = vsel %vm313, %v249, %v377
  %v442 = vsel %vm314, %v250, %v378
  %v443 = vsel %vm315, %v251, %v379
  %v444 = vsel %vm316, %v252, %v380
  %v445 = vsel %vm317, %v253, %v381
  %v446 = vsel %vm318, %v254, %v382
  %v447 = vsel %vm319, %v255, %v383
  %v448 = vsel %vm320, %v256, %v384
  %v449 = vsel %vm321, %v257, %v385
  %v450 = vsel %vm322, %v258, %v386
  %v451 = vsel %vm323, %v259, %v387
  %v452 = vsel %vm324, %v260, %v388
  %v453 = vsel %vm325, %v261, %v389
  %v454 = vsel %vm326, %v262, %v390
  %v455 = vsel %vm327, %v263, %v391
  %v456 = vsel %vm328, %v264, %v392
  %v457 = vsel %vm329, %v265, %v393
  %v458 = vsel %vm330, %v266, %v394
  %v459 = vsel %vm331, %v267, %v395
  %v460 = vsel %vm332, %v268, %v396
  %v461 = vsel %vm333, %v269, %v397
  %v462 = vsel %vm334, %v270, %v398
  %v463 = vsel %vm335, %v271, %v399
  %v464 = vsel %vm336, %v272, %v400
  %v465 = vsel %vm337, %v273, %v401
  %v466 = vsel %vm338, %v274, %v402
  %v467 = vsel %vm339, %v275, %v403
  %v468 = vsel %vm340, %v276, %v404
  %v469 = vsel %vm341, %v277, %v405
  %v470 = vsel %vm342, %v278, %v406
  %v471 = vsel %vm343, %v279, %v407
  %v472 = vsel %vm344, %v280, %v408
  %v473 = vsel %vm345, %v281, %v409
  %v474 = vsel %vm346, %v282, %v410
  %v475 = vsel %vm347, %v283, %v411
  %v476 = vpack.c.bf16 %v413, %v412
  %v477 = vpack.c.bf16 %v415, %v414
  %v478 = vpack.c.bf16 %v417, %v416
  %v479 = vpack.c.bf16 %v419, %v418
  %v480 = vpack.c.bf16 %v421, %v420
  %v481 = vpack.c.bf16 %v423, %v422
  %v482 = vpack.c.bf16 %v425, %v424
  %v483 = vpack.c.bf16 %v427, %v426
  %v484 = vpack.c.bf16 %v429, %v428
  %v485 = vpack.c.bf16 %v431, %v430
  %v486 = vpack.c.bf16 %v433, %v432
  %v487 = vpack.c.bf16 %v435, %v434
  %v488 = vpack.c.bf16 %v437, %v436
  %v489 = vpack.c.bf16 %v439, %v438
  %v490 = vpack.c.bf16 %v441, %v440
  %v491 = vpack.c.bf16 %v443, %v442
  %v492 = vpack.c.bf16 %v445, %v444
  %v493 = vpack.c.bf16 %v447, %v446
  %v494 = vpack.c.bf16 %v449, %v448
  %v495 = vpack.c.bf16 %v451, %v450
  %v496 = vpack.c.bf16 %v453, %v452
  %v497 = vpack.c.bf16 %v455, %v454
  %v498 = vpack.c.bf16 %v457, %v456
  %v499 = vpack.c.bf16 %v459, %v458
  %v500 = vpack.c.bf16 %v461, %v460
  %v501 = vpack.c.bf16 %v463, %v462
  %v502 = vpack.c.bf16 %v465, %v464
  %v503 = vpack.c.bf16 %v467, %v466
  %v504 = vpack.c.bf16 %v469, %v468
  %v505 = vpack.c.bf16 %v471, %v470
  %v506 = vpack.c.bf16 %v473, %v472
  %v507 = vpack.c.bf16 %v475, %v474
  %v540 = vunpack.c.l.b16 %v476
  %v541 = vunpack.c.h.b16 %v476
  %v542 = vunpack.c.l.b16 %v477
  %v543 = vunpack.c.h.b16 %v477
  %v544 = vunpack.c.l.b16 %v478
  %v545 = vunpack.c.h.b16 %v478
  %v546 = vunpack.c.l.b16 %v479
  %v547 = vunpack.c.h.b16 %v479
  %v548 = vunpack.c.l.b16 %v480
  %v549 = vunpack.c.h.b16 %v480
  %v550 = vunpack.c.l.b16 %v481
  %v551 = vunpack.c.h.b16 %v481
  %v552 = vunpack.c.l.b16 %v482
  %v553 = vunpack.c.h.b16 %v482
  %v554 = vunpack.c.l.b16 %v483
  %v555 = vunpack.c.h.b16 %v483
  %v556 = vunpack.c.l.b16 %v484
  %v557 = vunpack.c.h.b16 %v484
  %v558 = vunpack.c.l.b16 %v485
  %v559 = vunpack.c.h.b16 %v485
  %v560 = vunpack.c.l.b16 %v486
  %v561 = vunpack.c.h.b16 %v486
  %v562 = vunpack.c.l.b16 %v487
  %v563 = vunpack.c.h.b16 %v487
  %v564 = vunpack.c.l.b16 %v488
  %v565 = vunpack.c.h.b16 %v488
  %v566 = vunpack.c.l.b16 %v489
  %v567 = vunpack.c.h.b16 %v489
  %v568 = vunpack.c.l.b16 %v490
  %v569 = vunpack.c.h.b16 %v490
  %v570 = vunpack.c.l.b16 %v491
  %v571 = vunpack.c.h.b16 %v491
  %v572 = vunpack.c.l.b16 %v492
  %v573 = vunpack.c.h.b16 %v492
  %v574 = vunpack.c.l.b16 %v493
  %v575 = vunpack.c.h.b16 %v493
  %v576 = vunpack.c.l.b16 %v494
  %v577 = vunpack.c.h.b16 %v494
  %v578 = vunpack.c.l.b16 %v495
  %v579 = vunpack.c.h.b16 %v495
  %v580 = vunpack.c.l.b16 %v496
  %v581 = vunpack.c.h.b16 %v496
  %v582 = vunpack.c.l.b16 %v497
  %v583 = vunpack.c.h.b16 %v497
  %v584 = vunpack.c.l.b16 %v498
  %v585 = vunpack.c.h.b16 %v498
  %v586 = vunpack.c.l.b16 %v499
  %v587 = vunpack.c.h.b16 %v499
  %v588 = vunpack.c.l.b16 %v500
  %v589 = vunpack.c.h.b16 %v500
  %v590 = vunpack.c.l.b16 %v501
  %v591 = vunpack.c.h.b16 %v501
  %v592 = vunpack.c.l.b16 %v502
  %v593 = vunpack.c.h.b16 %v502
  %v594 = vunpack.c.l.b16 %v503
  %v595 = vunpack.c.h.b16 %v503
  %v596 = vunpack.c.l.b16 %v504
  %v597 = vunpack.c.h.b16 %v504
  %v598 = vunpack.c.l.b16 %v505
  %v599 = vunpack.c.h.b16 %v505
  %v600 = vunpack.c.l.b16 %v506
  %v601 = vunpack.c.h.b16 %v506
  %v602 = vunpack.c.l.b16 %v507
  %v603 = vunpack.c.h.b16 %v507
  %v604 = vpack.c.b16 %v540, %v540
  %v605 = vpack.c.b16 %v541, %v541
  %v606 = vpack.c.b16 %v542, %v542
  %v607 = vpack.c.b16 %v543, %v543
  %v608 = vpack.c.b16 %v544, %v544
  %v609 = vpack.c.b16 %v545, %v545
  %v610 = vpack.c.b16 %v546, %v546
  %v611 = vpack.c.b16 %v547, %v547
  %v612 = vpack.c.b16 %v548, %v548
  %v613 = vpack.c.b16 %v549, %v549
  %v614 = vpack.c.b16 %v550, %v550
  %v615 = vpack.c.b16 %v551, %v551
  %v616 = vpack.c.b16 %v552, %v552
  %v617 = vpack.c.b16 %v553, %v553
  %v618 = vpack.c.b16 %v554, %v554
  %v619 = vpack.c.b16 %v555, %v555
  %v620 = vpack.c.b16 %v556, %v556
  %v621 = vpack.c.b16 %v557, %v557
  %v622 = vpack.c.b16 %v558, %v558
  %v623 = vpack.c.b16 %v559, %v559
  %v624 = vpack.c.b16 %v560, %v560
  %v625 = vpack.c.b16 %v561, %v561
  %v626 = vpack.c.b16 %v562, %v562
  %v627 = vpack.c.b16 %v563, %v563
  %v628 = vpack.c.b16 %v564, %v564
  %v629 = vpack.c.b16 %v565, %v565
  %v630 = vpack.c.b16 %v566, %v566
  %v631 = vpack.c.b16 %v567, %v567
  %v632 = vpack.c.b16 %v568, %v568
  %v633 = vpack.c.b16 %v569, %v569
  %v634 = vpack.c.b16 %v570, %v570
  %v635 = vpack.c.b16 %v571, %v571
  %v636 = vpack.c.b16 %v572, %v572
  %v637 = vpack.c.b16 %v573, %v573
  %v638 = vpack.c.b16 %v574, %v574
  %v639 = vpack.c.b16 %v575, %v575
  %v640 = vpack.c.b16 %v576, %v576
  %v641 = vpack.c.b16 %v577, %v577
  %v642 = vpack.c.b16 %v578, %v578
  %v643 = vpack.c.b16 %v579, %v579
  %v644 = vpack.c.b16 %v580, %v580
  %v645 = vpack.c.b16 %v581, %v581
  %v646 = vpack.c.b16 %v582, %v582
  %v647 = vpack.c.b16 %v583, %v583
  %v648 = vpack.c.b16 %v584, %v584
  %v649 = vpack.c.b16 %v585, %v585
  %v650 = vpack.c.b16 %v586, %v586
  %v651 = vpack.c.b16 %v587, %v587
  %v652 = vpack.c.b16 %v588, %v588
  %v653 = vpack.c.b16 %v589, %v589
  %v654 = vpack.c.b16 %v590, %v590
  %v655 = vpack.c.b16 %v591, %v591
  %v656 = vpack.c.b16 %v592, %v592
  %v657 = vpack.c.b16 %v593, %v593
  %v658 = vpack.c.b16 %v594, %v594
  %v659 = vpack.c.b16 %v595, %v595
  %v660 = vpack.c.b16 %v596, %v596
  %v661 = vpack.c.b16 %v597, %v597
  %v662 = vpack.c.b16 %v598, %v598
  %v663 = vpack.c.b16 %v599, %v599
  %v664 = vpack.c.b16 %v600, %v600
  %v665 = vpack.c.b16 %v601, %v601
  %v666 = vpack.c.b16 %v602, %v602
  %v667 = vpack.c.b16 %v603, %v603
  %732 = vst [vmem:[%s3] sm:$0xf] %v604
  %733 = vst [vmem:[%s3 + $0x4] sm:$0xf] %v605
  %734 = vst [vmem:[%s3 + $0x8] sm:$0xf] %v606
  %735 = vst [vmem:[%s3 + $0xc] sm:$0xf] %v607
  %736 = vst [vmem:[%s3 + $0x10] sm:$0xf] %v608
  %737 = vst [vmem:[%s3 + $0x14] sm:$0xf] %v609
  %738 = vst [vmem:[%s3 + $0x18] sm:$0xf] %v610
  %739 = vst [vmem:[%s3 + $0x1c] sm:$0xf] %v611
  %740 = vst [vmem:[%s3 + $0x20] sm:$0xf] %v612
  %741 = vst [vmem:[%s3 + $0x24] sm:$0xf] %v613
  %742 = vst [vmem:[%s3 + $0x28] sm:$0xf] %v614
  %743 = vst [vmem:[%s3 + $0x2c] sm:$0xf] %v615
  %744 = vst [vmem:[%s3 + $0x30] sm:$0xf] %v616
  %745 = vst [vmem:[%s3 + $0x34] sm:$0xf] %v617
  %746 = vst [vmem:[%s3 + $0x38] sm:$0xf] %v618
  %747 = vst [vmem:[%s3 + $0x3c] sm:$0xf] %v619
  %748 = vst [vmem:[%s3 + $0x40] sm:$0xf] %v620
  %749 = vst [vmem:[%s3 + $0x44] sm:$0xf] %v621
  %750 = vst [vmem:[%s3 + $0x48] sm:$0xf] %v622
  %751 = vst [vmem:[%s3 + $0x4c] sm:$0xf] %v623
  %752 = vst [vmem:[%s3 + $0x50] sm:$0xf] %v624
  %753 = vst [vmem:[%s3 + $0x54] sm:$0xf] %v625
  %754 = vst [vmem:[%s3 + $0x58] sm:$0xf] %v626
  %755 = vst [vmem:[%s3 + $0x5c] sm:$0xf] %v627
  %756 = vst [vmem:[%s3 + $0x60] sm:$0xf] %v628
  %757 = vst [vmem:[%s3 + $0x64] sm:$0xf] %v629
  %758 = vst [vmem:[%s3 + $0x68] sm:$0xf] %v630
  %759 = vst [vmem:[%s3 + $0x6c] sm:$0xf] %v631
  %760 = vst [vmem:[%s3 + $0x70] sm:$0xf] %v632
  %761 = vst [vmem:[%s3 + $0x74] sm:$0xf] %v633
  %762 = vst [vmem:[%s3 + $0x78] sm:$0xf] %v634
  %763 = vst [vmem:[%s3 + $0x7c] sm:$0xf] %v635
  %764 = vst [vmem:[%s3 + $0x80] sm:$0xf] %v636
  %765 = vst [vmem:[%s3 + $0x84] sm:$0xf] %v637
  %766 = vst [vmem:[%s3 + $0x88] sm:$0xf] %v638
  %767 = vst [vmem:[%s3 + $0x8c] sm:$0xf] %v639
  %768 = vst [vmem:[%s3 + $0x90] sm:$0xf] %v640
  %769 = vst [vmem:[%s3 + $0x94] sm:$0xf] %v641
  %770 = vst [vmem:[%s3 + $0x98] sm:$0xf] %v642
  %771 = vst [vmem:[%s3 + $0x9c] sm:$0xf] %v643
  %772 = vst [vmem:[%s3 + $0xa0] sm:$0xf] %v644
  %773 = vst [vmem:[%s3 + $0xa4] sm:$0xf] %v645
  %774 = vst [vmem:[%s3 + $0xa8] sm:$0xf] %v646
  %775 = vst [vmem:[%s3 + $0xac] sm:$0xf] %v647
  %776 = vst [vmem:[%s3 + $0xb0] sm:$0xf] %v648
  %777 = vst [vmem:[%s3 + $0xb4] sm:$0xf] %v649
  %778 = vst [vmem:[%s3 + $0xb8] sm:$0xf] %v650
  %779 = vst [vmem:[%s3 + $0xbc] sm:$0xf] %v651
  %780 = vst [vmem:[%s3 + $0xc0] sm:$0xf] %v652
  %781 = vst [vmem:[%s3 + $0xc4] sm:$0xf] %v653
  %782 = vst [vmem:[%s3 + $0xc8] sm:$0xf] %v654
  %783 = vst [vmem:[%s3 + $0xcc] sm:$0xf] %v655
  %784 = vst [vmem:[%s3 + $0xd0] sm:$0xf] %v656
  %785 = vst [vmem:[%s3 + $0xd4] sm:$0xf] %v657
  %786 = vst [vmem:[%s3 + $0xd8] sm:$0xf] %v658
  %787 = vst [vmem:[%s3 + $0xdc] sm:$0xf] %v659
  %788 = vst [vmem:[%s3 + $0xe0] sm:$0xf] %v660
  %789 = vst [vmem:[%s3 + $0xe4] sm:$0xf] %v661
  %790 = vst [vmem:[%s3 + $0xe8] sm:$0xf] %v662
  %791 = vst [vmem:[%s3 + $0xec] sm:$0xf] %v663
  %792 = vst [vmem:[%s3 + $0xf0] sm:$0xf] %v664
  %793 = vst [vmem:[%s3 + $0xf4] sm:$0xf] %v665
  %794 = vst [vmem:[%s3 + $0xf8] sm:$0xf] %v666
  %795 = vst [vmem:[%s3 + $0xfc] sm:$0xf] %v667
  // Predicated region
  $region14: #{discriminator512_forward.12} parent=0 // pred_check
    _
  $region15: #{discriminator512_forward.12} parent=0 // pred_check_branch
    %797 = sbr.rel (0) target = $region17
  $region16: #{discriminator512_forward.12} parent=0 // pred_region
    _
  $region17: #{discriminator512_forward.12} parent=0 // pred_fallthru
    _
  // Predicated region
  $region18: #{discriminator512_forward.12} parent=0 // pred_check
    _
  $region19: #{discriminator512_forward.12} parent=0 // pred_check_branch
    %799 = sbr.rel (0) target = $region21
  $region20: #{discriminator512_forward.12} parent=0 // pred_region
    _
  $region21: #{discriminator512_forward.12} parent=0 // pred_fallthru
    _

// kernel: discriminator512_forward.11
$region0: #{discriminator512_forward.11}
  #allocation0 [shape = 'u32[]', space=smem, size = 0x4, offset = 0x4, fixed_abs, tag = 'smem constant byte address 0x4 - core index']
  #allocation1 [shape = 'u32[144,128]{1,0:T(1,128)}', space=vmem, size = 0x12000, scoped, tag = 'internal scratch']
  #allocation2 [shape = 'f32[256,128]{1,0:T(8,128)}', space=vmem, size = 0x20000, scoped, tag = 'scratch operand']
  %s0 = inlined_call_operand.vmem [shape: bf16[512,128], index: 0, kind: input, shape index: {}]
  %s1 = inlined_call_operand.vmem [shape: bf16[128,128], index: 1, kind: input, shape index: {}]
  %s2 = inlined_call_operand.vmem [shape: f32[1,128], index: 2, kind: input, shape index: {}]
  %s3 = inlined_call_operand.vmem [shape: bf16[512,128], index: 3, kind: output, shape index: {0}]
  %s4 = inlined_call_operand.vmem [shape: f32[16,128], index: 4, kind: output, shape index: {1}]
  %5 = xla_tuple %s3, %s4
  %s6 = sld [smem:[#allocation0]]
  $region61: #{discriminator512_forward.11} parent=0
    _
  %s8 = ssub.s32 1, %s6
  %s9 = scalar_select 0, %s8, %s6
  loop: start=0, step=1, limit=4
  $region2: #{discriminator512_forward.11} parent=0 // loop_pre_header
    _
  $region3: #{discriminator512_forward.11} parent=0 // loop_header
    %s11 = sphi 0, %s15
    %p12 = scmp.ge.s32.totalorder %s11, 4
    %s18 = sphi 0, %s30
    %s19 = sphi 0, %s26
    %s20 = sphi 0, %s18
    %s21 = sphi 0, %s19
    %s22 = sphi 0, %s20
    %s23 = sphi 0, %s21
    %s35 = sphi 0, %s37
    %s38 = sphi 0, %s35
    %s39 = sphi 0, %s38
    %s55 = sphi 0, %s39
    %s59 = sphi 0, %s59
    %s61 = sphi 0, %s59
    %s62 = sphi 0, %s61
    %s76 = sphi 0, %s62
    %s80 = sphi 0, %s80
    %s82 = sphi 0, %s80
    %s83 = sphi 0, %s82
    %s97 = sphi 0, %s83
    %s103 = sphi 0, %s105
    %s106 = sphi 0, %s103
    %s107 = sphi 0, %s106
    %s123 = sphi 0, %s107
    %s129 = sphi 0, %s131
    %s132 = sphi 0, %s129
    %s133 = sphi 0, %s132
    %s149 = sphi 0, %s133
  $region4: #{discriminator512_forward.11} parent=0 // loop_header_branch
    %14 = sbr.rel (%p12) target = $region8
  $region5: #{discriminator512_forward.11} parent=0 // loop_body
    %s16 = ssub.s32 %s11, 1
    %s17 = ssub.s32 %s11, 2
    %s24 = sadd.s32 1, %s19
    %p25 = scmp.ge.s32.totalorder %s24, 1
    %s26 = scalar_select %p25, 0, %s24
    %s27 = sadd.s32 1, %s18
    %s28 = scalar_select %p25, %s27, %s18
    %p29 = scmp.ge.s32.totalorder %s28, 2
    %s30 = scalar_select %p29, 0, %s28
    %s31 = ssub.s32 %s18, %s30
    %s32 = ssub.s32 %s19, %s26
    %s33 = sor.u32 %s31, %s32
    %p34 = scmp.eq.s32.totalorder %s33, 0
    %s36 = sadd.s32 %s35, 1
    %s37 = scalar_select %p34, %s35, %s36
    %p40 = pneg %p34
    %p41 = scmp.eq.s32.totalorder %s11, 1
    %p42 = por %p40, %p41
    %p43 = scmp.ne.s32.totalorder %s35, %s38
    %p44 = scmp.eq.s32.totalorder %s11, 0
    %p45 = por %p43, %p44
    %p46 = scmp.ne.s32.totalorder %s35, %s38
    %p47 = scmp.eq.s32.totalorder %s16, 1
    %p48 = por %p46, %p47
    %p49 = scmp.ne.s32.totalorder %s38, %s39
    %p50 = scmp.eq.s32.totalorder %s16, 0
    %p51 = por %p49, %p50
    %p52 = scmp.ne.s32.totalorder %s38, %s39
    %p53 = scmp.eq.s32.totalorder %s17, 1
    %p54 = por %p52, %p53
    %p56 = scmp.ne.s32.totalorder %s39, %s55
    %p57 = scmp.eq.s32.totalorder %s17, 0
    %p58 = por %p56, %p57
    %s60 = sadd.s32 %s59, 1
    %p63 = scmp.eq.s32.totalorder %s11, 1
    %p64 = scmp.ne.s32.totalorder %s59, %s61
    %p65 = scmp.eq.s32.totalorder %s11, 0
    %p66 = por %p64, %p65
    %p67 = scmp.ne.s32.totalorder %s59, %s61
    %p68 = scmp.eq.s32.totalorder %s16, 1
    %p69 = por %p67, %p68
    %p70 = scmp.ne.s32.totalorder %s61, %s62
    %p71 = scmp.eq.s32.totalorder %s16, 0
    %p72 = por %p70, %p71
    %p73 = scmp.ne.s32.totalorder %s61, %s62
    %p74 = scmp.eq.s32.totalorder %s17, 1
    %p75 = por %p73, %p74
    %p77 = scmp.ne.s32.totalorder %s62, %s76
    %p78 = scmp.eq.s32.totalorder %s17, 0
    %p79 = por %p77, %p78
    %s81 = sadd.s32 %s80, 1
    %p84 = scmp.eq.s32.totalorder %s11, 1
    %p85 = scmp.ne.s32.totalorder %s80, %s82
    %p86 = scmp.eq.s32.totalorder %s11, 0
    %p87 = por %p85, %p86
    %p88 = scmp.ne.s32.totalorder %s80, %s82
    %p89 = scmp.eq.s32.totalorder %s16, 1
    %p90 = por %p88, %p89
    %p91 = scmp.ne.s32.totalorder %s82, %s83
    %p92 = scmp.eq.s32.totalorder %s16, 0
    %p93 = por %p91, %p92
    %p94 = scmp.ne.s32.totalorder %s82, %s83
    %p95 = scmp.eq.s32.totalorder %s17, 1
    %p96 = por %p94, %p95
    %p98 = scmp.ne.s32.totalorder %s83, %s97
    %p99 = scmp.eq.s32.totalorder %s17, 0
    %p100 = por %p98, %p99
    %s101 = ssub.s32 %s18, %s30
    %p102 = scmp.eq.s32.totalorder %s101, 0
    %s104 = sadd.s32 %s103, 1
    %s105 = scalar_select %p102, %s103, %s104
    %p108 = pneg %p102
    %p109 = scmp.eq.s32.totalorder %s11, 1
    %p110 = por %p108, %p109
    %p111 = scmp.ne.s32.totalorder %s103, %s106
    %p112 = scmp.eq.s32.totalorder %s11, 0
    %p113 = por %p111, %p112
    %p114 = scmp.ne.s32.totalorder %s103, %s106
    %p115 = scmp.eq.s32.totalorder %s16, 1
    %p116 = por %p114, %p115
    %p117 = scmp.ne.s32.totalorder %s106, %s107
    %p118 = scmp.eq.s32.totalorder %s16, 0
    %p119 = por %p117, %p118
    %p120 = scmp.ne.s32.totalorder %s106, %s107
    %p121 = scmp.eq.s32.totalorder %s17, 1
    %p122 = por %p120, %p121
    %p124 = scmp.ne.s32.totalorder %s107, %s123
    %p125 = scmp.eq.s32.totalorder %s17, 0
    %p126 = por %p124, %p125
    %s127 = ssub.s32 %s18, %s30
    %p128 = scmp.eq.s32.totalorder %s127, 0
    %s130 = sadd.s32 %s129, 1
    %s131 = scalar_select %p128, %s129, %s130
    %p134 = pneg %p128
    %p135 = scmp.eq.s32.totalorder %s11, 1
    %p136 = por %p134, %p135
    %p137 = scmp.ne.s32.totalorder %s129, %s132
    %p138 = scmp.eq.s32.totalorder %s11, 0
    %p139 = por %p137, %p138
    %p140 = scmp.ne.s32.totalorder %s129, %s132
    %p141 = scmp.eq.s32.totalorder %s16, 1
    %p142 = por %p140, %p141
    %p143 = scmp.ne.s32.totalorder %s132, %s133
    %p144 = scmp.eq.s32.totalorder %s16, 0
    %p145 = por %p143, %p144
    %p146 = scmp.ne.s32.totalorder %s132, %s133
    %p147 = scmp.eq.s32.totalorder %s17, 1
    %p148 = por %p146, %p147
    %p150 = scmp.ne.s32.totalorder %s133, %s149
    %p151 = scmp.eq.s32.totalorder %s17, 0
    %p152 = por %p150, %p151
    %p153 = scmp.le.s32.totalorder 1, %s11
    %p154 = scmp.lt.s32.totalorder %s11, 3
    %p155 = pnand %p153, %p154
    %p156 = pneg %p155
    // Predicated region
    $region9: #{discriminator512_forward.11} parent=5 // pred_check
      _
    $region10: #{discriminator512_forward.11} parent=5 // pred_check_branch
      %158 = sbr.rel (%p155) target = $region12
    $region11: #{discriminator512_forward.11} parent=5 // pred_region
      %s159 = ssub.s32 %s11, 1
      // Predicated region
      $region13: #{discriminator512_forward.11} parent=11 // pred_check
        %p160 = pneg %p72
      $region14: #{discriminator512_forward.11} parent=11 // pred_check_branch
        %162 = sbr.rel (%p160) target = $region16
      $region15: #{discriminator512_forward.11} parent=11 // pred_region
        _
      $region16: #{discriminator512_forward.11} parent=11 // pred_fallthru
        _
      // Predicated region
      $region17: #{discriminator512_forward.11} parent=11 // pred_check
        %p163 = pneg %p93
      $region18: #{discriminator512_forward.11} parent=11 // pred_check_branch
        %165 = sbr.rel (%p163) target = $region20
      $region19: #{discriminator512_forward.11} parent=11 // pred_region
        _
      $region20: #{discriminator512_forward.11} parent=11 // pred_fallthru
        _
    $region12: #{discriminator512_forward.11} parent=5 // pred_fallthru
      _
    %p166 = scmp.lt.s32.totalorder %s11, 2
    // Predicated region
    $region21: #{discriminator512_forward.11} parent=5 // pred_check
      %p167 = pneg %p166
    $region22: #{discriminator512_forward.11} parent=5 // pred_check_branch
      %169 = sbr.rel (%p167) target = $region24
    $region23: #{discriminator512_forward.11} parent=5 // pred_region
      // Predicated region
      $region25: #{discriminator512_forward.11} parent=23 // pred_check
        %p170 = pneg %p45
      $region26: #{discriminator512_forward.11} parent=23 // pred_check_branch
        %172 = sbr.rel (%p170) target = $region28
      $region27: #{discriminator512_forward.11} parent=23 // pred_region
        %s173 = smul.u32 32, %s18
        %p174 = scmp.lt.s32.totalorder %s173, 63
        %s175 = scalar_select %p174, %s173, 63
        %p176 = scmp.lt.s32.totalorder %s19, 0
        %s177 = scalar_select %p176, %s19, 0
        %s178 = sadd.s32 %s177, %s175
        %s179 = smul.addr %s178, 4
        %s180 = scalar_lea.vmem %s0, %s179
        %s181 = smul.u32 32, %s18
      $region28: #{discriminator512_forward.11} parent=23 // pred_fallthru
        _
    $region24: #{discriminator512_forward.11} parent=5 // pred_fallthru
      _
    %p182 = scmp.le.s32.totalorder 1, %s11
    %p183 = scmp.lt.s32.totalorder %s11, 3
    %p184 = pnand %p182, %p183
    %p185 = pneg %p184
    // Predicated region
    $region29: #{discriminator512_forward.11} parent=5 // pred_check
      _
    $region30: #{discriminator512_forward.11} parent=5 // pred_check_branch
      %187 = sbr.rel (%p184) target = $region32
    $region31: #{discriminator512_forward.11} parent=5 // pred_region
      %s188 = ssub.s32 %s11, 1
      %s189 = smul.u32 32, %s20
      %p190 = scmp.lt.s32.totalorder %s189, 63
      %s191 = scalar_select %p190, %s189, 63
      %p192 = scmp.lt.s32.totalorder %s21, 0
      %s193 = scalar_select %p192, %s21, 0
      %s194 = sadd.s32 %s193, %s191
      %s195 = smul.addr %s194, 4
      %s196 = scalar_lea.vmem %s0, %s195
      %p197 = pneg %p51
      %p198 = pneg %p48
      %p199 = pneg %p72
      %p200 = pneg %p69
      %p201 = pneg %p93
      %p202 = pneg %p90
      %p203 = pneg %p119
      %p204 = pneg %p116
      %s205 = smul.u32 32, %s20
      %p206 = scmp.lt.s32.totalorder %s205, 63
      %s207 = scalar_select %p206, %s205, 63
      %s208 = smul.addr %s207, 4
      %s209 = scalar_lea.vmem %s3, %s208
      %p210 = pneg %p145
      %p211 = pneg %p142
      %p212 = scmp.lt.s32.totalorder %s20, 1
      %s213 = scalar_select %p212, %s20, 1
      %s214 = smul.addr %s213, 8
      %s215 = scalar_lea.vmem %s4, %s214
      %s216 = smul.u32 32, %s20
      %p217 = scmp.lt.s32.totalorder %s216, 63
      %s218 = scalar_select %p217, %s216, 63
      %p219 = scmp.lt.s32.totalorder %s21, 0
      %s220 = scalar_select %p219, %s21, 0
      %s221 = sadd.s32 %s220, %s218
      %s222 = smul.addr %s221, 4
      %s223 = scalar_lea.vmem %s0, %s222
      %s224 = smul.u32 32, %s20
      %s225 = smul.u32 32, %s20
      %p226 = scmp.lt.s32.totalorder %s225, 63
      %s227 = scalar_select %p226, %s225, 63
      %s228 = smul.addr %s227, 4
      %s229 = scalar_lea.vmem %s3, %s228
      %s230 = smul.u32 32, %s20
      %p231 = scmp.lt.s32.totalorder %s20, 1
      %s232 = scalar_select %p231, %s20, 1
      %s233 = smul.addr %s232, 8
      %s234 = scalar_lea.vmem %s4, %s233
      %p236 = scmp.eq.s32.totalorder %s21, 0
      // Predicated region
      $region33: #{discriminator512_forward.11} parent=31 // pred_check
        %p237 = pneg %p236
      $region34: #{discriminator512_forward.11} parent=31 // pred_check_branch
        %239 = sbr.rel (%p237) target = $region36
      $region35: #{discriminator512_forward.11} parent=31 // pred_region
        %240 = vst [vmem:[#allocation2] sm:$0xff] 0.0
        %241 = vst [vmem:[#allocation2 + $0x8] sm:$0xff] 0.0
        %242 = vst [vmem:[#allocation2 + $0x10] sm:$0xff] 0.0
        %243 = vst [vmem:[#allocation2 + $0x18] sm:$0xff] 0.0
        %244 = vst [vmem:[#allocation2 + $0x20] sm:$0xff] 0.0
        %245 = vst [vmem:[#allocation2 + $0x28] sm:$0xff] 0.0
        %246 = vst [vmem:[#allocation2 + $0x30] sm:$0xff] 0.0
        %247 = vst [vmem:[#allocation2 + $0x38] sm:$0xff] 0.0
        %248 = vst [vmem:[#allocation2 + $0x40] sm:$0xff] 0.0
        %249 = vst [vmem:[#allocation2 + $0x48] sm:$0xff] 0.0
        %250 = vst [vmem:[#allocation2 + $0x50] sm:$0xff] 0.0
        %251 = vst [vmem:[#allocation2 + $0x58] sm:$0xff] 0.0
        %252 = vst [vmem:[#allocation2 + $0x60] sm:$0xff] 0.0
        %253 = vst [vmem:[#allocation2 + $0x68] sm:$0xff] 0.0
        %254 = vst [vmem:[#allocation2 + $0x70] sm:$0xff] 0.0
        %255 = vst [vmem:[#allocation2 + $0x78] sm:$0xff] 0.0
        %256 = vst [vmem:[#allocation2 + $0x80] sm:$0xff] 0.0
        %257 = vst [vmem:[#allocation2 + $0x88] sm:$0xff] 0.0
        %258 = vst [vmem:[#allocation2 + $0x90] sm:$0xff] 0.0
        %259 = vst [vmem:[#allocation2 + $0x98] sm:$0xff] 0.0
        %260 = vst [vmem:[#allocation2 + $0xa0] sm:$0xff] 0.0
        %261 = vst [vmem:[#allocation2 + $0xa8] sm:$0xff] 0.0
        %262 = vst [vmem:[#allocation2 + $0xb0] sm:$0xff] 0.0
        %263 = vst [vmem:[#allocation2 + $0xb8] sm:$0xff] 0.0
        %264 = vst [vmem:[#allocation2 + $0xc0] sm:$0xff] 0.0
        %265 = vst [vmem:[#allocation2 + $0xc8] sm:$0xff] 0.0
        %266 = vst [vmem:[#allocation2 + $0xd0] sm:$0xff] 0.0
        %267 = vst [vmem:[#allocation2 + $0xd8] sm:$0xff] 0.0
        %268 = vst [vmem:[#allocation2 + $0xe0] sm:$0xff] 0.0
        %269 = vst [vmem:[#allocation2 + $0xe8] sm:$0xff] 0.0
        %270 = vst [vmem:[#allocation2 + $0xf0] sm:$0xff] 0.0
        %271 = vst [vmem:[#allocation2 + $0xf8] sm:$0xff] 0.0
      $region36: #{discriminator512_forward.11} parent=31 // pred_fallthru
        _
      %v272 = vld [vmem:[%s1] sm:$0xf]
      %v273 = vld [vmem:[%s1 + $0x4] sm:$0xf]
      %v274 = vld [vmem:[%s1 + $0x8] sm:$0xf]
      %v275 = vld [vmem:[%s1 + $0xc] sm:$0xf]
      %v276 = vld [vmem:[%s1 + $0x10] sm:$0xf]
      %v277 = vld [vmem:[%s1 + $0x14] sm:$0xf]
      %v278 = vld [vmem:[%s1 + $0x18] sm:$0xf]
      %v279 = vld [vmem:[%s1 + $0x1c] sm:$0xf]
      %v280 = vld [vmem:[%s1 + $0x20] sm:$0xf]
      %v281 = vld [vmem:[%s1 + $0x24] sm:$0xf]
      %v282 = vld [vmem:[%s1 + $0x28] sm:$0xf]
      %v283 = vld [vmem:[%s1 + $0x2c] sm:$0xf]
      %v284 = vld [vmem:[%s1 + $0x30] sm:$0xf]
      %v285 = vld [vmem:[%s1 + $0x34] sm:$0xf]
      %v286 = vld [vmem:[%s1 + $0x38] sm:$0xf]
      %v287 = vld [vmem:[%s1 + $0x3c] sm:$0xf]
      %v288 = vld [vmem:[#allocation2] sm:$0xff]
      %v289 = vld [vmem:[#allocation2 + $0x8] sm:$0xff]
      %v290 = vld [vmem:[#allocation2 + $0x10] sm:$0xff]
      %v291 = vld [vmem:[#allocation2 + $0x18] sm:$0xff]
      %v292 = vld [vmem:[#allocation2 + $0x20] sm:$0xff]
      %v293 = vld [vmem:[#allocation2 + $0x28] sm:$0xff]
      %v294 = vld [vmem:[#allocation2 + $0x30] sm:$0xff]
      %v295 = vld [vmem:[#allocation2 + $0x38] sm:$0xff]
      %v296 = vld [vmem:[#allocation2 + $0x40] sm:$0xff]
      %v297 = vld [vmem:[#allocation2 + $0x48] sm:$0xff]
      %v298 = vld [vmem:[#allocation2 + $0x50] sm:$0xff]
      %v299 = vld [vmem:[#allocation2 + $0x58] sm:$0xff]
      %v300 = vld [vmem:[#allocation2 + $0x60] sm:$0xff]
      %v301 = vld [vmem:[#allocation2 + $0x68] sm:$0xff]
      %v302 = vld [vmem:[#allocation2 + $0x70] sm:$0xff]
      %v303 = vld [vmem:[#allocation2 + $0x78] sm:$0xff]
      %v304 = vld [vmem:[#allocation2 + $0x80] sm:$0xff]
      %v305 = vld [vmem:[#allocation2 + $0x88] sm:$0xff]
      %v306 = vld [vmem:[#allocation2 + $0x90] sm:$0xff]
      %v307 = vld [vmem:[#allocation2 + $0x98] sm:$0xff]
      %v308 = vld [vmem:[#allocation2 + $0xa0] sm:$0xff]
      %v309 = vld [vmem:[#allocation2 + $0xa8] sm:$0xff]
      %v310 = vld [vmem:[#allocation2 + $0xb0] sm:$0xff]
      %v311 = vld [vmem:[#allocation2 + $0xb8] sm:$0xff]
      %v312 = vld [vmem:[#allocation2 + $0xc0] sm:$0xff]
      %v313 = vld [vmem:[#allocation2 + $0xc8] sm:$0xff]
      %v314 = vld [vmem:[#allocation2 + $0xd0] sm:$0xff]
      %v315 = vld [vmem:[#allocation2 + $0xd8] sm:$0xff]
      %v316 = vld [vmem:[#allocation2 + $0xe0] sm:$0xff]
      %v317 = vld [vmem:[#allocation2 + $0xe8] sm:$0xff]
      %v318 = vld [vmem:[#allocation2 + $0xf0] sm:$0xff]
      %v319 = vld [vmem:[#allocation2 + $0xf8] sm:$0xff]
      %v320 = vld [vmem:[%s223] sm:$0xf]
      %v321 = vld [vmem:[%s223 + $0x4] sm:$0xf]
      %v322 = vld [vmem:[%s223 + $0x8] sm:$0xf]
      %v323 = vld [vmem:[%s223 + $0xc] sm:$0xf]
      %v324 = vld [vmem:[%s223 + $0x10] sm:$0xf]
      %v325 = vld [vmem:[%s223 + $0x14] sm:$0xf]
      %v326 = vld [vmem:[%s223 + $0x18] sm:$0xf]
      %v327 = vld [vmem:[%s223 + $0x1c] sm:$0xf]
      %v328 = vld [vmem:[%s223 + $0x20] sm:$0xf]
      %v329 = vld [vmem:[%s223 + $0x24] sm:$0xf]
      %v330 = vld [vmem:[%s223 + $0x28] sm:$0xf]
      %v331 = vld [vmem:[%s223 + $0x2c] sm:$0xf]
      %v332 = vld [vmem:[%s223 + $0x30] sm:$0xf]
      %v333 = vld [vmem:[%s223 + $0x34] sm:$0xf]
      %v334 = vld [vmem:[%s223 + $0x38] sm:$0xf]
      %v335 = vld [vmem:[%s223 + $0x3c] sm:$0xf]
      %v336 = vld [vmem:[%s223 + $0x40] sm:$0xf]
      %v337 = vld [vmem:[%s223 + $0x44] sm:$0xf]
      %v338 = vld [vmem:[%s223 + $0x48] sm:$0xf]
      %v339 = vld [vmem:[%s223 + $0x4c] sm:$0xf]
      %v340 = vld [vmem:[%s223 + $0x50] sm:$0xf]
      %v341 = vld [vmem:[%s223 + $0x54] sm:$0xf]
      %v342 = vld [vmem:[%s223 + $0x58] sm:$0xf]
      %v343 = vld [vmem:[%s223 + $0x5c] sm:$0xf]
      %v344 = vld [vmem:[%s223 + $0x60] sm:$0xf]
      %v345 = vld [vmem:[%s223 + $0x64] sm:$0xf]
      %v346 = vld [vmem:[%s223 + $0x68] sm:$0xf]
      %v347 = vld [vmem:[%s223 + $0x6c] sm:$0xf]
      %v348 = vld [vmem:[%s223 + $0x70] sm:$0xf]
      %v349 = vld [vmem:[%s223 + $0x74] sm:$0xf]
      %v350 = vld [vmem:[%s223 + $0x78] sm:$0xf]
      %v351 = vld [vmem:[%s223 + $0x7c] sm:$0xf]
      %v384 = vunpack.c.l.b16 %v320
      %v385 = vunpack.c.l.b16 %v321
      %v386 = vunpack.c.l.b16 %v322
      %v387 = vunpack.c.l.b16 %v323
      %v388 = vunpack.c.l.b16 %v324
      %v389 = vunpack.c.l.b16 %v325
      %v390 = vunpack.c.l.b16 %v326
      %v391 = vunpack.c.l.b16 %v327
      %v392 = vunpack.c.l.b16 %v328
      %v393 = vunpack.c.l.b16 %v329
      %v394 = vunpack.c.l.b16 %v330
      %v395 = vunpack.c.l.b16 %v331
      %v396 = vunpack.c.l.b16 %v332
      %v397 = vunpack.c.l.b16 %v333
      %v398 = vunpack.c.l.b16 %v334
      %v399 = vunpack.c.l.b16 %v335
      %v400 = vunpack.c.l.b16 %v336
      %v401 = vunpack.c.l.b16 %v337
      %v402 = vunpack.c.l.b16 %v338
      %v403 = vunpack.c.l.b16 %v339
      %v404 = vunpack.c.l.b16 %v340
      %v405 = vunpack.c.l.b16 %v341
      %v406 = vunpack.c.l.b16 %v342
      %v407 = vunpack.c.l.b16 %v343
      %v408 = vunpack.c.l.b16 %v344
      %v409 = vunpack.c.l.b16 %v345
      %v410 = vunpack.c.l.b16 %v346
      %v411 = vunpack.c.l.b16 %v347
      %v412 = vunpack.c.l.b16 %v348
      %v413 = vunpack.c.l.b16 %v349
      %v414 = vunpack.c.l.b16 %v350
      %v415 = vunpack.c.l.b16 %v351
      %v416 = vpack.c.b16 %v385, %v384
      %v417 = vpack.c.b16 %v387, %v386
      %v418 = vpack.c.b16 %v389, %v388
      %v419 = vpack.c.b16 %v391, %v390
      %v420 = vpack.c.b16 %v393, %v392
      %v421 = vpack.c.b16 %v395, %v394
      %v422 = vpack.c.b16 %v397, %v396
      %v423 = vpack.c.b16 %v399, %v398
      %v424 = vpack.c.b16 %v401, %v400
      %v425 = vpack.c.b16 %v403, %v402
      %v426 = vpack.c.b16 %v405, %v404
      %v427 = vpack.c.b16 %v407, %v406
      %v428 = vpack.c.b16 %v409, %v408
      %v429 = vpack.c.b16 %v411, %v410
      %v430 = vpack.c.b16 %v413, %v412
      %v431 = vpack.c.b16 %v415, %v414
      %v464 = vunpack.c.l.b16 %v272
      %v465 = vunpack.c.l.b16 %v273
      %v466 = vunpack.c.l.b16 %v274
      %v467 = vunpack.c.l.b16 %v275
      %v468 = vunpack.c.l.b16 %v276
      %v469 = vunpack.c.l.b16 %v277
      %v470 = vunpack.c.l.b16 %v278
      %v471 = vunpack.c.l.b16 %v279
      %v472 = vunpack.c.l.b16 %v280
      %v473 = vunpack.c.l.b16 %v281
      %v474 = vunpack.c.l.b16 %v282
      %v475 = vunpack.c.l.b16 %v283
      %v476 = vunpack.c.l.b16 %v284
      %v477 = vunpack.c.l.b16 %v285
      %v478 = vunpack.c.l.b16 %v286
      %v479 = vunpack.c.l.b16 %v287
      %v480 = vpack.c.b16 %v465, %v464
      %v481 = vpack.c.b16 %v467, %v466
      %v482 = vpack.c.b16 %v469, %v468
      %v483 = vpack.c.b16 %v471, %v470
      %v484 = vpack.c.b16 %v473, %v472
      %v485 = vpack.c.b16 %v475, %v474
      %v486 = vpack.c.b16 %v477, %v476
      %v487 = vpack.c.b16 %v479, %v478
      %496 = vmatprep.subr.bf16.mxu0 0
      %497 = vmatpush1.bf16.msra.mxu0 %v487
      %498 = vmatprep.subr.bf16.mxu0 0
      %499 = vmatpush1.bf16.msra.mxu0 %v486
      %500 = vmatprep.subr.bf16.mxu0 0
      %501 = vmatpush1.bf16.msra.mxu0 %v485
      %502 = vmatprep.subr.bf16.mxu0 0
      %503 = vmatpush1.bf16.msra.mxu0 %v484
      %504 = vmatprep.subr.bf16.mxu0 0
      %505 = vmatpush1.bf16.msra.mxu0 %v483
      %506 = vmatprep.subr.bf16.mxu0 0
      %507 = vmatpush1.bf16.msra.mxu0 %v482
      %508 = vmatprep.subr.bf16.mxu0 0
      %509 = vmatpush1.bf16.msra.mxu0 %v481
      %510 = vmatprep.subr.bf16.mxu0 0
      %511 = vmatpush1.bf16.msra.mxu0 %v480
      %512 = vmatprep.subr.bf16.mxu0 0
      %513 = vmatpush2.bf16.msra.mxu0 0
      %514 = vmatprep.subr.bf16.mxu0 0
      %515 = vmatpush2.bf16.msra.mxu0 0
      %516 = vmatprep.subr.bf16.mxu0 0
      %517 = vmatpush2.bf16.msra.mxu0 0
      %518 = vmatprep.subr.bf16.mxu0 0
      %519 = vmatpush2.bf16.msra.mxu0 0
      %520 = vmatprep.subr.bf16.mxu0 0
      %521 = vmatpush2.bf16.msra.mxu0 0
      %522 = vmatprep.subr.bf16.mxu0 0
      %523 = vmatpush2.bf16.msra.mxu0 0
      %524 = vmatprep.subr.bf16.mxu0 0
      %525 = vmatpush2.bf16.msra.mxu0 0
      %526 = vmatprep.subr.bf16.mxu0 0
      %527 = vmatpush2.bf16.msra.mxu0 0
      %528 = vmatprep.mubr.bf16.mxu0 0
      %529 = vmatmul.mubr.bf16.gmra.mxu0 %v416
      %v530 = vpop.f32.mrf.mxu0
      %v531 = vadd.f32 0.0, %v530
      %v532 = vpop.f32.mrf.mxu0
      %v533 = vpop.f32.mrf.mxu0
      %v534 = vadd.f32 0.0, %v533
      %v535 = vpop.f32.mrf.mxu0
      %536 = vmatprep.mubr.bf16.mxu0 0
      %537 = vmatmul.mubr.bf16.gmra.mxu0 %v417
      %v538 = vpop.f32.mrf.mxu0
      %v539 = vadd.f32 0.0, %v538
      %v540 = vpop.f32.mrf.mxu0
      %v541 = vpop.f32.mrf.mxu0
      %v542 = vadd.f32 0.0, %v541
      %v543 = vpop.f32.mrf.mxu0
      %544 = vmatprep.mubr.bf16.mxu0 0
      %545 = vmatmul.mubr.bf16.gmra.mxu0 %v418
      %v546 = vpop.f32.mrf.mxu0
      %v547 = vadd.f32 0.0, %v546
      %v548 = vpop.f32.mrf.mxu0
      %v549 = vpop.f32.mrf.mxu0
      %v550 = vadd.f32 0.0, %v549
      %v551 = vpop.f32.mrf.mxu0
      %552 = vmatprep.mubr.bf16.mxu0 0
      %553 = vmatmul.mubr.bf16.gmra.mxu0 %v419
      %v554 = vpop.f32.mrf.mxu0
      %v555 = vadd.f32 0.0, %v554
      %v556 = vpop.f32.mrf.mxu0
      %v557 = vpop.f32.mrf.mxu0
      %v558 = vadd.f32 0.0, %v557
      %v559 = vpop.f32.mrf.mxu0
      %560 = vmatprep.mubr.bf16.mxu0 0
      %561 = vmatmul.mubr.bf16.gmra.mxu0 %v420
      %v562 = vpop.f32.mrf.mxu0
      %v563 = vadd.f32 0.0, %v562
      %v564 = vpop.f32.mrf.mxu0
      %v565 = vpop.f32.mrf.mxu0
      %v566 = vadd.f32 0.0, %v565
      %v567 = vpop.f32.mrf.mxu0
      %568 = vmatprep.mubr.bf16.mxu0 0
      %569 = vmatmul.mubr.bf16.gmra.mxu0 %v421
      %v570 = vpop.f32.mrf.mxu0
      %v571 = vadd.f32 0.0, %v570
      %v572 = vpop.f32.mrf.mxu0
      %v573 = vpop.f32.mrf.mxu0
      %v574 = vadd.f32 0.0, %v573
      %v575 = vpop.f32.mrf.mxu0
      %576 = vmatprep.mubr.bf16.mxu0 0
      %577 = vmatmul.mubr.bf16.gmra.mxu0 %v422
      %v578 = vpop.f32.mrf.mxu0
      %v579 = vadd.f32 0.0, %v578
      %v580 = vpop.f32.mrf.mxu0
      %v581 = vpop.f32.mrf.mxu0
      %v582 = vadd.f32 0.0, %v581
      %v583 = vpop.f32.mrf.mxu0
      %584 = vmatprep.mubr.bf16.mxu0 0
      %585 = vmatmul.mubr.bf16.gmra.mxu0 %v423
      %v586 = vpop.f32.mrf.mxu0
      %v587 = vadd.f32 0.0, %v586
      %v588 = vpop.f32.mrf.mxu0
      %v589 = vpop.f32.mrf.mxu0
      %v590 = vadd.f32 0.0, %v589
      %v591 = vpop.f32.mrf.mxu0
      %592 = vmatprep.mubr.bf16.mxu0 0
      %593 = vmatmul.mubr.bf16.gmra.mxu0 %v424
      %v594 = vpop.f32.mrf.mxu0
      %v595 = vadd.f32 0.0, %v594
      %v596 = vpop.f32.mrf.mxu0
      %v597 = vpop.f32.mrf.mxu0
      %v598 = vadd.f32 0.0, %v597
      %v599 = vpop.f32.mrf.mxu0
      %600 = vmatprep.mubr.bf16.mxu0 0
      %601 = vmatmul.mubr.bf16.gmra.mxu0 %v425
      %v602 = vpop.f32.mrf.mxu0
      %v603 = vadd.f32 0.0, %v602
      %v604 = vpop.f32.mrf.mxu0
      %v605 = vpop.f32.mrf.mxu0
      %v606 = vadd.f32 0.0, %v605
      %v607 = vpop.f32.mrf.mxu0
      %608 = vmatprep.mubr.bf16.mxu0 0
      %609 = vmatmul.mubr.bf16.gmra.mxu0 %v426
      %v610 = vpop.f32.mrf.mxu0
      %v611 = vadd.f32 0.0, %v610
      %v612 = vpop.f32.mrf.mxu0
      %v613 = vpop.f32.mrf.mxu0
      %v614 = vadd.f32 0.0, %v613
      %v615 = vpop.f32.mrf.mxu0
      %616 = vmatprep.mubr.bf16.mxu0 0
      %617 = vmatmul.mubr.bf16.gmra.mxu0 %v427
      %v618 = vpop.f32.mrf.mxu0
      %v619 = vadd.f32 0.0, %v618
      %v620 = vpop.f32.mrf.mxu0
      %v621 = vpop.f32.mrf.mxu0
      %v622 = vadd.f32 0.0, %v621
      %v623 = vpop.f32.mrf.mxu0
      %624 = vmatprep.mubr.bf16.mxu0 0
      %625 = vmatmul.mubr.bf16.gmra.mxu0 %v428
      %v626 = vpop.f32.mrf.mxu0
      %v627 = vadd.f32 0.0, %v626
      %v628 = vpop.f32.mrf.mxu0
      %v629 = vpop.f32.mrf.mxu0
      %v630 = vadd.f32 0.0, %v629
      %v631 = vpop.f32.mrf.mxu0
      %632 = vmatprep.mubr.bf16.mxu0 0
      %633 = vmatmul.mubr.bf16.gmra.mxu0 %v429
      %v634 = vpop.f32.mrf.mxu0
      %v635 = vadd.f32 0.0, %v634
      %v636 = vpop.f32.mrf.mxu0
      %v637 = vpop.f32.mrf.mxu0
      %v638 = vadd.f32 0.0, %v637
      %v639 = vpop.f32.mrf.mxu0
      %640 = vmatprep.mubr.bf16.mxu0 0
      %641 = vmatmul.mubr.bf16.gmra.mxu0 %v430
      %v642 = vpop.f32.mrf.mxu0
      %v643 = vadd.f32 0.0, %v642
      %v644 = vpop.f32.mrf.mxu0
      %v645 = vpop.f32.mrf.mxu0
      %v646 = vadd.f32 0.0, %v645
      %v647 = vpop.f32.mrf.mxu0
      %648 = vmatprep.mubr.bf16.mxu0 0
      %649 = vmatmul.mubr.bf16.gmra.mxu0 %v431
      %v650 = vpop.f32.mrf.mxu0
      %v651 = vadd.f32 0.0, %v650
      %v652 = vpop.f32.mrf.mxu0
      %v653 = vpop.f32.mrf.mxu0
      %v654 = vadd.f32 0.0, %v653
      %v655 = vpop.f32.mrf.mxu0
      %656 = vdwg.mxu0
      %v657 = vadd.f32 %v288, %v531
      %v658 = vadd.f32 %v289, %v534
      %v659 = vadd.f32 %v290, %v539
      %v660 = vadd.f32 %v291, %v542
      %v661 = vadd.f32 %v292, %v547
      %v662 = vadd.f32 %v293, %v550
      %v663 = vadd.f32 %v294, %v555
      %v664 = vadd.f32 %v295, %v558
      %v665 = vadd.f32 %v296, %v563
      %v666 = vadd.f32 %v297, %v566
      %v667 = vadd.f32 %v298, %v571
      %v668 = vadd.f32 %v299, %v574
      %v669 = vadd.f32 %v300, %v579
      %v670 = vadd.f32 %v301, %v582
      %v671 = vadd.f32 %v302, %v587
      %v672 = vadd.f32 %v303, %v590
      %v673 = vadd.f32 %v304, %v595
      %v674 = vadd.f32 %v305, %v598
      %v675 = vadd.f32 %v306, %v603
      %v676 = vadd.f32 %v307, %v606
      %v677 = vadd.f32 %v308, %v611
      %v678 = vadd.f32 %v309, %v614
      %v679 = vadd.f32 %v310, %v619
      %v680 = vadd.f32 %v311, %v622
      %v681 = vadd.f32 %v312, %v627
      %v682 = vadd.f32 %v313, %v630
      %v683 = vadd.f32 %v314, %v635
      %v684 = vadd.f32 %v315, %v638
      %v685 = vadd.f32 %v316, %v643
      %v686 = vadd.f32 %v317, %v646
      %v687 = vadd.f32 %v318, %v651
      %v688 = vadd.f32 %v319, %v654
      %689 = vst [vmem:[#allocation2] sm:$0xff] %v657
      %690 = vst [vmem:[#allocation2 + $0x8] sm:$0xff] %v658
      %691 = vst [vmem:[#allocation2 + $0x10] sm:$0xff] %v659
      %692 = vst [vmem:[#allocation2 + $0x18] sm:$0xff] %v660
      %693 = vst [vmem:[#allocation2 + $0x20] sm:$0xff] %v661
      %694 = vst [vmem:[#allocation2 + $0x28] sm:$0xff] %v662
      %695 = vst [vmem:[#allocation2 + $0x30] sm:$0xff] %v663
      %696 = vst [vmem:[#allocation2 + $0x38] sm:$0xff] %v664
      %697 = vst [vmem:[#allocation2 + $0x40] sm:$0xff] %v665
      %698 = vst [vmem:[#allocation2 + $0x48] sm:$0xff] %v666
      %699 = vst [vmem:[#allocation2 + $0x50] sm:$0xff] %v667
      %700 = vst [vmem:[#allocation2 + $0x58] sm:$0xff] %v668
      %701 = vst [vmem:[#allocation2 + $0x60] sm:$0xff] %v669
      %702 = vst [vmem:[#allocation2 + $0x68] sm:$0xff] %v670
      %703 = vst [vmem:[#allocation2 + $0x70] sm:$0xff] %v671
      %704 = vst [vmem:[#allocation2 + $0x78] sm:$0xff] %v672
      %705 = vst [vmem:[#allocation2 + $0x80] sm:$0xff] %v673
      %706 = vst [vmem:[#allocation2 + $0x88] sm:$0xff] %v674
      %707 = vst [vmem:[#allocation2 + $0x90] sm:$0xff] %v675
      %708 = vst [vmem:[#allocation2 + $0x98] sm:$0xff] %v676
      %709 = vst [vmem:[#allocation2 + $0xa0] sm:$0xff] %v677
      %710 = vst [vmem:[#allocation2 + $0xa8] sm:$0xff] %v678
      %711 = vst [vmem:[#allocation2 + $0xb0] sm:$0xff] %v679
      %712 = vst [vmem:[#allocation2 + $0xb8] sm:$0xff] %v680
      %713 = vst [vmem:[#allocation2 + $0xc0] sm:$0xff] %v681
      %714 = vst [vmem:[#allocation2 + $0xc8] sm:$0xff] %v682
      %715 = vst [vmem:[#allocation2 + $0xd0] sm:$0xff] %v683
      %716 = vst [vmem:[#allocation2 + $0xd8] sm:$0xff] %v684
      %717 = vst [vmem:[#allocation2 + $0xe0] sm:$0xff] %v685
      %718 = vst [vmem:[#allocation2 + $0xe8] sm:$0xff] %v686
      %719 = vst [vmem:[#allocation2 + $0xf0] sm:$0xff] %v687
      %720 = vst [vmem:[#allocation2 + $0xf8] sm:$0xff] %v688
      // Predicated region
      $region37: #{discriminator512_forward.11} parent=31 // pred_check
        %p721 = pneg %p236
      $region38: #{discriminator512_forward.11} parent=31 // pred_check_branch
        %723 = sbr.rel (%p721) target = $region40
      $region39: #{discriminator512_forward.11} parent=31 // pred_region
        %v724 = vld [vmem:[#allocation2] sm:$0xff]
        %v725 = vld [vmem:[#allocation2 + $0x8] sm:$0xff]
        %v726 = vld [vmem:[#allocation2 + $0x10] sm:$0xff]
        %v727 = vld [vmem:[#allocation2 + $0x18] sm:$0xff]
        %v728 = vld [vmem:[#allocation2 + $0x20] sm:$0xff]
        %v729 = vld [vmem:[#allocation2 + $0x28] sm:$0xff]
        %v730 = vld [vmem:[#allocation2 + $0x30] sm:$0xff]
        %v731 = vld [vmem:[#allocation2 + $0x38] sm:$0xff]
        %v732 = vld [vmem:[#allocation2 + $0x40] sm:$0xff]
        %v733 = vld [vmem:[#allocation2 + $0x48] sm:$0xff]
        %v734 = vld [vmem:[#allocation2 + $0x50] sm:$0xff]
        %v735 = vld [vmem:[#allocation2 + $0x58] sm:$0xff]
        %v736 = vld [vmem:[#allocation2 + $0x60] sm:$0xff]
        %v737 = vld [vmem:[#allocation2 + $0x68] sm:$0xff]
        %v738 = vld [vmem:[#allocation2 + $0x70] sm:$0xff]
        %v739 = vld [vmem:[#allocation2 + $0x78] sm:$0xff]
        %v740 = vld [vmem:[#allocation2 + $0x80] sm:$0xff]
        %v741 = vld [vmem:[#allocation2 + $0x88] sm:$0xff]
        %v742 = vld [vmem:[#allocation2 + $0x90] sm:$0xff]
        %v743 = vld [vmem:[#allocation2 + $0x98] sm:$0xff]
        %v744 = vld [vmem:[#allocation2 + $0xa0] sm:$0xff]
        %v745 = vld [vmem:[#allocation2 + $0xa8] sm:$0xff]
        %v746 = vld [vmem:[#allocation2 + $0xb0] sm:$0xff]
        %v747 = vld [vmem:[#allocation2 + $0xb8] sm:$0xff]
        %v748 = vld [vmem:[#allocation2 + $0xc0] sm:$0xff]
        %v749 = vld [vmem:[#allocation2 + $0xc8] sm:$0xff]
        %v750 = vld [vmem:[#allocation2 + $0xd0] sm:$0xff]
        %v751 = vld [vmem:[#allocation2 + $0xd8] sm:$0xff]
        %v752 = vld [vmem:[#allocation2 + $0xe0] sm:$0xff]
        %v753 = vld [vmem:[#allocation2 + $0xe8] sm:$0xff]
        %v754 = vld [vmem:[#allocation2 + $0xf0] sm:$0xff]
        %v755 = vld [vmem:[#allocation2 + $0xf8] sm:$0xff]
        %v756 = vadd.f32 %v724, %v725
        %v757 = vadd.f32 %v756, %v726
        %v758 = vadd.f32 %v757, %v727
        %v759 = vadd.f32 %v758, %v728
        %v760 = vadd.f32 %v759, %v729
        %v761 = vadd.f32 %v760, %v730
        %v762 = vadd.f32 %v761, %v731
        %v763 = vadd.f32 %v762, %v732
        %v764 = vadd.f32 %v763, %v733
        %v765 = vadd.f32 %v764, %v734
        %v766 = vadd.f32 %v765, %v735
        %v767 = vadd.f32 %v766, %v736
        %v768 = vadd.f32 %v767, %v737
        %v769 = vadd.f32 %v768, %v738
        %v770 = vadd.f32 %v769, %v739
        %v771 = vadd.f32 %v770, %v740
        %v772 = vadd.f32 %v771, %v741
        %v773 = vadd.f32 %v772, %v742
        %v774 = vadd.f32 %v773, %v743
        %v775 = vadd.f32 %v774, %v744
        %v776 = vadd.f32 %v775, %v745
        %v777 = vadd.f32 %v776, %v746
        %v778 = vadd.f32 %v777, %v747
        %v779 = vadd.f32 %v778, %v748
        %v780 = vadd.f32 %v779, %v749
        %v781 = vadd.f32 %v780, %v750
        %v782 = vadd.f32 %v781, %v751
        %v783 = vadd.f32 %v782, %v752
        %v784 = vadd.f32 %v783, %v753
        %v785 = vadd.f32 %v784, %v754
        %v786 = vadd.f32 %v785, %v755
        %v787 = vrot.slane %v786, 4
        %v788 = vadd.f32 %v786, %v787
        %v789 = vrot.slane %v788, 2
        %v790 = vadd.f32 %v788, %v789
        %v791 = vrot.slane %v790, 1
        %v792 = vadd.f32 %v790, %v791
        %v793 = vmul.f32 %v724, %v724
        %v794 = vmul.f32 %v725, %v725
        %v795 = vmul.f32 %v726, %v726
        %v796 = vmul.f32 %v727, %v727
        %v797 = vmul.f32 %v728, %v728
        %v798 = vmul.f32 %v729, %v729
        %v799 = vmul.f32 %v730, %v730
        %v800 = vmul.f32 %v731, %v731
        %v801 = vmul.f32 %v732, %v732
        %v802 = vmul.f32 %v733, %v733
        %v803 = vmul.f32 %v734, %v734
        %v804 = vmul.f32 %v735, %v735
        %v805 = vmul.f32 %v736, %v736
        %v806 = vmul.f32 %v737, %v737
        %v807 = vmul.f32 %v738, %v738
        %v808 = vmul.f32 %v739, %v739
        %v809 = vmul.f32 %v740, %v740
        %v810 = vmul.f32 %v741, %v741
        %v811 = vmul.f32 %v742, %v742
        %v812 = vmul.f32 %v743, %v743
        %v813 = vmul.f32 %v744, %v744
        %v814 = vmul.f32 %v745, %v745
        %v815 = vmul.f32 %v746, %v746
        %v816 = vmul.f32 %v747, %v747
        %v817 = vmul.f32 %v748, %v748
        %v818 = vmul.f32 %v749, %v749
        %v819 = vmul.f32 %v750, %v750
        %v820 = vmul.f32 %v751, %v751
        %v821 = vmul.f32 %v752, %v752
        %v822 = vmul.f32 %v753, %v753
        %v823 = vmul.f32 %v754, %v754
        %v824 = vmul.f32 %v755, %v755
        %v825 = vadd.f32 %v793, %v794
        %v826 = vadd.f32 %v825, %v795
        %v827 = vadd.f32 %v826, %v796
        %v828 = vadd.f32 %v827, %v797
        %v829 = vadd.f32 %v828, %v798
        %v830 = vadd.f32 %v829, %v799
        %v831 = vadd.f32 %v830, %v800
        %v832 = vadd.f32 %v831, %v801
        %v833 = vadd.f32 %v832, %v802
        %v834 = vadd.f32 %v833, %v803
        %v835 = vadd.f32 %v834, %v804
        %v836 = vadd.f32 %v835, %v805
        %v837 = vadd.f32 %v836, %v806
        %v838 = vadd.f32 %v837, %v807
        %v839 = vadd.f32 %v838, %v808
        %v840 = vadd.f32 %v839, %v809
        %v841 = vadd.f32 %v840, %v810
        %v842 = vadd.f32 %v841, %v811
        %v843 = vadd.f32 %v842, %v812
        %v844 = vadd.f32 %v843, %v813
        %v845 = vadd.f32 %v844, %v814
        %v846 = vadd.f32 %v845, %v815
        %v847 = vadd.f32 %v846, %v816
        %v848 = vadd.f32 %v847, %v817
        %v849 = vadd.f32 %v848, %v818
        %v850 = vadd.f32 %v849, %v819
        %v851 = vadd.f32 %v850, %v820
        %v852 = vadd.f32 %v851, %v821
        %v853 = vadd.f32 %v852, %v822
        %v854 = vadd.f32 %v853, %v823
        %v855 = vadd.f32 %v854, %v824
        %v856 = vrot.slane %v855, 4
        %v857 = vadd.f32 %v855, %v856
        %v858 = vrot.slane %v857, 2
        %v859 = vadd.f32 %v857, %v858
        %v860 = vrot.slane %v859, 1
        %v861 = vadd.f32 %v859, %v860
        %v862 = vlaneseq
        %v863 = vshrl.u32 %v862, 7
        %vm864 = vcmp.eq.s32.totalorder %v863, 0
        %v865 = vsel %vm864, %v792, 0.0
        %vm866 = vcmp.eq.s32.totalorder %v863, 1
        %v867 = vsel %vm866, %v861, 0.0
        %v868 = vadd.f32 %v865, %v867
        %869 = vst [vmem:[%s234] sm:$0xff] %v868
        %v870 = vpack.c.bf16 %v725, %v724
        %v871 = vpack.c.bf16 %v727, %v726
        %v872 = vpack.c.bf16 %v729, %v728
        %v873 = vpack.c.bf16 %v731, %v730
        %v874 = vpack.c.bf16 %v733, %v732
        %v875 = vpack.c.bf16 %v735, %v734
        %v876 = vpack.c.bf16 %v737, %v736
        %v877 = vpack.c.bf16 %v739, %v738
        %v878 = vpack.c.bf16 %v741, %v740
        %v879 = vpack.c.bf16 %v743, %v742
        %v880 = vpack.c.bf16 %v745, %v744
        %v881 = vpack.c.bf16 %v747, %v746
        %v882 = vpack.c.bf16 %v749, %v748
        %v883 = vpack.c.bf16 %v751, %v750
        %v884 = vpack.c.bf16 %v753, %v752
        %v885 = vpack.c.bf16 %v755, %v754
        %v902 = vunpack.c.l.b16 %v870
        %v903 = vunpack.c.h.b16 %v870
        %v904 = vunpack.c.l.b16 %v871
        %v905 = vunpack.c.h.b16 %v871
        %v906 = vunpack.c.l.b16 %v872
        %v907 = vunpack.c.h.b16 %v872
        %v908 = vunpack.c.l.b16 %v873
        %v909 = vunpack.c.h.b16 %v873
        %v910 = vunpack.c.l.b16 %v874
        %v911 = vunpack.c.h.b16 %v874
        %v912 = vunpack.c.l.b16 %v875
        %v913 = vunpack.c.h.b16 %v875
        %v914 = vunpack.c.l.b16 %v876
        %v915 = vunpack.c.h.b16 %v876
        %v916 = vunpack.c.l.b16 %v877
        %v917 = vunpack.c.h.b16 %v877
        %v918 = vunpack.c.l.b16 %v878
        %v919 = vunpack.c.h.b16 %v878
        %v920 = vunpack.c.l.b16 %v879
        %v921 = vunpack.c.h.b16 %v879
        %v922 = vunpack.c.l.b16 %v880
        %v923 = vunpack.c.h.b16 %v880
        %v924 = vunpack.c.l.b16 %v881
        %v925 = vunpack.c.h.b16 %v881
        %v926 = vunpack.c.l.b16 %v882
        %v927 = vunpack.c.h.b16 %v882
        %v928 = vunpack.c.l.b16 %v883
        %v929 = vunpack.c.h.b16 %v883
        %v930 = vunpack.c.l.b16 %v884
        %v931 = vunpack.c.h.b16 %v884
        %v932 = vunpack.c.l.b16 %v885
        %v933 = vunpack.c.h.b16 %v885
        %v934 = vpack.c.b16 %v902, %v902
        %v935 = vpack.c.b16 %v903, %v903
        %v936 = vpack.c.b16 %v904, %v904
        %v937 = vpack.c.b16 %v905, %v905
        %v938 = vpack.c.b16 %v906, %v906
        %v939 = vpack.c.b16 %v907, %v907
        %v940 = vpack.c.b16 %v908, %v908
        %v941 = vpack.c.b16 %v909, %v909
        %v942 = vpack.c.b16 %v910, %v910
        %v943 = vpack.c.b16 %v911, %v911
        %v944 = vpack.c.b16 %v912, %v912
        %v945 = vpack.c.b16 %v913, %v913
        %v946 = vpack.c.b16 %v914, %v914
        %v947 = vpack.c.b16 %v915, %v915
        %v948 = vpack.c.b16 %v916, %v916
        %v949 = vpack.c.b16 %v917, %v917
        %v950 = vpack.c.b16 %v918, %v918
        %v951 = vpack.c.b16 %v919, %v919
        %v952 = vpack.c.b16 %v920, %v920
        %v953 = vpack.c.b16 %v921, %v921
        %v954 = vpack.c.b16 %v922, %v922
        %v955 = vpack.c.b16 %v923, %v923
        %v956 = vpack.c.b16 %v924, %v924
        %v957 = vpack.c.b16 %v925, %v925
        %v958 = vpack.c.b16 %v926, %v926
        %v959 = vpack.c.b16 %v927, %v927
        %v960 = vpack.c.b16 %v928, %v928
        %v961 = vpack.c.b16 %v929, %v929
        %v962 = vpack.c.b16 %v930, %v930
        %v963 = vpack.c.b16 %v931, %v931
        %v964 = vpack.c.b16 %v932, %v932
        %v965 = vpack.c.b16 %v933, %v933
        %998 = vst [vmem:[%s229] sm:$0xf] %v934
        %999 = vst [vmem:[%s229 + $0x4] sm:$0xf] %v935
        %1000 = vst [vmem:[%s229 + $0x8] sm:$0xf] %v936
        %1001 = vst [vmem:[%s229 + $0xc] sm:$0xf] %v937
        %1002 = vst [vmem:[%s229 + $0x10] sm:$0xf] %v938
        %1003 = vst [vmem:[%s229 + $0x14] sm:$0xf] %v939
        %1004 = vst [vmem:[%s229 + $0x18] sm:$0xf] %v940
        %1005 = vst [vmem:[%s229 + $0x1c] sm:$0xf] %v941
        %1006 = vst [vmem:[%s229 + $0x20] sm:$0xf] %v942
        %1007 = vst [vmem:[%s229 + $0x24] sm:$0xf] %v943
        %1008 = vst [vmem:[%s229 + $0x28] sm:$0xf] %v944
        %1009 = vst [vmem:[%s229 + $0x2c] sm:$0xf] %v945
        %1010 = vst [vmem:[%s229 + $0x30] sm:$0xf] %v946
        %1011 = vst [vmem:[%s229 + $0x34] sm:$0xf] %v947
        %1012 = vst [vmem:[%s229 + $0x38] sm:$0xf] %v948
        %1013 = vst [vmem:[%s229 + $0x3c] sm:$0xf] %v949
        %1014 = vst [vmem:[%s229 + $0x40] sm:$0xf] %v950
        %1015 = vst [vmem:[%s229 + $0x44] sm:$0xf] %v951
        %1016 = vst [vmem:[%s229 + $0x48] sm:$0xf] %v952
        %1017 = vst [vmem:[%s229 + $0x4c] sm:$0xf] %v953
        %1018 = vst [vmem:[%s229 + $0x50] sm:$0xf] %v954
        %1019 = vst [vmem:[%s229 + $0x54] sm:$0xf] %v955
        %1020 = vst [vmem:[%s229 + $0x58] sm:$0xf] %v956
        %1021 = vst [vmem:[%s229 + $0x5c] sm:$0xf] %v957
        %1022 = vst [vmem:[%s229 + $0x60] sm:$0xf] %v958
        %1023 = vst [vmem:[%s229 + $0x64] sm:$0xf] %v959
        %1024 = vst [vmem:[%s229 + $0x68] sm:$0xf] %v960
        %1025 = vst [vmem:[%s229 + $0x6c] sm:$0xf] %v961
        %1026 = vst [vmem:[%s229 + $0x70] sm:$0xf] %v962
        %1027 = vst [vmem:[%s229 + $0x74] sm:$0xf] %v963
        %1028 = vst [vmem:[%s229 + $0x78] sm:$0xf] %v964
        %1029 = vst [vmem:[%s229 + $0x7c] sm:$0xf] %v965
      $region40: #{discriminator512_forward.11} parent=31 // pred_fallthru
        _
      %s1030 = smul.u32 32, %s20
      %p1031 = scmp.lt.s32.totalorder %s1030, 63
      %s1032 = scalar_select %p1031, %s1030, 63
      %s1033 = smul.addr %s1032, 4
      %s1034 = scalar_lea.vmem %s3, %s1033
      %p1035 = scmp.lt.s32.totalorder %s20, 1
      %s1036 = scalar_select %p1035, %s20, 1
      %s1037 = smul.addr %s1036, 8
      %s1038 = scalar_lea.vmem %s4, %s1037
      // Predicated region
      $region41: #{discriminator512_forward.11} parent=31 // pred_check
        %p1039 = pneg %p116
      $region42: #{discriminator512_forward.11} parent=31 // pred_check_branch
        %1041 = sbr.rel (%p1039) target = $region44
      $region43: #{discriminator512_forward.11} parent=31 // pred_region
        %s1042 = smul.u32 32, %s20
      $region44: #{discriminator512_forward.11} parent=31 // pred_fallthru
        _
      // Predicated region
      $region45: #{discriminator512_forward.11} parent=31 // pred_check
        %p1043 = pneg %p142
      $region46: #{discriminator512_forward.11} parent=31 // pred_check_branch
        %1045 = sbr.rel (%p1043) target = $region48
      $region47: #{discriminator512_forward.11} parent=31 // pred_region
        _
      $region48: #{discriminator512_forward.11} parent=31 // pred_fallthru
        _
    $region32: #{discriminator512_forward.11} parent=5 // pred_fallthru
      _
    %p1046 = scmp.le.s32.totalorder 2, %s11
    // Predicated region
    $region49: #{discriminator512_forward.11} parent=5 // pred_check
      %p1047 = pneg %p1046
    $region50: #{discriminator512_forward.11} parent=5 // pred_check_branch
      %1049 = sbr.rel (%p1047) target = $region52
    $region51: #{discriminator512_forward.11} parent=5 // pred_region
      %s1050 = ssub.s32 %s11, 2
      // Predicated region
      $region53: #{discriminator512_forward.11} parent=51 // pred_check
        %p1051 = pneg %p122
      $region54: #{discriminator512_forward.11} parent=51 // pred_check_branch
        %1053 = sbr.rel (%p1051) target = $region56
      $region55: #{discriminator512_forward.11} parent=51 // pred_region
        %s1054 = smul.u32 32, %s22
        %p1055 = scmp.lt.s32.totalorder %s1054, 63
        %s1056 = scalar_select %p1055, %s1054, 63
        %s1057 = smul.addr %s1056, 4
        %s1058 = scalar_lea.vmem %s3, %s1057
      $region56: #{discriminator512_forward.11} parent=51 // pred_fallthru
        _
      // Predicated region
      $region57: #{discriminator512_forward.11} parent=51 // pred_check
        %p1059 = pneg %p148
      $region58: #{discriminator512_forward.11} parent=51 // pred_check_branch
        %1061 = sbr.rel (%p1059) target = $region60
      $region59: #{discriminator512_forward.11} parent=51 // pred_region
        %p1062 = scmp.lt.s32.totalorder %s22, 1
        %s1063 = scalar_select %p1062, %s22, 1
        %s1064 = smul.addr %s1063, 8
        %s1065 = scalar_lea.vmem %s4, %s1064
      $region60: #{discriminator512_forward.11} parent=51 // pred_fallthru
        _
    $region52: #{discriminator512_forward.11} parent=5 // pred_fallthru
      _
  $region6: #{discriminator512_forward.11} parent=0 // loop_footer
    %s15 = sadd.s32 1, %s11
  $region7: #{discriminator512_forward.11} parent=0 // loop_footer_branch
    %10 = sbr.rel target = $region3
  $region8: #{discriminator512_forward.11} parent=0 // loop_exit
    _

// kernel: discriminator512_forward.14
$region0: #{discriminator512_forward.14}
  #allocation0 [shape = 'u32[]', space=smem, size = 0x4, offset = 0x4, fixed_abs, tag = 'smem constant byte address 0x4 - core index']
  #allocation1 [shape = 'u32[144,128]{1,0:T(1,128)}', space=vmem, size = 0x12000, scoped, tag = 'internal scratch']
  %s0 = inlined_call_operand.vmem [shape: bf16[128,128], index: 0, kind: input, shape index: {}]
  %s1 = inlined_call_operand.vmem [shape: f32[1,128], index: 1, kind: input, shape index: {}]
  %s2 = inlined_call_operand.vmem [shape: f32[1,128], index: 2, kind: input, shape index: {}]
  %s3 = inlined_call_operand.vmem [shape: bf16[128,128], index: 3, kind: output, shape index: {}]
  %s4 = sld [smem:[#allocation0]]
  $region22: #{discriminator512_forward.14} parent=0
    _
  %s6 = ssub.s32 1, %s4
  %s7 = scalar_select 0, %s6, %s4
  // Predicated region
  $region2: #{discriminator512_forward.14} parent=0 // pred_check
    _
  $region3: #{discriminator512_forward.14} parent=0 // pred_check_branch
    %9 = sbr.rel (0) target = $region5
  $region4: #{discriminator512_forward.14} parent=0 // pred_region
    _
  $region5: #{discriminator512_forward.14} parent=0 // pred_fallthru
    _
  // Predicated region
  $region6: #{discriminator512_forward.14} parent=0 // pred_check
    _
  $region7: #{discriminator512_forward.14} parent=0 // pred_check_branch
    %11 = sbr.rel (0) target = $region9
  $region8: #{discriminator512_forward.14} parent=0 // pred_region
    _
  $region9: #{discriminator512_forward.14} parent=0 // pred_fallthru
    _
  // Predicated region
  $region10: #{discriminator512_forward.14} parent=0 // pred_check
    _
  $region11: #{discriminator512_forward.14} parent=0 // pred_check_branch
    %13 = sbr.rel (0) target = $region13
  $region12: #{discriminator512_forward.14} parent=0 // pred_region
    _
  $region13: #{discriminator512_forward.14} parent=0 // pred_fallthru
    _
  %v14 = vld [vmem:[%s0] sm:$0xf]
  %v15 = vld [vmem:[%s0 + $0x4] sm:$0xf]
  %v16 = vld [vmem:[%s0 + $0x8] sm:$0xf]
  %v17 = vld [vmem:[%s0 + $0xc] sm:$0xf]
  %v18 = vld [vmem:[%s0 + $0x10] sm:$0xf]
  %v19 = vld [vmem:[%s0 + $0x14] sm:$0xf]
  %v20 = vld [vmem:[%s0 + $0x18] sm:$0xf]
  %v21 = vld [vmem:[%s0 + $0x1c] sm:$0xf]
  %v22 = vld [vmem:[%s0 + $0x20] sm:$0xf]
  %v23 = vld [vmem:[%s0 + $0x24] sm:$0xf]
  %v24 = vld [vmem:[%s0 + $0x28] sm:$0xf]
  %v25 = vld [vmem:[%s0 + $0x2c] sm:$0xf]
  %v26 = vld [vmem:[%s0 + $0x30] sm:$0xf]
  %v27 = vld [vmem:[%s0 + $0x34] sm:$0xf]
  %v28 = vld [vmem:[%s0 + $0x38] sm:$0xf]
  %v29 = vld [vmem:[%s0 + $0x3c] sm:$0xf]
  %v30 = vunpack.c.l.bf16 %v14
  %v31 = vunpack.c.l.bf16 %v15
  %v32 = vunpack.c.l.bf16 %v16
  %v33 = vunpack.c.l.bf16 %v17
  %v34 = vunpack.c.l.bf16 %v18
  %v35 = vunpack.c.l.bf16 %v19
  %v36 = vunpack.c.l.bf16 %v20
  %v37 = vunpack.c.l.bf16 %v21
  %v38 = vunpack.c.l.bf16 %v22
  %v39 = vunpack.c.l.bf16 %v23
  %v40 = vunpack.c.l.bf16 %v24
  %v41 = vunpack.c.l.bf16 %v25
  %v42 = vunpack.c.l.bf16 %v26
  %v43 = vunpack.c.l.bf16 %v27
  %v44 = vunpack.c.l.bf16 %v28
  %v45 = vunpack.c.l.bf16 %v29
  %v46 = vld [vmem:[%s1] sm:$0x1]
  %v48 = vlaneseq
  %v49 = vshrl.u32 %v48, 7
  %v50 = vsub.s32 0, %v49
  %v51 = vrot.slane %v46, %v50
  %v53 = vmul.f32 %v30, %v51
  %v54 = vmul.f32 %v31, %v51
  %v55 = vmul.f32 %v32, %v51
  %v56 = vmul.f32 %v33, %v51
  %v57 = vmul.f32 %v34, %v51
  %v58 = vmul.f32 %v35, %v51
  %v59 = vmul.f32 %v36, %v51
  %v60 = vmul.f32 %v37, %v51
  %v61 = vmul.f32 %v38, %v51
  %v62 = vmul.f32 %v39, %v51
  %v63 = vmul.f32 %v40, %v51
  %v64 = vmul.f32 %v41, %v51
  %v65 = vmul.f32 %v42, %v51
  %v66 = vmul.f32 %v43, %v51
  %v67 = vmul.f32 %v44, %v51
  %v68 = vmul.f32 %v45, %v51
  %v69 = vld [vmem:[%s2] sm:$0x1]
  %v71 = vlaneseq
  %v72 = vshrl.u32 %v71, 7
  %v73 = vsub.s32 0, %v72
  %v74 = vrot.slane %v69, %v73
  %v76 = vadd.f32 %v53, %v74
  %v77 = vadd.f32 %v54, %v74
  %v78 = vadd.f32 %v55, %v74
  %v79 = vadd.f32 %v56, %v74
  %v80 = vadd.f32 %v57, %v74
  %v81 = vadd.f32 %v58, %v74
  %v82 = vadd.f32 %v59, %v74
  %v83 = vadd.f32 %v60, %v74
  %v84 = vadd.f32 %v61, %v74
  %v85 = vadd.f32 %v62, %v74
  %v86 = vadd.f32 %v63, %v74
  %v87 = vadd.f32 %v64, %v74
  %v88 = vadd.f32 %v65, %v74
  %v89 = vadd.f32 %v66, %v74
  %v90 = vadd.f32 %v67, %v74
  %v91 = vadd.f32 %v68, %v74
  %vm92 = vcmp.gt.f32.partialorder %v76, 0.0
  %vm93 = vcmp.gt.f32.partialorder %v77, 0.0
  %vm94 = vcmp.gt.f32.partialorder %v78, 0.0
  %vm95 = vcmp.gt.f32.partialorder %v79, 0.0
  %vm96 = vcmp.gt.f32.partialorder %v80, 0.0
  %vm97 = vcmp.gt.f32.partialorder %v81, 0.0
  %vm98 = vcmp.gt.f32.partialorder %v82, 0.0
  %vm99 = vcmp.gt.f32.partialorder %v83, 0.0
  %vm100 = vcmp.gt.f32.partialorder %v84, 0.0
  %vm101 = vcmp.gt.f32.partialorder %v85, 0.0
  %vm102 = vcmp.gt.f32.partialorder %v86, 0.0
  %vm103 = vcmp.gt.f32.partialorder %v87, 0.0
  %vm104 = vcmp.gt.f32.partialorder %v88, 0.0
  %vm105 = vcmp.gt.f32.partialorder %v89, 0.0
  %vm106 = vcmp.gt.f32.partialorder %v90, 0.0
  %vm107 = vcmp.gt.f32.partialorder %v91, 0.0
  %v108 = vmul.f32 %v76, 0.2
  %v109 = vmul.f32 %v77, 0.2
  %v110 = vmul.f32 %v78, 0.2
  %v111 = vmul.f32 %v79, 0.2
  %v112 = vmul.f32 %v80, 0.2
  %v113 = vmul.f32 %v81, 0.2
  %v114 = vmul.f32 %v82, 0.2
  %v115 = vmul.f32 %v83, 0.2
  %v116 = vmul.f32 %v84, 0.2
  %v117 = vmul.f32 %v85, 0.2
  %v118 = vmul.f32 %v86, 0.2
  %v119 = vmul.f32 %v87, 0.2
  %v120 = vmul.f32 %v88, 0.2
  %v121 = vmul.f32 %v89, 0.2
  %v122 = vmul.f32 %v90, 0.2
  %v123 = vmul.f32 %v91, 0.2
  %v124 = vsel %vm92, %v76, %v108
  %v125 = vsel %vm93, %v77, %v109
  %v126 = vsel %vm94, %v78, %v110
  %v127 = vsel %vm95, %v79, %v111
  %v128 = vsel %vm96, %v80, %v112
  %v129 = vsel %vm97, %v81, %v113
  %v130 = vsel %vm98, %v82, %v114
  %v131 = vsel %vm99, %v83, %v115
  %v132 = vsel %vm100, %v84, %v116
  %v133 = vsel %vm101, %v85, %v117
  %v134 = vsel %vm102, %v86, %v118
  %v135 = vsel %vm103, %v87, %v119
  %v136 = vsel %vm104, %v88, %v120
  %v137 = vsel %vm105, %v89, %v121
  %v138 = vsel %vm106, %v90, %v122
  %v139 = vsel %vm107, %v91, %v123
  %v140 = vpack.c.bf16 %v125, %v124
  %v141 = vpack.c.bf16 %v127, %v126
  %v142 = vpack.c.bf16 %v129, %v128
  %v143 = vpack.c.bf16 %v131, %v130
  %v144 = vpack.c.bf16 %v133, %v132
  %v145 = vpack.c.bf16 %v135, %v134
  %v146 = vpack.c.bf16 %v137, %v136
  %v147 = vpack.c.bf16 %v139, %v138
  %v156 = vunpack.c.l.b16 %v140
  %v157 = vunpack.c.h.b16 %v140
  %v158 = vunpack.c.l.b16 %v141
  %v159 = vunpack.c.h.b16 %v141
  %v160 = vunpack.c.l.b16 %v142
  %v161 = vunpack.c.h.b16 %v142
  %v162 = vunpack.c.l.b16 %v143
  %v163 = vunpack.c.h.b16 %v143
  %v164 = vunpack.c.l.b16 %v144
  %v165 = vunpack.c.h.b16 %v144
  %v166 = vunpack.c.l.b16 %v145
  %v167 = vunpack.c.h.b16 %v145
  %v168 = vunpack.c.l.b16 %v146
  %v169 = vunpack.c.h.b16 %v146
  %v170 = vunpack.c.l.b16 %v147
  %v171 = vunpack.c.h.b16 %v147
  %v172 = vpack.c.b16 %v156, %v156
  %v173 = vpack.c.b16 %v157, %v157
  %v174 = vpack.c.b16 %v158, %v158
  %v175 = vpack.c.b16 %v159, %v159
  %v176 = vpack.c.b16 %v160, %v160
  %v177 = vpack.c.b16 %v161, %v161
  %v178 = vpack.c.b16 %v162, %v162
  %v179 = vpack.c.b16 %v163, %v163
  %v180 = vpack.c.b16 %v164, %v164
  %v181 = vpack.c.b16 %v165, %v165
  %v182 = vpack.c.b16 %v166, %v166
  %v183 = vpack.c.b16 %v167, %v167
  %v184 = vpack.c.b16 %v168, %v168
  %v185 = vpack.c.b16 %v169, %v169
  %v186 = vpack.c.b16 %v170, %v170
  %v187 = vpack.c.b16 %v171, %v171
  %204 = vst [vmem:[%s3] sm:$0xf] %v172
  %205 = vst [vmem:[%s3 + $0x4] sm:$0xf] %v173
  %206 = vst [vmem:[%s3 + $0x8] sm:$0xf] %v174
  %207 = vst [vmem:[%s3 + $0xc] sm:$0xf] %v175
  %208 = vst [vmem:[%s3 + $0x10] sm:$0xf] %v176
  %209 = vst [vmem:[%s3 + $0x14] sm:$0xf] %v177
  %210 = vst [vmem:[%s3 + $0x18] sm:$0xf] %v178
  %211 = vst [vmem:[%s3 + $0x1c] sm:$0xf] %v179
  %212 = vst [vmem:[%s3 + $0x20] sm:$0xf] %v180
  %213 = vst [vmem:[%s3 + $0x24] sm:$0xf] %v181
  %214 = vst [vmem:[%s3 + $0x28] sm:$0xf] %v182
  %215 = vst [vmem:[%s3 + $0x2c] sm:$0xf] %v183
  %216 = vst [vmem:[%s3 + $0x30] sm:$0xf] %v184
  %217 = vst [vmem:[%s3 + $0x34] sm:$0xf] %v185
  %218 = vst [vmem:[%s3 + $0x38] sm:$0xf] %v186
  %219 = vst [vmem:[%s3 + $0x3c] sm:$0xf] %v187
  // Predicated region
  $region14: #{discriminator512_forward.14} parent=0 // pred_check
    _
  $region15: #{discriminator512_forward.14} parent=0 // pred_check_branch
    %221 = sbr.rel (0) target = $region17
  $region16: #{discriminator512_forward.14} parent=0 // pred_region
    _
  $region17: #{discriminator512_forward.14} parent=0 // pred_fallthru
    _
  // Predicated region
  $region18: #{discriminator512_forward.14} parent=0 // pred_check
    _
  $region19: #{discriminator512_forward.14} parent=0 // pred_check_branch
    %223 = sbr.rel (0) target = $region21
  $region20: #{discriminator512_forward.14} parent=0 // pred_region
    _
  $region21: #{discriminator512_forward.14} parent=0 // pred_fallthru
    _

// kernel: discriminator512_forward.13
$region0: #{discriminator512_forward.13}
  #allocation0 [shape = 'u32[]', space=smem, size = 0x4, offset = 0x4, fixed_abs, tag = 'smem constant byte address 0x4 - core index']
  #allocation1 [shape = 'u32[144,128]{1,0:T(1,128)}', space=vmem, size = 0x12000, scoped, tag = 'internal scratch']
  #allocation2 [shape = 'f32[64,128]{1,0:T(8,128)}', space=vmem, size = 0x8000, scoped, tag = 'scratch operand']
  %s0 = inlined_call_operand.vmem [shape: bf16[128,256], index: 0, kind: input, shape index: {}]
  %s1 = inlined_call_operand.vmem [shape: bf16[256,128], index: 1, kind: input, shape index: {}]
  %s2 = inlined_call_operand.vmem [shape: f32[1,128], index: 2, kind: input, shape index: {}]
  %s3 = inlined_call_operand.vmem [shape: bf16[128,128], index: 3, kind: output, shape index: {0}]
  %s4 = inlined_call_operand.vmem [shape: f32[16,128], index: 4, kind: output, shape index: {1}]
  %5 = xla_tuple %s3, %s4
  %s6 = sld [smem:[#allocation0]]
  $region61: #{discriminator512_forward.13} parent=0
    _
  %s8 = ssub.s32 1, %s6
  %s9 = scalar_select 0, %s8, %s6
  loop: start=0, step=1, limit=4
  $region2: #{discriminator512_forward.13} parent=0 // loop_pre_header
    _
  $region3: #{discriminator512_forward.13} parent=0 // loop_header
    %s11 = sphi 0, %s15
    %p12 = scmp.ge.s32.totalorder %s11, 4
    %s18 = sphi 0, %s30
    %s19 = sphi 0, %s26
    %s20 = sphi 0, %s18
    %s21 = sphi 0, %s19
    %s22 = sphi 0, %s20
    %s23 = sphi 0, %s21
    %s35 = sphi 0, %s37
    %s38 = sphi 0, %s35
    %s39 = sphi 0, %s38
    %s55 = sphi 0, %s39
    %s59 = sphi 0, %s59
    %s61 = sphi 0, %s59
    %s62 = sphi 0, %s61
    %s76 = sphi 0, %s62
    %s80 = sphi 0, %s80
    %s82 = sphi 0, %s80
    %s83 = sphi 0, %s82
    %s97 = sphi 0, %s83
    %s103 = sphi 0, %s105
    %s106 = sphi 0, %s103
    %s107 = sphi 0, %s106
    %s123 = sphi 0, %s107
    %s129 = sphi 0, %s131
    %s132 = sphi 0, %s129
    %s133 = sphi 0, %s132
    %s149 = sphi 0, %s133
  $region4: #{discriminator512_forward.13} parent=0 // loop_header_branch
    %14 = sbr.rel (%p12) target = $region8
  $region5: #{discriminator512_forward.13} parent=0 // loop_body
    %s16 = ssub.s32 %s11, 1
    %s17 = ssub.s32 %s11, 2
    %s24 = sadd.s32 1, %s19
    %p25 = scmp.ge.s32.totalorder %s24, 1
    %s26 = scalar_select %p25, 0, %s24
    %s27 = sadd.s32 1, %s18
    %s28 = scalar_select %p25, %s27, %s18
    %p29 = scmp.ge.s32.totalorder %s28, 2
    %s30 = scalar_select %p29, 0, %s28
    %s31 = ssub.s32 %s18, %s30
    %s32 = ssub.s32 %s19, %s26
    %s33 = sor.u32 %s31, %s32
    %p34 = scmp.eq.s32.totalorder %s33, 0
    %s36 = sadd.s32 %s35, 1
    %s37 = scalar_select %p34, %s35, %s36
    %p40 = pneg %p34
    %p41 = scmp.eq.s32.totalorder %s11, 1
    %p42 = por %p40, %p41
    %p43 = scmp.ne.s32.totalorder %s35, %s38
    %p44 = scmp.eq.s32.totalorder %s11, 0
    %p45 = por %p43, %p44
    %p46 = scmp.ne.s32.totalorder %s35, %s38
    %p47 = scmp.eq.s32.totalorder %s16, 1
    %p48 = por %p46, %p47
    %p49 = scmp.ne.s32.totalorder %s38, %s39
    %p50 = scmp.eq.s32.totalorder %s16, 0
    %p51 = por %p49, %p50
    %p52 = scmp.ne.s32.totalorder %s38, %s39
    %p53 = scmp.eq.s32.totalorder %s17, 1
    %p54 = por %p52, %p53
    %p56 = scmp.ne.s32.totalorder %s39, %s55
    %p57 = scmp.eq.s32.totalorder %s17, 0
    %p58 = por %p56, %p57
    %s60 = sadd.s32 %s59, 1
    %p63 = scmp.eq.s32.totalorder %s11, 1
    %p64 = scmp.ne.s32.totalorder %s59, %s61
    %p65 = scmp.eq.s32.totalorder %s11, 0
    %p66 = por %p64, %p65
    %p67 = scmp.ne.s32.totalorder %s59, %s61
    %p68 = scmp.eq.s32.totalorder %s16, 1
    %p69 = por %p67, %p68
    %p70 = scmp.ne.s32.totalorder %s61, %s62
    %p71 = scmp.eq.s32.totalorder %s16, 0
    %p72 = por %p70, %p71
    %p73 = scmp.ne.s32.totalorder %s61, %s62
    %p74 = scmp.eq.s32.totalorder %s17, 1
    %p75 = por %p73, %p74
    %p77 = scmp.ne.s32.totalorder %s62, %s76
    %p78 = scmp.eq.s32.totalorder %s17, 0
    %p79 = por %p77, %p78
    %s81 = sadd.s32 %s80, 1
    %p84 = scmp.eq.s32.totalorder %s11, 1
    %p85 = scmp.ne.s32.totalorder %s80, %s82
    %p86 = scmp.eq.s32.totalorder %s11, 0
    %p87 = por %p85, %p86
    %p88 = scmp.ne.s32.totalorder %s80, %s82
    %p89 = scmp.eq.s32.totalorder %s16, 1
    %p90 = por %p88, %p89
    %p91 = scmp.ne.s32.totalorder %s82, %s83
    %p92 = scmp.eq.s32.totalorder %s16, 0
    %p93 = por %p91, %p92
    %p94 = scmp.ne.s32.totalorder %s82, %s83
    %p95 = scmp.eq.s32.totalorder %s17, 1
    %p96 = por %p94, %p95
    %p98 = scmp.ne.s32.totalorder %s83, %s97
    %p99 = scmp.eq.s32.totalorder %s17, 0
    %p100 = por %p98, %p99
    %s101 = ssub.s32 %s18, %s30
    %p102 = scmp.eq.s32.totalorder %s101, 0
    %s104 = sadd.s32 %s103, 1
    %s105 = scalar_select %p102, %s103, %s104
    %p108 = pneg %p102
    %p109 = scmp.eq.s32.totalorder %s11, 1
    %p110 = por %p108, %p109
    %p111 = scmp.ne.s32.totalorder %s103, %s106
    %p112 = scmp.eq.s32.totalorder %s11, 0
    %p113 = por %p111, %p112
    %p114 = scmp.ne.s32.totalorder %s103, %s106
    %p115 = scmp.eq.s32.totalorder %s16, 1
    %p116 = por %p114, %p115
    %p117 = scmp.ne.s32.totalorder %s106, %s107
    %p118 = scmp.eq.s32.totalorder %s16, 0
    %p119 = por %p117, %p118
    %p120 = scmp.ne.s32.totalorder %s106, %s107
    %p121 = scmp.eq.s32.totalorder %s17, 1
    %p122 = por %p120, %p121
    %p124 = scmp.ne.s32.totalorder %s107, %s123
    %p125 = scmp.eq.s32.totalorder %s17, 0
    %p126 = por %p124, %p125
    %s127 = ssub.s32 %s18, %s30
    %p128 = scmp.eq.s32.totalorder %s127, 0
    %s130 = sadd.s32 %s129, 1
    %s131 = scalar_select %p128, %s129, %s130
    %p134 = pneg %p128
    %p135 = scmp.eq.s32.totalorder %s11, 1
    %p136 = por %p134, %p135
    %p137 = scmp.ne.s32.totalorder %s129, %s132
    %p138 = scmp.eq.s32.totalorder %s11, 0
    %p139 = por %p137, %p138
    %p140 = scmp.ne.s32.totalorder %s129, %s132
    %p141 = scmp.eq.s32.totalorder %s16, 1
    %p142 = por %p140, %p141
    %p143 = scmp.ne.s32.totalorder %s132, %s133
    %p144 = scmp.eq.s32.totalorder %s16, 0
    %p145 = por %p143, %p144
    %p146 = scmp.ne.s32.totalorder %s132, %s133
    %p147 = scmp.eq.s32.totalorder %s17, 1
    %p148 = por %p146, %p147
    %p150 = scmp.ne.s32.totalorder %s133, %s149
    %p151 = scmp.eq.s32.totalorder %s17, 0
    %p152 = por %p150, %p151
    %p153 = scmp.le.s32.totalorder 1, %s11
    %p154 = scmp.lt.s32.totalorder %s11, 3
    %p155 = pnand %p153, %p154
    %p156 = pneg %p155
    // Predicated region
    $region9: #{discriminator512_forward.13} parent=5 // pred_check
      _
    $region10: #{discriminator512_forward.13} parent=5 // pred_check_branch
      %158 = sbr.rel (%p155) target = $region12
    $region11: #{discriminator512_forward.13} parent=5 // pred_region
      %s159 = ssub.s32 %s11, 1
      // Predicated region
      $region13: #{discriminator512_forward.13} parent=11 // pred_check
        %p160 = pneg %p72
      $region14: #{discriminator512_forward.13} parent=11 // pred_check_branch
        %162 = sbr.rel (%p160) target = $region16
      $region15: #{discriminator512_forward.13} parent=11 // pred_region
        _
      $region16: #{discriminator512_forward.13} parent=11 // pred_fallthru
        _
      // Predicated region
      $region17: #{discriminator512_forward.13} parent=11 // pred_check
        %p163 = pneg %p93
      $region18: #{discriminator512_forward.13} parent=11 // pred_check_branch
        %165 = sbr.rel (%p163) target = $region20
      $region19: #{discriminator512_forward.13} parent=11 // pred_region
        _
      $region20: #{discriminator512_forward.13} parent=11 // pred_fallthru
        _
    $region12: #{discriminator512_forward.13} parent=5 // pred_fallthru
      _
    %p166 = scmp.lt.s32.totalorder %s11, 2
    // Predicated region
    $region21: #{discriminator512_forward.13} parent=5 // pred_check
      %p167 = pneg %p166
    $region22: #{discriminator512_forward.13} parent=5 // pred_check_branch
      %169 = sbr.rel (%p167) target = $region24
    $region23: #{discriminator512_forward.13} parent=5 // pred_region
      // Predicated region
      $region25: #{discriminator512_forward.13} parent=23 // pred_check
        %p170 = pneg %p45
      $region26: #{discriminator512_forward.13} parent=23 // pred_check_branch
        %172 = sbr.rel (%p170) target = $region28
      $region27: #{discriminator512_forward.13} parent=23 // pred_region
        %s173 = smul.u32 8, %s18
        %s174 = smul.u32 2, %s19
        %p175 = scmp.lt.s32.totalorder %s173, 15
        %s176 = scalar_select %p175, %s173, 15
        %p177 = scmp.lt.s32.totalorder %s174, 1
        %s178 = scalar_select %p177, %s174, 1
        %s179 = smul.addr %s176, 2
        %s180 = sadd.s32 %s178, %s179
        %s181 = smul.addr %s180, 4
        %s182 = scalar_lea.vmem %s0, %s181
        %s183 = smul.u32 8, %s18
        %s184 = smul.u32 2, %s19
      $region28: #{discriminator512_forward.13} parent=23 // pred_fallthru
        _
    $region24: #{discriminator512_forward.13} parent=5 // pred_fallthru
      _
    %p185 = scmp.le.s32.totalorder 1, %s11
    %p186 = scmp.lt.s32.totalorder %s11, 3
    %p187 = pnand %p185, %p186
    %p188 = pneg %p187
    // Predicated region
    $region29: #{discriminator512_forward.13} parent=5 // pred_check
      _
    $region30: #{discriminator512_forward.13} parent=5 // pred_check_branch
      %190 = sbr.rel (%p187) target = $region32
    $region31: #{discriminator512_forward.13} parent=5 // pred_region
      %s191 = ssub.s32 %s11, 1
      %s192 = smul.u32 8, %s20
      %s193 = smul.u32 2, %s21
      %p194 = scmp.lt.s32.totalorder %s192, 15
      %s195 = scalar_select %p194, %s192, 15
      %p196 = scmp.lt.s32.totalorder %s193, 1
      %s197 = scalar_select %p196, %s193, 1
      %s198 = smul.addr %s195, 2
      %s199 = sadd.s32 %s197, %s198
      %s200 = smul.addr %s199, 4
      %s201 = scalar_lea.vmem %s0, %s200
      %p202 = pneg %p51
      %p203 = pneg %p48
      %p204 = pneg %p72
      %p205 = pneg %p69
      %p206 = pneg %p93
      %p207 = pneg %p90
      %p208 = pneg %p119
      %p209 = pneg %p116
      %s210 = smul.u32 8, %s20
      %p211 = scmp.lt.s32.totalorder %s210, 15
      %s212 = scalar_select %p211, %s210, 15
      %s213 = smul.addr %s212, 4
      %s214 = scalar_lea.vmem %s3, %s213
      %p215 = pneg %p145
      %p216 = pneg %p142
      %p217 = scmp.lt.s32.totalorder %s20, 1
      %s218 = scalar_select %p217, %s20, 1
      %s219 = smul.addr %s218, 8
      %s220 = scalar_lea.vmem %s4, %s219
      %s221 = smul.u32 8, %s20
      %s222 = smul.u32 2, %s21
      %p223 = scmp.lt.s32.totalorder %s221, 15
      %s224 = scalar_select %p223, %s221, 15
      %p225 = scmp.lt.s32.totalorder %s222, 1
      %s226 = scalar_select %p225, %s222, 1
      %s227 = smul.addr %s224, 2
      %s228 = sadd.s32 %s226, %s227
      %s229 = smul.addr %s228, 4
      %s230 = scalar_lea.vmem %s0, %s229
      %s231 = smul.u32 8, %s20
      %s232 = smul.u32 2, %s21
      %s233 = smul.u32 8, %s20
      %p234 = scmp.lt.s32.totalorder %s233, 15
      %s235 = scalar_select %p234, %s233, 15
      %s236 = smul.addr %s235, 4
      %s237 = scalar_lea.vmem %s3, %s236
      %s238 = smul.u32 8, %s20
      %p239 = scmp.lt.s32.totalorder %s20, 1
      %s240 = scalar_select %p239, %s20, 1
      %s241 = smul.addr %s240, 8
      %s242 = scalar_lea.vmem %s4, %s241
      %p244 = scmp.eq.s32.totalorder %s21, 0
      // Predicated region
      $region33: #{discriminator512_forward.13} parent=31 // pred_check
        %p245 = pneg %p244
      $region34: #{discriminator512_forward.13} parent=31 // pred_check_branch
        %247 = sbr.rel (%p245) target = $region36
      $region35: #{discriminator512_forward.13} parent=31 // pred_region
        %248 = vst [vmem:[#allocation2] sm:$0xff] 0.0
        %249 = vst [vmem:[#allocation2 + $0x8] sm:$0xff] 0.0
        %250 = vst [vmem:[#allocation2 + $0x10] sm:$0xff] 0.0
        %251 = vst [vmem:[#allocation2 + $0x18] sm:$0xff] 0.0
        %252 = vst [vmem:[#allocation2 + $0x20] sm:$0xff] 0.0
        %253 = vst [vmem:[#allocation2 + $0x28] sm:$0xff] 0.0
        %254 = vst [vmem:[#allocation2 + $0x30] sm:$0xff] 0.0
        %255 = vst [vmem:[#allocation2 + $0x38] sm:$0xff] 0.0
      $region36: #{discriminator512_forward.13} parent=31 // pred_fallthru
        _
      %v256 = vld [vmem:[%s1] sm:$0xf]
      %v257 = vld [vmem:[%s1 + $0x4] sm:$0xf]
      %v258 = vld [vmem:[%s1 + $0x8] sm:$0xf]
      %v259 = vld [vmem:[%s1 + $0xc] sm:$0xf]
      %v260 = vld [vmem:[%s1 + $0x10] sm:$0xf]
      %v261 = vld [vmem:[%s1 + $0x14] sm:$0xf]
      %v262 = vld [vmem:[%s1 + $0x18] sm:$0xf]
      %v263 = vld [vmem:[%s1 + $0x1c] sm:$0xf]
      %v264 = vld [vmem:[%s1 + $0x20] sm:$0xf]
      %v265 = vld [vmem:[%s1 + $0x24] sm:$0xf]
      %v266 = vld [vmem:[%s1 + $0x28] sm:$0xf]
      %v267 = vld [vmem:[%s1 + $0x2c] sm:$0xf]
      %v268 = vld [vmem:[%s1 + $0x30] sm:$0xf]
      %v269 = vld [vmem:[%s1 + $0x34] sm:$0xf]
      %v270 = vld [vmem:[%s1 + $0x38] sm:$0xf]
      %v271 = vld [vmem:[%s1 + $0x3c] sm:$0xf]
      %v272 = vld [vmem:[%s1 + $0x40] sm:$0xf]
      %v273 = vld [vmem:[%s1 + $0x44] sm:$0xf]
      %v274 = vld [vmem:[%s1 + $0x48] sm:$0xf]
      %v275 = vld [vmem:[%s1 + $0x4c] sm:$0xf]
      %v276 = vld [vmem:[%s1 + $0x50] sm:$0xf]
      %v277 = vld [vmem:[%s1 + $0x54] sm:$0xf]
      %v278 = vld [vmem:[%s1 + $0x58] sm:$0xf]
      %v279 = vld [vmem:[%s1 + $0x5c] sm:$0xf]
      %v280 = vld [vmem:[%s1 + $0x60] sm:$0xf]
      %v281 = vld [vmem:[%s1 + $0x64] sm:$0xf]
      %v282 = vld [vmem:[%s1 + $0x68] sm:$0xf]
      %v283 = vld [vmem:[%s1 + $0x6c] sm:$0xf]
      %v284 = vld [vmem:[%s1 + $0x70] sm:$0xf]
      %v285 = vld [vmem:[%s1 + $0x74] sm:$0xf]
      %v286 = vld [vmem:[%s1 + $0x78] sm:$0xf]
      %v287 = vld [vmem:[%s1 + $0x7c] sm:$0xf]
      %v288 = vld [vmem:[#allocation2] sm:$0xff]
      %v289 = vld [vmem:[#allocation2 + $0x8] sm:$0xff]
      %v290 = vld [vmem:[#allocation2 + $0x10] sm:$0xff]
      %v291 = vld [vmem:[#allocation2 + $0x18] sm:$0xff]
      %v292 = vld [vmem:[#allocation2 + $0x20] sm:$0xff]
      %v293 = vld [vmem:[#allocation2 + $0x28] sm:$0xff]
      %v294 = vld [vmem:[#allocation2 + $0x30] sm:$0xff]
      %v295 = vld [vmem:[#allocation2 + $0x38] sm:$0xff]
      %v296 = vld [vmem:[%s230] sm:$0xff]
      %v297 = vld [vmem:[%s230 + $0x8] sm:$0xff]
      %v298 = vld [vmem:[%s230 + $0x10] sm:$0xff]
      %v299 = vld [vmem:[%s230 + $0x18] sm:$0xff]
      %v300 = vld [vmem:[%s230 + $0x20] sm:$0xff]
      %v301 = vld [vmem:[%s230 + $0x28] sm:$0xff]
      %v302 = vld [vmem:[%s230 + $0x30] sm:$0xff]
      %v303 = vld [vmem:[%s230 + $0x38] sm:$0xff]
      %v312 = vunpack.c.l.b16 %v296
      %v313 = vunpack.c.h.b16 %v296
      %v314 = vunpack.c.l.b16 %v297
      %v315 = vunpack.c.h.b16 %v297
      %v316 = vunpack.c.l.b16 %v298
      %v317 = vunpack.c.h.b16 %v298
      %v318 = vunpack.c.l.b16 %v299
      %v319 = vunpack.c.h.b16 %v299
      %v320 = vunpack.c.l.b16 %v300
      %v321 = vunpack.c.h.b16 %v300
      %v322 = vunpack.c.l.b16 %v301
      %v323 = vunpack.c.h.b16 %v301
      %v324 = vunpack.c.l.b16 %v302
      %v325 = vunpack.c.h.b16 %v302
      %v326 = vunpack.c.l.b16 %v303
      %v327 = vunpack.c.h.b16 %v303
      %v328 = vpack.c.b16 %v314, %v312
      %v329 = vpack.c.b16 %v315, %v313
      %v330 = vpack.c.b16 %v318, %v316
      %v331 = vpack.c.b16 %v319, %v317
      %v332 = vpack.c.b16 %v322, %v320
      %v333 = vpack.c.b16 %v323, %v321
      %v334 = vpack.c.b16 %v326, %v324
      %v335 = vpack.c.b16 %v327, %v325
      %v376 = vunpack.c.l.b16 %v256
      %v377 = vunpack.c.l.b16 %v257
      %v378 = vunpack.c.l.b16 %v258
      %v379 = vunpack.c.l.b16 %v259
      %v380 = vunpack.c.l.b16 %v260
      %v381 = vunpack.c.l.b16 %v261
      %v382 = vunpack.c.l.b16 %v262
      %v383 = vunpack.c.l.b16 %v263
      %v384 = vunpack.c.l.b16 %v264
      %v385 = vunpack.c.l.b16 %v265
      %v386 = vunpack.c.l.b16 %v266
      %v387 = vunpack.c.l.b16 %v267
      %v388 = vunpack.c.l.b16 %v268
      %v389 = vunpack.c.l.b16 %v269
      %v390 = vunpack.c.l.b16 %v270
      %v391 = vunpack.c.l.b16 %v271
      %v392 = vunpack.c.l.b16 %v272
      %v393 = vunpack.c.l.b16 %v273
      %v394 = vunpack.c.l.b16 %v274
      %v395 = vunpack.c.l.b16 %v275
      %v396 = vunpack.c.l.b16 %v276
      %v397 = vunpack.c.l.b16 %v277
      %v398 = vunpack.c.l.b16 %v278
      %v399 = vunpack.c.l.b16 %v279
      %v400 = vunpack.c.l.b16 %v280
      %v401 = vunpack.c.l.b16 %v281
      %v402 = vunpack.c.l.b16 %v282
      %v403 = vunpack.c.l.b16 %v283
      %v404 = vunpack.c.l.b16 %v284
      %v405 = vunpack.c.l.b16 %v285
      %v406 = vunpack.c.l.b16 %v286
      %v407 = vunpack.c.l.b16 %v287
      %v408 = vpack.c.b16 %v377, %v376
      %v409 = vpack.c.b16 %v379, %v378
      %v410 = vpack.c.b16 %v381, %v380
      %v411 = vpack.c.b16 %v383, %v382
      %v412 = vpack.c.b16 %v385, %v384
      %v413 = vpack.c.b16 %v387, %v386
      %v414 = vpack.c.b16 %v389, %v388
      %v415 = vpack.c.b16 %v391, %v390
      %v416 = vpack.c.b16 %v393, %v392
      %v417 = vpack.c.b16 %v395, %v394
      %v418 = vpack.c.b16 %v397, %v396
      %v419 = vpack.c.b16 %v399, %v398
      %v420 = vpack.c.b16 %v401, %v400
      %v421 = vpack.c.b16 %v403, %v402
      %v422 = vpack.c.b16 %v405, %v404
      %v423 = vpack.c.b16 %v407, %v406
      %440 = vmatprep.subr.bf16.mxu0 0
      %441 = vmatpush1.bf16.msra.mxu0 %v415
      %442 = vmatprep.subr.bf16.mxu0 0
      %443 = vmatpush1.bf16.msra.mxu0 %v414
      %444 = vmatprep.subr.bf16.mxu0 0
      %445 = vmatpush1.bf16.msra.mxu0 %v413
      %446 = vmatprep.subr.bf16.mxu0 0
      %447 = vmatpush1.bf16.msra.mxu0 %v412
      %448 = vmatprep.subr.bf16.mxu0 0
      %449 = vmatpush1.bf16.msra.mxu0 %v411
      %450 = vmatprep.subr.bf16.mxu0 0
      %451 = vmatpush1.bf16.msra.mxu0 %v410
      %452 = vmatprep.subr.bf16.mxu0 0
      %453 = vmatpush1.bf16.msra.mxu0 %v409
      %454 = vmatprep.subr.bf16.mxu0 0
      %455 = vmatpush1.bf16.msra.mxu0 %v408
      %456 = vmatprep.subr.bf16.mxu0 0
      %457 = vmatpush2.bf16.msra.mxu0 %v423
      %458 = vmatprep.subr.bf16.mxu0 0
      %459 = vmatpush2.bf16.msra.mxu0 %v422
      %460 = vmatprep.subr.bf16.mxu0 0
      %461 = vmatpush2.bf16.msra.mxu0 %v421
      %462 = vmatprep.subr.bf16.mxu0 0
      %463 = vmatpush2.bf16.msra.mxu0 %v420
      %464 = vmatprep.subr.bf16.mxu0 0
      %465 = vmatpush2.bf16.msra.mxu0 %v419
      %466 = vmatprep.subr.bf16.mxu0 0
      %467 = vmatpush2.bf16.msra.mxu0 %v418
      %468 = vmatprep.subr.bf16.mxu0 0
      %469 = vmatpush2.bf16.msra.mxu0 %v417
      %470 = vmatprep.subr.bf16.mxu0 0
      %471 = vmatpush2.bf16.msra.mxu0 %v416
      %472 = vmatprep.mubr.bf16.mxu0 %v329
      %473 = vmatmul.mubr.bf16.gmra.mxu0 %v328
      %v474 = vpop.f32.mrf.mxu0
      %v475 = vadd.f32 0.0, %v474
      %v476 = vpop.f32.mrf.mxu0
      %v477 = vpop.f32.mrf.mxu0
      %v478 = vadd.f32 0.0, %v477
      %v479 = vpop.f32.mrf.mxu0
      %480 = vmatprep.mubr.bf16.mxu0 %v331
      %481 = vmatmul.mubr.bf16.gmra.mxu0 %v330
      %v482 = vpop.f32.mrf.mxu0
      %v483 = vadd.f32 0.0, %v482
      %v484 = vpop.f32.mrf.mxu0
      %v485 = vpop.f32.mrf.mxu0
      %v486 = vadd.f32 0.0, %v485
      %v487 = vpop.f32.mrf.mxu0
      %488 = vmatprep.mubr.bf16.mxu0 %v333
      %489 = vmatmul.mubr.bf16.gmra.mxu0 %v332
      %v490 = vpop.f32.mrf.mxu0
      %v491 = vadd.f32 0.0, %v490
      %v492 = vpop.f32.mrf.mxu0
      %v493 = vpop.f32.mrf.mxu0
      %v494 = vadd.f32 0.0, %v493
      %v495 = vpop.f32.mrf.mxu0
      %496 = vmatprep.mubr.bf16.mxu0 %v335
      %497 = vmatmul.mubr.bf16.gmra.mxu0 %v334
      %v498 = vpop.f32.mrf.mxu0
      %v499 = vadd.f32 0.0, %v498
      %v500 = vpop.f32.mrf.mxu0
      %v501 = vpop.f32.mrf.mxu0
      %v502 = vadd.f32 0.0, %v501
      %v503 = vpop.f32.mrf.mxu0
      %504 = vdwg.mxu0
      %v505 = vadd.f32 %v288, %v475
      %v506 = vadd.f32 %v289, %v478
      %v507 = vadd.f32 %v290, %v483
      %v508 = vadd.f32 %v291, %v486
      %v509 = vadd.f32 %v292, %v491
      %v510 = vadd.f32 %v293, %v494
      %v511 = vadd.f32 %v294, %v499
      %v512 = vadd.f32 %v295, %v502
      %513 = vst [vmem:[#allocation2] sm:$0xff] %v505
      %514 = vst [vmem:[#allocation2 + $0x8] sm:$0xff] %v506
      %515 = vst [vmem:[#allocation2 + $0x10] sm:$0xff] %v507
      %516 = vst [vmem:[#allocation2 + $0x18] sm:$0xff] %v508
      %517 = vst [vmem:[#allocation2 + $0x20] sm:$0xff] %v509
      %518 = vst [vmem:[#allocation2 + $0x28] sm:$0xff] %v510
      %519 = vst [vmem:[#allocation2 + $0x30] sm:$0xff] %v511
      %520 = vst [vmem:[#allocation2 + $0x38] sm:$0xff] %v512
      // Predicated region
      $region37: #{discriminator512_forward.13} parent=31 // pred_check
        %p521 = pneg %p244
      $region38: #{discriminator512_forward.13} parent=31 // pred_check_branch
        %523 = sbr.rel (%p521) target = $region40
      $region39: #{discriminator512_forward.13} parent=31 // pred_region
        %v524 = vld [vmem:[#allocation2] sm:$0xff]
        %v525 = vld [vmem:[#allocation2 + $0x8] sm:$0xff]
        %v526 = vld [vmem:[#allocation2 + $0x10] sm:$0xff]
        %v527 = vld [vmem:[#allocation2 + $0x18] sm:$0xff]
        %v528 = vld [vmem:[#allocation2 + $0x20] sm:$0xff]
        %v529 = vld [vmem:[#allocation2 + $0x28] sm:$0xff]
        %v530 = vld [vmem:[#allocation2 + $0x30] sm:$0xff]
        %v531 = vld [vmem:[#allocation2 + $0x38] sm:$0xff]
        %v532 = vadd.f32 %v524, %v525
        %v533 = vadd.f32 %v532, %v526
        %v534 = vadd.f32 %v533, %v527
        %v535 = vadd.f32 %v534, %v528
        %v536 = vadd.f32 %v535, %v529
        %v537 = vadd.f32 %v536, %v530
        %v538 = vadd.f32 %v537, %v531
        %v539 = vrot.slane %v538, 4
        %v540 = vadd.f32 %v538, %v539
        %v541 = vrot.slane %v540, 2
        %v542 = vadd.f32 %v540, %v541
        %v543 = vrot.slane %v542, 1
        %v544 = vadd.f32 %v542, %v543
        %v545 = vmul.f32 %v524, %v524
        %v546 = vmul.f32 %v525, %v525
        %v547 = vmul.f32 %v526, %v526
        %v548 = vmul.f32 %v527, %v527
        %v549 = vmul.f32 %v528, %v528
        %v550 = vmul.f32 %v529, %v529
        %v551 = vmul.f32 %v530, %v530
        %v552 = vmul.f32 %v531, %v531
        %v553 = vadd.f32 %v545, %v546
        %v554 = vadd.f32 %v553, %v547
        %v555 = vadd.f32 %v554, %v548
        %v556 = vadd.f32 %v555, %v549
        %v557 = vadd.f32 %v556, %v550
        %v558 = vadd.f32 %v557, %v551
        %v559 = vadd.f32 %v558, %v552
        %v560 = vrot.slane %v559, 4
        %v561 = vadd.f32 %v559, %v560
        %v562 = vrot.slane %v561, 2
        %v563 = vadd.f32 %v561, %v562
        %v564 = vrot.slane %v563, 1
        %v565 = vadd.f32 %v563, %v564
        %v566 = vlaneseq
        %v567 = vshrl.u32 %v566, 7
        %vm568 = vcmp.eq.s32.totalorder %v567, 0
        %v569 = vsel %vm568, %v544, 0.0
        %vm570 = vcmp.eq.s32.totalorder %v567, 1
        %v571 = vsel %vm570, %v565, 0.0
        %v572 = vadd.f32 %v569, %v571
        %573 = vst [vmem:[%s242] sm:$0xff] %v572
        %v574 = vpack.c.bf16 %v525, %v524
        %v575 = vpack.c.bf16 %v527, %v526
        %v576 = vpack.c.bf16 %v529, %v528
        %v577 = vpack.c.bf16 %v531, %v530
        %v582 = vunpack.c.l.b16 %v574
        %v583 = vunpack.c.h.b16 %v574
        %v584 = vunpack.c.l.b16 %v575
        %v585 = vunpack.c.h.b16 %v575
        %v586 = vunpack.c.l.b16 %v576
        %v587 = vunpack.c.h.b16 %v576
        %v588 = vunpack.c.l.b16 %v577
        %v589 = vunpack.c.h.b16 %v577
        %v590 = vpack.c.b16 %v582, %v582
        %v591 = vpack.c.b16 %v583, %v583
        %v592 = vpack.c.b16 %v584, %v584
        %v593 = vpack.c.b16 %v585, %v585
        %v594 = vpack.c.b16 %v586, %v586
        %v595 = vpack.c.b16 %v587, %v587
        %v596 = vpack.c.b16 %v588, %v588
        %v597 = vpack.c.b16 %v589, %v589
        %606 = vst [vmem:[%s237] sm:$0xf] %v590
        %607 = vst [vmem:[%s237 + $0x4] sm:$0xf] %v591
        %608 = vst [vmem:[%s237 + $0x8] sm:$0xf] %v592
        %609 = vst [vmem:[%s237 + $0xc] sm:$0xf] %v593
        %610 = vst [vmem:[%s237 + $0x10] sm:$0xf] %v594
        %611 = vst [vmem:[%s237 + $0x14] sm:$0xf] %v595
        %612 = vst [vmem:[%s237 + $0x18] sm:$0xf] %v596
        %613 = vst [vmem:[%s237 + $0x1c] sm:$0xf] %v597
      $region40: #{discriminator512_forward.13} parent=31 // pred_fallthru
        _
      %s614 = smul.u32 8, %s20
      %p615 = scmp.lt.s32.totalorder %s614, 15
      %s616 = scalar_select %p615, %s614, 15
      %s617 = smul.addr %s616, 4
      %s618 = scalar_lea.vmem %s3, %s617
      %p619 = scmp.lt.s32.totalorder %s20, 1
      %s620 = scalar_select %p619, %s20, 1
      %s621 = smul.addr %s620, 8
      %s622 = scalar_lea.vmem %s4, %s621
      // Predicated region
      $region41: #{discriminator512_forward.13} parent=31 // pred_check
        %p623 = pneg %p116
      $region42: #{discriminator512_forward.13} parent=31 // pred_check_branch
        %625 = sbr.rel (%p623) target = $region44
      $region43: #{discriminator512_forward.13} parent=31 // pred_region
        %s626 = smul.u32 8, %s20
      $region44: #{discriminator512_forward.13} parent=31 // pred_fallthru
        _
      // Predicated region
      $region45: #{discriminator512_forward.13} parent=31 // pred_check
        %p627 = pneg %p142
      $region46: #{discriminator512_forward.13} parent=31 // pred_check_branch
        %629 = sbr.rel (%p627) target = $region48
      $region47: #{discriminator512_forward.13} parent=31 // pred_region
        _
      $region48: #{discriminator512_forward.13} parent=31 // pred_fallthru
        _
    $region32: #{discriminator512_forward.13} parent=5 // pred_fallthru
      _
    %p630 = scmp.le.s32.totalorder 2, %s11
    // Predicated region
    $region49: #{discriminator512_forward.13} parent=5 // pred_check
      %p631 = pneg %p630
    $region50: #{discriminator512_forward.13} parent=5 // pred_check_branch
      %633 = sbr.rel (%p631) target = $region52
    $region51: #{discriminator512_forward.13} parent=5 // pred_region
      %s634 = ssub.s32 %s11, 2
      // Predicated region
      $region53: #{discriminator512_forward.13} parent=51 // pred_check
        %p635 = pneg %p122
      $region54: #{discriminator512_forward.13} parent=51 // pred_check_branch
        %637 = sbr.rel (%p635) target = $region56
      $region55: #{discriminator512_forward.13} parent=51 // pred_region
        %s638 = smul.u32 8, %s22
        %p639 = scmp.lt.s32.totalorder %s638, 15
        %s640 = scalar_select %p639, %s638, 15
        %s641 = smul.addr %s640, 4
        %s642 = scalar_lea.vmem %s3, %s641
      $region56: #{discriminator512_forward.13} parent=51 // pred_fallthru
        _
      // Predicated region
      $region57: #{discriminator512_forward.13} parent=51 // pred_check
        %p643 = pneg %p148
      $region58: #{discriminator512_forward.13} parent=51 // pred_check_branch
        %645 = sbr.rel (%p643) target = $region60
      $region59: #{discriminator512_forward.13} parent=51 // pred_region
        %p646 = scmp.lt.s32.totalorder %s22, 1
        %s647 = scalar_select %p646, %s22, 1
        %s648 = smul.addr %s647, 8
        %s649 = scalar_lea.vmem %s4, %s648
      $region60: #{discriminator512_forward.13} parent=51 // pred_fallthru
        _
    $region52: #{discriminator512_forward.13} parent=5 // pred_fallthru
      _
  $region6: #{discriminator512_forward.13} parent=0 // loop_footer
    %s15 = sadd.s32 1, %s11
  $region7: #{discriminator512_forward.13} parent=0 // loop_footer_branch
    %10 = sbr.rel target = $region3
  $region8: #{discriminator512_forward.13} parent=0 // loop_exit
    _

// kernel: discriminator512_forward.16
$region0: #{discriminator512_forward.16}
  #allocation0 [shape = 'u32[]', space=smem, size = 0x4, offset = 0x4, fixed_abs, tag = 'smem constant byte address 0x4 - core index']
  #allocation1 [shape = 'u32[144,128]{1,0:T(1,128)}', space=vmem, size = 0x12000, scoped, tag = 'internal scratch']
  %s0 = inlined_call_operand.vmem [shape: bf16[32,128], index: 0, kind: input, shape index: {}]
  %s1 = inlined_call_operand.vmem [shape: f32[1,128], index: 1, kind: input, shape index: {}]
  %s2 = inlined_call_operand.vmem [shape: f32[1,128], index: 2, kind: input, shape index: {}]
  %s3 = inlined_call_operand.vmem [shape: bf16[32,128], index: 3, kind: output, shape index: {}]
  %s4 = sld [smem:[#allocation0]]
  $region22: #{discriminator512_forward.16} parent=0
    _
  %s6 = ssub.s32 1, %s4
  %s7 = scalar_select 0, %s6, %s4
  // Predicated region
  $region2: #{discriminator512_forward.16} parent=0 // pred_check
    _
  $region3: #{discriminator512_forward.16} parent=0 // pred_check_branch
    %9 = sbr.rel (0) target = $region5
  $region4: #{discriminator512_forward.16} parent=0 // pred_region
    _
  $region5: #{discriminator512_forward.16} parent=0 // pred_fallthru
    _
  // Predicated region
  $region6: #{discriminator512_forward.16} parent=0 // pred_check
    _
  $region7: #{discriminator512_forward.16} parent=0 // pred_check_branch
    %11 = sbr.rel (0) target = $region9
  $region8: #{discriminator512_forward.16} parent=0 // pred_region
    _
  $region9: #{discriminator512_forward.16} parent=0 // pred_fallthru
    _
  // Predicated region
  $region10: #{discriminator512_forward.16} parent=0 // pred_check
    _
  $region11: #{discriminator512_forward.16} parent=0 // pred_check_branch
    %13 = sbr.rel (0) target = $region13
  $region12: #{discriminator512_forward.16} parent=0 // pred_region
    _
  $region13: #{discriminator512_forward.16} parent=0 // pred_fallthru
    _
  %v14 = vld [vmem:[%s0] sm:$0xf]
  %v15 = vld [vmem:[%s0 + $0x4] sm:$0xf]
  %v16 = vld [vmem:[%s0 + $0x8] sm:$0xf]
  %v17 = vld [vmem:[%s0 + $0xc] sm:$0xf]
  %v18 = vunpack.c.l.bf16 %v14
  %v19 = vunpack.c.l.bf16 %v15
  %v20 = vunpack.c.l.bf16 %v16
  %v21 = vunpack.c.l.bf16 %v17
  %v22 = vld [vmem:[%s1] sm:$0x1]
  %v24 = vlaneseq
  %v25 = vshrl.u32 %v24, 7
  %v26 = vsub.s32 0, %v25
  %v27 = vrot.slane %v22, %v26
  %v29 = vmul.f32 %v18, %v27
  %v30 = vmul.f32 %v19, %v27
  %v31 = vmul.f32 %v20, %v27
  %v32 = vmul.f32 %v21, %v27
  %v33 = vld [vmem:[%s2] sm:$0x1]
  %v35 = vlaneseq
  %v36 = vshrl.u32 %v35, 7
  %v37 = vsub.s32 0, %v36
  %v38 = vrot.slane %v33, %v37
  %v40 = vadd.f32 %v29, %v38
  %v41 = vadd.f32 %v30, %v38
  %v42 = vadd.f32 %v31, %v38
  %v43 = vadd.f32 %v32, %v38
  %vm44 = vcmp.gt.f32.partialorder %v40, 0.0
  %vm45 = vcmp.gt.f32.partialorder %v41, 0.0
  %vm46 = vcmp.gt.f32.partialorder %v42, 0.0
  %vm47 = vcmp.gt.f32.partialorder %v43, 0.0
  %v48 = vmul.f32 %v40, 0.2
  %v49 = vmul.f32 %v41, 0.2
  %v50 = vmul.f32 %v42, 0.2
  %v51 = vmul.f32 %v43, 0.2
  %v52 = vsel %vm44, %v40, %v48
  %v53 = vsel %vm45, %v41, %v49
  %v54 = vsel %vm46, %v42, %v50
  %v55 = vsel %vm47, %v43, %v51
  %v56 = vpack.c.bf16 %v53, %v52
  %v57 = vpack.c.bf16 %v55, %v54
  %v60 = vunpack.c.l.b16 %v56
  %v61 = vunpack.c.h.b16 %v56
  %v62 = vunpack.c.l.b16 %v57
  %v63 = vunpack.c.h.b16 %v57
  %v64 = vpack.c.b16 %v60, %v60
  %v65 = vpack.c.b16 %v61, %v61
  %v66 = vpack.c.b16 %v62, %v62
  %v67 = vpack.c.b16 %v63, %v63
  %72 = vst [vmem:[%s3] sm:$0xf] %v64
  %73 = vst [vmem:[%s3 + $0x4] sm:$0xf] %v65
  %74 = vst [vmem:[%s3 + $0x8] sm:$0xf] %v66
  %75 = vst [vmem:[%s3 + $0xc] sm:$0xf] %v67
  // Predicated region
  $region14: #{discriminator512_forward.16} parent=0 // pred_check
    _
  $region15: #{discriminator512_forward.16} parent=0 // pred_check_branch
    %77 = sbr.rel (0) target = $region17
  $region16: #{discriminator512_forward.16} parent=0 // pred_region
    _
  $region17: #{discriminator512_forward.16} parent=0 // pred_fallthru
    _
  // Predicated region
  $region18: #{discriminator512_forward.16} parent=0 // pred_check
    _
  $region19: #{discriminator512_forward.16} parent=0 // pred_check_branch
    %79 = sbr.rel (0) target = $region21
  $region20: #{discriminator512_forward.16} parent=0 // pred_region
    _
  $region21: #{discriminator512_forward.16} parent=0 // pred_fallthru
    _

// kernel: discriminator512_forward.15
$region0: #{discriminator512_forward.15}
  #allocation0 [shape = 'u32[]', space=smem, size = 0x4, offset = 0x4, fixed_abs, tag = 'smem constant byte address 0x4 - core index']
  #allocation1 [shape = 'u32[144,128]{1,0:T(1,128)}', space=vmem, size = 0x12000, scoped, tag = 'internal scratch']
  #allocation2 [shape = 'f32[16,128]{1,0:T(8,128)}', space=vmem, size = 0x2000, scoped, tag = 'scratch operand']
  %s0 = inlined_call_operand.vmem [shape: bf16[32,512], index: 0, kind: input, shape index: {}]
  %s1 = inlined_call_operand.vmem [shape: bf16[512,128], index: 1, kind: input, shape index: {}]
  %s2 = inlined_call_operand.vmem [shape: f32[1,128], index: 2, kind: input, shape index: {}]
  %s3 = inlined_call_operand.vmem [shape: bf16[32,128], index: 3, kind: output, shape index: {0}]
  %s4 = inlined_call_operand.vmem [shape: f32[16,128], index: 4, kind: output, shape index: {1}]
  %5 = xla_tuple %s3, %s4
  %s6 = sld [smem:[#allocation0]]
  $region61: #{discriminator512_forward.15} parent=0
    _
  %s8 = ssub.s32 1, %s6
  %s9 = scalar_select 0, %s8, %s6
  loop: start=0, step=1, limit=4
  $region2: #{discriminator512_forward.15} parent=0 // loop_pre_header
    _
  $region3: #{discriminator512_forward.15} parent=0 // loop_header
    %s11 = sphi 0, %s15
    %p12 = scmp.ge.s32.totalorder %s11, 4
    %s18 = sphi 0, %s30
    %s19 = sphi 0, %s26
    %s20 = sphi 0, %s18
    %s21 = sphi 0, %s19
    %s22 = sphi 0, %s20
    %s23 = sphi 0, %s21
    %s35 = sphi 0, %s37
    %s38 = sphi 0, %s35
    %s39 = sphi 0, %s38
    %s55 = sphi 0, %s39
    %s59 = sphi 0, %s59
    %s61 = sphi 0, %s59
    %s62 = sphi 0, %s61
    %s76 = sphi 0, %s62
    %s80 = sphi 0, %s80
    %s82 = sphi 0, %s80
    %s83 = sphi 0, %s82
    %s97 = sphi 0, %s83
    %s103 = sphi 0, %s105
    %s106 = sphi 0, %s103
    %s107 = sphi 0, %s106
    %s123 = sphi 0, %s107
    %s129 = sphi 0, %s131
    %s132 = sphi 0, %s129
    %s133 = sphi 0, %s132
    %s149 = sphi 0, %s133
  $region4: #{discriminator512_forward.15} parent=0 // loop_header_branch
    %14 = sbr.rel (%p12) target = $region8
  $region5: #{discriminator512_forward.15} parent=0 // loop_body
    %s16 = ssub.s32 %s11, 1
    %s17 = ssub.s32 %s11, 2
    %s24 = sadd.s32 1, %s19
    %p25 = scmp.ge.s32.totalorder %s24, 1
    %s26 = scalar_select %p25, 0, %s24
    %s27 = sadd.s32 1, %s18
    %s28 = scalar_select %p25, %s27, %s18
    %p29 = scmp.ge.s32.totalorder %s28, 2
    %s30 = scalar_select %p29, 0, %s28
    %s31 = ssub.s32 %s18, %s30
    %s32 = ssub.s32 %s19, %s26
    %s33 = sor.u32 %s31, %s32
    %p34 = scmp.eq.s32.totalorder %s33, 0
    %s36 = sadd.s32 %s35, 1
    %s37 = scalar_select %p34, %s35, %s36
    %p40 = pneg %p34
    %p41 = scmp.eq.s32.totalorder %s11, 1
    %p42 = por %p40, %p41
    %p43 = scmp.ne.s32.totalorder %s35, %s38
    %p44 = scmp.eq.s32.totalorder %s11, 0
    %p45 = por %p43, %p44
    %p46 = scmp.ne.s32.totalorder %s35, %s38
    %p47 = scmp.eq.s32.totalorder %s16, 1
    %p48 = por %p46, %p47
    %p49 = scmp.ne.s32.totalorder %s38, %s39
    %p50 = scmp.eq.s32.totalorder %s16, 0
    %p51 = por %p49, %p50
    %p52 = scmp.ne.s32.totalorder %s38, %s39
    %p53 = scmp.eq.s32.totalorder %s17, 1
    %p54 = por %p52, %p53
    %p56 = scmp.ne.s32.totalorder %s39, %s55
    %p57 = scmp.eq.s32.totalorder %s17, 0
    %p58 = por %p56, %p57
    %s60 = sadd.s32 %s59, 1
    %p63 = scmp.eq.s32.totalorder %s11, 1
    %p64 = scmp.ne.s32.totalorder %s59, %s61
    %p65 = scmp.eq.s32.totalorder %s11, 0
    %p66 = por %p64, %p65
    %p67 = scmp.ne.s32.totalorder %s59, %s61
    %p68 = scmp.eq.s32.totalorder %s16, 1
    %p69 = por %p67, %p68
    %p70 = scmp.ne.s32.totalorder %s61, %s62
    %p71 = scmp.eq.s32.totalorder %s16, 0
    %p72 = por %p70, %p71
    %p73 = scmp.ne.s32.totalorder %s61, %s62
    %p74 = scmp.eq.s32.totalorder %s17, 1
    %p75 = por %p73, %p74
    %p77 = scmp.ne.s32.totalorder %s62, %s76
    %p78 = scmp.eq.s32.totalorder %s17, 0
    %p79 = por %p77, %p78
    %s81 = sadd.s32 %s80, 1
    %p84 = scmp.eq.s32.totalorder %s11, 1
    %p85 = scmp.ne.s32.totalorder %s80, %s82
    %p86 = scmp.eq.s32.totalorder %s11, 0
    %p87 = por %p85, %p86
    %p88 = scmp.ne.s32.totalorder %s80, %s82
    %p89 = scmp.eq.s32.totalorder %s16, 1
    %p90 = por %p88, %p89
    %p91 = scmp.ne.s32.totalorder %s82, %s83
    %p92 = scmp.eq.s32.totalorder %s16, 0
    %p93 = por %p91, %p92
    %p94 = scmp.ne.s32.totalorder %s82, %s83
    %p95 = scmp.eq.s32.totalorder %s17, 1
    %p96 = por %p94, %p95
    %p98 = scmp.ne.s32.totalorder %s83, %s97
    %p99 = scmp.eq.s32.totalorder %s17, 0
    %p100 = por %p98, %p99
    %s101 = ssub.s32 %s18, %s30
    %p102 = scmp.eq.s32.totalorder %s101, 0
    %s104 = sadd.s32 %s103, 1
    %s105 = scalar_select %p102, %s103, %s104
    %p108 = pneg %p102
    %p109 = scmp.eq.s32.totalorder %s11, 1
    %p110 = por %p108, %p109
    %p111 = scmp.ne.s32.totalorder %s103, %s106
    %p112 = scmp.eq.s32.totalorder %s11, 0
    %p113 = por %p111, %p112
    %p114 = scmp.ne.s32.totalorder %s103, %s106
    %p115 = scmp.eq.s32.totalorder %s16, 1
    %p116 = por %p114, %p115
    %p117 = scmp.ne.s32.totalorder %s106, %s107
    %p118 = scmp.eq.s32.totalorder %s16, 0
    %p119 = por %p117, %p118
    %p120 = scmp.ne.s32.totalorder %s106, %s107
    %p121 = scmp.eq.s32.totalorder %s17, 1
    %p122 = por %p120, %p121
    %p124 = scmp.ne.s32.totalorder %s107, %s123
    %p125 = scmp.eq.s32.totalorder %s17, 0
    %p126 = por %p124, %p125
    %s127 = ssub.s32 %s18, %s30
    %p128 = scmp.eq.s32.totalorder %s127, 0
    %s130 = sadd.s32 %s129, 1
    %s131 = scalar_select %p128, %s129, %s130
    %p134 = pneg %p128
    %p135 = scmp.eq.s32.totalorder %s11, 1
    %p136 = por %p134, %p135
    %p137 = scmp.ne.s32.totalorder %s129, %s132
    %p138 = scmp.eq.s32.totalorder %s11, 0
    %p139 = por %p137, %p138
    %p140 = scmp.ne.s32.totalorder %s129, %s132
    %p141 = scmp.eq.s32.totalorder %s16, 1
    %p142 = por %p140, %p141
    %p143 = scmp.ne.s32.totalorder %s132, %s133
    %p144 = scmp.eq.s32.totalorder %s16, 0
    %p145 = por %p143, %p144
    %p146 = scmp.ne.s32.totalorder %s132, %s133
    %p147 = scmp.eq.s32.totalorder %s17, 1
    %p148 = por %p146, %p147
    %p150 = scmp.ne.s32.totalorder %s133, %s149
    %p151 = scmp.eq.s32.totalorder %s17, 0
    %p152 = por %p150, %p151
    %p153 = scmp.le.s32.totalorder 1, %s11
    %p154 = scmp.lt.s32.totalorder %s11, 3
    %p155 = pnand %p153, %p154
    %p156 = pneg %p155
    // Predicated region
    $region9: #{discriminator512_forward.15} parent=5 // pred_check
      _
    $region10: #{discriminator512_forward.15} parent=5 // pred_check_branch
      %158 = sbr.rel (%p155) target = $region12
    $region11: #{discriminator512_forward.15} parent=5 // pred_region
      %s159 = ssub.s32 %s11, 1
      // Predicated region
      $region13: #{discriminator512_forward.15} parent=11 // pred_check
        %p160 = pneg %p72
      $region14: #{discriminator512_forward.15} parent=11 // pred_check_branch
        %162 = sbr.rel (%p160) target = $region16
      $region15: #{discriminator512_forward.15} parent=11 // pred_region
        _
      $region16: #{discriminator512_forward.15} parent=11 // pred_fallthru
        _
      // Predicated region
      $region17: #{discriminator512_forward.15} parent=11 // pred_check
        %p163 = pneg %p93
      $region18: #{discriminator512_forward.15} parent=11 // pred_check_branch
        %165 = sbr.rel (%p163) target = $region20
      $region19: #{discriminator512_forward.15} parent=11 // pred_region
        _
      $region20: #{discriminator512_forward.15} parent=11 // pred_fallthru
        _
    $region12: #{discriminator512_forward.15} parent=5 // pred_fallthru
      _
    %p166 = scmp.lt.s32.totalorder %s11, 2
    // Predicated region
    $region21: #{discriminator512_forward.15} parent=5 // pred_check
      %p167 = pneg %p166
    $region22: #{discriminator512_forward.15} parent=5 // pred_check_branch
      %169 = sbr.rel (%p167) target = $region24
    $region23: #{discriminator512_forward.15} parent=5 // pred_region
      // Predicated region
      $region25: #{discriminator512_forward.15} parent=23 // pred_check
        %p170 = pneg %p45
      $region26: #{discriminator512_forward.15} parent=23 // pred_check_branch
        %172 = sbr.rel (%p170) target = $region28
      $region27: #{discriminator512_forward.15} parent=23 // pred_region
        %s173 = smul.u32 2, %s18
        %s174 = smul.u32 4, %s19
        %p175 = scmp.lt.s32.totalorder %s173, 3
        %s176 = scalar_select %p175, %s173, 3
        %p177 = scmp.lt.s32.totalorder %s174, 3
        %s178 = scalar_select %p177, %s174, 3
        %s179 = smul.addr %s176, 4
        %s180 = sadd.s32 %s178, %s179
        %s181 = smul.addr %s180, 4
        %s182 = scalar_lea.vmem %s0, %s181
        %s183 = smul.u32 2, %s18
        %s184 = smul.u32 4, %s19
      $region28: #{discriminator512_forward.15} parent=23 // pred_fallthru
        _
    $region24: #{discriminator512_forward.15} parent=5 // pred_fallthru
      _
    %p185 = scmp.le.s32.totalorder 1, %s11
    %p186 = scmp.lt.s32.totalorder %s11, 3
    %p187 = pnand %p185, %p186
    %p188 = pneg %p187
    // Predicated region
    $region29: #{discriminator512_forward.15} parent=5 // pred_check
      _
    $region30: #{discriminator512_forward.15} parent=5 // pred_check_branch
      %190 = sbr.rel (%p187) target = $region32
    $region31: #{discriminator512_forward.15} parent=5 // pred_region
      %s191 = ssub.s32 %s11, 1
      %s192 = smul.u32 2, %s20
      %s193 = smul.u32 4, %s21
      %p194 = scmp.lt.s32.totalorder %s192, 3
      %s195 = scalar_select %p194, %s192, 3
      %p196 = scmp.lt.s32.totalorder %s193, 3
      %s197 = scalar_select %p196, %s193, 3
      %s198 = smul.addr %s195, 4
      %s199 = sadd.s32 %s197, %s198
      %s200 = smul.addr %s199, 4
      %s201 = scalar_lea.vmem %s0, %s200
      %p202 = pneg %p51
      %p203 = pneg %p48
      %p204 = pneg %p72
      %p205 = pneg %p69
      %p206 = pneg %p93
      %p207 = pneg %p90
      %p208 = pneg %p119
      %p209 = pneg %p116
      %s210 = smul.u32 2, %s20
      %p211 = scmp.lt.s32.totalorder %s210, 3
      %s212 = scalar_select %p211, %s210, 3
      %s213 = smul.addr %s212, 4
      %s214 = scalar_lea.vmem %s3, %s213
      %p215 = pneg %p145
      %p216 = pneg %p142
      %p217 = scmp.lt.s32.totalorder %s20, 1
      %s218 = scalar_select %p217, %s20, 1
      %s219 = smul.addr %s218, 8
      %s220 = scalar_lea.vmem %s4, %s219
      %s221 = smul.u32 2, %s20
      %s222 = smul.u32 4, %s21
      %p223 = scmp.lt.s32.totalorder %s221, 3
      %s224 = scalar_select %p223, %s221, 3
      %p225 = scmp.lt.s32.totalorder %s222, 3
      %s226 = scalar_select %p225, %s222, 3
      %s227 = smul.addr %s224, 4
      %s228 = sadd.s32 %s226, %s227
      %s229 = smul.addr %s228, 4
      %s230 = scalar_lea.vmem %s0, %s229
      %s231 = smul.u32 2, %s20
      %s232 = smul.u32 4, %s21
      %s233 = smul.u32 2, %s20
      %p234 = scmp.lt.s32.totalorder %s233, 3
      %s235 = scalar_select %p234, %s233, 3
      %s236 = smul.addr %s235, 4
      %s237 = scalar_lea.vmem %s3, %s236
      %s238 = smul.u32 2, %s20
      %p239 = scmp.lt.s32.totalorder %s20, 1
      %s240 = scalar_select %p239, %s20, 1
      %s241 = smul.addr %s240, 8
      %s242 = scalar_lea.vmem %s4, %s241
      %p244 = scmp.eq.s32.totalorder %s21, 0
      // Predicated region
      $region33: #{discriminator512_forward.15} parent=31 // pred_check
        %p245 = pneg %p244
      $region34: #{discriminator512_forward.15} parent=31 // pred_check_branch
        %247 = sbr.rel (%p245) target = $region36
      $region35: #{discriminator512_forward.15} parent=31 // pred_region
        %248 = vst [vmem:[#allocation2] sm:$0xff] 0.0
        %249 = vst [vmem:[#allocation2 + $0x8] sm:$0xff] 0.0
      $region36: #{discriminator512_forward.15} parent=31 // pred_fallthru
        _
      %v250 = vld [vmem:[%s1] sm:$0xf]
      %v251 = vld [vmem:[%s1 + $0x4] sm:$0xf]
      %v252 = vld [vmem:[%s1 + $0x8] sm:$0xf]
      %v253 = vld [vmem:[%s1 + $0xc] sm:$0xf]
      %v254 = vld [vmem:[%s1 + $0x10] sm:$0xf]
      %v255 = vld [vmem:[%s1 + $0x14] sm:$0xf]
      %v256 = vld [vmem:[%s1 + $0x18] sm:$0xf]
      %v257 = vld [vmem:[%s1 + $0x1c] sm:$0xf]
      %v258 = vld [vmem:[%s1 + $0x20] sm:$0xf]
      %v259 = vld [vmem:[%s1 + $0x24] sm:$0xf]
      %v260 = vld [vmem:[%s1 + $0x28] sm:$0xf]
      %v261 = vld [vmem:[%s1 + $0x2c] sm:$0xf]
      %v262 = vld [vmem:[%s1 + $0x30] sm:$0xf]
      %v263 = vld [vmem:[%s1 + $0x34] sm:$0xf]
      %v264 = vld [vmem:[%s1 + $0x38] sm:$0xf]
      %v265 = vld [vmem:[%s1 + $0x3c] sm:$0xf]
      %v266 = vld [vmem:[%s1 + $0x40] sm:$0xf]
      %v267 = vld [vmem:[%s1 + $0x44] sm:$0xf]
      %v268 = vld [vmem:[%s1 + $0x48] sm:$0xf]
      %v269 = vld [vmem:[%s1 + $0x4c] sm:$0xf]
      %v270 = vld [vmem:[%s1 + $0x50] sm:$0xf]
      %v271 = vld [vmem:[%s1 + $0x54] sm:$0xf]
      %v272 = vld [vmem:[%s1 + $0x58] sm:$0xf]
      %v273 = vld [vmem:[%s1 + $0x5c] sm:$0xf]
      %v274 = vld [vmem:[%s1 + $0x60] sm:$0xf]
      %v275 = vld [vmem:[%s1 + $0x64] sm:$0xf]
      %v276 = vld [vmem:[%s1 + $0x68] sm:$0xf]
      %v277 = vld [vmem:[%s1 + $0x6c] sm:$0xf]
      %v278 = vld [vmem:[%s1 + $0x70] sm:$0xf]
      %v279 = vld [vmem:[%s1 + $0x74] sm:$0xf]
      %v280 = vld [vmem:[%s1 + $0x78] sm:$0xf]
      %v281 = vld [vmem:[%s1 + $0x7c] sm:$0xf]
      %v282 = vld [vmem:[%s1 + $0x80] sm:$0xf]
      %v283 = vld [vmem:[%s1 + $0x84] sm:$0xf]
      %v284 = vld [vmem:[%s1 + $0x88] sm:$0xf]
      %v285 = vld [vmem:[%s1 + $0x8c] sm:$0xf]
      %v286 = vld [vmem:[%s1 + $0x90] sm:$0xf]
      %v287 = vld [vmem:[%s1 + $0x94] sm:$0xf]
      %v288 = vld [vmem:[%s1 + $0x98] sm:$0xf]
      %v289 = vld [vmem:[%s1 + $0x9c] sm:$0xf]
      %v290 = vld [vmem:[%s1 + $0xa0] sm:$0xf]
      %v291 = vld [vmem:[%s1 + $0xa4] sm:$0xf]
      %v292 = vld [vmem:[%s1 + $0xa8] sm:$0xf]
      %v293 = vld [vmem:[%s1 + $0xac] sm:$0xf]
      %v294 = vld [vmem:[%s1 + $0xb0] sm:$0xf]
      %v295 = vld [vmem:[%s1 + $0xb4] sm:$0xf]
      %v296 = vld [vmem:[%s1 + $0xb8] sm:$0xf]
      %v297 = vld [vmem:[%s1 + $0xbc] sm:$0xf]
      %v298 = vld [vmem:[%s1 + $0xc0] sm:$0xf]
      %v299 = vld [vmem:[%s1 + $0xc4] sm:$0xf]
      %v300 = vld [vmem:[%s1 + $0xc8] sm:$0xf]
      %v301 = vld [vmem:[%s1 + $0xcc] sm:$0xf]
      %v302 = vld [vmem:[%s1 + $0xd0] sm:$0xf]
      %v303 = vld [vmem:[%s1 + $0xd4] sm:$0xf]
      %v304 = vld [vmem:[%s1 + $0xd8] sm:$0xf]
      %v305 = vld [vmem:[%s1 + $0xdc] sm:$0xf]
      %v306 = vld [vmem:[%s1 + $0xe0] sm:$0xf]
      %v307 = vld [vmem:[%s1 + $0xe4] sm:$0xf]
      %v308 = vld [vmem:[%s1 + $0xe8] sm:$0xf]
      %v309 = vld [vmem:[%s1 + $0xec] sm:$0xf]
      %v310 = vld [vmem:[%s1 + $0xf0] sm:$0xf]
      %v311 = vld [vmem:[%s1 + $0xf4] sm:$0xf]
      %v312 = vld [vmem:[%s1 + $0xf8] sm:$0xf]
      %v313 = vld [vmem:[%s1 + $0xfc] sm:$0xf]
      %v314 = vld [vmem:[#allocation2] sm:$0xff]
      %v315 = vld [vmem:[#allocation2 + $0x8] sm:$0xff]
      %v316 = vld [vmem:[%s230] sm:$0xff]
      %v317 = vld [vmem:[%s230 + $0x8] sm:$0xff]
      %v318 = vld [vmem:[%s230 + $0x10] sm:$0xff]
      %v319 = vld [vmem:[%s230 + $0x18] sm:$0xff]
      %v324 = vunpack.c.l.b16 %v316
      %v325 = vunpack.c.h.b16 %v316
      %v326 = vunpack.c.l.b16 %v317
      %v327 = vunpack.c.h.b16 %v317
      %v328 = vunpack.c.l.b16 %v318
      %v329 = vunpack.c.h.b16 %v318
      %v330 = vunpack.c.l.b16 %v319
      %v331 = vunpack.c.h.b16 %v319
      %v332 = vpack.c.b16 %v328, %v324
      %v333 = vpack.c.b16 %v329, %v325
      %v334 = vpack.c.b16 %v330, %v326
      %v335 = vpack.c.b16 %v331, %v327
      %v404 = vunpack.c.l.b16 %v250
      %v405 = vunpack.c.l.b16 %v251
      %v406 = vunpack.c.l.b16 %v252
      %v407 = vunpack.c.l.b16 %v253
      %v408 = vunpack.c.l.b16 %v254
      %v409 = vunpack.c.l.b16 %v255
      %v410 = vunpack.c.l.b16 %v256
      %v411 = vunpack.c.l.b16 %v257
      %v412 = vunpack.c.l.b16 %v258
      %v413 = vunpack.c.l.b16 %v259
      %v414 = vunpack.c.l.b16 %v260
      %v415 = vunpack.c.l.b16 %v261
      %v416 = vunpack.c.l.b16 %v262
      %v417 = vunpack.c.l.b16 %v263
      %v418 = vunpack.c.l.b16 %v264
      %v419 = vunpack.c.l.b16 %v265
      %v420 = vunpack.c.l.b16 %v266
      %v421 = vunpack.c.l.b16 %v267
      %v422 = vunpack.c.l.b16 %v268
      %v423 = vunpack.c.l.b16 %v269
      %v424 = vunpack.c.l.b16 %v270
      %v425 = vunpack.c.l.b16 %v271
      %v426 = vunpack.c.l.b16 %v272
      %v427 = vunpack.c.l.b16 %v273
      %v428 = vunpack.c.l.b16 %v274
      %v429 = vunpack.c.l.b16 %v275
      %v430 = vunpack.c.l.b16 %v276
      %v431 = vunpack.c.l.b16 %v277
      %v432 = vunpack.c.l.b16 %v278
      %v433 = vunpack.c.l.b16 %v279
      %v434 = vunpack.c.l.b16 %v280
      %v435 = vunpack.c.l.b16 %v281
      %v436 = vunpack.c.l.b16 %v282
      %v437 = vunpack.c.l.b16 %v283
      %v438 = vunpack.c.l.b16 %v284
      %v439 = vunpack.c.l.b16 %v285
      %v440 = vunpack.c.l.b16 %v286
      %v441 = vunpack.c.l.b16 %v287
      %v442 = vunpack.c.l.b16 %v288
      %v443 = vunpack.c.l.b16 %v289
      %v444 = vunpack.c.l.b16 %v290
      %v445 = vunpack.c.l.b16 %v291
      %v446 = vunpack.c.l.b16 %v292
      %v447 = vunpack.c.l.b16 %v293
      %v448 = vunpack.c.l.b16 %v294
      %v449 = vunpack.c.l.b16 %v295
      %v450 = vunpack.c.l.b16 %v296
      %v451 = vunpack.c.l.b16 %v297
      %v452 = vunpack.c.l.b16 %v298
      %v453 = vunpack.c.l.b16 %v299
      %v454 = vunpack.c.l.b16 %v300
      %v455 = vunpack.c.l.b16 %v301
      %v456 = vunpack.c.l.b16 %v302
      %v457 = vunpack.c.l.b16 %v303
      %v458 = vunpack.c.l.b16 %v304
      %v459 = vunpack.c.l.b16 %v305
      %v460 = vunpack.c.l.b16 %v306
      %v461 = vunpack.c.l.b16 %v307
      %v462 = vunpack.c.l.b16 %v308
      %v463 = vunpack.c.l.b16 %v309
      %v464 = vunpack.c.l.b16 %v310
      %v465 = vunpack.c.l.b16 %v311
      %v466 = vunpack.c.l.b16 %v312
      %v467 = vunpack.c.l.b16 %v313
      %v468 = vpack.c.b16 %v405, %v404
      %v469 = vpack.c.b16 %v407, %v406
      %v470 = vpack.c.b16 %v409, %v408
      %v471 = vpack.c.b16 %v411, %v410
      %v472 = vpack.c.b16 %v413, %v412
      %v473 = vpack.c.b16 %v415, %v414
      %v474 = vpack.c.b16 %v417, %v416
      %v475 = vpack.c.b16 %v419, %v418
      %v476 = vpack.c.b16 %v421, %v420
      %v477 = vpack.c.b16 %v423, %v422
      %v478 = vpack.c.b16 %v425, %v424
      %v479 = vpack.c.b16 %v427, %v426
      %v480 = vpack.c.b16 %v429, %v428
      %v481 = vpack.c.b16 %v431, %v430
      %v482 = vpack.c.b16 %v433, %v432
      %v483 = vpack.c.b16 %v435, %v434
      %v484 = vpack.c.b16 %v437, %v436
      %v485 = vpack.c.b16 %v439, %v438
      %v486 = vpack.c.b16 %v441, %v440
      %v487 = vpack.c.b16 %v443, %v442
      %v488 = vpack.c.b16 %v445, %v444
      %v489 = vpack.c.b16 %v447, %v446
      %v490 = vpack.c.b16 %v449, %v448
      %v491 = vpack.c.b16 %v451, %v450
      %v492 = vpack.c.b16 %v453, %v452
      %v493 = vpack.c.b16 %v455, %v454
      %v494 = vpack.c.b16 %v457, %v456
      %v495 = vpack.c.b16 %v459, %v458
      %v496 = vpack.c.b16 %v461, %v460
      %v497 = vpack.c.b16 %v463, %v462
      %v498 = vpack.c.b16 %v465, %v464
      %v499 = vpack.c.b16 %v467, %v466
      %532 = vmatprep.subr.bf16.mxu0 0
      %533 = vmatpush1.bf16.msra.mxu0 %v475
      %534 = vmatprep.subr.bf16.mxu0 0
      %535 = vmatpush1.bf16.msra.mxu0 %v474
      %536 = vmatprep.subr.bf16.mxu0 0
      %537 = vmatpush1.bf16.msra.mxu0 %v473
      %538 = vmatprep.subr.bf16.mxu0 0
      %539 = vmatpush1.bf16.msra.mxu0 %v472
      %540 = vmatprep.subr.bf16.mxu0 0
      %541 = vmatpush1.bf16.msra.mxu0 %v471
      %542 = vmatprep.subr.bf16.mxu0 0
      %543 = vmatpush1.bf16.msra.mxu0 %v470
      %544 = vmatprep.subr.bf16.mxu0 0
      %545 = vmatpush1.bf16.msra.mxu0 %v469
      %546 = vmatprep.subr.bf16.mxu0 0
      %547 = vmatpush1.bf16.msra.mxu0 %v468
      %548 = vmatprep.subr.bf16.mxu0 0
      %549 = vmatpush2.bf16.msra.mxu0 %v483
      %550 = vmatprep.subr.bf16.mxu0 0
      %551 = vmatpush2.bf16.msra.mxu0 %v482
      %552 = vmatprep.subr.bf16.mxu0 0
      %553 = vmatpush2.bf16.msra.mxu0 %v481
      %554 = vmatprep.subr.bf16.mxu0 0
      %555 = vmatpush2.bf16.msra.mxu0 %v480
      %556 = vmatprep.subr.bf16.mxu0 0
      %557 = vmatpush2.bf16.msra.mxu0 %v479
      %558 = vmatprep.subr.bf16.mxu0 0
      %559 = vmatpush2.bf16.msra.mxu0 %v478
      %560 = vmatprep.subr.bf16.mxu0 0
      %561 = vmatpush2.bf16.msra.mxu0 %v477
      %562 = vmatprep.subr.bf16.mxu0 0
      %563 = vmatpush2.bf16.msra.mxu0 %v476
      %564 = vmatprep.mubr.bf16.mxu0 %v333
      %565 = vmatmul.mubr.bf16.gmra.mxu0 %v332
      %v566 = vpop.f32.mrf.mxu0
      %v567 = vadd.f32 0.0, %v566
      %v568 = vpop.f32.mrf.mxu0
      %v569 = vpop.f32.mrf.mxu0
      %v570 = vadd.f32 0.0, %v569
      %v571 = vpop.f32.mrf.mxu0
      %572 = vdwg.mxu0
      %573 = vmatprep.subr.bf16.mxu0 0
      %574 = vmatpush1.bf16.msra.mxu0 %v491
      %575 = vmatprep.subr.bf16.mxu0 0
      %576 = vmatpush1.bf16.msra.mxu0 %v490
      %577 = vmatprep.subr.bf16.mxu0 0
      %578 = vmatpush1.bf16.msra.mxu0 %v489
      %579 = vmatprep.subr.bf16.mxu0 0
      %580 = vmatpush1.bf16.msra.mxu0 %v488
      %581 = vmatprep.subr.bf16.mxu0 0
      %582 = vmatpush1.bf16.msra.mxu0 %v487
      %583 = vmatprep.subr.bf16.mxu0 0
      %584 = vmatpush1.bf16.msra.mxu0 %v486
      %585 = vmatprep.subr.bf16.mxu0 0
      %586 = vmatpush1.bf16.msra.mxu0 %v485
      %587 = vmatprep.subr.bf16.mxu0 0
      %588 = vmatpush1.bf16.msra.mxu0 %v484
      %589 = vmatprep.subr.bf16.mxu0 0
      %590 = vmatpush2.bf16.msra.mxu0 %v499
      %591 = vmatprep.subr.bf16.mxu0 0
      %592 = vmatpush2.bf16.msra.mxu0 %v498
      %593 = vmatprep.subr.bf16.mxu0 0
      %594 = vmatpush2.bf16.msra.mxu0 %v497
      %595 = vmatprep.subr.bf16.mxu0 0
      %596 = vmatpush2.bf16.msra.mxu0 %v496
      %597 = vmatprep.subr.bf16.mxu0 0
      %598 = vmatpush2.bf16.msra.mxu0 %v495
      %599 = vmatprep.subr.bf16.mxu0 0
      %600 = vmatpush2.bf16.msra.mxu0 %v494
      %601 = vmatprep.subr.bf16.mxu0 0
      %602 = vmatpush2.bf16.msra.mxu0 %v493
      %603 = vmatprep.subr.bf16.mxu0 0
      %604 = vmatpush2.bf16.msra.mxu0 %v492
      %605 = vmatprep.mubr.bf16.mxu0 %v335
      %606 = vmatmul.mubr.bf16.gmra.mxu0 %v334
      %v607 = vpop.f32.mrf.mxu0
      %v608 = vadd.f32 %v567, %v607
      %v609 = vpop.f32.mrf.mxu0
      %v610 = vpop.f32.mrf.mxu0
      %v611 = vadd.f32 %v570, %v610
      %v612 = vpop.f32.mrf.mxu0
      %613 = vdwg.mxu0
      %v614 = vadd.f32 %v314, %v608
      %v615 = vadd.f32 %v315, %v611
      %616 = vst [vmem:[#allocation2] sm:$0xff] %v614
      %617 = vst [vmem:[#allocation2 + $0x8] sm:$0xff] %v615
      // Predicated region
      $region37: #{discriminator512_forward.15} parent=31 // pred_check
        %p618 = pneg %p244
      $region38: #{discriminator512_forward.15} parent=31 // pred_check_branch
        %620 = sbr.rel (%p618) target = $region40
      $region39: #{discriminator512_forward.15} parent=31 // pred_region
        %v621 = vld [vmem:[#allocation2] sm:$0xff]
        %v622 = vld [vmem:[#allocation2 + $0x8] sm:$0xff]
        %v623 = vadd.f32 %v621, %v622
        %v624 = vrot.slane %v623, 4
        %v625 = vadd.f32 %v623, %v624
        %v626 = vrot.slane %v625, 2
        %v627 = vadd.f32 %v625, %v626
        %v628 = vrot.slane %v627, 1
        %v629 = vadd.f32 %v627, %v628
        %v630 = vmul.f32 %v621, %v621
        %v631 = vmul.f32 %v622, %v622
        %v632 = vadd.f32 %v630, %v631
        %v633 = vrot.slane %v632, 4
        %v634 = vadd.f32 %v632, %v633
        %v635 = vrot.slane %v634, 2
        %v636 = vadd.f32 %v634, %v635
        %v637 = vrot.slane %v636, 1
        %v638 = vadd.f32 %v636, %v637
        %v639 = vlaneseq
        %v640 = vshrl.u32 %v639, 7
        %vm641 = vcmp.eq.s32.totalorder %v640, 0
        %v642 = vsel %vm641, %v629, 0.0
        %vm643 = vcmp.eq.s32.totalorder %v640, 1
        %v644 = vsel %vm643, %v638, 0.0
        %v645 = vadd.f32 %v642, %v644
        %646 = vst [vmem:[%s242] sm:$0xff] %v645
        %v647 = vpack.c.bf16 %v622, %v621
        %v649 = vunpack.c.l.b16 %v647
        %v650 = vunpack.c.h.b16 %v647
        %v651 = vpack.c.b16 %v649, %v649
        %v652 = vpack.c.b16 %v650, %v650
        %655 = vst [vmem:[%s237] sm:$0xf] %v651
        %656 = vst [vmem:[%s237 + $0x4] sm:$0xf] %v652
      $region40: #{discriminator512_forward.15} parent=31 // pred_fallthru
        _
      %s657 = smul.u32 2, %s20
      %p658 = scmp.lt.s32.totalorder %s657, 3
      %s659 = scalar_select %p658, %s657, 3
      %s660 = smul.addr %s659, 4
      %s661 = scalar_lea.vmem %s3, %s660
      %p662 = scmp.lt.s32.totalorder %s20, 1
      %s663 = scalar_select %p662, %s20, 1
      %s664 = smul.addr %s663, 8
      %s665 = scalar_lea.vmem %s4, %s664
      // Predicated region
      $region41: #{discriminator512_forward.15} parent=31 // pred_check
        %p666 = pneg %p116
      $region42: #{discriminator512_forward.15} parent=31 // pred_check_branch
        %668 = sbr.rel (%p666) target = $region44
      $region43: #{discriminator512_forward.15} parent=31 // pred_region
        %s669 = smul.u32 2, %s20
      $region44: #{discriminator512_forward.15} parent=31 // pred_fallthru
        _
      // Predicated region
      $region45: #{discriminator512_forward.15} parent=31 // pred_check
        %p670 = pneg %p142
      $region46: #{discriminator512_forward.15} parent=31 // pred_check_branch
        %672 = sbr.rel (%p670) target = $region48
      $region47: #{discriminator512_forward.15} parent=31 // pred_region
        _
      $region48: #{discriminator512_forward.15} parent=31 // pred_fallthru
        _
    $region32: #{discriminator512_forward.15} parent=5 // pred_fallthru
      _
    %p673 = scmp.le.s32.totalorder 2, %s11
    // Predicated region
    $region49: #{discriminator512_forward.15} parent=5 // pred_check
      %p674 = pneg %p673
    $region50: #{discriminator512_forward.15} parent=5 // pred_check_branch
      %676 = sbr.rel (%p674) target = $region52
    $region51: #{discriminator512_forward.15} parent=5 // pred_region
      %s677 = ssub.s32 %s11, 2
      // Predicated region
      $region53: #{discriminator512_forward.15} parent=51 // pred_check
        %p678 = pneg %p122
      $region54: #{discriminator512_forward.15} parent=51 // pred_check_branch
        %680 = sbr.rel (%p678) target = $region56
      $region55: #{discriminator512_forward.15} parent=51 // pred_region
        %s681 = smul.u32 2, %s22
        %p682 = scmp.lt.s32.totalorder %s681, 3
        %s683 = scalar_select %p682, %s681, 3
        %s684 = smul.addr %s683, 4
        %s685 = scalar_lea.vmem %s3, %s684
      $region56: #{discriminator512_forward.15} parent=51 // pred_fallthru
        _
      // Predicated region
      $region57: #{discriminator512_forward.15} parent=51 // pred_check
        %p686 = pneg %p148
      $region58: #{discriminator512_forward.15} parent=51 // pred_check_branch
        %688 = sbr.rel (%p686) target = $region60
      $region59: #{discriminator512_forward.15} parent=51 // pred_region
        %p689 = scmp.lt.s32.totalorder %s22, 1
        %s690 = scalar_select %p689, %s22, 1
        %s691 = smul.addr %s690, 8
        %s692 = scalar_lea.vmem %s4, %s691
      $region60: #{discriminator512_forward.15} parent=51 // pred_fallthru
        _
    $region52: #{discriminator512_forward.15} parent=5 // pred_fallthru
      _
  $region6: #{discriminator512_forward.15} parent=0 // loop_footer
    %s15 = sadd.s32 1, %s11
  $region7: #{discriminator512_forward.15} parent=0 // loop_footer_branch
    %10 = sbr.rel target = $region3
  $region8: #{discriminator512_forward.15} parent=0 // loop_exit
    _

// kernel: discriminator512_forward.17
$region0: #{discriminator512_forward.17}
  #allocation0 [shape = 'u32[]', space=smem, size = 0x4, offset = 0x4, fixed_abs, tag = 'smem constant byte address 0x4 - core index']
  #allocation1 [shape = 'u32[144,128]{1,0:T(1,128)}', space=vmem, size = 0x12000, scoped, tag = 'internal scratch']
  #allocation2 [shape = 'f32[32,128]{1,0:T(8,128)}', space=vmem, size = 0x4000, scoped, tag = 'scratch operand']
  %s0 = inlined_call_operand.vmem [shape: bf16[32,1024], index: 0, kind: input, shape index: {}]
  %s1 = inlined_call_operand.vmem [shape: bf16[1024,128], index: 1, kind: input, shape index: {}]
  %s2 = inlined_call_operand.vmem [shape: f32[1,128], index: 2, kind: input, shape index: {}]
  %s3 = inlined_call_operand.vmem [shape: bf16[32,128], index: 3, kind: output, shape index: {0}]
  %s4 = inlined_call_operand.vmem [shape: f32[8,128], index: 4, kind: output, shape index: {1}]
  %5 = xla_tuple %s3, %s4
  %s6 = sld [smem:[#allocation0]]
  $region84: #{discriminator512_forward.17} parent=0
    _
  %s8 = ssub.s32 1, %s6
  %s9 = scalar_select 0, %s8, %s6
  $region1: #{discriminator512_forward.17} parent=0
    #allocation3 [shape = 'u8[65536]{0}', space=vmem, size = 0x10000, scoped, tag = 'input window, operand 0']
    loop: start=0, step=1, limit=4
    $region2: #{discriminator512_forward.17} parent=1 // loop_pre_header
      _
    $region3: #{discriminator512_forward.17} parent=1 // loop_header
      %s11 = sphi 0, %s15
      %p12 = scmp.ge.s32.totalorder %s11, 4
      %s18 = sphi 0, %s30
      %s19 = sphi 0, %s26
      %s20 = sphi 0, %s18
      %s21 = sphi 0, %s19
      %s22 = sphi 0, %s20
      %s23 = sphi 0, %s21
      %s35 = sphi 0, %s37
      %s38 = sphi 0, %s35
      %s39 = sphi 0, %s38
      %s55 = sphi 0, %s39
      %s59 = sphi 0, %s59
      %s61 = sphi 0, %s59
      %s62 = sphi 0, %s61
      %s76 = sphi 0, %s62
      %s80 = sphi 0, %s80
      %s82 = sphi 0, %s80
      %s83 = sphi 0, %s82
      %s97 = sphi 0, %s83
      %s103 = sphi 0, %s105
      %s106 = sphi 0, %s103
      %s107 = sphi 0, %s106
      %s123 = sphi 0, %s107
      %s129 = sphi 0, %s131
      %s132 = sphi 0, %s129
      %s133 = sphi 0, %s132
      %s149 = sphi 0, %s133
    $region4: #{discriminator512_forward.17} parent=1 // loop_header_branch
      %14 = sbr.rel (%p12) target = $region8
    $region5: #{discriminator512_forward.17} parent=1 // loop_body
      %s16 = ssub.s32 %s11, 1
      %s17 = ssub.s32 %s11, 2
      %s24 = sadd.s32 1, %s19
      %p25 = scmp.ge.s32.totalorder %s24, 2
      %s26 = scalar_select %p25, 0, %s24
      %s27 = sadd.s32 1, %s18
      %s28 = scalar_select %p25, %s27, %s18
      %p29 = scmp.ge.s32.totalorder %s28, 1
      %s30 = scalar_select %p29, 0, %s28
      %s31 = ssub.s32 %s18, %s30
      %s32 = ssub.s32 %s19, %s26
      %s33 = sor.u32 %s31, %s32
      %p34 = scmp.eq.s32.totalorder %s33, 0
      %s36 = sadd.s32 %s35, 1
      %s37 = scalar_select %p34, %s35, %s36
      %p40 = pneg %p34
      %p41 = scmp.eq.s32.totalorder %s11, 1
      %p42 = por %p40, %p41
      %p43 = scmp.ne.s32.totalorder %s35, %s38
      %p44 = scmp.eq.s32.totalorder %s11, 0
      %p45 = por %p43, %p44
      %p46 = scmp.ne.s32.totalorder %s35, %s38
      %p47 = scmp.eq.s32.totalorder %s16, 1
      %p48 = por %p46, %p47
      %p49 = scmp.ne.s32.totalorder %s38, %s39
      %p50 = scmp.eq.s32.totalorder %s16, 0
      %p51 = por %p49, %p50
      %p52 = scmp.ne.s32.totalorder %s38, %s39
      %p53 = scmp.eq.s32.totalorder %s17, 1
      %p54 = por %p52, %p53
      %p56 = scmp.ne.s32.totalorder %s39, %s55
      %p57 = scmp.eq.s32.totalorder %s17, 0
      %p58 = por %p56, %p57
      %s60 = sadd.s32 %s59, 1
      %p63 = scmp.eq.s32.totalorder %s11, 1
      %p64 = scmp.ne.s32.totalorder %s59, %s61
      %p65 = scmp.eq.s32.totalorder %s11, 0
      %p66 = por %p64, %p65
      %p67 = scmp.ne.s32.totalorder %s59, %s61
      %p68 = scmp.eq.s32.totalorder %s16, 1
      %p69 = por %p67, %p68
      %p70 = scmp.ne.s32.totalorder %s61, %s62
      %p71 = scmp.eq.s32.totalorder %s16, 0
      %p72 = por %p70, %p71
      %p73 = scmp.ne.s32.totalorder %s61, %s62
      %p74 = scmp.eq.s32.totalorder %s17, 1
      %p75 = por %p73, %p74
      %p77 = scmp.ne.s32.totalorder %s62, %s76
      %p78 = scmp.eq.s32.totalorder %s17, 0
      %p79 = por %p77, %p78
      %s81 = sadd.s32 %s80, 1
      %p84 = scmp.eq.s32.totalorder %s11, 1
      %p85 = scmp.ne.s32.totalorder %s80, %s82
      %p86 = scmp.eq.s32.totalorder %s11, 0
      %p87 = por %p85, %p86
      %p88 = scmp.ne.s32.totalorder %s80, %s82
      %p89 = scmp.eq.s32.totalorder %s16, 1
      %p90 = por %p88, %p89
      %p91 = scmp.ne.s32.totalorder %s82, %s83
      %p92 = scmp.eq.s32.totalorder %s16, 0
      %p93 = por %p91, %p92
      %p94 = scmp.ne.s32.totalorder %s82, %s83
      %p95 = scmp.eq.s32.totalorder %s17, 1
      %p96 = por %p94, %p95
      %p98 = scmp.ne.s32.totalorder %s83, %s97
      %p99 = scmp.eq.s32.totalorder %s17, 0
      %p100 = por %p98, %p99
      %s101 = ssub.s32 %s18, %s30
      %p102 = scmp.eq.s32.totalorder %s101, 0
      %s104 = sadd.s32 %s103, 1
      %s105 = scalar_select %p102, %s103, %s104
      %p108 = pneg %p102
      %p109 = scmp.eq.s32.totalorder %s11, 1
      %p110 = por %p108, %p109
      %p111 = scmp.ne.s32.totalorder %s103, %s106
      %p112 = scmp.eq.s32.totalorder %s11, 0
      %p113 = por %p111, %p112
      %p114 = scmp.ne.s32.totalorder %s103, %s106
      %p115 = scmp.eq.s32.totalorder %s16, 1
      %p116 = por %p114, %p115
      %p117 = scmp.ne.s32.totalorder %s106, %s107
      %p118 = scmp.eq.s32.totalorder %s16, 0
      %p119 = por %p117, %p118
      %p120 = scmp.ne.s32.totalorder %s106, %s107
      %p121 = scmp.eq.s32.totalorder %s17, 1
      %p122 = por %p120, %p121
      %p124 = scmp.ne.s32.totalorder %s107, %s123
      %p125 = scmp.eq.s32.totalorder %s17, 0
      %p126 = por %p124, %p125
      %s127 = ssub.s32 %s18, %s30
      %p128 = scmp.eq.s32.totalorder %s127, 0
      %s130 = sadd.s32 %s129, 1
      %s131 = scalar_select %p128, %s129, %s130
      %p134 = pneg %p128
      %p135 = scmp.eq.s32.totalorder %s11, 1
      %p136 = por %p134, %p135
      %p137 = scmp.ne.s32.totalorder %s129, %s132
      %p138 = scmp.eq.s32.totalorder %s11, 0
      %p139 = por %p137, %p138
      %p140 = scmp.ne.s32.totalorder %s129, %s132
      %p141 = scmp.eq.s32.totalorder %s16, 1
      %p142 = por %p140, %p141
      %p143 = scmp.ne.s32.totalorder %s132, %s133
      %p144 = scmp.eq.s32.totalorder %s16, 0
      %p145 = por %p143, %p144
      %p146 = scmp.ne.s32.totalorder %s132, %s133
      %p147 = scmp.eq.s32.totalorder %s17, 1
      %p148 = por %p146, %p147
      %p150 = scmp.ne.s32.totalorder %s133, %s149
      %p151 = scmp.eq.s32.totalorder %s17, 0
      %p152 = por %p150, %p151
      %p153 = scmp.le.s32.totalorder 1, %s11
      %p154 = scmp.lt.s32.totalorder %s11, 3
      %p155 = pnand %p153, %p154
      %p156 = pneg %p155
      // Predicated region
      $region9: #{discriminator512_forward.17} parent=5 // pred_check
        _
      $region10: #{discriminator512_forward.17} parent=5 // pred_check_branch
        %158 = sbr.rel (%p155) target = $region12
      $region11: #{discriminator512_forward.17} parent=5 // pred_region
        %s159 = ssub.s32 %s11, 1
        // Predicated region
        $region13: #{discriminator512_forward.17} parent=11 // pred_check
          %p160 = pneg %p72
        $region14: #{discriminator512_forward.17} parent=11 // pred_check_branch
          %162 = sbr.rel (%p160) target = $region16
        $region15: #{discriminator512_forward.17} parent=11 // pred_region
          _
        $region16: #{discriminator512_forward.17} parent=11 // pred_fallthru
          _
        // Predicated region
        $region17: #{discriminator512_forward.17} parent=11 // pred_check
          %p163 = pneg %p93
        $region18: #{discriminator512_forward.17} parent=11 // pred_check_branch
          %165 = sbr.rel (%p163) target = $region20
        $region19: #{discriminator512_forward.17} parent=11 // pred_region
          _
        $region20: #{discriminator512_forward.17} parent=11 // pred_fallthru
          _
      $region12: #{discriminator512_forward.17} parent=5 // pred_fallthru
        _
      %p166 = scmp.lt.s32.totalorder %s11, 2
      // Predicated region
      $region21: #{discriminator512_forward.17} parent=5 // pred_check
        %p167 = pneg %p166
      $region22: #{discriminator512_forward.17} parent=5 // pred_check_branch
        %169 = sbr.rel (%p167) target = $region24
      $region23: #{discriminator512_forward.17} parent=5 // pred_region
        // Predicated region
        $region25: #{discriminator512_forward.17} parent=23 // pred_check
          %p170 = pneg %p45
        $region26: #{discriminator512_forward.17} parent=23 // pred_check_branch
          %172 = sbr.rel (%p170) target = $region28
        $region27: #{discriminator512_forward.17} parent=23 // pred_region
          %s173 = sand.u32 %s35, 1
          %s174 = sand.u32 %s35, 1
          %s175 = smul.addr %s174, 64
          %s176 = scalar_lea.vmem [#allocation3], %s175
          %s177 = smul.u32 4, %s18
          %s178 = smul.u32 4, %s19
          %s179 = smul.addr %s177, 8
          %s180 = sadd.s32 %s178, %s179
          %s181 = smul.addr %s180, 4
          %s182 = scalar_lea.vmem %s0, %s181
          // Predicated region
          $region29: #{discriminator512_forward.17} parent=27 // pred_check
            _
          $region30: #{discriminator512_forward.17} parent=27 // pred_check_branch
            %184 = sbr.rel (0) target = $region32
          $region31: #{discriminator512_forward.17} parent=27 // pred_region
            // Predicated region
            $region33: #{discriminator512_forward.17} parent=31 // pred_check
              _
            $region34: #{discriminator512_forward.17} parent=31 // pred_check_branch
              %186 = sbr.rel (0) target = $region36
            $region35: #{discriminator512_forward.17} parent=31 // pred_region
              loop: start=0, step=1, limit=1
              $region37: #{discriminator512_forward.17} parent=35 // loop_pre_header
                _
              $region38: #{discriminator512_forward.17} parent=35 // loop_header
                %s188 = sphi 0, %s192
                %p189 = scmp.ge.s32.totalorder %s188, 1
                %s193 = sphi %s182, %s182
                %s194 = sphi %s176, %s176
              $region39: #{discriminator512_forward.17} parent=35 // loop_header_branch
                %191 = sbr.rel (%p189) target = $region43
              $region40: #{discriminator512_forward.17} parent=35 // loop_body
                %v195 = vld [vmem:[%s193] sm:$0xff]
                %196 = vst [vmem:[%s194] sm:$0xff] %v195
                %v197 = vld [vmem:[%s193 + $0x8] sm:$0xff]
                %198 = vst [vmem:[%s194 + $0x8] sm:$0xff] %v197
                %v199 = vld [vmem:[%s193 + $0x20] sm:$0xff]
                %200 = vst [vmem:[%s194 + $0x10] sm:$0xff] %v199
                %v201 = vld [vmem:[%s193 + $0x28] sm:$0xff]
                %202 = vst [vmem:[%s194 + $0x18] sm:$0xff] %v201
                %v203 = vld [vmem:[%s193 + $0x40] sm:$0xff]
                %204 = vst [vmem:[%s194 + $0x20] sm:$0xff] %v203
                %v205 = vld [vmem:[%s193 + $0x48] sm:$0xff]
                %206 = vst [vmem:[%s194 + $0x28] sm:$0xff] %v205
                %v207 = vld [vmem:[%s193 + $0x60] sm:$0xff]
                %208 = vst [vmem:[%s194 + $0x30] sm:$0xff] %v207
                %v209 = vld [vmem:[%s193 + $0x68] sm:$0xff]
                %210 = vst [vmem:[%s194 + $0x38] sm:$0xff] %v209
              $region41: #{discriminator512_forward.17} parent=35 // loop_footer
                %s192 = sadd.s32 1, %s188
              $region42: #{discriminator512_forward.17} parent=35 // loop_footer_branch
                %187 = sbr.rel target = $region38
              $region43: #{discriminator512_forward.17} parent=35 // loop_exit
                _
            $region36: #{discriminator512_forward.17} parent=31 // pred_fallthru
              _
            // Predicated region
            $region44: #{discriminator512_forward.17} parent=31 // pred_check
              _
            $region45: #{discriminator512_forward.17} parent=31 // pred_check_branch
              %212 = sbr.rel target = $region47
            $region46: #{discriminator512_forward.17} parent=31 // pred_region
              _
            $region47: #{discriminator512_forward.17} parent=31 // pred_fallthru
              _
          $region32: #{discriminator512_forward.17} parent=27 // pred_fallthru
            _
          %213 = vnop
        $region28: #{discriminator512_forward.17} parent=23 // pred_fallthru
          _
      $region24: #{discriminator512_forward.17} parent=5 // pred_fallthru
        _
      %p214 = scmp.le.s32.totalorder 1, %s11
      %p215 = scmp.lt.s32.totalorder %s11, 3
      %p216 = pnand %p214, %p215
      %p217 = pneg %p216
      // Predicated region
      $region48: #{discriminator512_forward.17} parent=5 // pred_check
        _
      $region49: #{discriminator512_forward.17} parent=5 // pred_check_branch
        %219 = sbr.rel (%p216) target = $region51
      $region50: #{discriminator512_forward.17} parent=5 // pred_region
        %s220 = ssub.s32 %s11, 1
        %s221 = sand.u32 %s38, 1
        %s222 = sand.u32 %s38, 1
        %s223 = smul.addr %s222, 64
        %s224 = scalar_lea.vmem [#allocation3], %s223
        // Predicated region
        $region52: #{discriminator512_forward.17} parent=50 // pred_check
          %p225 = pneg %p51
        $region53: #{discriminator512_forward.17} parent=50 // pred_check_branch
          %227 = sbr.rel (%p225) target = $region55
        $region54: #{discriminator512_forward.17} parent=50 // pred_region
          _
        $region55: #{discriminator512_forward.17} parent=50 // pred_fallthru
          _
        %s228 = sand.u32 %s38, 1
        %s229 = sand.u32 %s38, 1
        %s230 = smul.addr %s229, 64
        %s231 = scalar_lea.vmem [#allocation3], %s230
        %p232 = pneg %p51
        %p233 = pneg %p48
        %p234 = pneg %p72
        %p235 = pneg %p69
        %p236 = pneg %p93
        %p237 = pneg %p90
        %p238 = pneg %p119
        %p239 = pneg %p116
        %s240 = smul.u32 4, %s20
        %p241 = scmp.lt.s32.totalorder %s240, 3
        %s242 = scalar_select %p241, %s240, 3
        %s243 = smul.addr %s242, 4
        %s244 = scalar_lea.vmem %s3, %s243
        %p245 = pneg %p145
        %p246 = pneg %p142
        %p247 = scmp.lt.s32.totalorder %s20, 0
        %s248 = scalar_select %p247, %s20, 0
        %s249 = smul.addr %s248, 8
        %s250 = scalar_lea.vmem %s4, %s249
        %s251 = smul.u32 4, %s20
        %s252 = smul.u32 4, %s21
        %s253 = smul.u32 4, %s20
        %p254 = scmp.lt.s32.totalorder %s253, 3
        %s255 = scalar_select %p254, %s253, 3
        %s256 = smul.addr %s255, 4
        %s257 = scalar_lea.vmem %s3, %s256
        %s258 = smul.u32 4, %s20
        %p259 = scmp.lt.s32.totalorder %s20, 0
        %s260 = scalar_select %p259, %s20, 0
        %s261 = smul.addr %s260, 8
        %s262 = scalar_lea.vmem %s4, %s261
        %p264 = scmp.eq.s32.totalorder %s21, 0
        // Predicated region
        $region56: #{discriminator512_forward.17} parent=50 // pred_check
          %p265 = pneg %p264
        $region57: #{discriminator512_forward.17} parent=50 // pred_check_branch
          %267 = sbr.rel (%p265) target = $region59
        $region58: #{discriminator512_forward.17} parent=50 // pred_region
          %268 = vst [vmem:[#allocation2] sm:$0xff] 0.0
          %269 = vst [vmem:[#allocation2 + $0x8] sm:$0xff] 0.0
          %270 = vst [vmem:[#allocation2 + $0x10] sm:$0xff] 0.0
          %271 = vst [vmem:[#allocation2 + $0x18] sm:$0xff] 0.0
        $region59: #{discriminator512_forward.17} parent=50 // pred_fallthru
          _
        %s272 = smul.u32 %s21, 512
        %s273 = sshra.s32 %s272, 3
        %s274 = sand.u32 %s272, 7
        %s275 = smul.addr %s273, 4
        %s276 = scalar_lea.vmem %s1, %s275
        %v277 = vld [vmem:[%s276] sm:$0xf]
        %v278 = vld [vmem:[%s276 + $0x4] sm:$0xf]
        %v279 = vld [vmem:[%s276 + $0x8] sm:$0xf]
        %v280 = vld [vmem:[%s276 + $0xc] sm:$0xf]
        %v281 = vld [vmem:[%s276 + $0x10] sm:$0xf]
        %v282 = vld [vmem:[%s276 + $0x14] sm:$0xf]
        %v283 = vld [vmem:[%s276 + $0x18] sm:$0xf]
        %v284 = vld [vmem:[%s276 + $0x1c] sm:$0xf]
        %v285 = vld [vmem:[%s276 + $0x20] sm:$0xf]
        %v286 = vld [vmem:[%s276 + $0x24] sm:$0xf]
        %v287 = vld [vmem:[%s276 + $0x28] sm:$0xf]
        %v288 = vld [vmem:[%s276 + $0x2c] sm:$0xf]
        %v289 = vld [vmem:[%s276 + $0x30] sm:$0xf]
        %v290 = vld [vmem:[%s276 + $0x34] sm:$0xf]
        %v291 = vld [vmem:[%s276 + $0x38] sm:$0xf]
        %v292 = vld [vmem:[%s276 + $0x3c] sm:$0xf]
        %v293 = vld [vmem:[%s276 + $0x40] sm:$0xf]
        %v294 = vld [vmem:[%s276 + $0x44] sm:$0xf]
        %v295 = vld [vmem:[%s276 + $0x48] sm:$0xf]
        %v296 = vld [vmem:[%s276 + $0x4c] sm:$0xf]
        %v297 = vld [vmem:[%s276 + $0x50] sm:$0xf]
        %v298 = vld [vmem:[%s276 + $0x54] sm:$0xf]
        %v299 = vld [vmem:[%s276 + $0x58] sm:$0xf]
        %v300 = vld [vmem:[%s276 + $0x5c] sm:$0xf]
        %v301 = vld [vmem:[%s276 + $0x60] sm:$0xf]
        %v302 = vld [vmem:[%s276 + $0x64] sm:$0xf]
        %v303 = vld [vmem:[%s276 + $0x68] sm:$0xf]
        %v304 = vld [vmem:[%s276 + $0x6c] sm:$0xf]
        %v305 = vld [vmem:[%s276 + $0x70] sm:$0xf]
        %v306 = vld [vmem:[%s276 + $0x74] sm:$0xf]
        %v307 = vld [vmem:[%s276 + $0x78] sm:$0xf]
        %v308 = vld [vmem:[%s276 + $0x7c] sm:$0xf]
        %v309 = vld [vmem:[%s276 + $0x80] sm:$0xf]
        %v310 = vld [vmem:[%s276 + $0x84] sm:$0xf]
        %v311 = vld [vmem:[%s276 + $0x88] sm:$0xf]
        %v312 = vld [vmem:[%s276 + $0x8c] sm:$0xf]
        %v313 = vld [vmem:[%s276 + $0x90] sm:$0xf]
        %v314 = vld [vmem:[%s276 + $0x94] sm:$0xf]
        %v315 = vld [vmem:[%s276 + $0x98] sm:$0xf]
        %v316 = vld [vmem:[%s276 + $0x9c] sm:$0xf]
        %v317 = vld [vmem:[%s276 + $0xa0] sm:$0xf]
        %v318 = vld [vmem:[%s276 + $0xa4] sm:$0xf]
        %v319 = vld [vmem:[%s276 + $0xa8] sm:$0xf]
        %v320 = vld [vmem:[%s276 + $0xac] sm:$0xf]
        %v321 = vld [vmem:[%s276 + $0xb0] sm:$0xf]
        %v322 = vld [vmem:[%s276 + $0xb4] sm:$0xf]
        %v323 = vld [vmem:[%s276 + $0xb8] sm:$0xf]
        %v324 = vld [vmem:[%s276 + $0xbc] sm:$0xf]
        %v325 = vld [vmem:[%s276 + $0xc0] sm:$0xf]
        %v326 = vld [vmem:[%s276 + $0xc4] sm:$0xf]
        %v327 = vld [vmem:[%s276 + $0xc8] sm:$0xf]
        %v328 = vld [vmem:[%s276 + $0xcc] sm:$0xf]
        %v329 = vld [vmem:[%s276 + $0xd0] sm:$0xf]
        %v330 = vld [vmem:[%s276 + $0xd4] sm:$0xf]
        %v331 = vld [vmem:[%s276 + $0xd8] sm:$0xf]
        %v332 = vld [vmem:[%s276 + $0xdc] sm:$0xf]
        %v333 = vld [vmem:[%s276 + $0xe0] sm:$0xf]
        %v334 = vld [vmem:[%s276 + $0xe4] sm:$0xf]
        %v335 = vld [vmem:[%s276 + $0xe8] sm:$0xf]
        %v336 = vld [vmem:[%s276 + $0xec] sm:$0xf]
        %v337 = vld [vmem:[%s276 + $0xf0] sm:$0xf]
        %v338 = vld [vmem:[%s276 + $0xf4] sm:$0xf]
        %v339 = vld [vmem:[%s276 + $0xf8] sm:$0xf]
        %v340 = vld [vmem:[%s276 + $0xfc] sm:$0xf]
        %v341 = vld [vmem:[#allocation2] sm:$0xff]
        %v342 = vld [vmem:[#allocation2 + $0x8] sm:$0xff]
        %v343 = vld [vmem:[#allocation2 + $0x10] sm:$0xff]
        %v344 = vld [vmem:[#allocation2 + $0x18] sm:$0xff]
        %v345 = vld [vmem:[%s224] sm:$0xff]
        %v346 = vld [vmem:[%s224 + $0x8] sm:$0xff]
        %v347 = vld [vmem:[%s224 + $0x10] sm:$0xff]
        %v348 = vld [vmem:[%s224 + $0x18] sm:$0xff]
        %v349 = vld [vmem:[%s224 + $0x20] sm:$0xff]
        %v350 = vld [vmem:[%s224 + $0x28] sm:$0xff]
        %v351 = vld [vmem:[%s224 + $0x30] sm:$0xff]
        %v352 = vld [vmem:[%s224 + $0x38] sm:$0xff]
        %v361 = vunpack.c.l.b16 %v345
        %v362 = vunpack.c.h.b16 %v345
        %v363 = vunpack.c.l.b16 %v346
        %v364 = vunpack.c.h.b16 %v346
        %v365 = vunpack.c.l.b16 %v347
        %v366 = vunpack.c.h.b16 %v347
        %v367 = vunpack.c.l.b16 %v348
        %v368 = vunpack.c.h.b16 %v348
        %v369 = vunpack.c.l.b16 %v349
        %v370 = vunpack.c.h.b16 %v349
        %v371 = vunpack.c.l.b16 %v350
        %v372 = vunpack.c.h.b16 %v350
        %v373 = vunpack.c.l.b16 %v351
        %v374 = vunpack.c.h.b16 %v351
        %v375 = vunpack.c.l.b16 %v352
        %v376 = vunpack.c.h.b16 %v352
        %v377 = vpack.c.b16 %v365, %v361
        %v378 = vpack.c.b16 %v366, %v362
        %v379 = vpack.c.b16 %v367, %v363
        %v380 = vpack.c.b16 %v368, %v364
        %v381 = vpack.c.b16 %v373, %v369
        %v382 = vpack.c.b16 %v374, %v370
        %v383 = vpack.c.b16 %v375, %v371
        %v384 = vpack.c.b16 %v376, %v372
        %v457 = vunpack.c.l.b16 %v277
        %v458 = vunpack.c.l.b16 %v278
        %v459 = vunpack.c.l.b16 %v279
        %v460 = vunpack.c.l.b16 %v280
        %v461 = vunpack.c.l.b16 %v281
        %v462 = vunpack.c.l.b16 %v282
        %v463 = vunpack.c.l.b16 %v283
        %v464 = vunpack.c.l.b16 %v284
        %v465 = vunpack.c.l.b16 %v285
        %v466 = vunpack.c.l.b16 %v286
        %v467 = vunpack.c.l.b16 %v287
        %v468 = vunpack.c.l.b16 %v288
        %v469 = vunpack.c.l.b16 %v289
        %v470 = vunpack.c.l.b16 %v290
        %v471 = vunpack.c.l.b16 %v291
        %v472 = vunpack.c.l.b16 %v292
        %v473 = vunpack.c.l.b16 %v293
        %v474 = vunpack.c.l.b16 %v294
        %v475 = vunpack.c.l.b16 %v295
        %v476 = vunpack.c.l.b16 %v296
        %v477 = vunpack.c.l.b16 %v297
        %v478 = vunpack.c.l.b16 %v298
        %v479 = vunpack.c.l.b16 %v299
        %v480 = vunpack.c.l.b16 %v300
        %v481 = vunpack.c.l.b16 %v301
        %v482 = vunpack.c.l.b16 %v302
        %v483 = vunpack.c.l.b16 %v303
        %v484 = vunpack.c.l.b16 %v304
        %v485 = vunpack.c.l.b16 %v305
        %v486 = vunpack.c.l.b16 %v306
        %v487 = vunpack.c.l.b16 %v307
        %v488 = vunpack.c.l.b16 %v308
        %v489 = vunpack.c.l.b16 %v309
        %v490 = vunpack.c.l.b16 %v310
        %v491 = vunpack.c.l.b16 %v311
        %v492 = vunpack.c.l.b16 %v312
        %v493 = vunpack.c.l.b16 %v313
        %v494 = vunpack.c.l.b16 %v314
        %v495 = vunpack.c.l.b16 %v315
        %v496 = vunpack.c.l.b16 %v316
        %v497 = vunpack.c.l.b16 %v317
        %v498 = vunpack.c.l.b16 %v318
        %v499 = vunpack.c.l.b16 %v319
        %v500 = vunpack.c.l.b16 %v320
        %v501 = vunpack.c.l.b16 %v321
        %v502 = vunpack.c.l.b16 %v322
        %v503 = vunpack.c.l.b16 %v323
        %v504 = vunpack.c.l.b16 %v324
        %v505 = vunpack.c.l.b16 %v325
        %v506 = vunpack.c.l.b16 %v326
        %v507 = vunpack.c.l.b16 %v327
        %v508 = vunpack.c.l.b16 %v328
        %v509 = vunpack.c.l.b16 %v329
        %v510 = vunpack.c.l.b16 %v330
        %v511 = vunpack.c.l.b16 %v331
        %v512 = vunpack.c.l.b16 %v332
        %v513 = vunpack.c.l.b16 %v333
        %v514 = vunpack.c.l.b16 %v334
        %v515 = vunpack.c.l.b16 %v335
        %v516 = vunpack.c.l.b16 %v336
        %v517 = vunpack.c.l.b16 %v337
        %v518 = vunpack.c.l.b16 %v338
        %v519 = vunpack.c.l.b16 %v339
        %v520 = vunpack.c.l.b16 %v340
        %v521 = vpack.c.b16 %v458, %v457
        %v522 = vpack.c.b16 %v460, %v459
        %v523 = vpack.c.b16 %v462, %v461
        %v524 = vpack.c.b16 %v464, %v463
        %v525 = vpack.c.b16 %v466, %v465
        %v526 = vpack.c.b16 %v468, %v467
        %v527 = vpack.c.b16 %v470, %v469
        %v528 = vpack.c.b16 %v472, %v471
        %v529 = vpack.c.b16 %v474, %v473
        %v530 = vpack.c.b16 %v476, %v475
        %v531 = vpack.c.b16 %v478, %v477
        %v532 = vpack.c.b16 %v480, %v479
        %v533 = vpack.c.b16 %v482, %v481
        %v534 = vpack.c.b16 %v484, %v483
        %v535 = vpack.c.b16 %v486, %v485
        %v536 = vpack.c.b16 %v488, %v487
        %v537 = vpack.c.b16 %v490, %v489
        %v538 = vpack.c.b16 %v492, %v491
        %v539 = vpack.c.b16 %v494, %v493
        %v540 = vpack.c.b16 %v496, %v495
        %v541 = vpack.c.b16 %v498, %v497
        %v542 = vpack.c.b16 %v500, %v499
        %v543 = vpack.c.b16 %v502, %v501
        %v544 = vpack.c.b16 %v504, %v503
        %v545 = vpack.c.b16 %v506, %v505
        %v546 = vpack.c.b16 %v508, %v507
        %v547 = vpack.c.b16 %v510, %v509
        %v548 = vpack.c.b16 %v512, %v511
        %v549 = vpack.c.b16 %v514, %v513
        %v550 = vpack.c.b16 %v516, %v515
        %v551 = vpack.c.b16 %v518, %v517
        %v552 = vpack.c.b16 %v520, %v519
        %585 = vmatprep.subr.bf16.mxu0 0
        %586 = vmatpush1.bf16.msra.mxu0 %v528
        %587 = vmatprep.subr.bf16.mxu0 0
        %588 = vmatpush1.bf16.msra.mxu0 %v527
        %589 = vmatprep.subr.bf16.mxu0 0
        %590 = vmatpush1.bf16.msra.mxu0 %v526
        %591 = vmatprep.subr.bf16.mxu0 0
        %592 = vmatpush1.bf16.msra.mxu0 %v525
        %593 = vmatprep.subr.bf16.mxu0 0
        %594 = vmatpush1.bf16.msra.mxu0 %v524
        %595 = vmatprep.subr.bf16.mxu0 0
        %596 = vmatpush1.bf16.msra.mxu0 %v523
        %597 = vmatprep.subr.bf16.mxu0 0
        %598 = vmatpush1.bf16.msra.mxu0 %v522
        %599 = vmatprep.subr.bf16.mxu0 0
        %600 = vmatpush1.bf16.msra.mxu0 %v521
        %601 = vmatprep.subr.bf16.mxu0 0
        %602 = vmatpush2.bf16.msra.mxu0 %v536
        %603 = vmatprep.subr.bf16.mxu0 0
        %604 = vmatpush2.bf16.msra.mxu0 %v535
        %605 = vmatprep.subr.bf16.mxu0 0
        %606 = vmatpush2.bf16.msra.mxu0 %v534
        %607 = vmatprep.subr.bf16.mxu0 0
        %608 = vmatpush2.bf16.msra.mxu0 %v533
        %609 = vmatprep.subr.bf16.mxu0 0
        %610 = vmatpush2.bf16.msra.mxu0 %v532
        %611 = vmatprep.subr.bf16.mxu0 0
        %612 = vmatpush2.bf16.msra.mxu0 %v531
        %613 = vmatprep.subr.bf16.mxu0 0
        %614 = vmatpush2.bf16.msra.mxu0 %v530
        %615 = vmatprep.subr.bf16.mxu0 0
        %616 = vmatpush2.bf16.msra.mxu0 %v529
        %617 = vmatprep.mubr.bf16.mxu0 %v378
        %618 = vmatmul.mubr.bf16.gmra.mxu0 %v377
        %v619 = vpop.f32.mrf.mxu0
        %v620 = vadd.f32 0.0, %v619
        %v621 = vpop.f32.mrf.mxu0
        %v622 = vpop.f32.mrf.mxu0
        %v623 = vadd.f32 0.0, %v622
        %v624 = vpop.f32.mrf.mxu0
        %625 = vmatprep.mubr.bf16.mxu0 %v382
        %626 = vmatmul.mubr.bf16.gmra.mxu0 %v381
        %v627 = vpop.f32.mrf.mxu0
        %v628 = vadd.f32 0.0, %v627
        %v629 = vpop.f32.mrf.mxu0
        %v630 = vpop.f32.mrf.mxu0
        %v631 = vadd.f32 0.0, %v630
        %v632 = vpop.f32.mrf.mxu0
        %633 = vdwg.mxu0
        %634 = vmatprep.subr.bf16.mxu0 0
        %635 = vmatpush1.bf16.msra.mxu0 %v544
        %636 = vmatprep.subr.bf16.mxu0 0
        %637 = vmatpush1.bf16.msra.mxu0 %v543
        %638 = vmatprep.subr.bf16.mxu0 0
        %639 = vmatpush1.bf16.msra.mxu0 %v542
        %640 = vmatprep.subr.bf16.mxu0 0
        %641 = vmatpush1.bf16.msra.mxu0 %v541
        %642 = vmatprep.subr.bf16.mxu0 0
        %643 = vmatpush1.bf16.msra.mxu0 %v540
        %644 = vmatprep.subr.bf16.mxu0 0
        %645 = vmatpush1.bf16.msra.mxu0 %v539
        %646 = vmatprep.subr.bf16.mxu0 0
        %647 = vmatpush1.bf16.msra.mxu0 %v538
        %648 = vmatprep.subr.bf16.mxu0 0
        %649 = vmatpush1.bf16.msra.mxu0 %v537
        %650 = vmatprep.subr.bf16.mxu0 0
        %651 = vmatpush2.bf16.msra.mxu0 %v552
        %652 = vmatprep.subr.bf16.mxu0 0
        %653 = vmatpush2.bf16.msra.mxu0 %v551
        %654 = vmatprep.subr.bf16.mxu0 0
        %655 = vmatpush2.bf16.msra.mxu0 %v550
        %656 = vmatprep.subr.bf16.mxu0 0
        %657 = vmatpush2.bf16.msra.mxu0 %v549
        %658 = vmatprep.subr.bf16.mxu0 0
        %659 = vmatpush2.bf16.msra.mxu0 %v548
        %660 = vmatprep.subr.bf16.mxu0 0
        %661 = vmatpush2.bf16.msra.mxu0 %v547
        %662 = vmatprep.subr.bf16.mxu0 0
        %663 = vmatpush2.bf16.msra.mxu0 %v546
        %664 = vmatprep.subr.bf16.mxu0 0
        %665 = vmatpush2.bf16.msra.mxu0 %v545
        %666 = vmatprep.mubr.bf16.mxu0 %v380
        %667 = vmatmul.mubr.bf16.gmra.mxu0 %v379
        %v668 = vpop.f32.mrf.mxu0
        %v669 = vadd.f32 %v620, %v668
        %v670 = vpop.f32.mrf.mxu0
        %v671 = vpop.f32.mrf.mxu0
        %v672 = vadd.f32 %v623, %v671
        %v673 = vpop.f32.mrf.mxu0
        %674 = vmatprep.mubr.bf16.mxu0 %v384
        %675 = vmatmul.mubr.bf16.gmra.mxu0 %v383
        %v676 = vpop.f32.mrf.mxu0
        %v677 = vadd.f32 %v628, %v676
        %v678 = vpop.f32.mrf.mxu0
        %v679 = vpop.f32.mrf.mxu0
        %v680 = vadd.f32 %v631, %v679
        %v681 = vpop.f32.mrf.mxu0
        %682 = vdwg.mxu0
        %v683 = vadd.f32 %v341, %v669
        %v684 = vadd.f32 %v342, %v672
        %v685 = vadd.f32 %v343, %v677
        %v686 = vadd.f32 %v344, %v680
        %687 = vst [vmem:[#allocation2] sm:$0xff] %v683
        %688 = vst [vmem:[#allocation2 + $0x8] sm:$0xff] %v684
        %689 = vst [vmem:[#allocation2 + $0x10] sm:$0xff] %v685
        %690 = vst [vmem:[#allocation2 + $0x18] sm:$0xff] %v686
        %p691 = scmp.eq.s32.totalorder %s21, 1
        // Predicated region
        $region60: #{discriminator512_forward.17} parent=50 // pred_check
          %p692 = pneg %p691
        $region61: #{discriminator512_forward.17} parent=50 // pred_check_branch
          %694 = sbr.rel (%p692) target = $region63
        $region62: #{discriminator512_forward.17} parent=50 // pred_region
          %v695 = vld [vmem:[#allocation2] sm:$0xff]
          %v696 = vld [vmem:[#allocation2 + $0x8] sm:$0xff]
          %v697 = vld [vmem:[#allocation2 + $0x10] sm:$0xff]
          %v698 = vld [vmem:[#allocation2 + $0x18] sm:$0xff]
          %v699 = vadd.f32 %v695, %v696
          %v700 = vadd.f32 %v699, %v697
          %v701 = vadd.f32 %v700, %v698
          %v702 = vrot.slane %v701, 4
          %v703 = vadd.f32 %v701, %v702
          %v704 = vrot.slane %v703, 2
          %v705 = vadd.f32 %v703, %v704
          %v706 = vrot.slane %v705, 1
          %v707 = vadd.f32 %v705, %v706
          %v708 = vmul.f32 %v695, %v695
          %v709 = vmul.f32 %v696, %v696
          %v710 = vmul.f32 %v697, %v697
          %v711 = vmul.f32 %v698, %v698
          %v712 = vadd.f32 %v708, %v709
          %v713 = vadd.f32 %v712, %v710
          %v714 = vadd.f32 %v713, %v711
          %v715 = vrot.slane %v714, 4
          %v716 = vadd.f32 %v714, %v715
          %v717 = vrot.slane %v716, 2
          %v718 = vadd.f32 %v716, %v717
          %v719 = vrot.slane %v718, 1
          %v720 = vadd.f32 %v718, %v719
          %v721 = vlaneseq
          %v722 = vshrl.u32 %v721, 7
          %vm723 = vcmp.eq.s32.totalorder %v722, 0
          %v724 = vsel %vm723, %v707, 0.0
          %vm725 = vcmp.eq.s32.totalorder %v722, 1
          %v726 = vsel %vm725, %v720, 0.0
          %v727 = vadd.f32 %v724, %v726
          %728 = vst [vmem:[%s262] sm:$0xff] %v727
          %v729 = vpack.c.bf16 %v696, %v695
          %v730 = vpack.c.bf16 %v698, %v697
          %v733 = vunpack.c.l.b16 %v729
          %v734 = vunpack.c.h.b16 %v729
          %v735 = vunpack.c.l.b16 %v730
          %v736 = vunpack.c.h.b16 %v730
          %v737 = vpack.c.b16 %v733, %v733
          %v738 = vpack.c.b16 %v734, %v734
          %v739 = vpack.c.b16 %v735, %v735
          %v740 = vpack.c.b16 %v736, %v736
          %745 = vst [vmem:[%s257] sm:$0xf] %v737
          %746 = vst [vmem:[%s257 + $0x4] sm:$0xf] %v738
          %747 = vst [vmem:[%s257 + $0x8] sm:$0xf] %v739
          %748 = vst [vmem:[%s257 + $0xc] sm:$0xf] %v740
        $region63: #{discriminator512_forward.17} parent=50 // pred_fallthru
          _
        %s749 = smul.u32 4, %s20
        %p750 = scmp.lt.s32.totalorder %s749, 3
        %s751 = scalar_select %p750, %s749, 3
        %s752 = smul.addr %s751, 4
        %s753 = scalar_lea.vmem %s3, %s752
        %p754 = scmp.lt.s32.totalorder %s20, 0
        %s755 = scalar_select %p754, %s20, 0
        %s756 = smul.addr %s755, 8
        %s757 = scalar_lea.vmem %s4, %s756
        // Predicated region
        $region64: #{discriminator512_forward.17} parent=50 // pred_check
          %p758 = pneg %p116
        $region65: #{discriminator512_forward.17} parent=50 // pred_check_branch
          %760 = sbr.rel (%p758) target = $region67
        $region66: #{discriminator512_forward.17} parent=50 // pred_region
          %s761 = smul.u32 4, %s20
        $region67: #{discriminator512_forward.17} parent=50 // pred_fallthru
          _
        // Predicated region
        $region68: #{discriminator512_forward.17} parent=50 // pred_check
          %p762 = pneg %p142
        $region69: #{discriminator512_forward.17} parent=50 // pred_check_branch
          %764 = sbr.rel (%p762) target = $region71
        $region70: #{discriminator512_forward.17} parent=50 // pred_region
          _
        $region71: #{discriminator512_forward.17} parent=50 // pred_fallthru
          _
        // Predicated region
        $region72: #{discriminator512_forward.17} parent=50 // pred_check
          %p765 = pneg %p116
        $region73: #{discriminator512_forward.17} parent=50 // pred_check_branch
          %767 = sbr.rel (%p765) target = $region75
        $region74: #{discriminator512_forward.17} parent=50 // pred_region
          %s768 = smul.u32 4, %s20
          %p769 = scmp.lt.s32.totalorder %s768, 3
          %s770 = scalar_select %p769, %s768, 3
          %s771 = smul.addr %s770, 4
          %s772 = scalar_lea.vmem %s3, %s771
        $region75: #{discriminator512_forward.17} parent=50 // pred_fallthru
          _
        // Predicated region
        $region76: #{discriminator512_forward.17} parent=50 // pred_check
          %p773 = pneg %p142
        $region77: #{discriminator512_forward.17} parent=50 // pred_check_branch
          %775 = sbr.rel (%p773) target = $region79
        $region78: #{discriminator512_forward.17} parent=50 // pred_region
          %p776 = scmp.lt.s32.totalorder %s20, 0
          %s777 = scalar_select %p776, %s20, 0
          %s778 = smul.addr %s777, 8
          %s779 = scalar_lea.vmem %s4, %s778
        $region79: #{discriminator512_forward.17} parent=50 // pred_fallthru
          _
      $region51: #{discriminator512_forward.17} parent=5 // pred_fallthru
        _
      %p780 = scmp.le.s32.totalorder 2, %s11
      // Predicated region
      $region80: #{discriminator512_forward.17} parent=5 // pred_check
        %p781 = pneg %p780
      $region81: #{discriminator512_forward.17} parent=5 // pred_check_branch
        %783 = sbr.rel (%p781) target = $region83
      $region82: #{discriminator512_forward.17} parent=5 // pred_region
        %s784 = ssub.s32 %s11, 2
      $region83: #{discriminator512_forward.17} parent=5 // pred_fallthru
        _
    $region6: #{discriminator512_forward.17} parent=1 // loop_footer
      %s15 = sadd.s32 1, %s11
    $region7: #{discriminator512_forward.17} parent=1 // loop_footer_branch
      %10 = sbr.rel target = $region3
    $region8: #{discriminator512_forward.17} parent=1 // loop_exit
      _

// kernel: discriminator512_forward.19
$region0: #{discriminator512_forward.19}
  #allocation0 [shape = 'u32[]', space=smem, size = 0x4, offset = 0x4, fixed_abs, tag = 'smem constant byte address 0x4 - core index']
  #allocation1 [shape = 'u32[144,128]{1,0:T(1,128)}', space=vmem, size = 0x12000, scoped, tag = 'internal scratch']
  #allocation2 [shape = 'f32[16,128]{1,0:T(8,128)}', space=vmem, size = 0x2000, scoped, tag = 'scratch operand']
  %s0 = inlined_call_operand.vmem [shape: bf16[16,2048], index: 0, kind: input, shape index: {}]
  %s1 = inlined_call_operand.vmem [shape: bf16[2048,128], index: 1, kind: input, shape index: {}]
  %s2 = inlined_call_operand.vmem [shape: f32[1,128], index: 2, kind: input, shape index: {}]
  %s3 = inlined_call_operand.vmem [shape: f32[16,128], index: 3, kind: output, shape index: {}]
  %s4 = sld [smem:[#allocation0]]
  $region76: #{discriminator512_forward.19} parent=0
    _
  %s6 = ssub.s32 1, %s4
  %s7 = scalar_select 0, %s6, %s4
  $region1: #{discriminator512_forward.19} parent=0
    #allocation3 [shape = 'u8[32768]{0}', space=vmem, size = 0x8000, scoped, tag = 'input window, operand 0']
    loop: start=0, step=1, limit=6
    $region2: #{discriminator512_forward.19} parent=1 // loop_pre_header
      _
    $region3: #{discriminator512_forward.19} parent=1 // loop_header
      %s9 = sphi 0, %s13
      %p10 = scmp.ge.s32.totalorder %s9, 6
      %s16 = sphi 0, %s28
      %s17 = sphi 0, %s24
      %s18 = sphi 0, %s16
      %s19 = sphi 0, %s17
      %s20 = sphi 0, %s18
      %s21 = sphi 0, %s19
      %s33 = sphi 0, %s35
      %s36 = sphi 0, %s33
      %s37 = sphi 0, %s36
      %s53 = sphi 0, %s37
      %s57 = sphi 0, %s57
      %s59 = sphi 0, %s57
      %s60 = sphi 0, %s59
      %s74 = sphi 0, %s60
      %s78 = sphi 0, %s78
      %s80 = sphi 0, %s78
      %s81 = sphi 0, %s80
      %s95 = sphi 0, %s81
      %s101 = sphi 0, %s103
      %s104 = sphi 0, %s101
      %s105 = sphi 0, %s104
      %s121 = sphi 0, %s105
    $region4: #{discriminator512_forward.19} parent=1 // loop_header_branch
      %12 = sbr.rel (%p10) target = $region8
    $region5: #{discriminator512_forward.19} parent=1 // loop_body
      %s14 = ssub.s32 %s9, 1
      %s15 = ssub.s32 %s9, 2
      %s22 = sadd.s32 1, %s17
      %p23 = scmp.ge.s32.totalorder %s22, 4
      %s24 = scalar_select %p23, 0, %s22
      %s25 = sadd.s32 1, %s16
      %s26 = scalar_select %p23, %s25, %s16
      %p27 = scmp.ge.s32.totalorder %s26, 1
      %s28 = scalar_select %p27, 0, %s26
      %s29 = ssub.s32 %s16, %s28
      %s30 = ssub.s32 %s17, %s24
      %s31 = sor.u32 %s29, %s30
      %p32 = scmp.eq.s32.totalorder %s31, 0
      %s34 = sadd.s32 %s33, 1
      %s35 = scalar_select %p32, %s33, %s34
      %p38 = pneg %p32
      %p39 = scmp.eq.s32.totalorder %s9, 3
      %p40 = por %p38, %p39
      %p41 = scmp.ne.s32.totalorder %s33, %s36
      %p42 = scmp.eq.s32.totalorder %s9, 0
      %p43 = por %p41, %p42
      %p44 = scmp.ne.s32.totalorder %s33, %s36
      %p45 = scmp.eq.s32.totalorder %s14, 3
      %p46 = por %p44, %p45
      %p47 = scmp.ne.s32.totalorder %s36, %s37
      %p48 = scmp.eq.s32.totalorder %s14, 0
      %p49 = por %p47, %p48
      %p50 = scmp.ne.s32.totalorder %s36, %s37
      %p51 = scmp.eq.s32.totalorder %s15, 3
      %p52 = por %p50, %p51
      %p54 = scmp.ne.s32.totalorder %s37, %s53
      %p55 = scmp.eq.s32.totalorder %s15, 0
      %p56 = por %p54, %p55
      %s58 = sadd.s32 %s57, 1
      %p61 = scmp.eq.s32.totalorder %s9, 3
      %p62 = scmp.ne.s32.totalorder %s57, %s59
      %p63 = scmp.eq.s32.totalorder %s9, 0
      %p64 = por %p62, %p63
      %p65 = scmp.ne.s32.totalorder %s57, %s59
      %p66 = scmp.eq.s32.totalorder %s14, 3
      %p67 = por %p65, %p66
      %p68 = scmp.ne.s32.totalorder %s59, %s60
      %p69 = scmp.eq.s32.totalorder %s14, 0
      %p70 = por %p68, %p69
      %p71 = scmp.ne.s32.totalorder %s59, %s60
      %p72 = scmp.eq.s32.totalorder %s15, 3
      %p73 = por %p71, %p72
      %p75 = scmp.ne.s32.totalorder %s60, %s74
      %p76 = scmp.eq.s32.totalorder %s15, 0
      %p77 = por %p75, %p76
      %s79 = sadd.s32 %s78, 1
      %p82 = scmp.eq.s32.totalorder %s9, 3
      %p83 = scmp.ne.s32.totalorder %s78, %s80
      %p84 = scmp.eq.s32.totalorder %s9, 0
      %p85 = por %p83, %p84
      %p86 = scmp.ne.s32.totalorder %s78, %s80
      %p87 = scmp.eq.s32.totalorder %s14, 3
      %p88 = por %p86, %p87
      %p89 = scmp.ne.s32.totalorder %s80, %s81
      %p90 = scmp.eq.s32.totalorder %s14, 0
      %p91 = por %p89, %p90
      %p92 = scmp.ne.s32.totalorder %s80, %s81
      %p93 = scmp.eq.s32.totalorder %s15, 3
      %p94 = por %p92, %p93
      %p96 = scmp.ne.s32.totalorder %s81, %s95
      %p97 = scmp.eq.s32.totalorder %s15, 0
      %p98 = por %p96, %p97
      %s99 = ssub.s32 %s16, %s28
      %p100 = scmp.eq.s32.totalorder %s99, 0
      %s102 = sadd.s32 %s101, 1
      %s103 = scalar_select %p100, %s101, %s102
      %p106 = pneg %p100
      %p107 = scmp.eq.s32.totalorder %s9, 3
      %p108 = por %p106, %p107
      %p109 = scmp.ne.s32.totalorder %s101, %s104
      %p110 = scmp.eq.s32.totalorder %s9, 0
      %p111 = por %p109, %p110
      %p112 = scmp.ne.s32.totalorder %s101, %s104
      %p113 = scmp.eq.s32.totalorder %s14, 3
      %p114 = por %p112, %p113
      %p115 = scmp.ne.s32.totalorder %s104, %s105
      %p116 = scmp.eq.s32.totalorder %s14, 0
      %p117 = por %p115, %p116
      %p118 = scmp.ne.s32.totalorder %s104, %s105
      %p119 = scmp.eq.s32.totalorder %s15, 3
      %p120 = por %p118, %p119
      %p122 = scmp.ne.s32.totalorder %s105, %s121
      %p123 = scmp.eq.s32.totalorder %s15, 0
      %p124 = por %p122, %p123
      %p125 = scmp.le.s32.totalorder 1, %s9
      %p126 = scmp.lt.s32.totalorder %s9, 5
      %p127 = pnand %p125, %p126
      %p128 = pneg %p127
      // Predicated region
      $region9: #{discriminator512_forward.19} parent=5 // pred_check
        _
      $region10: #{discriminator512_forward.19} parent=5 // pred_check_branch
        %130 = sbr.rel (%p127) target = $region12
      $region11: #{discriminator512_forward.19} parent=5 // pred_region
        %s131 = ssub.s32 %s9, 1
        // Predicated region
        $region13: #{discriminator512_forward.19} parent=11 // pred_check
          %p132 = pneg %p70
        $region14: #{discriminator512_forward.19} parent=11 // pred_check_branch
          %134 = sbr.rel (%p132) target = $region16
        $region15: #{discriminator512_forward.19} parent=11 // pred_region
          _
        $region16: #{discriminator512_forward.19} parent=11 // pred_fallthru
          _
        // Predicated region
        $region17: #{discriminator512_forward.19} parent=11 // pred_check
          %p135 = pneg %p91
        $region18: #{discriminator512_forward.19} parent=11 // pred_check_branch
          %137 = sbr.rel (%p135) target = $region20
        $region19: #{discriminator512_forward.19} parent=11 // pred_region
          _
        $region20: #{discriminator512_forward.19} parent=11 // pred_fallthru
          _
      $region12: #{discriminator512_forward.19} parent=5 // pred_fallthru
        _
      %p138 = scmp.lt.s32.totalorder %s9, 4
      // Predicated region
      $region21: #{discriminator512_forward.19} parent=5 // pred_check
        %p139 = pneg %p138
      $region22: #{discriminator512_forward.19} parent=5 // pred_check_branch
        %141 = sbr.rel (%p139) target = $region24
      $region23: #{discriminator512_forward.19} parent=5 // pred_region
        // Predicated region
        $region25: #{discriminator512_forward.19} parent=23 // pred_check
          %p142 = pneg %p43
        $region26: #{discriminator512_forward.19} parent=23 // pred_check_branch
          %144 = sbr.rel (%p142) target = $region28
        $region27: #{discriminator512_forward.19} parent=23 // pred_region
          %s145 = sand.u32 %s33, 1
          %s146 = sand.u32 %s33, 1
          %s147 = smul.addr %s146, 32
          %s148 = scalar_lea.vmem [#allocation3], %s147
          %s149 = smul.u32 2, %s16
          %s150 = smul.u32 4, %s17
          %s151 = smul.addr %s149, 16
          %s152 = sadd.s32 %s150, %s151
          %s153 = smul.addr %s152, 4
          %s154 = scalar_lea.vmem %s0, %s153
          // Predicated region
          $region29: #{discriminator512_forward.19} parent=27 // pred_check
            _
          $region30: #{discriminator512_forward.19} parent=27 // pred_check_branch
            %156 = sbr.rel (0) target = $region32
          $region31: #{discriminator512_forward.19} parent=27 // pred_region
            // Predicated region
            $region33: #{discriminator512_forward.19} parent=31 // pred_check
              _
            $region34: #{discriminator512_forward.19} parent=31 // pred_check_branch
              %158 = sbr.rel (0) target = $region36
            $region35: #{discriminator512_forward.19} parent=31 // pred_region
              loop: start=0, step=1, limit=1
              $region37: #{discriminator512_forward.19} parent=35 // loop_pre_header
                _
              $region38: #{discriminator512_forward.19} parent=35 // loop_header
                %s160 = sphi 0, %s164
                %p161 = scmp.ge.s32.totalorder %s160, 1
                %s165 = sphi %s154, %s154
                %s166 = sphi %s148, %s148
              $region39: #{discriminator512_forward.19} parent=35 // loop_header_branch
                %163 = sbr.rel (%p161) target = $region43
              $region40: #{discriminator512_forward.19} parent=35 // loop_body
                %v167 = vld [vmem:[%s165] sm:$0xff]
                %168 = vst [vmem:[%s166] sm:$0xff] %v167
                %v169 = vld [vmem:[%s165 + $0x8] sm:$0xff]
                %170 = vst [vmem:[%s166 + $0x8] sm:$0xff] %v169
                %v171 = vld [vmem:[%s165 + $0x40] sm:$0xff]
                %172 = vst [vmem:[%s166 + $0x10] sm:$0xff] %v171
                %v173 = vld [vmem:[%s165 + $0x48] sm:$0xff]
                %174 = vst [vmem:[%s166 + $0x18] sm:$0xff] %v173
              $region41: #{discriminator512_forward.19} parent=35 // loop_footer
                %s164 = sadd.s32 1, %s160
              $region42: #{discriminator512_forward.19} parent=35 // loop_footer_branch
                %159 = sbr.rel target = $region38
              $region43: #{discriminator512_forward.19} parent=35 // loop_exit
                _
            $region36: #{discriminator512_forward.19} parent=31 // pred_fallthru
              _
            // Predicated region
            $region44: #{discriminator512_forward.19} parent=31 // pred_check
              _
            $region45: #{discriminator512_forward.19} parent=31 // pred_check_branch
              %176 = sbr.rel target = $region47
            $region46: #{discriminator512_forward.19} parent=31 // pred_region
              _
            $region47: #{discriminator512_forward.19} parent=31 // pred_fallthru
              _
          $region32: #{discriminator512_forward.19} parent=27 // pred_fallthru
            _
          %177 = vnop
        $region28: #{discriminator512_forward.19} parent=23 // pred_fallthru
          _
      $region24: #{discriminator512_forward.19} parent=5 // pred_fallthru
        _
      %p178 = scmp.le.s32.totalorder 1, %s9
      %p179 = scmp.lt.s32.totalorder %s9, 5
      %p180 = pnand %p178, %p179
      %p181 = pneg %p180
      // Predicated region
      $region48: #{discriminator512_forward.19} parent=5 // pred_check
        _
      $region49: #{discriminator512_forward.19} parent=5 // pred_check_branch
        %183 = sbr.rel (%p180) target = $region51
      $region50: #{discriminator512_forward.19} parent=5 // pred_region
        %s184 = ssub.s32 %s9, 1
        %s185 = sand.u32 %s36, 1
        %s186 = sand.u32 %s36, 1
        %s187 = smul.addr %s186, 32
        %s188 = scalar_lea.vmem [#allocation3], %s187
        // Predicated region
        $region52: #{discriminator512_forward.19} parent=50 // pred_check
          %p189 = pneg %p49
        $region53: #{discriminator512_forward.19} parent=50 // pred_check_branch
          %191 = sbr.rel (%p189) target = $region55
        $region54: #{discriminator512_forward.19} parent=50 // pred_region
          _
        $region55: #{discriminator512_forward.19} parent=50 // pred_fallthru
          _
        %s192 = sand.u32 %s36, 1
        %s193 = sand.u32 %s36, 1
        %s194 = smul.addr %s193, 32
        %s195 = scalar_lea.vmem [#allocation3], %s194
        %p196 = pneg %p49
        %p197 = pneg %p46
        %p198 = pneg %p70
        %p199 = pneg %p67
        %p200 = pneg %p91
        %p201 = pneg %p88
        %p202 = pneg %p117
        %p203 = pneg %p114
        %s204 = smul.u32 2, %s18
        %p205 = scmp.lt.s32.totalorder %s204, 1
        %s206 = scalar_select %p205, %s204, 1
        %s207 = smul.addr %s206, 8
        %s208 = scalar_lea.vmem %s3, %s207
        %s209 = smul.u32 2, %s18
        %s210 = smul.u32 4, %s19
        %s211 = smul.u32 2, %s18
        %p212 = scmp.lt.s32.totalorder %s211, 1
        %s213 = scalar_select %p212, %s211, 1
        %s214 = smul.addr %s213, 8
        %s215 = scalar_lea.vmem %s3, %s214
        %s216 = smul.u32 2, %s18
        %p218 = scmp.eq.s32.totalorder %s19, 0
        // Predicated region
        $region56: #{discriminator512_forward.19} parent=50 // pred_check
          %p219 = pneg %p218
        $region57: #{discriminator512_forward.19} parent=50 // pred_check_branch
          %221 = sbr.rel (%p219) target = $region59
        $region58: #{discriminator512_forward.19} parent=50 // pred_region
          %222 = vst [vmem:[#allocation2] sm:$0xff] 0.0
          %223 = vst [vmem:[#allocation2 + $0x8] sm:$0xff] 0.0
        $region59: #{discriminator512_forward.19} parent=50 // pred_fallthru
          _
        %s224 = smul.u32 %s19, 512
        %s225 = sshra.s32 %s224, 3
        %s226 = sand.u32 %s224, 7
        %s227 = smul.addr %s225, 4
        %s228 = scalar_lea.vmem %s1, %s227
        %v229 = vld [vmem:[%s228] sm:$0xf]
        %v230 = vld [vmem:[%s228 + $0x4] sm:$0xf]
        %v231 = vld [vmem:[%s228 + $0x8] sm:$0xf]
        %v232 = vld [vmem:[%s228 + $0xc] sm:$0xf]
        %v233 = vld [vmem:[%s228 + $0x10] sm:$0xf]
        %v234 = vld [vmem:[%s228 + $0x14] sm:$0xf]
        %v235 = vld [vmem:[%s228 + $0x18] sm:$0xf]
        %v236 = vld [vmem:[%s228 + $0x1c] sm:$0xf]
        %v237 = vld [vmem:[%s228 + $0x20] sm:$0xf]
        %v238 = vld [vmem:[%s228 + $0x24] sm:$0xf]
        %v239 = vld [vmem:[%s228 + $0x28] sm:$0xf]
        %v240 = vld [vmem:[%s228 + $0x2c] sm:$0xf]
        %v241 = vld [vmem:[%s228 + $0x30] sm:$0xf]
        %v242 = vld [vmem:[%s228 + $0x34] sm:$0xf]
        %v243 = vld [vmem:[%s228 + $0x38] sm:$0xf]
        %v244 = vld [vmem:[%s228 + $0x3c] sm:$0xf]
        %v245 = vld [vmem:[%s228 + $0x40] sm:$0xf]
        %v246 = vld [vmem:[%s228 + $0x44] sm:$0xf]
        %v247 = vld [vmem:[%s228 + $0x48] sm:$0xf]
        %v248 = vld [vmem:[%s228 + $0x4c] sm:$0xf]
        %v249 = vld [vmem:[%s228 + $0x50] sm:$0xf]
        %v250 = vld [vmem:[%s228 + $0x54] sm:$0xf]
        %v251 = vld [vmem:[%s228 + $0x58] sm:$0xf]
        %v252 = vld [vmem:[%s228 + $0x5c] sm:$0xf]
        %v253 = vld [vmem:[%s228 + $0x60] sm:$0xf]
        %v254 = vld [vmem:[%s228 + $0x64] sm:$0xf]
        %v255 = vld [vmem:[%s228 + $0x68] sm:$0xf]
        %v256 = vld [vmem:[%s228 + $0x6c] sm:$0xf]
        %v257 = vld [vmem:[%s228 + $0x70] sm:$0xf]
        %v258 = vld [vmem:[%s228 + $0x74] sm:$0xf]
        %v259 = vld [vmem:[%s228 + $0x78] sm:$0xf]
        %v260 = vld [vmem:[%s228 + $0x7c] sm:$0xf]
        %v261 = vld [vmem:[%s228 + $0x80] sm:$0xf]
        %v262 = vld [vmem:[%s228 + $0x84] sm:$0xf]
        %v263 = vld [vmem:[%s228 + $0x88] sm:$0xf]
        %v264 = vld [vmem:[%s228 + $0x8c] sm:$0xf]
        %v265 = vld [vmem:[%s228 + $0x90] sm:$0xf]
        %v266 = vld [vmem:[%s228 + $0x94] sm:$0xf]
        %v267 = vld [vmem:[%s228 + $0x98] sm:$0xf]
        %v268 = vld [vmem:[%s228 + $0x9c] sm:$0xf]
        %v269 = vld [vmem:[%s228 + $0xa0] sm:$0xf]
        %v270 = vld [vmem:[%s228 + $0xa4] sm:$0xf]
        %v271 = vld [vmem:[%s228 + $0xa8] sm:$0xf]
        %v272 = vld [vmem:[%s228 + $0xac] sm:$0xf]
        %v273 = vld [vmem:[%s228 + $0xb0] sm:$0xf]
        %v274 = vld [vmem:[%s228 + $0xb4] sm:$0xf]
        %v275 = vld [vmem:[%s228 + $0xb8] sm:$0xf]
        %v276 = vld [vmem:[%s228 + $0xbc] sm:$0xf]
        %v277 = vld [vmem:[%s228 + $0xc0] sm:$0xf]
        %v278 = vld [vmem:[%s228 + $0xc4] sm:$0xf]
        %v279 = vld [vmem:[%s228 + $0xc8] sm:$0xf]
        %v280 = vld [vmem:[%s228 + $0xcc] sm:$0xf]
        %v281 = vld [vmem:[%s228 + $0xd0] sm:$0xf]
        %v282 = vld [vmem:[%s228 + $0xd4] sm:$0xf]
        %v283 = vld [vmem:[%s228 + $0xd8] sm:$0xf]
        %v284 = vld [vmem:[%s228 + $0xdc] sm:$0xf]
        %v285 = vld [vmem:[%s228 + $0xe0] sm:$0xf]
        %v286 = vld [vmem:[%s228 + $0xe4] sm:$0xf]
        %v287 = vld [vmem:[%s228 + $0xe8] sm:$0xf]
        %v288 = vld [vmem:[%s228 + $0xec] sm:$0xf]
        %v289 = vld [vmem:[%s228 + $0xf0] sm:$0xf]
        %v290 = vld [vmem:[%s228 + $0xf4] sm:$0xf]
        %v291 = vld [vmem:[%s228 + $0xf8] sm:$0xf]
        %v292 = vld [vmem:[%s228 + $0xfc] sm:$0xf]
        %v293 = vld [vmem:[#allocation2] sm:$0xff]
        %v294 = vld [vmem:[#allocation2 + $0x8] sm:$0xff]
        %v295 = vld [vmem:[%s188] sm:$0xff]
        %v296 = vld [vmem:[%s188 + $0x8] sm:$0xff]
        %v297 = vld [vmem:[%s188 + $0x10] sm:$0xff]
        %v298 = vld [vmem:[%s188 + $0x18] sm:$0xff]
        %v303 = vunpack.c.l.b16 %v295
        %v304 = vunpack.c.h.b16 %v295
        %v305 = vunpack.c.l.b16 %v296
        %v306 = vunpack.c.h.b16 %v296
        %v307 = vunpack.c.l.b16 %v297
        %v308 = vunpack.c.h.b16 %v297
        %v309 = vunpack.c.l.b16 %v298
        %v310 = vunpack.c.h.b16 %v298
        %v311 = vpack.c.b16 %v307, %v303
        %v312 = vpack.c.b16 %v308, %v304
        %v313 = vpack.c.b16 %v309, %v305
        %v314 = vpack.c.b16 %v310, %v306
        %v383 = vunpack.c.l.b16 %v229
        %v384 = vunpack.c.l.b16 %v230
        %v385 = vunpack.c.l.b16 %v231
        %v386 = vunpack.c.l.b16 %v232
        %v387 = vunpack.c.l.b16 %v233
        %v388 = vunpack.c.l.b16 %v234
        %v389 = vunpack.c.l.b16 %v235
        %v390 = vunpack.c.l.b16 %v236
        %v391 = vunpack.c.l.b16 %v237
        %v392 = vunpack.c.l.b16 %v238
        %v393 = vunpack.c.l.b16 %v239
        %v394 = vunpack.c.l.b16 %v240
        %v395 = vunpack.c.l.b16 %v241
        %v396 = vunpack.c.l.b16 %v242
        %v397 = vunpack.c.l.b16 %v243
        %v398 = vunpack.c.l.b16 %v244
        %v399 = vunpack.c.l.b16 %v245
        %v400 = vunpack.c.l.b16 %v246
        %v401 = vunpack.c.l.b16 %v247
        %v402 = vunpack.c.l.b16 %v248
        %v403 = vunpack.c.l.b16 %v249
        %v404 = vunpack.c.l.b16 %v250
        %v405 = vunpack.c.l.b16 %v251
        %v406 = vunpack.c.l.b16 %v252
        %v407 = vunpack.c.l.b16 %v253
        %v408 = vunpack.c.l.b16 %v254
        %v409 = vunpack.c.l.b16 %v255
        %v410 = vunpack.c.l.b16 %v256
        %v411 = vunpack.c.l.b16 %v257
        %v412 = vunpack.c.l.b16 %v258
        %v413 = vunpack.c.l.b16 %v259
        %v414 = vunpack.c.l.b16 %v260
        %v415 = vunpack.c.l.b16 %v261
        %v416 = vunpack.c.l.b16 %v262
        %v417 = vunpack.c.l.b16 %v263
        %v418 = vunpack.c.l.b16 %v264
        %v419 = vunpack.c.l.b16 %v265
        %v420 = vunpack.c.l.b16 %v266
        %v421 = vunpack.c.l.b16 %v267
        %v422 = vunpack.c.l.b16 %v268
        %v423 = vunpack.c.l.b16 %v269
        %v424 = vunpack.c.l.b16 %v270
        %v425 = vunpack.c.l.b16 %v271
        %v426 = vunpack.c.l.b16 %v272
        %v427 = vunpack.c.l.b16 %v273
        %v428 = vunpack.c.l.b16 %v274
        %v429 = vunpack.c.l.b16 %v275
        %v430 = vunpack.c.l.b16 %v276
        %v431 = vunpack.c.l.b16 %v277
        %v432 = vunpack.c.l.b16 %v278
        %v433 = vunpack.c.l.b16 %v279
        %v434 = vunpack.c.l.b16 %v280
        %v435 = vunpack.c.l.b16 %v281
        %v436 = vunpack.c.l.b16 %v282
        %v437 = vunpack.c.l.b16 %v283
        %v438 = vunpack.c.l.b16 %v284
        %v439 = vunpack.c.l.b16 %v285
        %v440 = vunpack.c.l.b16 %v286
        %v441 = vunpack.c.l.b16 %v287
        %v442 = vunpack.c.l.b16 %v288
        %v443 = vunpack.c.l.b16 %v289
        %v444 = vunpack.c.l.b16 %v290
        %v445 = vunpack.c.l.b16 %v291
        %v446 = vunpack.c.l.b16 %v292
        %v447 = vpack.c.b16 %v384, %v383
        %v448 = vpack.c.b16 %v386, %v385
        %v449 = vpack.c.b16 %v388, %v387
        %v450 = vpack.c.b16 %v390, %v389
        %v451 = vpack.c.b16 %v392, %v391
        %v452 = vpack.c.b16 %v394, %v393
        %v453 = vpack.c.b16 %v396, %v395
        %v454 = vpack.c.b16 %v398, %v397
        %v455 = vpack.c.b16 %v400, %v399
        %v456 = vpack.c.b16 %v402, %v401
        %v457 = vpack.c.b16 %v404, %v403
        %v458 = vpack.c.b16 %v406, %v405
        %v459 = vpack.c.b16 %v408, %v407
        %v460 = vpack.c.b16 %v410, %v409
        %v461 = vpack.c.b16 %v412, %v411
        %v462 = vpack.c.b16 %v414, %v413
        %v463 = vpack.c.b16 %v416, %v415
        %v464 = vpack.c.b16 %v418, %v417
        %v465 = vpack.c.b16 %v420, %v419
        %v466 = vpack.c.b16 %v422, %v421
        %v467 = vpack.c.b16 %v424, %v423
        %v468 = vpack.c.b16 %v426, %v425
        %v469 = vpack.c.b16 %v428, %v427
        %v470 = vpack.c.b16 %v430, %v429
        %v471 = vpack.c.b16 %v432, %v431
        %v472 = vpack.c.b16 %v434, %v433
        %v473 = vpack.c.b16 %v436, %v435
        %v474 = vpack.c.b16 %v438, %v437
        %v475 = vpack.c.b16 %v440, %v439
        %v476 = vpack.c.b16 %v442, %v441
        %v477 = vpack.c.b16 %v444, %v443
        %v478 = vpack.c.b16 %v446, %v445
        %511 = vmatprep.subr.bf16.mxu0 0
        %512 = vmatpush1.bf16.msra.mxu0 %v454
        %513 = vmatprep.subr.bf16.mxu0 0
        %514 = vmatpush1.bf16.msra.mxu0 %v453
        %515 = vmatprep.subr.bf16.mxu0 0
        %516 = vmatpush1.bf16.msra.mxu0 %v452
        %517 = vmatprep.subr.bf16.mxu0 0
        %518 = vmatpush1.bf16.msra.mxu0 %v451
        %519 = vmatprep.subr.bf16.mxu0 0
        %520 = vmatpush1.bf16.msra.mxu0 %v450
        %521 = vmatprep.subr.bf16.mxu0 0
        %522 = vmatpush1.bf16.msra.mxu0 %v449
        %523 = vmatprep.subr.bf16.mxu0 0
        %524 = vmatpush1.bf16.msra.mxu0 %v448
        %525 = vmatprep.subr.bf16.mxu0 0
        %526 = vmatpush1.bf16.msra.mxu0 %v447
        %527 = vmatprep.subr.bf16.mxu0 0
        %528 = vmatpush2.bf16.msra.mxu0 %v462
        %529 = vmatprep.subr.bf16.mxu0 0
        %530 = vmatpush2.bf16.msra.mxu0 %v461
        %531 = vmatprep.subr.bf16.mxu0 0
        %532 = vmatpush2.bf16.msra.mxu0 %v460
        %533 = vmatprep.subr.bf16.mxu0 0
        %534 = vmatpush2.bf16.msra.mxu0 %v459
        %535 = vmatprep.subr.bf16.mxu0 0
        %536 = vmatpush2.bf16.msra.mxu0 %v458
        %537 = vmatprep.subr.bf16.mxu0 0
        %538 = vmatpush2.bf16.msra.mxu0 %v457
        %539 = vmatprep.subr.bf16.mxu0 0
        %540 = vmatpush2.bf16.msra.mxu0 %v456
        %541 = vmatprep.subr.bf16.mxu0 0
        %542 = vmatpush2.bf16.msra.mxu0 %v455
        %543 = vmatprep.mubr.bf16.mxu0 %v312
        %544 = vmatmul.mubr.bf16.gmra.mxu0 %v311
        %v545 = vpop.f32.mrf.mxu0
        %v546 = vadd.f32 0.0, %v545
        %v547 = vpop.f32.mrf.mxu0
        %v548 = vpop.f32.mrf.mxu0
        %v549 = vadd.f32 0.0, %v548
        %v550 = vpop.f32.mrf.mxu0
        %551 = vdwg.mxu0
        %552 = vmatprep.subr.bf16.mxu0 0
        %553 = vmatpush1.bf16.msra.mxu0 %v470
        %554 = vmatprep.subr.bf16.mxu0 0
        %555 = vmatpush1.bf16.msra.mxu0 %v469
        %556 = vmatprep.subr.bf16.mxu0 0
        %557 = vmatpush1.bf16.msra.mxu0 %v468
        %558 = vmatprep.subr.bf16.mxu0 0
        %559 = vmatpush1.bf16.msra.mxu0 %v467
        %560 = vmatprep.subr.bf16.mxu0 0
        %561 = vmatpush1.bf16.msra.mxu0 %v466
        %562 = vmatprep.subr.bf16.mxu0 0
        %563 = vmatpush1.bf16.msra.mxu0 %v465
        %564 = vmatprep.subr.bf16.mxu0 0
        %565 = vmatpush1.bf16.msra.mxu0 %v464
        %566 = vmatprep.subr.bf16.mxu0 0
        %567 = vmatpush1.bf16.msra.mxu0 %v463
        %568 = vmatprep.subr.bf16.mxu0 0
        %569 = vmatpush2.bf16.msra.mxu0 %v478
        %570 = vmatprep.subr.bf16.mxu0 0
        %571 = vmatpush2.bf16.msra.mxu0 %v477
        %572 = vmatprep.subr.bf16.mxu0 0
        %573 = vmatpush2.bf16.msra.mxu0 %v476
        %574 = vmatprep.subr.bf16.mxu0 0
        %575 = vmatpush2.bf16.msra.mxu0 %v475
        %576 = vmatprep.subr.bf16.mxu0 0
        %577 = vmatpush2.bf16.msra.mxu0 %v474
        %578 = vmatprep.subr.bf16.mxu0 0
        %579 = vmatpush2.bf16.msra.mxu0 %v473
        %580 = vmatprep.subr.bf16.mxu0 0
        %581 = vmatpush2.bf16.msra.mxu0 %v472
        %582 = vmatprep.subr.bf16.mxu0 0
        %583 = vmatpush2.bf16.msra.mxu0 %v471
        %584 = vmatprep.mubr.bf16.mxu0 %v314
        %585 = vmatmul.mubr.bf16.gmra.mxu0 %v313
        %v586 = vpop.f32.mrf.mxu0
        %v587 = vadd.f32 %v546, %v586
        %v588 = vpop.f32.mrf.mxu0
        %v589 = vpop.f32.mrf.mxu0
        %v590 = vadd.f32 %v549, %v589
        %v591 = vpop.f32.mrf.mxu0
        %592 = vdwg.mxu0
        %v593 = vadd.f32 %v293, %v587
        %v594 = vadd.f32 %v294, %v590
        %595 = vst [vmem:[#allocation2] sm:$0xff] %v593
        %596 = vst [vmem:[#allocation2 + $0x8] sm:$0xff] %v594
        %p597 = scmp.eq.s32.totalorder %s19, 3
        // Predicated region
        $region60: #{discriminator512_forward.19} parent=50 // pred_check
          %p598 = pneg %p597
        $region61: #{discriminator512_forward.19} parent=50 // pred_check_branch
          %600 = sbr.rel (%p598) target = $region63
        $region62: #{discriminator512_forward.19} parent=50 // pred_region
          %v601 = vld [vmem:[#allocation2] sm:$0xff]
          %v602 = vld [vmem:[#allocation2 + $0x8] sm:$0xff]
          %v603 = vld [vmem:[%s2] sm:$0x1]
          %v605 = vlaneseq
          %v606 = vshrl.u32 %v605, 7
          %v607 = vsub.s32 0, %v606
          %v608 = vrot.slane %v603, %v607
          %v610 = vadd.f32 %v601, %v608
          %v611 = vadd.f32 %v602, %v608
          %v612 = vsub.f32 0.0, %v610
          %v613 = vsub.f32 0.0, %v611
          %v614 = vmul.f32 %v612, 1.442695
          %v615 = vpow.pop %v614
          %v616 = vmul.f32 %v613, 1.442695
          %v617 = vpow.pop %v616
          %v618 = vadd.f32 %v615, 1.0
          %v619 = vadd.f32 %v617, 1.0
          %v620 = vrcp.pop %v618
          %v621 = vrcp.pop %v619
          %622 = vst [vmem:[%s215] sm:$0xff] %v620
          %623 = vst [vmem:[%s215 + $0x8] sm:$0xff] %v621
        $region63: #{discriminator512_forward.19} parent=50 // pred_fallthru
          _
        %s624 = smul.u32 2, %s18
        %p625 = scmp.lt.s32.totalorder %s624, 1
        %s626 = scalar_select %p625, %s624, 1
        %s627 = smul.addr %s626, 8
        %s628 = scalar_lea.vmem %s3, %s627
        // Predicated region
        $region64: #{discriminator512_forward.19} parent=50 // pred_check
          %p629 = pneg %p114
        $region65: #{discriminator512_forward.19} parent=50 // pred_check_branch
          %631 = sbr.rel (%p629) target = $region67
        $region66: #{discriminator512_forward.19} parent=50 // pred_region
          %s632 = smul.u32 2, %s18
        $region67: #{discriminator512_forward.19} parent=50 // pred_fallthru
          _
        // Predicated region
        $region68: #{discriminator512_forward.19} parent=50 // pred_check
          %p633 = pneg %p114
        $region69: #{discriminator512_forward.19} parent=50 // pred_check_branch
          %635 = sbr.rel (%p633) target = $region71
        $region70: #{discriminator512_forward.19} parent=50 // pred_region
          %s636 = smul.u32 2, %s18
          %p637 = scmp.lt.s32.totalorder %s636, 1
          %s638 = scalar_select %p637, %s636, 1
          %s639 = smul.addr %s638, 8
          %s640 = scalar_lea.vmem %s3, %s639
        $region71: #{discriminator512_forward.19} parent=50 // pred_fallthru
          _
      $region51: #{discriminator512_forward.19} parent=5 // pred_fallthru
        _
      %p641 = scmp.le.s32.totalorder 2, %s9
      // Predicated region
      $region72: #{discriminator512_forward.19} parent=5 // pred_check
        %p642 = pneg %p641
      $region73: #{discriminator512_forward.19} parent=5 // pred_check_branch
        %644 = sbr.rel (%p642) target = $region75
      $region74: #{discriminator512_forward.19} parent=5 // pred_region
        %s645 = ssub.s32 %s9, 2
      $region75: #{discriminator512_forward.19} parent=5 // pred_fallthru
        _
    $region6: #{discriminator512_forward.19} parent=1 // loop_footer
      %s13 = sadd.s32 1, %s9
    $region7: #{discriminator512_forward.19} parent=1 // loop_footer_branch
      %8 = sbr.rel target = $region3
    $region8: #{discriminator512_forward.19} parent=1 // loop_exit
      _

</llo_original>
